<compile_context>
chip_gen: v7x
topology: tpu7x:2x2x1
jax: 0.10.0
libtpu: 0.0.40
codegen_flags: <defaults>
</compile_context>

<pallas_src>
import functools
import math

import jax
import jax.numpy as jnp
import numpy as np
from jax.experimental import pallas as pl
from jax.experimental.pallas import tpu as pltpu

# ----- config (EquivariantBlock defaults, scaled-down sizes) -----
HIDDEN_NF = 32
N_LAYERS = 2
COORDS_RANGE = 15.0
NORM_CONSTANT = 1.0
NORMALIZATION_FACTOR = 1.0
DIST_DIM = 1          # no sin_embedding
NODE_OUT_W = 128      # lane-dense packed node output: [h(H) | pos(3) | zero pad]


# ------------------------- weight slab layout -------------------------
def _weight_layout():
    """Static row layout of the packed (P, H) weight slab (8-row aligned entries).

    Stacked weights are pre-split so the kernel never needs lane concats:
      edge_mlp layer-0 weight -> h_i / h_j / dist / edge-attr pieces,
      node_mlp layer-0 weight -> h / agg pieces,
      coord_mlp layer-0 weight -> h_i / h_j / edge-attr pieces.
    """
    H = HIDDEN_NF
    entries = []
    for l in range(N_LAYERS):
        entries += [(f"we0i_{l}", (H, H)), (f"we0j_{l}", (H, H))]
        if l == 0:
            entries += [(f"we0d_{l}", (DIST_DIM, H)),
                        (f"we0e_{l}", (H - DIST_DIM, H))]
        else:
            entries += [(f"we0e_{l}", (H, H))]
        entries += [(f"be0_{l}", (1, H)), (f"we1_{l}", (H, H)), (f"be1_{l}", (1, H)),
                    (f"wa_t_{l}", (1, H)), (f"ba_{l}", (1, 1)),
                    (f"wn0h_{l}", (H, H)), (f"wn0a_{l}", (H, H)), (f"bn0_{l}", (1, H)),
                    (f"wn1_{l}", (H, H)), (f"bn1_{l}", (1, H))]
    entries += [("wc0i", (H, H)), ("wc0j", (H, H)), ("wc0e", (H, H)), ("bc0", (1, H)),
                ("wc1", (H, H)), ("bc1", (1, H)),
                ("wc2_t", (1, H)), ("bc2", (1, 1)),
                ("wd0", (1, 16)), ("bd0", (1, 16)),
                ("wd1", (16, H)), ("bd1", (1, H))]
    layout, off = {}, 0
    for name, (r, c) in entries:
        layout[name] = (off, r, c)
        off += ((r + 7) // 8) * 8
    return layout, off


def _pack_params(params):
    """Pack the param pytree into a single (P, H) f32 slab -> one DMA into VMEM."""
    layout, total = _weight_layout()
    H = HIDDEN_NF
    vals = {}
    for l in range(N_LAYERS):
        p = params[f"gcl_{l}"]
        vals[f"we0i_{l}"] = p["we0"][:H]
        vals[f"we0j_{l}"] = p["we0"][H:2 * H]
        if l == 0:
            vals[f"we0d_{l}"] = p["we0"][2 * H:2 * H + DIST_DIM]
            vals[f"we0e_{l}"] = p["we0"][2 * H + DIST_DIM:]
        else:
            vals[f"we0e_{l}"] = p["we0"][2 * H:]
        vals[f"be0_{l}"] = p["be0"].reshape(1, -1)
        vals[f"we1_{l}"] = p["we1"]
        vals[f"be1_{l}"] = p["be1"].reshape(1, -1)
        vals[f"wa_t_{l}"] = p["wa"].T
        vals[f"ba_{l}"] = p["ba"].reshape(1, 1)
        vals[f"wn0h_{l}"] = p["wn0"][:H]
        vals[f"wn0a_{l}"] = p["wn0"][H:]
        vals[f"bn0_{l}"] = p["bn0"].reshape(1, -1)
        vals[f"wn1_{l}"] = p["wn1"]
        vals[f"bn1_{l}"] = p["bn1"].reshape(1, -1)
    q = params["equiv"]
    vals["wc0i"] = q["wc0"][:H]
    vals["wc0j"] = q["wc0"][H:2 * H]
    vals["wc0e"] = q["wc0"][2 * H:]
    vals["bc0"] = q["bc0"].reshape(1, -1)
    vals["wc1"] = q["wc1"]; vals["bc1"] = q["bc1"].reshape(1, -1)
    vals["wc2_t"] = q["wc2"].T; vals["bc2"] = q["bc2"].reshape(1, 1)
    vals["wd0"] = q["wd0"]; vals["bd0"] = q["bd0"].reshape(1, -1)
    vals["wd1"] = q["wd1"]; vals["bd1"] = q["bd1"].reshape(1, -1)

    slab = jnp.zeros((total, HIDDEN_NF), jnp.float32)
    for name, v in vals.items():
        off, r, c = layout[name]
        slab = slab.at[off:off + r, :c].set(v.astype(jnp.float32))
    return slab


# ------------------------- Pallas kernel -------------------------
def _equivariant_block_kernel(idx_ref, iirow_ref, h_ref, pos_ref, ea_ref, w_ref,
                              node_out_ref, e_out_ref, *, layout):
    f32 = jnp.float32
    bf16 = jnp.bfloat16

    def W(name):
        off, r, c = layout[name]
        return w_ref[off:off + r, 0:c]

    def silu(x):
        # sigmoid via EUP tanh: 0.5*(tanh(x/2)+1) == 1/(1+exp(-x)); avoids VALU divides.
        return x * (0.5 * jnp.tanh(0.5 * x) + 0.5)

    def dotf(a, b):                       # exact f32 matmul (small MLP weights)
        return jnp.dot(a, b, preferred_element_type=f32)

    def dotb(sel, x):                     # bf16 MXU gather/scatter matmul (sel is bf16)
        return jnp.dot(sel, x.astype(bf16), preferred_element_type=f32)

    idx = idx_ref[...]                    # (EB, 2) int32: [ii | jj], block-local ids
    ii_c = idx[:, 0:1]                    # (EB, 1)
    jj_c = idx[:, 1:2]                    # (EB, 1)
    ii_r = iirow_ref[...]                 # (1, EB) lane-major copy of ii
    h = h_ref[...]                        # (NB, H) f32
    pos = pos_ref[...]                    # (NB, 3) f32
    ea = ea_ref[...]                      # (EB, H-1) f32

    EB = idx.shape[0]
    NB = h.shape[0]
    H = h.shape[1]

    # One-hot gather/scatter matrices.  bf16 copies feed full-rate MXU matmuls on the
    # h path (0/1 exact in bf16); f32 copies keep the geometry path exact.  The scatter
    # matrix is built directly transposed from the lane-major ii copy (no XLU transpose).
    col_ids = jax.lax.broadcasted_iota(jnp.int32, (EB, NB), 1)
    row_ids = jax.lax.broadcasted_iota(jnp.int32, (NB, EB), 0)
    sel_i = (ii_c == col_ids).astype(bf16)        # (EB, NB)
    sel_j = (jj_c == col_ids).astype(bf16)        # (EB, NB)
    sel_iT = (ii_r == row_ids).astype(bf16)       # (NB, EB)
    sel_i32 = sel_i.astype(f32)
    sel_j32 = sel_j.astype(f32)
    sel_iT32 = sel_iT.astype(f32)
    # NORMALIZATION_FACTOR == 1.0 -> segment sums are plain scatter matmuls (no divide);
    # a non-unit factor would be folded into sel_iT / sel_iT32 once here.

    # ---------------- coord2diff (exact f32) ----------------
    diff = dotf(sel_i32, pos) - dotf(sel_j32, pos)                 # (EB, 3)
    radial = jnp.sum(diff * diff, axis=1, keepdims=True)           # (EB, 1)
    inv_norm = pl.reciprocal(jnp.sqrt(radial + 1e-8) + NORM_CONSTANT, approx=True)
    coord_diff = diff * inv_norm
    distances = radial
    # coord2cross is computed by the reference module but unused because
    # reflect_equiv=True and subgraph_mask is None -> no observable effect.

    # ---------------- GCL layers ----------------
    edge_attr = None
    for l in range(N_LAYERS):
        # h_i / h_j front-end linears hoisted to node space (NB rows << EB rows), then
        # gathered with the bf16 one-hot matrices -> no 2H / 3H lane concats.
        hwi = dotf(h, W(f"we0i_{l}"))                              # (NB, H)
        hwj = dotf(h, W(f"we0j_{l}"))                              # (NB, H)
        z = dotb(sel_i, hwi) + dotb(sel_j, hwj)                    # (EB, H)
        if l == 0:
            # layer-0 edge feature = cat([dist, ea_in]); dist column handled as a
            # broadcast row-product, ea with its own weight rows -> no odd lane concat.
            z = z + distances * W(f"we0d_{l}") + dotf(ea, W(f"we0e_{l}"))
        else:
            z = z + dotf(edge_attr, W(f"we0e_{l}"))
        mij = silu(z + W(f"be0_{l}"))
        mij = silu(dotf(mij, W(f"we1_{l}")) + W(f"be1_{l}"))
        # attention gate: swish(Linear(H -> 1))
        att = silu(jnp.sum(mij * W(f"wa_t_{l}"), axis=1, keepdims=True) + W(f"ba_{l}"))
        edge_feat = mij * att

        agg = dotb(sel_iT, edge_feat)                              # (NB, H) segment sum
        t = silu(dotf(h, W(f"wn0h_{l}")) + dotf(agg, W(f"wn0a_{l}")) + W(f"bn0_{l}"))
        t = dotf(t, W(f"wn1_{l}")) + W(f"bn1_{l}")
        h = h + t
        edge_attr = edge_feat

    # ---------------- EquivariantUpdate ----------------
    hci = dotf(h, W("wc0i"))
    hcj = dotf(h, W("wc0j"))
    c = silu(dotb(sel_i, hci) + dotb(sel_j, hcj)
             + dotf(edge_attr, W("wc0e")) + W("bc0"))
    c = silu(dotf(c, W("wc1")) + W("bc1"))
    phi = silu(jnp.sum(c * W("wc2_t"), axis=1, keepdims=True) + W("bc2"))
    trans = coord_diff * jnp.tanh(phi) * COORDS_RANGE              # tanh=True path
    pos_new = pos + dotf(sel_iT32, trans)

    # dist2h: h = h + distance_embedding(segment_sum(distances))
    agg_d = dotf(sel_iT32, distances)                              # (NB, 1)
    d = silu(agg_d * W("wd0") + W("bd0"))                          # Linear(1 -> 16)
    d = silu(dotf(d, W("wd1")) + W("bd1"))
    h_new = h + d

    # Lane-dense epilogue: one 128-wide node block [h | pos | 0-pad] (unmasked stores,
    # single writeback DMA) + the full-width aligned (EB, H) edge block.  The [:, 1:]
    # edge slice and the h/pos split are done by the caller.
    pad = jnp.zeros((NB, node_out_ref.shape[1] - H - 3), f32)
    node_out_ref[...] = jnp.concatenate([h_new, pos_new, pad], axis=1)
    e_out_ref[...] = edge_attr


# ------------------------- wrapper -------------------------
@functools.partial(jax.jit, static_argnames=("graphs_per_block",))
def equivariant_block(params, h, pos, edge_index, edge_attr_in, *, graphs_per_block=8):
    B, N, H = h.shape
    E = edge_index.shape[-1]
    GB = graphs_per_block
    assert B % GB == 0, "batch must be divisible by graphs_per_block"
    nblk = B // GB
    NB, EB = GB * N, GB * E

    layout, total = _weight_layout()
    slab = _pack_params(params)

    # Block-local node ids; edge indices coalesced into one (B*E, 2) slab plus a
    # lane-major copy of ii for the scatter one-hot (2 tiny index DMAs per step, not 3).
    off = (jnp.arange(B, dtype=jnp.int32) % GB)[:, None] * N       # (B, 1)
    ii = edge_index[:, 0, :].astype(jnp.int32) + off               # (B, E)
    jj = edge_index[:, 1, :].astype(jnp.int32) + off
    idx_cols = jnp.stack([ii.reshape(B * E), jj.reshape(B * E)], axis=-1)  # (B*E, 2)
    ii_row = ii.reshape(nblk, 1, EB)                               # lane-major copy

    h_flat = h.reshape(B * N, H).astype(jnp.float32)
    pos_flat = pos.reshape(B * N, 3).astype(jnp.float32)
    ea_flat = edge_attr_in.reshape(B * E, H - DIST_DIM).astype(jnp.float32)

    kernel = functools.partial(_equivariant_block_kernel, layout=layout)

    out_shape = (
        jax.ShapeDtypeStruct((B * N, NODE_OUT_W), jnp.float32),    # [h | pos | pad]
        jax.ShapeDtypeStruct((B * E, H), jnp.float32),             # full-width edge_attr
    )
    node_o, e_o = pl.pallas_call(
        kernel,
        grid=(nblk,),
        in_specs=[
            pl.BlockSpec((EB, 2), lambda b: (b, 0)),               # [ii | jj] edge-major
            pl.BlockSpec((None, 1, EB), lambda b: (b, 0, 0)),      # ii lane-major
            pl.BlockSpec((NB, H), lambda b: (b, 0)),               # h
            pl.BlockSpec((NB, 3), lambda b: (b, 0)),               # pos
            pl.BlockSpec((EB, H - DIST_DIM), lambda b: (b, 0)),    # edge_attr_in
            pl.BlockSpec((total, H), lambda b: (0, 0)),            # packed weight slab
        ],
        out_specs=(
            pl.BlockSpec((NB, NODE_OUT_W), lambda b: (b, 0)),
            pl.BlockSpec((EB, H), lambda b: (b, 0)),
        ),
        out_shape=out_shape,
        compiler_params=pltpu.CompilerParams(
            dimension_semantics=("parallel",)),
    )(idx_cols, ii_row, h_flat, pos_flat, ea_flat, slab)

    h_out = node_o[:, :H].reshape(B, N, H)
    pos_out = node_o[:, H:H + 3].reshape(B, N, 3)
    e_out = e_o[:, DIST_DIM:].reshape(B, E, H - DIST_DIM)
    return h_out, pos_out, e_out


def _pick_graphs_per_block(batch, edges_per_graph):
    """Generation-aware block sizing: EB = GB*E ~ MXU rows (256 on v6e/v7x, 128 on
    v5e/other), keeping >= 2 grid steps when possible so both v7x TensorCores work."""
    try:
        kind = jax.devices()[0].device_kind.lower()
    except Exception:
        kind = ""
    target_eb = 256 if ("v6" in kind or "v7" in kind) else 128
    gb = max(1, min(batch, max(1, target_eb // max(1, edges_per_graph))))
    while batch % gb != 0:
        gb -= 1
    if "v7" in kind:
        while gb > 1 and batch // gb < 2:
            gb //= 2
        while batch % gb != 0:
            gb -= 1
    return gb


# ------------------------- deterministic params -------------------------
def _xavier(key, shape, gain=1.0):
    fan_in, fan_out = shape
    a = gain * math.sqrt(6.0 / (fan_in + fan_out))
    return jax.random.uniform(key, shape, jnp.float32, minval=-a, maxval=a)


def init_params(key):
    H = HIDDEN_NF
    keys = iter(jax.random.split(key, 64))

    def lin(in_d, out_d, gain=1.0, bias_scale=0.1):
        w = _xavier(next(keys), (in_d, out_d), gain)
        b = jax.random.uniform(next(keys), (out_d,), jnp.float32,
                               minval=-bias_scale, maxval=bias_scale)
        return w, b

    params = {}
    for l in range(N_LAYERS):
        we0, be0 = lin(3 * H, H)
        we1, be1 = lin(H, H)
        wa, ba = lin(H, 1)
        wn0, bn0 = lin(2 * H, H)
        wn1, bn1 = lin(H, H)
        params[f"gcl_{l}"] = dict(we0=we0, be0=be0, we1=we1, be1=be1,
                                  wa=wa, ba=ba, wn0=wn0, bn0=bn0,
                                  wn1=wn1, bn1=bn1)
    wd0, bd0 = lin(1, 16, bias_scale=1.0)        # distance_embedding: xavier + U(-1,1) bias
    wd1, bd1 = lin(16, H, bias_scale=1.0)
    wc0, bc0 = lin(3 * H, H)
    wc1, bc1 = lin(H, H)
    wc2, bc2 = lin(H, 1, gain=1e-3)              # coord_mlp last layer: xavier gain 1e-3
    params["equiv"] = dict(wd0=wd0, bd0=bd0, wd1=wd1, bd1=bd1,
                           wc0=wc0, bc0=bc0, wc1=wc1, bc1=bc1,
                           wc2=wc2, bc2=bc2)
    return params


# ------------------------- pure-JAX reference (single graph) -------------------------
def reference_forward(params, h, pos, ii, jj, ea_in):
    sig = lambda x: 1.0 / (1.0 + jnp.exp(-x))
    silu = lambda x: x * sig(x)
    N = h.shape[0]

    diff = pos[ii] - pos[jj]
    radial = jnp.sum(diff ** 2, axis=1, keepdims=True)
    coord_diff = diff / (jnp.sqrt(radial + 1e-8) + NORM_CONSTANT)
    distances = radial
    edge_attr = jnp.concatenate([distances, ea_in], axis=1)

    def segsum(data):
        return (jnp.zeros((N, data.shape[1]), data.dtype).at[ii].add(data)
                / NORMALIZATION_FACTOR)

    for l in range(N_LAYERS):
        p = params[f"gcl_{l}"]
        inp = jnp.concatenate([h[ii], h[jj], edge_attr], axis=1)
        mij = silu(inp @ p["we0"] + p["be0"])
        mij = silu(mij @ p["we1"] + p["be1"])
        att = silu(mij @ p["wa"] + p["ba"])
        ef = mij * att
        agg = segsum(ef)
        t = silu(jnp.concatenate([h, agg], axis=1) @ p["wn0"] + p["bn0"])
        t = t @ p["wn1"] + p["bn1"]
        h = h + t
        edge_attr = ef

    q = params["equiv"]
    inp = jnp.concatenate([h[ii], h[jj], edge_attr], axis=1)
    c = silu(inp @ q["wc0"] + q["bc0"])
    c = silu(c @ q["wc1"] + q["bc1"])
    phi = silu(c @ q["wc2"] + q["bc2"])
    trans = coord_diff * jnp.tanh(phi) * COORDS_RANGE
    pos = pos + segsum(trans)
    agg_d = segsum(distances)
    d = silu(agg_d @ q["wd0"] + q["bd0"])
    d = silu(d @ q["wd1"] + q["bd1"])
    h = h + d
    return h, pos, edge_attr[:, DIST_DIM:]


if __name__ == "__main__":
    key = jax.random.PRNGKey(0)
    k0, k1, k2, k3, k4 = jax.random.split(key, 5)

    B, N, E, H = 16, 8, 16, HIDDEN_NF           # 16 small graphs
    h = jax.random.normal(k0, (B, N, H), jnp.float32)
    pos = jax.random.normal(k1, (B, N, 3), jnp.float32)
    edge_index = jax.random.randint(k2, (B, 2, E), 0, N)
    edge_attr_in = jax.random.normal(k3, (B, E, H - DIST_DIM), jnp.float32)
    params = init_params(k4)

    gb = _pick_graphs_per_block(B, E)
    h_out, pos_out, e_out = equivariant_block(
        params, h, pos, edge_index, edge_attr_in, graphs_per_block=gb)
    jax.block_until_ready((h_out, pos_out, e_out))

    h_ref, pos_ref, e_ref = jax.vmap(
        reference_forward, in_axes=(None, 0, 0, 0, 0, 0))(
            params, h, pos, edge_index[:, 0, :], edge_index[:, 1, :], edge_attr_in)

    # bf16 MXU gathers on the h path (+ EUP tanh sigmoid, approx reciprocal) give a
    # slightly looser tolerance than a pure-f32 kernel; still far below any real-bug scale.
    np.testing.assert_allclose(np.asarray(h_out), np.asarray(h_ref), rtol=2e-2, atol=2e-2)
    np.testing.assert_allclose(np.asarray(pos_out), np.asarray(pos_ref), rtol=2e-2, atol=2e-2)
    np.testing.assert_allclose(np.asarray(e_out), np.asarray(e_ref), rtol=2e-2, atol=2e-2)
    assert h_out.shape == (B, N, H)
    assert pos_out.shape == (B, N, 3)
    assert e_out.shape == (B, E, H - DIST_DIM)

    print("KERNEL_OK")
</pallas_src>

<mosaic_0001>
module attributes {stable_mosaic.version = 11 : i64} {
  func.func @_equivariant_block_kernel(%arg0: i32, %arg1: memref<128x2xi32, #tpu.memory_space<vmem>>, %arg2: memref<1x1x128xi32, #tpu.memory_space<vmem>>, %arg3: memref<64x32xf32, #tpu.memory_space<vmem>>, %arg4: memref<64x3xf32, #tpu.memory_space<vmem>>, %arg5: memref<128x31xf32, #tpu.memory_space<vmem>>, %arg6: memref<752x32xf32, #tpu.memory_space<vmem>>, %arg7: memref<64x128xf32, #tpu.memory_space<vmem>>, %arg8: memref<128x32xf32, #tpu.memory_space<vmem>>) attributes {dimension_semantics = [#tpu.dimension_semantics<parallel>], iteration_bounds = array<i64: 2>, scalar_prefetch = 0 : i64, scratch_operands = 0 : i64, tpu.core_type = #tpu.core_type<tc>, window_params = [{transform_indices = @transform_0, window_bounds = array<i64: 128, 2>}, {transform_indices = @transform_1, window_bounds = array<i64: 1, 1, 128>}, {transform_indices = @transform_2, window_bounds = array<i64: 64, 32>}, {transform_indices = @transform_3, window_bounds = array<i64: 64, 3>}, {transform_indices = @transform_4, window_bounds = array<i64: 128, 31>}, {pipeline_mode = #tpu.pipeline_mode<synchronous>, transform_indices = @transform_5, window_bounds = array<i64: 752, 32>}, {transform_indices = @transform_6, window_bounds = array<i64: 64, 128>}, {transform_indices = @transform_7, window_bounds = array<i64: 128, 32>}]} {
    %c0 = arith.constant 0 : index
    %c0_0 = arith.constant 0 : index
    %0 = vector.load %arg1[%c0, %c0_0] : memref<128x2xi32, #tpu.memory_space<vmem>>, vector<128x2xi32>
    %1 = vector.extract_strided_slice %0 {offsets = [0, 0], sizes = [128, 1], strides = [1, 1]} : vector<128x2xi32> to vector<128x1xi32>
    %2 = vector.extract_strided_slice %0 {offsets = [0, 1], sizes = [128, 1], strides = [1, 1]} : vector<128x2xi32> to vector<128x1xi32>
    %c0_1 = arith.constant 0 : index
    %c0_2 = arith.constant 0 : index
    %c0_3 = arith.constant 0 : index
    %3 = vector.load %arg2[%c0_1, %c0_2, %c0_3] : memref<1x1x128xi32, #tpu.memory_space<vmem>>, vector<1x1x128xi32>
    %4 = vector.shape_cast %3 : vector<1x1x128xi32> to vector<1x128xi32>
    %c0_4 = arith.constant 0 : index
    %c0_5 = arith.constant 0 : index
    %5 = vector.load %arg3[%c0_4, %c0_5] : memref<64x32xf32, #tpu.memory_space<vmem>>, vector<64x32xf32>
    %c0_6 = arith.constant 0 : index
    %c0_7 = arith.constant 0 : index
    %6 = vector.load %arg4[%c0_6, %c0_7] : memref<64x3xf32, #tpu.memory_space<vmem>>, vector<64x3xf32>
    %c0_8 = arith.constant 0 : index
    %c0_9 = arith.constant 0 : index
    %7 = vector.load %arg5[%c0_8, %c0_9] : memref<128x31xf32, #tpu.memory_space<vmem>>, vector<128x31xf32>
    %8 = tpu.iota {dimensions = array<i32: 1>} : vector<128x64xi32>
    %9 = tpu.iota {dimensions = array<i32: 0>} : vector<64x128xi32>
    %10 = vector.broadcast %1 : vector<128x1xi32> to vector<128x64xi32>
    %11 = arith.cmpi eq, %10, %8 : vector<128x64xi32>
    %12 = arith.extui %11 : vector<128x64xi1> to vector<128x64xi32>
    %13 = arith.sitofp %12 : vector<128x64xi32> to vector<128x64xf32>
    %14 = arith.truncf %13 : vector<128x64xf32> to vector<128x64xbf16>
    %15 = vector.broadcast %2 : vector<128x1xi32> to vector<128x64xi32>
    %16 = arith.cmpi eq, %15, %8 : vector<128x64xi32>
    %17 = arith.extui %16 : vector<128x64xi1> to vector<128x64xi32>
    %18 = arith.sitofp %17 : vector<128x64xi32> to vector<128x64xf32>
    %19 = arith.truncf %18 : vector<128x64xf32> to vector<128x64xbf16>
    %20 = vector.broadcast %4 : vector<1x128xi32> to vector<64x128xi32>
    %21 = arith.cmpi eq, %20, %9 : vector<64x128xi32>
    %22 = arith.extui %21 : vector<64x128xi1> to vector<64x128xi32>
    %23 = arith.sitofp %22 : vector<64x128xi32> to vector<64x128xf32>
    %24 = arith.truncf %23 : vector<64x128xf32> to vector<64x128xbf16>
    %25 = arith.extf %14 : vector<128x64xbf16> to vector<128x64xf32>
    %26 = arith.extf %19 : vector<128x64xbf16> to vector<128x64xf32>
    %27 = arith.extf %24 : vector<64x128xbf16> to vector<64x128xf32>
    %cst = arith.constant dense<0.000000e+00> : vector<128x3xf32>
    %28 = tpu.matmul %25, %6, %cst {dimension_numbers = #tpu.dot_dimension_numbers<[1], [0], [0], [1], [0, 0, 1, 1], [], []>} : vector<128x64xf32>, vector<64x3xf32>, vector<128x3xf32> -> vector<128x3xf32>
    %cst_10 = arith.constant dense<0.000000e+00> : vector<128x3xf32>
    %29 = tpu.matmul %26, %6, %cst_10 {dimension_numbers = #tpu.dot_dimension_numbers<[1], [0], [0], [1], [0, 0, 1, 1], [], []>} : vector<128x64xf32>, vector<64x3xf32>, vector<128x3xf32> -> vector<128x3xf32>
    %30 = arith.subf %28, %29 : vector<128x3xf32>
    %31 = arith.mulf %30, %30 : vector<128x3xf32>
    %cst_11 = arith.constant dense<0.000000e+00> : vector<128xf32>
    %32 = vector.multi_reduction <add>, %31, %cst_11 [1] : vector<128x3xf32> to vector<128xf32>
    %33 = vector.shape_cast %32 : vector<128xf32> to vector<128x1xf32>
    %cst_12 = arith.constant 9.99999993E-9 : f32
    %34 = vector.broadcast %cst_12 : f32 to vector<128x1xf32>
    %35 = arith.addf %33, %34 : vector<128x1xf32>
    %36 = math.sqrt %35 : vector<128x1xf32>
    %cst_13 = arith.constant 1.000000e+00 : f32
    %37 = vector.broadcast %cst_13 : f32 to vector<128x1xf32>
    %38 = arith.addf %36, %37 : vector<128x1xf32>
    %39 = tpu.reciprocal %38 {approx = true} : vector<128x1xf32> -> vector<128x1xf32>
    %40 = vector.broadcast %39 : vector<128x1xf32> to vector<128x3xf32>
    %41 = arith.mulf %30, %40 : vector<128x3xf32>
    %c0_14 = arith.constant 0 : index
    %c0_15 = arith.constant 0 : index
    %42 = vector.load %arg6[%c0_14, %c0_15] : memref<752x32xf32, #tpu.memory_space<vmem>>, vector<32x32xf32>
    %cst_16 = arith.constant dense<0.000000e+00> : vector<64x32xf32>
    %43 = tpu.matmul %5, %42, %cst_16 {dimension_numbers = #tpu.dot_dimension_numbers<[1], [0], [0], [1], [0, 0, 1, 1], [], []>} : vector<64x32xf32>, vector<32x32xf32>, vector<64x32xf32> -> vector<64x32xf32>
    %c32 = arith.constant 32 : index
    %c0_17 = arith.constant 0 : index
    %44 = vector.load %arg6[%c32, %c0_17] : memref<752x32xf32, #tpu.memory_space<vmem>>, vector<32x32xf32>
    %cst_18 = arith.constant dense<0.000000e+00> : vector<64x32xf32>
    %45 = tpu.matmul %5, %44, %cst_18 {dimension_numbers = #tpu.dot_dimension_numbers<[1], [0], [0], [1], [0, 0, 1, 1], [], []>} : vector<64x32xf32>, vector<32x32xf32>, vector<64x32xf32> -> vector<64x32xf32>
    %46 = arith.truncf %43 : vector<64x32xf32> to vector<64x32xbf16>
    %cst_19 = arith.constant dense<0.000000e+00> : vector<128x32xf32>
    %47 = tpu.matmul %14, %46, %cst_19 {dimension_numbers = #tpu.dot_dimension_numbers<[1], [0], [0], [1], [0, 0, 1, 1], [], []>} : vector<128x64xbf16>, vector<64x32xbf16>, vector<128x32xf32> -> vector<128x32xf32>
    %48 = arith.truncf %45 : vector<64x32xf32> to vector<64x32xbf16>
    %cst_20 = arith.constant dense<0.000000e+00> : vector<128x32xf32>
    %49 = tpu.matmul %19, %48, %cst_20 {dimension_numbers = #tpu.dot_dimension_numbers<[1], [0], [0], [1], [0, 0, 1, 1], [], []>} : vector<128x64xbf16>, vector<64x32xbf16>, vector<128x32xf32> -> vector<128x32xf32>
    %50 = arith.addf %47, %49 : vector<128x32xf32>
    %c64 = arith.constant 64 : index
    %c0_21 = arith.constant 0 : index
    %51 = vector.load %arg6[%c64, %c0_21] : memref<752x32xf32, #tpu.memory_space<vmem>>, vector<1x32xf32>
    %52 = vector.broadcast %33 : vector<128x1xf32> to vector<128x32xf32>
    %53 = vector.broadcast %51 : vector<1x32xf32> to vector<128x32xf32>
    %54 = arith.mulf %52, %53 : vector<128x32xf32>
    %55 = arith.addf %50, %54 : vector<128x32xf32>
    %c72 = arith.constant 72 : index
    %c0_22 = arith.constant 0 : index
    %56 = vector.load %arg6[%c72, %c0_22] : memref<752x32xf32, #tpu.memory_space<vmem>>, vector<31x32xf32>
    %cst_23 = arith.constant dense<0.000000e+00> : vector<128x32xf32>
    %57 = tpu.matmul %7, %56, %cst_23 {dimension_numbers = #tpu.dot_dimension_numbers<[1], [0], [0], [1], [0, 0, 1, 1], [], []>} : vector<128x31xf32>, vector<31x32xf32>, vector<128x32xf32> -> vector<128x32xf32>
    %58 = arith.addf %55, %57 : vector<128x32xf32>
    %c104 = arith.constant 104 : index
    %c0_24 = arith.constant 0 : index
    %59 = vector.load %arg6[%c104, %c0_24] : memref<752x32xf32, #tpu.memory_space<vmem>>, vector<1x32xf32>
    %60 = vector.broadcast %59 : vector<1x32xf32> to vector<128x32xf32>
    %61 = arith.addf %58, %60 : vector<128x32xf32>
    %cst_25 = arith.constant 5.000000e-01 : f32
    %62 = vector.broadcast %cst_25 : f32 to vector<128x32xf32>
    %63 = arith.mulf %62, %61 : vector<128x32xf32>
    %64 = math.tanh %63 : vector<128x32xf32>
    %cst_26 = arith.constant 5.000000e-01 : f32
    %65 = vector.broadcast %cst_26 : f32 to vector<128x32xf32>
    %66 = arith.mulf %65, %64 : vector<128x32xf32>
    %cst_27 = arith.constant 5.000000e-01 : f32
    %67 = vector.broadcast %cst_27 : f32 to vector<128x32xf32>
    %68 = arith.addf %66, %67 : vector<128x32xf32>
    %69 = arith.mulf %61, %68 : vector<128x32xf32>
    %c112 = arith.constant 112 : index
    %c0_28 = arith.constant 0 : index
    %70 = vector.load %arg6[%c112, %c0_28] : memref<752x32xf32, #tpu.memory_space<vmem>>, vector<32x32xf32>
    %cst_29 = arith.constant dense<0.000000e+00> : vector<128x32xf32>
    %71 = tpu.matmul %69, %70, %cst_29 {dimension_numbers = #tpu.dot_dimension_numbers<[1], [0], [0], [1], [0, 0, 1, 1], [], []>} : vector<128x32xf32>, vector<32x32xf32>, vector<128x32xf32> -> vector<128x32xf32>
    %c144 = arith.constant 144 : index
    %c0_30 = arith.constant 0 : index
    %72 = vector.load %arg6[%c144, %c0_30] : memref<752x32xf32, #tpu.memory_space<vmem>>, vector<1x32xf32>
    %73 = vector.broadcast %72 : vector<1x32xf32> to vector<128x32xf32>
    %74 = arith.addf %71, %73 : vector<128x32xf32>
    %cst_31 = arith.constant 5.000000e-01 : f32
    %75 = vector.broadcast %cst_31 : f32 to vector<128x32xf32>
    %76 = arith.mulf %75, %74 : vector<128x32xf32>
    %77 = math.tanh %76 : vector<128x32xf32>
    %cst_32 = arith.constant 5.000000e-01 : f32
    %78 = vector.broadcast %cst_32 : f32 to vector<128x32xf32>
    %79 = arith.mulf %78, %77 : vector<128x32xf32>
    %cst_33 = arith.constant 5.000000e-01 : f32
    %80 = vector.broadcast %cst_33 : f32 to vector<128x32xf32>
    %81 = arith.addf %79, %80 : vector<128x32xf32>
    %82 = arith.mulf %74, %81 : vector<128x32xf32>
    %c152 = arith.constant 152 : index
    %c0_34 = arith.constant 0 : index
    %83 = vector.load %arg6[%c152, %c0_34] : memref<752x32xf32, #tpu.memory_space<vmem>>, vector<1x32xf32>
    %84 = vector.broadcast %83 : vector<1x32xf32> to vector<128x32xf32>
    %85 = arith.mulf %82, %84 : vector<128x32xf32>
    %cst_35 = arith.constant dense<0.000000e+00> : vector<128xf32>
    %86 = vector.multi_reduction <add>, %85, %cst_35 [1] : vector<128x32xf32> to vector<128xf32>
    %87 = vector.shape_cast %86 : vector<128xf32> to vector<128x1xf32>
    %c160 = arith.constant 160 : index
    %c0_36 = arith.constant 0 : index
    %88 = vector.load %arg6[%c160, %c0_36] : memref<752x32xf32, #tpu.memory_space<vmem>>, vector<1x1xf32>
    %89 = vector.broadcast %88 : vector<1x1xf32> to vector<128x1xf32>
    %90 = arith.addf %87, %89 : vector<128x1xf32>
    %cst_37 = arith.constant 5.000000e-01 : f32
    %91 = vector.broadcast %cst_37 : f32 to vector<128x1xf32>
    %92 = arith.mulf %91, %90 : vector<128x1xf32>
    %93 = math.tanh %92 : vector<128x1xf32>
    %cst_38 = arith.constant 5.000000e-01 : f32
    %94 = vector.broadcast %cst_38 : f32 to vector<128x1xf32>
    %95 = arith.mulf %94, %93 : vector<128x1xf32>
    %cst_39 = arith.constant 5.000000e-01 : f32
    %96 = vector.broadcast %cst_39 : f32 to vector<128x1xf32>
    %97 = arith.addf %95, %96 : vector<128x1xf32>
    %98 = arith.mulf %90, %97 : vector<128x1xf32>
    %99 = vector.broadcast %98 : vector<128x1xf32> to vector<128x32xf32>
    %100 = arith.mulf %82, %99 : vector<128x32xf32>
    %101 = arith.truncf %100 : vector<128x32xf32> to vector<128x32xbf16>
    %cst_40 = arith.constant dense<0.000000e+00> : vector<64x32xf32>
    %102 = tpu.matmul %24, %101, %cst_40 {dimension_numbers = #tpu.dot_dimension_numbers<[1], [0], [0], [1], [0, 0, 1, 1], [], []>} : vector<64x128xbf16>, vector<128x32xbf16>, vector<64x32xf32> -> vector<64x32xf32>
    %c168 = arith.constant 168 : index
    %c0_41 = arith.constant 0 : index
    %103 = vector.load %arg6[%c168, %c0_41] : memref<752x32xf32, #tpu.memory_space<vmem>>, vector<32x32xf32>
    %cst_42 = arith.constant dense<0.000000e+00> : vector<64x32xf32>
    %104 = tpu.matmul %5, %103, %cst_42 {dimension_numbers = #tpu.dot_dimension_numbers<[1], [0], [0], [1], [0, 0, 1, 1], [], []>} : vector<64x32xf32>, vector<32x32xf32>, vector<64x32xf32> -> vector<64x32xf32>
    %c200 = arith.constant 200 : index
    %c0_43 = arith.constant 0 : index
    %105 = vector.load %arg6[%c200, %c0_43] : memref<752x32xf32, #tpu.memory_space<vmem>>, vector<32x32xf32>
    %cst_44 = arith.constant dense<0.000000e+00> : vector<64x32xf32>
    %106 = tpu.matmul %102, %105, %cst_44 {dimension_numbers = #tpu.dot_dimension_numbers<[1], [0], [0], [1], [0, 0, 1, 1], [], []>} : vector<64x32xf32>, vector<32x32xf32>, vector<64x32xf32> -> vector<64x32xf32>
    %107 = arith.addf %104, %106 : vector<64x32xf32>
    %c232 = arith.constant 232 : index
    %c0_45 = arith.constant 0 : index
    %108 = vector.load %arg6[%c232, %c0_45] : memref<752x32xf32, #tpu.memory_space<vmem>>, vector<1x32xf32>
    %109 = vector.broadcast %108 : vector<1x32xf32> to vector<64x32xf32>
    %110 = arith.addf %107, %109 : vector<64x32xf32>
    %cst_46 = arith.constant 5.000000e-01 : f32
    %111 = vector.broadcast %cst_46 : f32 to vector<64x32xf32>
    %112 = arith.mulf %111, %110 : vector<64x32xf32>
    %113 = math.tanh %112 : vector<64x32xf32>
    %cst_47 = arith.constant 5.000000e-01 : f32
    %114 = vector.broadcast %cst_47 : f32 to vector<64x32xf32>
    %115 = arith.mulf %114, %113 : vector<64x32xf32>
    %cst_48 = arith.constant 5.000000e-01 : f32
    %116 = vector.broadcast %cst_48 : f32 to vector<64x32xf32>
    %117 = arith.addf %115, %116 : vector<64x32xf32>
    %118 = arith.mulf %110, %117 : vector<64x32xf32>
    %c240 = arith.constant 240 : index
    %c0_49 = arith.constant 0 : index
    %119 = vector.load %arg6[%c240, %c0_49] : memref<752x32xf32, #tpu.memory_space<vmem>>, vector<32x32xf32>
    %cst_50 = arith.constant dense<0.000000e+00> : vector<64x32xf32>
    %120 = tpu.matmul %118, %119, %cst_50 {dimension_numbers = #tpu.dot_dimension_numbers<[1], [0], [0], [1], [0, 0, 1, 1], [], []>} : vector<64x32xf32>, vector<32x32xf32>, vector<64x32xf32> -> vector<64x32xf32>
    %c272 = arith.constant 272 : index
    %c0_51 = arith.constant 0 : index
    %121 = vector.load %arg6[%c272, %c0_51] : memref<752x32xf32, #tpu.memory_space<vmem>>, vector<1x32xf32>
    %122 = vector.broadcast %121 : vector<1x32xf32> to vector<64x32xf32>
    %123 = arith.addf %120, %122 : vector<64x32xf32>
    %124 = arith.addf %5, %123 : vector<64x32xf32>
    %c280 = arith.constant 280 : index
    %c0_52 = arith.constant 0 : index
    %125 = vector.load %arg6[%c280, %c0_52] : memref<752x32xf32, #tpu.memory_space<vmem>>, vector<32x32xf32>
    %cst_53 = arith.constant dense<0.000000e+00> : vector<64x32xf32>
    %126 = tpu.matmul %124, %125, %cst_53 {dimension_numbers = #tpu.dot_dimension_numbers<[1], [0], [0], [1], [0, 0, 1, 1], [], []>} : vector<64x32xf32>, vector<32x32xf32>, vector<64x32xf32> -> vector<64x32xf32>
    %c312 = arith.constant 312 : index
    %c0_54 = arith.constant 0 : index
    %127 = vector.load %arg6[%c312, %c0_54] : memref<752x32xf32, #tpu.memory_space<vmem>>, vector<32x32xf32>
    %cst_55 = arith.constant dense<0.000000e+00> : vector<64x32xf32>
    %128 = tpu.matmul %124, %127, %cst_55 {dimension_numbers = #tpu.dot_dimension_numbers<[1], [0], [0], [1], [0, 0, 1, 1], [], []>} : vector<64x32xf32>, vector<32x32xf32>, vector<64x32xf32> -> vector<64x32xf32>
    %129 = arith.truncf %126 : vector<64x32xf32> to vector<64x32xbf16>
    %cst_56 = arith.constant dense<0.000000e+00> : vector<128x32xf32>
    %130 = tpu.matmul %14, %129, %cst_56 {dimension_numbers = #tpu.dot_dimension_numbers<[1], [0], [0], [1], [0, 0, 1, 1], [], []>} : vector<128x64xbf16>, vector<64x32xbf16>, vector<128x32xf32> -> vector<128x32xf32>
    %131 = arith.truncf %128 : vector<64x32xf32> to vector<64x32xbf16>
    %cst_57 = arith.constant dense<0.000000e+00> : vector<128x32xf32>
    %132 = tpu.matmul %19, %131, %cst_57 {dimension_numbers = #tpu.dot_dimension_numbers<[1], [0], [0], [1], [0, 0, 1, 1], [], []>} : vector<128x64xbf16>, vector<64x32xbf16>, vector<128x32xf32> -> vector<128x32xf32>
    %133 = arith.addf %130, %132 : vector<128x32xf32>
    %c344 = arith.constant 344 : index
    %c0_58 = arith.constant 0 : index
    %134 = vector.load %arg6[%c344, %c0_58] : memref<752x32xf32, #tpu.memory_space<vmem>>, vector<32x32xf32>
    %cst_59 = arith.constant dense<0.000000e+00> : vector<128x32xf32>
    %135 = tpu.matmul %100, %134, %cst_59 {dimension_numbers = #tpu.dot_dimension_numbers<[1], [0], [0], [1], [0, 0, 1, 1], [], []>} : vector<128x32xf32>, vector<32x32xf32>, vector<128x32xf32> -> vector<128x32xf32>
    %136 = arith.addf %133, %135 : vector<128x32xf32>
    %c376 = arith.constant 376 : index
    %c0_60 = arith.constant 0 : index
    %137 = vector.load %arg6[%c376, %c0_60] : memref<752x32xf32, #tpu.memory_space<vmem>>, vector<1x32xf32>
    %138 = vector.broadcast %137 : vector<1x32xf32> to vector<128x32xf32>
    %139 = arith.addf %136, %138 : vector<128x32xf32>
    %cst_61 = arith.constant 5.000000e-01 : f32
    %140 = vector.broadcast %cst_61 : f32 to vector<128x32xf32>
    %141 = arith.mulf %140, %139 : vector<128x32xf32>
    %142 = math.tanh %141 : vector<128x32xf32>
    %cst_62 = arith.constant 5.000000e-01 : f32
    %143 = vector.broadcast %cst_62 : f32 to vector<128x32xf32>
    %144 = arith.mulf %143, %142 : vector<128x32xf32>
    %cst_63 = arith.constant 5.000000e-01 : f32
    %145 = vector.broadcast %cst_63 : f32 to vector<128x32xf32>
    %146 = arith.addf %144, %145 : vector<128x32xf32>
    %147 = arith.mulf %139, %146 : vector<128x32xf32>
    %c384 = arith.constant 384 : index
    %c0_64 = arith.constant 0 : index
    %148 = vector.load %arg6[%c384, %c0_64] : memref<752x32xf32, #tpu.memory_space<vmem>>, vector<32x32xf32>
    %cst_65 = arith.constant dense<0.000000e+00> : vector<128x32xf32>
    %149 = tpu.matmul %147, %148, %cst_65 {dimension_numbers = #tpu.dot_dimension_numbers<[1], [0], [0], [1], [0, 0, 1, 1], [], []>} : vector<128x32xf32>, vector<32x32xf32>, vector<128x32xf32> -> vector<128x32xf32>
    %c416 = arith.constant 416 : index
    %c0_66 = arith.constant 0 : index
    %150 = vector.load %arg6[%c416, %c0_66] : memref<752x32xf32, #tpu.memory_space<vmem>>, vector<1x32xf32>
    %151 = vector.broadcast %150 : vector<1x32xf32> to vector<128x32xf32>
    %152 = arith.addf %149, %151 : vector<128x32xf32>
    %cst_67 = arith.constant 5.000000e-01 : f32
    %153 = vector.broadcast %cst_67 : f32 to vector<128x32xf32>
    %154 = arith.mulf %153, %152 : vector<128x32xf32>
    %155 = math.tanh %154 : vector<128x32xf32>
    %cst_68 = arith.constant 5.000000e-01 : f32
    %156 = vector.broadcast %cst_68 : f32 to vector<128x32xf32>
    %157 = arith.mulf %156, %155 : vector<128x32xf32>
    %cst_69 = arith.constant 5.000000e-01 : f32
    %158 = vector.broadcast %cst_69 : f32 to vector<128x32xf32>
    %159 = arith.addf %157, %158 : vector<128x32xf32>
    %160 = arith.mulf %152, %159 : vector<128x32xf32>
    %c424 = arith.constant 424 : index
    %c0_70 = arith.constant 0 : index
    %161 = vector.load %arg6[%c424, %c0_70] : memref<752x32xf32, #tpu.memory_space<vmem>>, vector<1x32xf32>
    %162 = vector.broadcast %161 : vector<1x32xf32> to vector<128x32xf32>
    %163 = arith.mulf %160, %162 : vector<128x32xf32>
    %cst_71 = arith.constant dense<0.000000e+00> : vector<128xf32>
    %164 = vector.multi_reduction <add>, %163, %cst_71 [1] : vector<128x32xf32> to vector<128xf32>
    %165 = vector.shape_cast %164 : vector<128xf32> to vector<128x1xf32>
    %c432 = arith.constant 432 : index
    %c0_72 = arith.constant 0 : index
    %166 = vector.load %arg6[%c432, %c0_72] : memref<752x32xf32, #tpu.memory_space<vmem>>, vector<1x1xf32>
    %167 = vector.broadcast %166 : vector<1x1xf32> to vector<128x1xf32>
    %168 = arith.addf %165, %167 : vector<128x1xf32>
    %cst_73 = arith.constant 5.000000e-01 : f32
    %169 = vector.broadcast %cst_73 : f32 to vector<128x1xf32>
    %170 = arith.mulf %169, %168 : vector<128x1xf32>
    %171 = math.tanh %170 : vector<128x1xf32>
    %cst_74 = arith.constant 5.000000e-01 : f32
    %172 = vector.broadcast %cst_74 : f32 to vector<128x1xf32>
    %173 = arith.mulf %172, %171 : vector<128x1xf32>
    %cst_75 = arith.constant 5.000000e-01 : f32
    %174 = vector.broadcast %cst_75 : f32 to vector<128x1xf32>
    %175 = arith.addf %173, %174 : vector<128x1xf32>
    %176 = arith.mulf %168, %175 : vector<128x1xf32>
    %177 = vector.broadcast %176 : vector<128x1xf32> to vector<128x32xf32>
    %178 = arith.mulf %160, %177 : vector<128x32xf32>
    %179 = arith.truncf %178 : vector<128x32xf32> to vector<128x32xbf16>
    %cst_76 = arith.constant dense<0.000000e+00> : vector<64x32xf32>
    %180 = tpu.matmul %24, %179, %cst_76 {dimension_numbers = #tpu.dot_dimension_numbers<[1], [0], [0], [1], [0, 0, 1, 1], [], []>} : vector<64x128xbf16>, vector<128x32xbf16>, vector<64x32xf32> -> vector<64x32xf32>
    %c440 = arith.constant 440 : index
    %c0_77 = arith.constant 0 : index
    %181 = vector.load %arg6[%c440, %c0_77] : memref<752x32xf32, #tpu.memory_space<vmem>>, vector<32x32xf32>
    %cst_78 = arith.constant dense<0.000000e+00> : vector<64x32xf32>
    %182 = tpu.matmul %124, %181, %cst_78 {dimension_numbers = #tpu.dot_dimension_numbers<[1], [0], [0], [1], [0, 0, 1, 1], [], []>} : vector<64x32xf32>, vector<32x32xf32>, vector<64x32xf32> -> vector<64x32xf32>
    %c472 = arith.constant 472 : index
    %c0_79 = arith.constant 0 : index
    %183 = vector.load %arg6[%c472, %c0_79] : memref<752x32xf32, #tpu.memory_space<vmem>>, vector<32x32xf32>
    %cst_80 = arith.constant dense<0.000000e+00> : vector<64x32xf32>
    %184 = tpu.matmul %180, %183, %cst_80 {dimension_numbers = #tpu.dot_dimension_numbers<[1], [0], [0], [1], [0, 0, 1, 1], [], []>} : vector<64x32xf32>, vector<32x32xf32>, vector<64x32xf32> -> vector<64x32xf32>
    %185 = arith.addf %182, %184 : vector<64x32xf32>
    %c504 = arith.constant 504 : index
    %c0_81 = arith.constant 0 : index
    %186 = vector.load %arg6[%c504, %c0_81] : memref<752x32xf32, #tpu.memory_space<vmem>>, vector<1x32xf32>
    %187 = vector.broadcast %186 : vector<1x32xf32> to vector<64x32xf32>
    %188 = arith.addf %185, %187 : vector<64x32xf32>
    %cst_82 = arith.constant 5.000000e-01 : f32
    %189 = vector.broadcast %cst_82 : f32 to vector<64x32xf32>
    %190 = arith.mulf %189, %188 : vector<64x32xf32>
    %191 = math.tanh %190 : vector<64x32xf32>
    %cst_83 = arith.constant 5.000000e-01 : f32
    %192 = vector.broadcast %cst_83 : f32 to vector<64x32xf32>
    %193 = arith.mulf %192, %191 : vector<64x32xf32>
    %cst_84 = arith.constant 5.000000e-01 : f32
    %194 = vector.broadcast %cst_84 : f32 to vector<64x32xf32>
    %195 = arith.addf %193, %194 : vector<64x32xf32>
    %196 = arith.mulf %188, %195 : vector<64x32xf32>
    %c512 = arith.constant 512 : index
    %c0_85 = arith.constant 0 : index
    %197 = vector.load %arg6[%c512, %c0_85] : memref<752x32xf32, #tpu.memory_space<vmem>>, vector<32x32xf32>
    %cst_86 = arith.constant dense<0.000000e+00> : vector<64x32xf32>
    %198 = tpu.matmul %196, %197, %cst_86 {dimension_numbers = #tpu.dot_dimension_numbers<[1], [0], [0], [1], [0, 0, 1, 1], [], []>} : vector<64x32xf32>, vector<32x32xf32>, vector<64x32xf32> -> vector<64x32xf32>
    %c544 = arith.constant 544 : index
    %c0_87 = arith.constant 0 : index
    %199 = vector.load %arg6[%c544, %c0_87] : memref<752x32xf32, #tpu.memory_space<vmem>>, vector<1x32xf32>
    %200 = vector.broadcast %199 : vector<1x32xf32> to vector<64x32xf32>
    %201 = arith.addf %198, %200 : vector<64x32xf32>
    %202 = arith.addf %124, %201 : vector<64x32xf32>
    %c552 = arith.constant 552 : index
    %c0_88 = arith.constant 0 : index
    %203 = vector.load %arg6[%c552, %c0_88] : memref<752x32xf32, #tpu.memory_space<vmem>>, vector<32x32xf32>
    %cst_89 = arith.constant dense<0.000000e+00> : vector<64x32xf32>
    %204 = tpu.matmul %202, %203, %cst_89 {dimension_numbers = #tpu.dot_dimension_numbers<[1], [0], [0], [1], [0, 0, 1, 1], [], []>} : vector<64x32xf32>, vector<32x32xf32>, vector<64x32xf32> -> vector<64x32xf32>
    %c584 = arith.constant 584 : index
    %c0_90 = arith.constant 0 : index
    %205 = vector.load %arg6[%c584, %c0_90] : memref<752x32xf32, #tpu.memory_space<vmem>>, vector<32x32xf32>
    %cst_91 = arith.constant dense<0.000000e+00> : vector<64x32xf32>
    %206 = tpu.matmul %202, %205, %cst_91 {dimension_numbers = #tpu.dot_dimension_numbers<[1], [0], [0], [1], [0, 0, 1, 1], [], []>} : vector<64x32xf32>, vector<32x32xf32>, vector<64x32xf32> -> vector<64x32xf32>
    %207 = arith.truncf %204 : vector<64x32xf32> to vector<64x32xbf16>
    %cst_92 = arith.constant dense<0.000000e+00> : vector<128x32xf32>
    %208 = tpu.matmul %14, %207, %cst_92 {dimension_numbers = #tpu.dot_dimension_numbers<[1], [0], [0], [1], [0, 0, 1, 1], [], []>} : vector<128x64xbf16>, vector<64x32xbf16>, vector<128x32xf32> -> vector<128x32xf32>
    %209 = arith.truncf %206 : vector<64x32xf32> to vector<64x32xbf16>
    %cst_93 = arith.constant dense<0.000000e+00> : vector<128x32xf32>
    %210 = tpu.matmul %19, %209, %cst_93 {dimension_numbers = #tpu.dot_dimension_numbers<[1], [0], [0], [1], [0, 0, 1, 1], [], []>} : vector<128x64xbf16>, vector<64x32xbf16>, vector<128x32xf32> -> vector<128x32xf32>
    %211 = arith.addf %208, %210 : vector<128x32xf32>
    %c616 = arith.constant 616 : index
    %c0_94 = arith.constant 0 : index
    %212 = vector.load %arg6[%c616, %c0_94] : memref<752x32xf32, #tpu.memory_space<vmem>>, vector<32x32xf32>
    %cst_95 = arith.constant dense<0.000000e+00> : vector<128x32xf32>
    %213 = tpu.matmul %178, %212, %cst_95 {dimension_numbers = #tpu.dot_dimension_numbers<[1], [0], [0], [1], [0, 0, 1, 1], [], []>} : vector<128x32xf32>, vector<32x32xf32>, vector<128x32xf32> -> vector<128x32xf32>
    %214 = arith.addf %211, %213 : vector<128x32xf32>
    %c648 = arith.constant 648 : index
    %c0_96 = arith.constant 0 : index
    %215 = vector.load %arg6[%c648, %c0_96] : memref<752x32xf32, #tpu.memory_space<vmem>>, vector<1x32xf32>
    %216 = vector.broadcast %215 : vector<1x32xf32> to vector<128x32xf32>
    %217 = arith.addf %214, %216 : vector<128x32xf32>
    %cst_97 = arith.constant 5.000000e-01 : f32
    %218 = vector.broadcast %cst_97 : f32 to vector<128x32xf32>
    %219 = arith.mulf %218, %217 : vector<128x32xf32>
    %220 = math.tanh %219 : vector<128x32xf32>
    %cst_98 = arith.constant 5.000000e-01 : f32
    %221 = vector.broadcast %cst_98 : f32 to vector<128x32xf32>
    %222 = arith.mulf %221, %220 : vector<128x32xf32>
    %cst_99 = arith.constant 5.000000e-01 : f32
    %223 = vector.broadcast %cst_99 : f32 to vector<128x32xf32>
    %224 = arith.addf %222, %223 : vector<128x32xf32>
    %225 = arith.mulf %217, %224 : vector<128x32xf32>
    %c656 = arith.constant 656 : index
    %c0_100 = arith.constant 0 : index
    %226 = vector.load %arg6[%c656, %c0_100] : memref<752x32xf32, #tpu.memory_space<vmem>>, vector<32x32xf32>
    %cst_101 = arith.constant dense<0.000000e+00> : vector<128x32xf32>
    %227 = tpu.matmul %225, %226, %cst_101 {dimension_numbers = #tpu.dot_dimension_numbers<[1], [0], [0], [1], [0, 0, 1, 1], [], []>} : vector<128x32xf32>, vector<32x32xf32>, vector<128x32xf32> -> vector<128x32xf32>
    %c688 = arith.constant 688 : index
    %c0_102 = arith.constant 0 : index
    %228 = vector.load %arg6[%c688, %c0_102] : memref<752x32xf32, #tpu.memory_space<vmem>>, vector<1x32xf32>
    %229 = vector.broadcast %228 : vector<1x32xf32> to vector<128x32xf32>
    %230 = arith.addf %227, %229 : vector<128x32xf32>
    %cst_103 = arith.constant 5.000000e-01 : f32
    %231 = vector.broadcast %cst_103 : f32 to vector<128x32xf32>
    %232 = arith.mulf %231, %230 : vector<128x32xf32>
    %233 = math.tanh %232 : vector<128x32xf32>
    %cst_104 = arith.constant 5.000000e-01 : f32
    %234 = vector.broadcast %cst_104 : f32 to vector<128x32xf32>
    %235 = arith.mulf %234, %233 : vector<128x32xf32>
    %cst_105 = arith.constant 5.000000e-01 : f32
    %236 = vector.broadcast %cst_105 : f32 to vector<128x32xf32>
    %237 = arith.addf %235, %236 : vector<128x32xf32>
    %238 = arith.mulf %230, %237 : vector<128x32xf32>
    %c696 = arith.constant 696 : index
    %c0_106 = arith.constant 0 : index
    %239 = vector.load %arg6[%c696, %c0_106] : memref<752x32xf32, #tpu.memory_space<vmem>>, vector<1x32xf32>
    %240 = vector.broadcast %239 : vector<1x32xf32> to vector<128x32xf32>
    %241 = arith.mulf %238, %240 : vector<128x32xf32>
    %cst_107 = arith.constant dense<0.000000e+00> : vector<128xf32>
    %242 = vector.multi_reduction <add>, %241, %cst_107 [1] : vector<128x32xf32> to vector<128xf32>
    %243 = vector.shape_cast %242 : vector<128xf32> to vector<128x1xf32>
    %c704 = arith.constant 704 : index
    %c0_108 = arith.constant 0 : index
    %244 = vector.load %arg6[%c704, %c0_108] : memref<752x32xf32, #tpu.memory_space<vmem>>, vector<1x1xf32>
    %245 = vector.broadcast %244 : vector<1x1xf32> to vector<128x1xf32>
    %246 = arith.addf %243, %245 : vector<128x1xf32>
    %cst_109 = arith.constant 5.000000e-01 : f32
    %247 = vector.broadcast %cst_109 : f32 to vector<128x1xf32>
    %248 = arith.mulf %247, %246 : vector<128x1xf32>
    %249 = math.tanh %248 : vector<128x1xf32>
    %cst_110 = arith.constant 5.000000e-01 : f32
    %250 = vector.broadcast %cst_110 : f32 to vector<128x1xf32>
    %251 = arith.mulf %250, %249 : vector<128x1xf32>
    %cst_111 = arith.constant 5.000000e-01 : f32
    %252 = vector.broadcast %cst_111 : f32 to vector<128x1xf32>
    %253 = arith.addf %251, %252 : vector<128x1xf32>
    %254 = arith.mulf %246, %253 : vector<128x1xf32>
    %255 = math.tanh %254 : vector<128x1xf32>
    %256 = vector.broadcast %255 : vector<128x1xf32> to vector<128x3xf32>
    %257 = arith.mulf %41, %256 : vector<128x3xf32>
    %cst_112 = arith.constant 1.500000e+01 : f32
    %258 = vector.broadcast %cst_112 : f32 to vector<128x3xf32>
    %259 = arith.mulf %257, %258 : vector<128x3xf32>
    %cst_113 = arith.constant dense<0.000000e+00> : vector<64x3xf32>
    %260 = tpu.matmul %27, %259, %cst_113 {dimension_numbers = #tpu.dot_dimension_numbers<[1], [0], [0], [1], [0, 0, 1, 1], [], []>} : vector<64x128xf32>, vector<128x3xf32>, vector<64x3xf32> -> vector<64x3xf32>
    %261 = arith.addf %6, %260 : vector<64x3xf32>
    %cst_114 = arith.constant dense<0.000000e+00> : vector<64x1xf32>
    %262 = tpu.matmul %27, %33, %cst_114 {dimension_numbers = #tpu.dot_dimension_numbers<[1], [0], [0], [1], [0, 0, 1, 1], [], []>} : vector<64x128xf32>, vector<128x1xf32>, vector<64x1xf32> -> vector<64x1xf32>
    %c712 = arith.constant 712 : index
    %c0_115 = arith.constant 0 : index
    %263 = vector.load %arg6[%c712, %c0_115] : memref<752x32xf32, #tpu.memory_space<vmem>>, vector<1x16xf32>
    %264 = vector.broadcast %262 : vector<64x1xf32> to vector<64x16xf32>
    %265 = vector.broadcast %263 : vector<1x16xf32> to vector<64x16xf32>
    %266 = arith.mulf %264, %265 : vector<64x16xf32>
    %c720 = arith.constant 720 : index
    %c0_116 = arith.constant 0 : index
    %267 = vector.load %arg6[%c720, %c0_116] : memref<752x32xf32, #tpu.memory_space<vmem>>, vector<1x16xf32>
    %268 = vector.broadcast %267 : vector<1x16xf32> to vector<64x16xf32>
    %269 = arith.addf %266, %268 : vector<64x16xf32>
    %cst_117 = arith.constant 5.000000e-01 : f32
    %270 = vector.broadcast %cst_117 : f32 to vector<64x16xf32>
    %271 = arith.mulf %270, %269 : vector<64x16xf32>
    %272 = math.tanh %271 : vector<64x16xf32>
    %cst_118 = arith.constant 5.000000e-01 : f32
    %273 = vector.broadcast %cst_118 : f32 to vector<64x16xf32>
    %274 = arith.mulf %273, %272 : vector<64x16xf32>
    %cst_119 = arith.constant 5.000000e-01 : f32
    %275 = vector.broadcast %cst_119 : f32 to vector<64x16xf32>
    %276 = arith.addf %274, %275 : vector<64x16xf32>
    %277 = arith.mulf %269, %276 : vector<64x16xf32>
    %c728 = arith.constant 728 : index
    %c0_120 = arith.constant 0 : index
    %278 = vector.load %arg6[%c728, %c0_120] : memref<752x32xf32, #tpu.memory_space<vmem>>, vector<16x32xf32>
    %cst_121 = arith.constant dense<0.000000e+00> : vector<64x32xf32>
    %279 = tpu.matmul %277, %278, %cst_121 {dimension_numbers = #tpu.dot_dimension_numbers<[1], [0], [0], [1], [0, 0, 1, 1], [], []>} : vector<64x16xf32>, vector<16x32xf32>, vector<64x32xf32> -> vector<64x32xf32>
    %c744 = arith.constant 744 : index
    %c0_122 = arith.constant 0 : index
    %280 = vector.load %arg6[%c744, %c0_122] : memref<752x32xf32, #tpu.memory_space<vmem>>, vector<1x32xf32>
    %281 = vector.broadcast %280 : vector<1x32xf32> to vector<64x32xf32>
    %282 = arith.addf %279, %281 : vector<64x32xf32>
    %cst_123 = arith.constant 5.000000e-01 : f32
    %283 = vector.broadcast %cst_123 : f32 to vector<64x32xf32>
    %284 = arith.mulf %283, %282 : vector<64x32xf32>
    %285 = math.tanh %284 : vector<64x32xf32>
    %cst_124 = arith.constant 5.000000e-01 : f32
    %286 = vector.broadcast %cst_124 : f32 to vector<64x32xf32>
    %287 = arith.mulf %286, %285 : vector<64x32xf32>
    %cst_125 = arith.constant 5.000000e-01 : f32
    %288 = vector.broadcast %cst_125 : f32 to vector<64x32xf32>
    %289 = arith.addf %287, %288 : vector<64x32xf32>
    %290 = arith.mulf %282, %289 : vector<64x32xf32>
    %291 = arith.addf %202, %290 : vector<64x32xf32>
    %cst_126 = arith.constant 0.000000e+00 : f32
    %292 = vector.broadcast %cst_126 : f32 to vector<64x93xf32>
    %293 = tpu.concatenate %291, %261, %292 in 1 : vector<64x32xf32>, vector<64x3xf32>, vector<64x93xf32> -> vector<64x128xf32>
    %c0_127 = arith.constant 0 : index
    %c0_128 = arith.constant 0 : index
    %294 = vector.load %arg7[%c0_127, %c0_128] : memref<64x128xf32, #tpu.memory_space<vmem>>, vector<64x128xf32>
    tpu.vector_store %arg7[%c0_127, %c0_128], %293 {strides = array<i32>} : memref<64x128xf32, #tpu.memory_space<vmem>>, vector<64x128xf32>,
    %c0_129 = arith.constant 0 : index
    %c0_130 = arith.constant 0 : index
    %295 = vector.load %arg8[%c0_129, %c0_130] : memref<128x32xf32, #tpu.memory_space<vmem>>, vector<128x32xf32>
    tpu.vector_store %arg8[%c0_129, %c0_130], %178 {strides = array<i32>} : memref<128x32xf32, #tpu.memory_space<vmem>>, vector<128x32xf32>,
    return
  }
  func.func @transform_0(%arg0: i32) -> (i32, i32) {
    %c0_i32 = arith.constant 0 : i32
    %c0_i32_0 = arith.constant 0 : i32
    return %arg0, %c0_i32 : i32, i32
  }
  func.func @transform_1(%arg0: i32) -> (i32, i32, i32) {
    %c0_i32 = arith.constant 0 : i32
    %c0_i32_0 = arith.constant 0 : i32
    %c0_i32_1 = arith.constant 0 : i32
    return %arg0, %c0_i32, %c0_i32_0 : i32, i32, i32
  }
  func.func @transform_2(%arg0: i32) -> (i32, i32) {
    %c0_i32 = arith.constant 0 : i32
    %c0_i32_0 = arith.constant 0 : i32
    return %arg0, %c0_i32 : i32, i32
  }
  func.func @transform_3(%arg0: i32) -> (i32, i32) {
    %c0_i32 = arith.constant 0 : i32
    %c0_i32_0 = arith.constant 0 : i32
    return %arg0, %c0_i32 : i32, i32
  }
  func.func @transform_4(%arg0: i32) -> (i32, i32) {
    %c0_i32 = arith.constant 0 : i32
    %c0_i32_0 = arith.constant 0 : i32
    return %arg0, %c0_i32 : i32, i32
  }
  func.func @transform_5(%arg0: i32) -> (i32, i32) {
    %c0_i32 = arith.constant 0 : i32
    %c0_i32_0 = arith.constant 0 : i32
    %c0_i32_1 = arith.constant 0 : i32
    return %c0_i32, %c0_i32_0 : i32, i32
  }
  func.func @transform_6(%arg0: i32) -> (i32, i32) {
    %c0_i32 = arith.constant 0 : i32
    %c0_i32_0 = arith.constant 0 : i32
    return %arg0, %c0_i32 : i32, i32
  }
  func.func @transform_7(%arg0: i32) -> (i32, i32) {
    %c0_i32 = arith.constant 0 : i32
    %c0_i32_0 = arith.constant 0 : i32
    return %arg0, %c0_i32 : i32, i32
  }
}

</mosaic_0001>

<llo_original>
// kernel: equivariant_block.1
$region0: #{equivariant_block.1}
  #allocation0 [shape = 'u32[]', space=smem, size = 0x4, offset = 0x4, fixed_abs, tag = 'smem constant byte address 0x4 - core index']
  #allocation1 [shape = 'u32[144,128]{1,0:T(1,128)}', space=vmem, size = 0x12000, scoped, tag = 'internal scratch']
  %s0 = inlined_call_operand.vmem [shape: s32[256,2], index: 0, kind: input, shape index: {}]
  %s1 = inlined_call_operand.vmem [shape: s32[2,1,128], index: 1, kind: input, shape index: {}]
  %s2 = inlined_call_operand.vmem [shape: f32[128,32], index: 2, kind: input, shape index: {}]
  %s3 = inlined_call_operand.vmem [shape: f32[128,3], index: 3, kind: input, shape index: {}]
  %s4 = inlined_call_operand.vmem [shape: f32[256,31], index: 4, kind: input, shape index: {}]
  %s5 = inlined_call_operand.vmem [shape: f32[752,32], index: 5, kind: input, shape index: {}]
  %s6 = inlined_call_operand.vmem [shape: f32[128,128], index: 6, kind: output, shape index: {0}]
  %s7 = inlined_call_operand.vmem [shape: f32[256,32], index: 7, kind: output, shape index: {1}]
  %8 = xla_tuple %s6, %s7
  %s9 = sld [smem:[#allocation0]]
  $region65: #{equivariant_block.1} parent=0
    _
  %s11 = ssub.s32 1, %s9
  %s12 = scalar_select 0, %s11, %s9
  loop: start=0, step=1, limit=4
  $region2: #{equivariant_block.1} parent=0 // loop_pre_header
    _
  $region3: #{equivariant_block.1} parent=0 // loop_header
    %s14 = sphi 0, %s18
    %p15 = scmp.ge.s32.totalorder %s14, 4
    %s24 = sphi 0, %s26
    %s27 = sphi 0, %s24
    %s28 = sphi 0, %s27
    %s44 = sphi 0, %s28
    %s50 = sphi 0, %s52
    %s53 = sphi 0, %s50
    %s54 = sphi 0, %s53
    %s70 = sphi 0, %s54
    %s76 = sphi 0, %s78
    %s79 = sphi 0, %s76
    %s80 = sphi 0, %s79
    %s96 = sphi 0, %s80
    %s102 = sphi 0, %s104
    %s105 = sphi 0, %s102
    %s106 = sphi 0, %s105
    %s122 = sphi 0, %s106
    %s128 = sphi 0, %s130
    %s131 = sphi 0, %s128
    %s132 = sphi 0, %s131
    %s148 = sphi 0, %s132
    %s152 = sphi 0, %s152
    %s154 = sphi 0, %s152
    %s155 = sphi 0, %s154
    %s169 = sphi 0, %s155
    %s175 = sphi 0, %s177
    %s178 = sphi 0, %s175
    %s179 = sphi 0, %s178
    %s195 = sphi 0, %s179
    %s201 = sphi 0, %s203
    %s204 = sphi 0, %s201
    %s205 = sphi 0, %s204
    %s221 = sphi 0, %s205
  $region4: #{equivariant_block.1} parent=0 // loop_header_branch
    %17 = sbr.rel (%p15) target = $region8
  $region5: #{equivariant_block.1} parent=0 // loop_body
    %s19 = ssub.s32 %s14, 1
    %s20 = ssub.s32 %s14, 2
    %s21 = sadd.s32 %s14, 1
    %s22 = ssub.s32 %s14, %s21
    %p23 = scmp.eq.s32.totalorder %s22, 0
    %s25 = sadd.s32 %s24, 1
    %s26 = scalar_select %p23, %s24, %s25
    %p29 = pneg %p23
    %p30 = scmp.eq.s32.totalorder %s14, 1
    %p31 = por %p29, %p30
    %p32 = scmp.ne.s32.totalorder %s24, %s27
    %p33 = scmp.eq.s32.totalorder %s14, 0
    %p34 = por %p32, %p33
    %p35 = scmp.ne.s32.totalorder %s24, %s27
    %p36 = scmp.eq.s32.totalorder %s19, 1
    %p37 = por %p35, %p36
    %p38 = scmp.ne.s32.totalorder %s27, %s28
    %p39 = scmp.eq.s32.totalorder %s19, 0
    %p40 = por %p38, %p39
    %p41 = scmp.ne.s32.totalorder %s27, %s28
    %p42 = scmp.eq.s32.totalorder %s20, 1
    %p43 = por %p41, %p42
    %p45 = scmp.ne.s32.totalorder %s28, %s44
    %p46 = scmp.eq.s32.totalorder %s20, 0
    %p47 = por %p45, %p46
    %s48 = ssub.s32 %s14, %s21
    %p49 = scmp.eq.s32.totalorder %s48, 0
    %s51 = sadd.s32 %s50, 1
    %s52 = scalar_select %p49, %s50, %s51
    %p55 = pneg %p49
    %p56 = scmp.eq.s32.totalorder %s14, 1
    %p57 = por %p55, %p56
    %p58 = scmp.ne.s32.totalorder %s50, %s53
    %p59 = scmp.eq.s32.totalorder %s14, 0
    %p60 = por %p58, %p59
    %p61 = scmp.ne.s32.totalorder %s50, %s53
    %p62 = scmp.eq.s32.totalorder %s19, 1
    %p63 = por %p61, %p62
    %p64 = scmp.ne.s32.totalorder %s53, %s54
    %p65 = scmp.eq.s32.totalorder %s19, 0
    %p66 = por %p64, %p65
    %p67 = scmp.ne.s32.totalorder %s53, %s54
    %p68 = scmp.eq.s32.totalorder %s20, 1
    %p69 = por %p67, %p68
    %p71 = scmp.ne.s32.totalorder %s54, %s70
    %p72 = scmp.eq.s32.totalorder %s20, 0
    %p73 = por %p71, %p72
    %s74 = ssub.s32 %s14, %s21
    %p75 = scmp.eq.s32.totalorder %s74, 0
    %s77 = sadd.s32 %s76, 1
    %s78 = scalar_select %p75, %s76, %s77
    %p81 = pneg %p75
    %p82 = scmp.eq.s32.totalorder %s14, 1
    %p83 = por %p81, %p82
    %p84 = scmp.ne.s32.totalorder %s76, %s79
    %p85 = scmp.eq.s32.totalorder %s14, 0
    %p86 = por %p84, %p85
    %p87 = scmp.ne.s32.totalorder %s76, %s79
    %p88 = scmp.eq.s32.totalorder %s19, 1
    %p89 = por %p87, %p88
    %p90 = scmp.ne.s32.totalorder %s79, %s80
    %p91 = scmp.eq.s32.totalorder %s19, 0
    %p92 = por %p90, %p91
    %p93 = scmp.ne.s32.totalorder %s79, %s80
    %p94 = scmp.eq.s32.totalorder %s20, 1
    %p95 = por %p93, %p94
    %p97 = scmp.ne.s32.totalorder %s80, %s96
    %p98 = scmp.eq.s32.totalorder %s20, 0
    %p99 = por %p97, %p98
    %s100 = ssub.s32 %s14, %s21
    %p101 = scmp.eq.s32.totalorder %s100, 0
    %s103 = sadd.s32 %s102, 1
    %s104 = scalar_select %p101, %s102, %s103
    %p107 = pneg %p101
    %p108 = scmp.eq.s32.totalorder %s14, 1
    %p109 = por %p107, %p108
    %p110 = scmp.ne.s32.totalorder %s102, %s105
    %p111 = scmp.eq.s32.totalorder %s14, 0
    %p112 = por %p110, %p111
    %p113 = scmp.ne.s32.totalorder %s102, %s105
    %p114 = scmp.eq.s32.totalorder %s19, 1
    %p115 = por %p113, %p114
    %p116 = scmp.ne.s32.totalorder %s105, %s106
    %p117 = scmp.eq.s32.totalorder %s19, 0
    %p118 = por %p116, %p117
    %p119 = scmp.ne.s32.totalorder %s105, %s106
    %p120 = scmp.eq.s32.totalorder %s20, 1
    %p121 = por %p119, %p120
    %p123 = scmp.ne.s32.totalorder %s106, %s122
    %p124 = scmp.eq.s32.totalorder %s20, 0
    %p125 = por %p123, %p124
    %s126 = ssub.s32 %s14, %s21
    %p127 = scmp.eq.s32.totalorder %s126, 0
    %s129 = sadd.s32 %s128, 1
    %s130 = scalar_select %p127, %s128, %s129
    %p133 = pneg %p127
    %p134 = scmp.eq.s32.totalorder %s14, 1
    %p135 = por %p133, %p134
    %p136 = scmp.ne.s32.totalorder %s128, %s131
    %p137 = scmp.eq.s32.totalorder %s14, 0
    %p138 = por %p136, %p137
    %p139 = scmp.ne.s32.totalorder %s128, %s131
    %p140 = scmp.eq.s32.totalorder %s19, 1
    %p141 = por %p139, %p140
    %p142 = scmp.ne.s32.totalorder %s131, %s132
    %p143 = scmp.eq.s32.totalorder %s19, 0
    %p144 = por %p142, %p143
    %p145 = scmp.ne.s32.totalorder %s131, %s132
    %p146 = scmp.eq.s32.totalorder %s20, 1
    %p147 = por %p145, %p146
    %p149 = scmp.ne.s32.totalorder %s132, %s148
    %p150 = scmp.eq.s32.totalorder %s20, 0
    %p151 = por %p149, %p150
    %s153 = sadd.s32 %s152, 1
    %p156 = scmp.eq.s32.totalorder %s14, 1
    %p157 = scmp.ne.s32.totalorder %s152, %s154
    %p158 = scmp.eq.s32.totalorder %s14, 0
    %p159 = por %p157, %p158
    %p160 = scmp.ne.s32.totalorder %s152, %s154
    %p161 = scmp.eq.s32.totalorder %s19, 1
    %p162 = por %p160, %p161
    %p163 = scmp.ne.s32.totalorder %s154, %s155
    %p164 = scmp.eq.s32.totalorder %s19, 0
    %p165 = por %p163, %p164
    %p166 = scmp.ne.s32.totalorder %s154, %s155
    %p167 = scmp.eq.s32.totalorder %s20, 1
    %p168 = por %p166, %p167
    %p170 = scmp.ne.s32.totalorder %s155, %s169
    %p171 = scmp.eq.s32.totalorder %s20, 0
    %p172 = por %p170, %p171
    %s173 = ssub.s32 %s14, %s21
    %p174 = scmp.eq.s32.totalorder %s173, 0
    %s176 = sadd.s32 %s175, 1
    %s177 = scalar_select %p174, %s175, %s176
    %p180 = pneg %p174
    %p181 = scmp.eq.s32.totalorder %s14, 1
    %p182 = por %p180, %p181
    %p183 = scmp.ne.s32.totalorder %s175, %s178
    %p184 = scmp.eq.s32.totalorder %s14, 0
    %p185 = por %p183, %p184
    %p186 = scmp.ne.s32.totalorder %s175, %s178
    %p187 = scmp.eq.s32.totalorder %s19, 1
    %p188 = por %p186, %p187
    %p189 = scmp.ne.s32.totalorder %s178, %s179
    %p190 = scmp.eq.s32.totalorder %s19, 0
    %p191 = por %p189, %p190
    %p192 = scmp.ne.s32.totalorder %s178, %s179
    %p193 = scmp.eq.s32.totalorder %s20, 1
    %p194 = por %p192, %p193
    %p196 = scmp.ne.s32.totalorder %s179, %s195
    %p197 = scmp.eq.s32.totalorder %s20, 0
    %p198 = por %p196, %p197
    %s199 = ssub.s32 %s14, %s21
    %p200 = scmp.eq.s32.totalorder %s199, 0
    %s202 = sadd.s32 %s201, 1
    %s203 = scalar_select %p200, %s201, %s202
    %p206 = pneg %p200
    %p207 = scmp.eq.s32.totalorder %s14, 1
    %p208 = por %p206, %p207
    %p209 = scmp.ne.s32.totalorder %s201, %s204
    %p210 = scmp.eq.s32.totalorder %s14, 0
    %p211 = por %p209, %p210
    %p212 = scmp.ne.s32.totalorder %s201, %s204
    %p213 = scmp.eq.s32.totalorder %s19, 1
    %p214 = por %p212, %p213
    %p215 = scmp.ne.s32.totalorder %s204, %s205
    %p216 = scmp.eq.s32.totalorder %s19, 0
    %p217 = por %p215, %p216
    %p218 = scmp.ne.s32.totalorder %s204, %s205
    %p219 = scmp.eq.s32.totalorder %s20, 1
    %p220 = por %p218, %p219
    %p222 = scmp.ne.s32.totalorder %s205, %s221
    %p223 = scmp.eq.s32.totalorder %s20, 0
    %p224 = por %p222, %p223
    %p225 = scmp.le.s32.totalorder 1, %s14
    %p226 = scmp.lt.s32.totalorder %s14, 3
    %p227 = pnand %p225, %p226
    %p228 = pneg %p227
    // Predicated region
    $region9: #{equivariant_block.1} parent=5 // pred_check
      _
    $region10: #{equivariant_block.1} parent=5 // pred_check_branch
      %230 = sbr.rel (%p227) target = $region12
    $region11: #{equivariant_block.1} parent=5 // pred_region
      %s231 = ssub.s32 %s14, 1
      // Predicated region
      $region13: #{equivariant_block.1} parent=11 // pred_check
        %p232 = pneg %p165
      $region14: #{equivariant_block.1} parent=11 // pred_check_branch
        %234 = sbr.rel (%p232) target = $region16
      $region15: #{equivariant_block.1} parent=11 // pred_region
        _
      $region16: #{equivariant_block.1} parent=11 // pred_fallthru
        _
    $region12: #{equivariant_block.1} parent=5 // pred_fallthru
      _
    %p235 = scmp.lt.s32.totalorder %s14, 2
    // Predicated region
    $region17: #{equivariant_block.1} parent=5 // pred_check
      %p236 = pneg %p235
    $region18: #{equivariant_block.1} parent=5 // pred_check_branch
      %238 = sbr.rel (%p236) target = $region20
    $region19: #{equivariant_block.1} parent=5 // pred_region
      // Predicated region
      $region21: #{equivariant_block.1} parent=19 // pred_check
        %p239 = pneg %p34
      $region22: #{equivariant_block.1} parent=19 // pred_check_branch
        %241 = sbr.rel (%p239) target = $region24
      $region23: #{equivariant_block.1} parent=19 // pred_region
        %s242 = smul.u32 16, %s14
        %p243 = scmp.lt.s32.totalorder %s242, 31
        %s244 = scalar_select %p243, %s242, 31
        %s245 = smul.addr %s244, 8
        %s246 = scalar_lea.vmem %s0, %s245
        %s247 = smul.u32 16, %s14
      $region24: #{equivariant_block.1} parent=19 // pred_fallthru
        _
      // Predicated region
      $region25: #{equivariant_block.1} parent=19 // pred_check
        %p248 = pneg %p60
      $region26: #{equivariant_block.1} parent=19 // pred_check_branch
        %250 = sbr.rel (%p248) target = $region28
      $region27: #{equivariant_block.1} parent=19 // pred_region
        %p251 = scmp.lt.s32.totalorder %s14, 1
        %s252 = scalar_select %p251, %s14, 1
        %s253 = scalar_lea.vmem %s1, %s252
      $region28: #{equivariant_block.1} parent=19 // pred_fallthru
        _
      // Predicated region
      $region29: #{equivariant_block.1} parent=19 // pred_check
        %p254 = pneg %p86
      $region30: #{equivariant_block.1} parent=19 // pred_check_branch
        %256 = sbr.rel (%p254) target = $region32
      $region31: #{equivariant_block.1} parent=19 // pred_region
        %s257 = smul.u32 8, %s14
        %p258 = scmp.lt.s32.totalorder %s257, 15
        %s259 = scalar_select %p258, %s257, 15
        %s260 = smul.addr %s259, 8
        %s261 = scalar_lea.vmem %s2, %s260
        %s262 = smul.u32 8, %s14
      $region32: #{equivariant_block.1} parent=19 // pred_fallthru
        _
      // Predicated region
      $region33: #{equivariant_block.1} parent=19 // pred_check
        %p263 = pneg %p112
      $region34: #{equivariant_block.1} parent=19 // pred_check_branch
        %265 = sbr.rel (%p263) target = $region36
      $region35: #{equivariant_block.1} parent=19 // pred_region
        %s266 = smul.u32 8, %s14
        %p267 = scmp.lt.s32.totalorder %s266, 15
        %s268 = scalar_select %p267, %s266, 15
        %s269 = smul.addr %s268, 8
        %s270 = scalar_lea.vmem %s3, %s269
        %s271 = smul.u32 8, %s14
      $region36: #{equivariant_block.1} parent=19 // pred_fallthru
        _
      // Predicated region
      $region37: #{equivariant_block.1} parent=19 // pred_check
        %p272 = pneg %p138
      $region38: #{equivariant_block.1} parent=19 // pred_check_branch
        %274 = sbr.rel (%p272) target = $region40
      $region39: #{equivariant_block.1} parent=19 // pred_region
        %s275 = smul.u32 16, %s14
        %p276 = scmp.lt.s32.totalorder %s275, 31
        %s277 = scalar_select %p276, %s275, 31
        %s278 = smul.addr %s277, 8
        %s279 = scalar_lea.vmem %s4, %s278
        %s280 = smul.u32 16, %s14
      $region40: #{equivariant_block.1} parent=19 // pred_fallthru
        _
    $region20: #{equivariant_block.1} parent=5 // pred_fallthru
      _
    %p281 = scmp.le.s32.totalorder 1, %s14
    %p282 = scmp.lt.s32.totalorder %s14, 3
    %p283 = pnand %p281, %p282
    %p284 = pneg %p283
    // Predicated region
    $region41: #{equivariant_block.1} parent=5 // pred_check
      _
    $region42: #{equivariant_block.1} parent=5 // pred_check_branch
      %286 = sbr.rel (%p283) target = $region44
    $region43: #{equivariant_block.1} parent=5 // pred_region
      %s287 = ssub.s32 %s14, 1
      %s288 = smul.u32 16, %s19
      %p289 = scmp.lt.s32.totalorder %s288, 31
      %s290 = scalar_select %p289, %s288, 31
      %s291 = smul.addr %s290, 8
      %s292 = scalar_lea.vmem %s0, %s291
      %p293 = pneg %p40
      %p294 = pneg %p37
      %p295 = scmp.lt.s32.totalorder %s19, 1
      %s296 = scalar_select %p295, %s19, 1
      %s297 = scalar_lea.vmem %s1, %s296
      %p298 = pneg %p66
      %p299 = pneg %p63
      %s300 = smul.u32 8, %s19
      %p301 = scmp.lt.s32.totalorder %s300, 15
      %s302 = scalar_select %p301, %s300, 15
      %s303 = smul.addr %s302, 8
      %s304 = scalar_lea.vmem %s2, %s303
      %p305 = pneg %p92
      %p306 = pneg %p89
      %s307 = smul.u32 8, %s19
      %p308 = scmp.lt.s32.totalorder %s307, 15
      %s309 = scalar_select %p308, %s307, 15
      %s310 = smul.addr %s309, 8
      %s311 = scalar_lea.vmem %s3, %s310
      %p312 = pneg %p118
      %p313 = pneg %p115
      %s314 = smul.u32 16, %s19
      %p315 = scmp.lt.s32.totalorder %s314, 31
      %s316 = scalar_select %p315, %s314, 31
      %s317 = smul.addr %s316, 8
      %s318 = scalar_lea.vmem %s4, %s317
      %p319 = pneg %p144
      %p320 = pneg %p141
      %p321 = pneg %p165
      %p322 = pneg %p162
      %p323 = pneg %p191
      %p324 = pneg %p188
      %s325 = smul.u32 8, %s19
      %p326 = scmp.lt.s32.totalorder %s325, 15
      %s327 = scalar_select %p326, %s325, 15
      %s328 = smul.addr %s327, 8
      %s329 = scalar_lea.vmem %s6, %s328
      %p330 = pneg %p217
      %p331 = pneg %p214
      %s332 = smul.u32 16, %s19
      %p333 = scmp.lt.s32.totalorder %s332, 31
      %s334 = scalar_select %p333, %s332, 31
      %s335 = smul.addr %s334, 8
      %s336 = scalar_lea.vmem %s7, %s335
      %s337 = smul.u32 16, %s19
      %p338 = scmp.lt.s32.totalorder %s337, 31
      %s339 = scalar_select %p338, %s337, 31
      %s340 = smul.addr %s339, 8
      %s341 = scalar_lea.vmem %s0, %s340
      %s342 = smul.u32 16, %s19
      %p343 = scmp.lt.s32.totalorder %s19, 1
      %s344 = scalar_select %p343, %s19, 1
      %s345 = scalar_lea.vmem %s1, %s344
      %s346 = smul.u32 8, %s19
      %p347 = scmp.lt.s32.totalorder %s346, 15
      %s348 = scalar_select %p347, %s346, 15
      %s349 = smul.addr %s348, 8
      %s350 = scalar_lea.vmem %s2, %s349
      %s351 = smul.u32 8, %s19
      %s352 = smul.u32 8, %s19
      %p353 = scmp.lt.s32.totalorder %s352, 15
      %s354 = scalar_select %p353, %s352, 15
      %s355 = smul.addr %s354, 8
      %s356 = scalar_lea.vmem %s3, %s355
      %s357 = smul.u32 8, %s19
      %s358 = smul.u32 16, %s19
      %p359 = scmp.lt.s32.totalorder %s358, 31
      %s360 = scalar_select %p359, %s358, 31
      %s361 = smul.addr %s360, 8
      %s362 = scalar_lea.vmem %s4, %s361
      %s363 = smul.u32 16, %s19
      %s364 = smul.u32 8, %s19
      %p365 = scmp.lt.s32.totalorder %s364, 15
      %s366 = scalar_select %p365, %s364, 15
      %s367 = smul.addr %s366, 8
      %s368 = scalar_lea.vmem %s6, %s367
      %s369 = smul.u32 8, %s19
      %s370 = smul.u32 16, %s19
      %p371 = scmp.lt.s32.totalorder %s370, 31
      %s372 = scalar_select %p371, %s370, 31
      %s373 = smul.addr %s372, 8
      %s374 = scalar_lea.vmem %s7, %s373
      %s375 = smul.u32 16, %s19
      %v377 = vld [vmem:[%s341] sm:$0xff]
      %v378 = vld [vmem:[%s341 + $0x8] sm:$0xff]
      %v379 = vld [vmem:[%s341 + $0x10] sm:$0xff]
      %v380 = vld [vmem:[%s341 + $0x18] sm:$0xff]
      %v381 = vld [vmem:[%s341 + $0x20] sm:$0xff]
      %v382 = vld [vmem:[%s341 + $0x28] sm:$0xff]
      %v383 = vld [vmem:[%s341 + $0x30] sm:$0xff]
      %v384 = vld [vmem:[%s341 + $0x38] sm:$0xff]
      %v385 = vld [vmem:[%s341 + $0x40] sm:$0xff]
      %v386 = vld [vmem:[%s341 + $0x48] sm:$0xff]
      %v387 = vld [vmem:[%s341 + $0x50] sm:$0xff]
      %v388 = vld [vmem:[%s341 + $0x58] sm:$0xff]
      %v389 = vld [vmem:[%s341 + $0x60] sm:$0xff]
      %v390 = vld [vmem:[%s341 + $0x68] sm:$0xff]
      %v391 = vld [vmem:[%s341 + $0x70] sm:$0xff]
      %v392 = vld [vmem:[%s341 + $0x78] sm:$0xff]
      %v393 = vld [vmem:[%s345] sm:$0x1]
      %v394 = vld [vmem:[%s350] sm:$0xff]
      %v395 = vld [vmem:[%s350 + $0x8] sm:$0xff]
      %v396 = vld [vmem:[%s350 + $0x10] sm:$0xff]
      %v397 = vld [vmem:[%s350 + $0x18] sm:$0xff]
      %v398 = vld [vmem:[%s350 + $0x20] sm:$0xff]
      %v399 = vld [vmem:[%s350 + $0x28] sm:$0xff]
      %v400 = vld [vmem:[%s350 + $0x30] sm:$0xff]
      %v401 = vld [vmem:[%s350 + $0x38] sm:$0xff]
      %v402 = vld [vmem:[%s356] sm:$0xff]
      %v403 = vld [vmem:[%s356 + $0x8] sm:$0xff]
      %v404 = vld [vmem:[%s356 + $0x10] sm:$0xff]
      %v405 = vld [vmem:[%s356 + $0x18] sm:$0xff]
      %v406 = vld [vmem:[%s356 + $0x20] sm:$0xff]
      %v407 = vld [vmem:[%s356 + $0x28] sm:$0xff]
      %v408 = vld [vmem:[%s356 + $0x30] sm:$0xff]
      %v409 = vld [vmem:[%s356 + $0x38] sm:$0xff]
      %v410 = vld [vmem:[%s362] sm:$0xff]
      %v411 = vld [vmem:[%s362 + $0x8] sm:$0xff]
      %v412 = vld [vmem:[%s362 + $0x10] sm:$0xff]
      %v413 = vld [vmem:[%s362 + $0x18] sm:$0xff]
      %v414 = vld [vmem:[%s362 + $0x20] sm:$0xff]
      %v415 = vld [vmem:[%s362 + $0x28] sm:$0xff]
      %v416 = vld [vmem:[%s362 + $0x30] sm:$0xff]
      %v417 = vld [vmem:[%s362 + $0x38] sm:$0xff]
      %v418 = vld [vmem:[%s362 + $0x40] sm:$0xff]
      %v419 = vld [vmem:[%s362 + $0x48] sm:$0xff]
      %v420 = vld [vmem:[%s362 + $0x50] sm:$0xff]
      %v421 = vld [vmem:[%s362 + $0x58] sm:$0xff]
      %v422 = vld [vmem:[%s362 + $0x60] sm:$0xff]
      %v423 = vld [vmem:[%s362 + $0x68] sm:$0xff]
      %v424 = vld [vmem:[%s362 + $0x70] sm:$0xff]
      %v425 = vld [vmem:[%s362 + $0x78] sm:$0xff]
      %v426 = vlaneseq
      %v427 = vand.u32 %v426, 127
      %v428 = vlaneseq
      %v429 = vshrl.u32 %v428, 7
      %v430 = vadd.s32 %v429, 8
      %v431 = vadd.s32 %v429, 16
      %v432 = vadd.s32 %v429, 24
      %v433 = vadd.s32 %v429, 32
      %v434 = vadd.s32 %v429, 40
      %v435 = vadd.s32 %v429, 48
      %v436 = vadd.s32 %v429, 56
      %437 = vset.pattern.permute.xlu0 0
      %438 = vperm.xlu0 %437, %v377
      %v439 = vpop.permute.xlu0 %438
      %440 = vset.pattern.permute.xlu0 0
      %441 = vperm.xlu0 %440, %v378
      %v442 = vpop.permute.xlu0 %441
      %443 = vset.pattern.permute.xlu0 0
      %444 = vperm.xlu0 %443, %v379
      %v445 = vpop.permute.xlu0 %444
      %446 = vset.pattern.permute.xlu0 0
      %447 = vperm.xlu0 %446, %v380
      %v448 = vpop.permute.xlu0 %447
      %449 = vset.pattern.permute.xlu0 0
      %450 = vperm.xlu0 %449, %v381
      %v451 = vpop.permute.xlu0 %450
      %452 = vset.pattern.permute.xlu0 0
      %453 = vperm.xlu0 %452, %v382
      %v454 = vpop.permute.xlu0 %453
      %455 = vset.pattern.permute.xlu0 0
      %456 = vperm.xlu0 %455, %v383
      %v457 = vpop.permute.xlu0 %456
      %458 = vset.pattern.permute.xlu0 0
      %459 = vperm.xlu0 %458, %v384
      %v460 = vpop.permute.xlu0 %459
      %461 = vset.pattern.permute.xlu0 0
      %462 = vperm.xlu0 %461, %v385
      %v463 = vpop.permute.xlu0 %462
      %464 = vset.pattern.permute.xlu0 0
      %465 = vperm.xlu0 %464, %v386
      %v466 = vpop.permute.xlu0 %465
      %467 = vset.pattern.permute.xlu0 0
      %468 = vperm.xlu0 %467, %v387
      %v469 = vpop.permute.xlu0 %468
      %470 = vset.pattern.permute.xlu0 0
      %471 = vperm.xlu0 %470, %v388
      %v472 = vpop.permute.xlu0 %471
      %473 = vset.pattern.permute.xlu0 0
      %474 = vperm.xlu0 %473, %v389
      %v475 = vpop.permute.xlu0 %474
      %476 = vset.pattern.permute.xlu0 0
      %477 = vperm.xlu0 %476, %v390
      %v478 = vpop.permute.xlu0 %477
      %479 = vset.pattern.permute.xlu0 0
      %480 = vperm.xlu0 %479, %v391
      %v481 = vpop.permute.xlu0 %480
      %482 = vset.pattern.permute.xlu0 0
      %483 = vperm.xlu0 %482, %v392
      %v484 = vpop.permute.xlu0 %483
      %vm485 = vcmp.eq.s32.totalorder %v439, %v427
      %vm486 = vcmp.eq.s32.totalorder %v442, %v427
      %vm487 = vcmp.eq.s32.totalorder %v445, %v427
      %vm488 = vcmp.eq.s32.totalorder %v448, %v427
      %vm489 = vcmp.eq.s32.totalorder %v451, %v427
      %vm490 = vcmp.eq.s32.totalorder %v454, %v427
      %vm491 = vcmp.eq.s32.totalorder %v457, %v427
      %vm492 = vcmp.eq.s32.totalorder %v460, %v427
      %vm493 = vcmp.eq.s32.totalorder %v463, %v427
      %vm494 = vcmp.eq.s32.totalorder %v466, %v427
      %vm495 = vcmp.eq.s32.totalorder %v469, %v427
      %vm496 = vcmp.eq.s32.totalorder %v472, %v427
      %vm497 = vcmp.eq.s32.totalorder %v475, %v427
      %vm498 = vcmp.eq.s32.totalorder %v478, %v427
      %vm499 = vcmp.eq.s32.totalorder %v481, %v427
      %vm500 = vcmp.eq.s32.totalorder %v484, %v427
      %v501 = vsel %vm485, 1, 0
      %v502 = vsel %vm486, 1, 0
      %v503 = vsel %vm487, 1, 0
      %v504 = vsel %vm488, 1, 0
      %v505 = vsel %vm489, 1, 0
      %v506 = vsel %vm490, 1, 0
      %v507 = vsel %vm491, 1, 0
      %v508 = vsel %vm492, 1, 0
      %v509 = vsel %vm493, 1, 0
      %v510 = vsel %vm494, 1, 0
      %v511 = vsel %vm495, 1, 0
      %v512 = vsel %vm496, 1, 0
      %v513 = vsel %vm497, 1, 0
      %v514 = vsel %vm498, 1, 0
      %v515 = vsel %vm499, 1, 0
      %v516 = vsel %vm500, 1, 0
      %v517 = vcvt.s32.f32 %v501
      %v518 = vcvt.s32.f32 %v502
      %v519 = vcvt.s32.f32 %v503
      %v520 = vcvt.s32.f32 %v504
      %v521 = vcvt.s32.f32 %v505
      %v522 = vcvt.s32.f32 %v506
      %v523 = vcvt.s32.f32 %v507
      %v524 = vcvt.s32.f32 %v508
      %v525 = vcvt.s32.f32 %v509
      %v526 = vcvt.s32.f32 %v510
      %v527 = vcvt.s32.f32 %v511
      %v528 = vcvt.s32.f32 %v512
      %v529 = vcvt.s32.f32 %v513
      %v530 = vcvt.s32.f32 %v514
      %v531 = vcvt.s32.f32 %v515
      %v532 = vcvt.s32.f32 %v516
      %v533 = vpack.c.bf16 %v518, %v517
      %v534 = vpack.c.bf16 %v520, %v519
      %v535 = vpack.c.bf16 %v522, %v521
      %v536 = vpack.c.bf16 %v524, %v523
      %v537 = vpack.c.bf16 %v526, %v525
      %v538 = vpack.c.bf16 %v528, %v527
      %v539 = vpack.c.bf16 %v530, %v529
      %v540 = vpack.c.bf16 %v532, %v531
      %541 = vset.pattern.permute.xlu0 1
      %542 = vperm.xlu0 %541, %v377
      %v543 = vpop.permute.xlu0 %542
      %544 = vset.pattern.permute.xlu0 1
      %545 = vperm.xlu0 %544, %v378
      %v546 = vpop.permute.xlu0 %545
      %547 = vset.pattern.permute.xlu0 1
      %548 = vperm.xlu0 %547, %v379
      %v549 = vpop.permute.xlu0 %548
      %550 = vset.pattern.permute.xlu0 1
      %551 = vperm.xlu0 %550, %v380
      %v552 = vpop.permute.xlu0 %551
      %553 = vset.pattern.permute.xlu0 1
      %554 = vperm.xlu0 %553, %v381
      %v555 = vpop.permute.xlu0 %554
      %556 = vset.pattern.permute.xlu0 1
      %557 = vperm.xlu0 %556, %v382
      %v558 = vpop.permute.xlu0 %557
      %559 = vset.pattern.permute.xlu0 1
      %560 = vperm.xlu0 %559, %v383
      %v561 = vpop.permute.xlu0 %560
      %562 = vset.pattern.permute.xlu0 1
      %563 = vperm.xlu0 %562, %v384
      %v564 = vpop.permute.xlu0 %563
      %565 = vset.pattern.permute.xlu0 1
      %566 = vperm.xlu0 %565, %v385
      %v567 = vpop.permute.xlu0 %566
      %568 = vset.pattern.permute.xlu0 1
      %569 = vperm.xlu0 %568, %v386
      %v570 = vpop.permute.xlu0 %569
      %571 = vset.pattern.permute.xlu0 1
      %572 = vperm.xlu0 %571, %v387
      %v573 = vpop.permute.xlu0 %572
      %574 = vset.pattern.permute.xlu0 1
      %575 = vperm.xlu0 %574, %v388
      %v576 = vpop.permute.xlu0 %575
      %577 = vset.pattern.permute.xlu0 1
      %578 = vperm.xlu0 %577, %v389
      %v579 = vpop.permute.xlu0 %578
      %580 = vset.pattern.permute.xlu0 1
      %581 = vperm.xlu0 %580, %v390
      %v582 = vpop.permute.xlu0 %581
      %583 = vset.pattern.permute.xlu0 1
      %584 = vperm.xlu0 %583, %v391
      %v585 = vpop.permute.xlu0 %584
      %586 = vset.pattern.permute.xlu0 1
      %587 = vperm.xlu0 %586, %v392
      %v588 = vpop.permute.xlu0 %587
      %vm589 = vcmp.eq.s32.totalorder %v543, %v427
      %vm590 = vcmp.eq.s32.totalorder %v546, %v427
      %vm591 = vcmp.eq.s32.totalorder %v549, %v427
      %vm592 = vcmp.eq.s32.totalorder %v552, %v427
      %vm593 = vcmp.eq.s32.totalorder %v555, %v427
      %vm594 = vcmp.eq.s32.totalorder %v558, %v427
      %vm595 = vcmp.eq.s32.totalorder %v561, %v427
      %vm596 = vcmp.eq.s32.totalorder %v564, %v427
      %vm597 = vcmp.eq.s32.totalorder %v567, %v427
      %vm598 = vcmp.eq.s32.totalorder %v570, %v427
      %vm599 = vcmp.eq.s32.totalorder %v573, %v427
      %vm600 = vcmp.eq.s32.totalorder %v576, %v427
      %vm601 = vcmp.eq.s32.totalorder %v579, %v427
      %vm602 = vcmp.eq.s32.totalorder %v582, %v427
      %vm603 = vcmp.eq.s32.totalorder %v585, %v427
      %vm604 = vcmp.eq.s32.totalorder %v588, %v427
      %v605 = vsel %vm589, 1, 0
      %v606 = vsel %vm590, 1, 0
      %v607 = vsel %vm591, 1, 0
      %v608 = vsel %vm592, 1, 0
      %v609 = vsel %vm593, 1, 0
      %v610 = vsel %vm594, 1, 0
      %v611 = vsel %vm595, 1, 0
      %v612 = vsel %vm596, 1, 0
      %v613 = vsel %vm597, 1, 0
      %v614 = vsel %vm598, 1, 0
      %v615 = vsel %vm599, 1, 0
      %v616 = vsel %vm600, 1, 0
      %v617 = vsel %vm601, 1, 0
      %v618 = vsel %vm602, 1, 0
      %v619 = vsel %vm603, 1, 0
      %v620 = vsel %vm604, 1, 0
      %v621 = vcvt.s32.f32 %v605
      %v622 = vcvt.s32.f32 %v606
      %v623 = vcvt.s32.f32 %v607
      %v624 = vcvt.s32.f32 %v608
      %v625 = vcvt.s32.f32 %v609
      %v626 = vcvt.s32.f32 %v610
      %v627 = vcvt.s32.f32 %v611
      %v628 = vcvt.s32.f32 %v612
      %v629 = vcvt.s32.f32 %v613
      %v630 = vcvt.s32.f32 %v614
      %v631 = vcvt.s32.f32 %v615
      %v632 = vcvt.s32.f32 %v616
      %v633 = vcvt.s32.f32 %v617
      %v634 = vcvt.s32.f32 %v618
      %v635 = vcvt.s32.f32 %v619
      %v636 = vcvt.s32.f32 %v620
      %v637 = vpack.c.bf16 %v622, %v621
      %v638 = vpack.c.bf16 %v624, %v623
      %v639 = vpack.c.bf16 %v626, %v625
      %v640 = vpack.c.bf16 %v628, %v627
      %v641 = vpack.c.bf16 %v630, %v629
      %v642 = vpack.c.bf16 %v632, %v631
      %v643 = vpack.c.bf16 %v634, %v633
      %v644 = vpack.c.bf16 %v636, %v635
      %v645 = vlaneseq
      %v646 = vshrl.u32 %v645, 7
      %v647 = vsub.s32 0, %v646
      %v648 = vrot.slane %v393, %v647
      %vm649 = vcmp.eq.s32.totalorder %v648, %v429
      %vm650 = vcmp.eq.s32.totalorder %v648, %v430
      %vm651 = vcmp.eq.s32.totalorder %v648, %v431
      %vm652 = vcmp.eq.s32.totalorder %v648, %v432
      %vm653 = vcmp.eq.s32.totalorder %v648, %v433
      %vm654 = vcmp.eq.s32.totalorder %v648, %v434
      %vm655 = vcmp.eq.s32.totalorder %v648, %v435
      %vm656 = vcmp.eq.s32.totalorder %v648, %v436
      %v657 = vsel %vm649, 1, 0
      %v658 = vsel %vm650, 1, 0
      %v659 = vsel %vm651, 1, 0
      %v660 = vsel %vm652, 1, 0
      %v661 = vsel %vm653, 1, 0
      %v662 = vsel %vm654, 1, 0
      %v663 = vsel %vm655, 1, 0
      %v664 = vsel %vm656, 1, 0
      %v665 = vcvt.s32.f32 %v657
      %v666 = vcvt.s32.f32 %v658
      %v667 = vcvt.s32.f32 %v659
      %v668 = vcvt.s32.f32 %v660
      %v669 = vcvt.s32.f32 %v661
      %v670 = vcvt.s32.f32 %v662
      %v671 = vcvt.s32.f32 %v663
      %v672 = vcvt.s32.f32 %v664
      %v673 = vpack.c.bf16 %v666, %v665
      %v674 = vpack.c.bf16 %v668, %v667
      %v675 = vpack.c.bf16 %v670, %v669
      %v676 = vpack.c.bf16 %v672, %v671
      %v677 = vunpack.c.l.bf16 %v533
      %v678 = vunpack.c.h.bf16 %v533
      %v679 = vunpack.c.l.bf16 %v534
      %v680 = vunpack.c.h.bf16 %v534
      %v681 = vunpack.c.l.bf16 %v535
      %v682 = vunpack.c.h.bf16 %v535
      %v683 = vunpack.c.l.bf16 %v536
      %v684 = vunpack.c.h.bf16 %v536
      %v685 = vunpack.c.l.bf16 %v537
      %v686 = vunpack.c.h.bf16 %v537
      %v687 = vunpack.c.l.bf16 %v538
      %v688 = vunpack.c.h.bf16 %v538
      %v689 = vunpack.c.l.bf16 %v539
      %v690 = vunpack.c.h.bf16 %v539
      %v691 = vunpack.c.l.bf16 %v540
      %v692 = vunpack.c.h.bf16 %v540
      %v693 = vunpack.c.l.bf16 %v637
      %v694 = vunpack.c.h.bf16 %v637
      %v695 = vunpack.c.l.bf16 %v638
      %v696 = vunpack.c.h.bf16 %v638
      %v697 = vunpack.c.l.bf16 %v639
      %v698 = vunpack.c.h.bf16 %v639
      %v699 = vunpack.c.l.bf16 %v640
      %v700 = vunpack.c.h.bf16 %v640
      %v701 = vunpack.c.l.bf16 %v641
      %v702 = vunpack.c.h.bf16 %v641
      %v703 = vunpack.c.l.bf16 %v642
      %v704 = vunpack.c.h.bf16 %v642
      %v705 = vunpack.c.l.bf16 %v643
      %v706 = vunpack.c.h.bf16 %v643
      %v707 = vunpack.c.l.bf16 %v644
      %v708 = vunpack.c.h.bf16 %v644
      %v709 = vunpack.c.l.bf16 %v673
      %v710 = vunpack.c.h.bf16 %v673
      %v711 = vunpack.c.l.bf16 %v674
      %v712 = vunpack.c.h.bf16 %v674
      %v713 = vunpack.c.l.bf16 %v675
      %v714 = vunpack.c.h.bf16 %v675
      %v715 = vunpack.c.l.bf16 %v676
      %v716 = vunpack.c.h.bf16 %v676
      %vm717 = vcmask 523264
      %v719 = vsel %vm717, %v677, 0
      %v722 = vsel %vm717, %v678, 0
      %v725 = vsel %vm717, %v679, 0
      %v728 = vsel %vm717, %v680, 0
      %v731 = vsel %vm717, %v681, 0
      %v734 = vsel %vm717, %v682, 0
      %v737 = vsel %vm717, %v683, 0
      %v740 = vsel %vm717, %v684, 0
      %v743 = vsel %vm717, %v685, 0
      %v746 = vsel %vm717, %v686, 0
      %v749 = vsel %vm717, %v687, 0
      %v752 = vsel %vm717, %v688, 0
      %v755 = vsel %vm717, %v689, 0
      %v758 = vsel %vm717, %v690, 0
      %v761 = vsel %vm717, %v691, 0
      %v764 = vsel %vm717, %v692, 0
      %766 = vmatprep.subr.mxu0 0.0
      %767 = vmatpush1.msra.mxu0 %v402
      %768 = vmatprep.subr.mxu0 0.0
      %769 = vmatpush1.msra.mxu0 %v403
      %770 = vmatprep.subr.mxu0 0.0
      %771 = vmatpush1.msra.mxu0 %v404
      %772 = vmatprep.subr.mxu0 0.0
      %773 = vmatpush1.msra.mxu0 %v405
      %774 = vmatprep.subr.mxu0 0.0
      %775 = vmatpush1.msra.mxu0 %v406
      %776 = vmatprep.subr.mxu0 0.0
      %777 = vmatpush1.msra.mxu0 %v407
      %778 = vmatprep.subr.mxu0 0.0
      %779 = vmatpush1.msra.mxu0 %v408
      %780 = vmatprep.subr.mxu0 0.0
      %781 = vmatpush1.msra.mxu0 %v409
      %782 = vmatprep.subr.mxu0 0.0
      %783 = vmatpush1.msra.mxu0 0.0
      %784 = vmatprep.subr.mxu0 0.0
      %785 = vmatpush1.msra.mxu0 0.0
      %786 = vmatprep.subr.mxu0 0.0
      %787 = vmatpush1.msra.mxu0 0.0
      %788 = vmatprep.subr.mxu0 0.0
      %789 = vmatpush1.msra.mxu0 0.0
      %790 = vmatprep.subr.mxu0 0.0
      %791 = vmatpush1.msra.mxu0 0.0
      %792 = vmatprep.subr.mxu0 0.0
      %793 = vmatpush1.msra.mxu0 0.0
      %794 = vmatprep.subr.mxu0 0.0
      %795 = vmatpush1.msra.mxu0 0.0
      %796 = vmatprep.subr.mxu0 0.0
      %797 = vmatpush1.msra.mxu0 0.0
      %798 = vmatprep.subr.mxu0 0.0
      %799 = vmatpush1.msra.mxu0 0.0
      %800 = vmatprep.subr.mxu0 0.0
      %801 = vmatpush1.msra.mxu0 0.0
      %802 = vmatprep.subr.mxu0 0.0
      %803 = vmatpush1.msra.mxu0 0.0
      %804 = vmatprep.subr.mxu0 0.0
      %805 = vmatpush1.msra.mxu0 0.0
      %806 = vmatprep.subr.mxu0 0.0
      %807 = vmatpush1.msra.mxu0 0.0
      %808 = vmatprep.subr.mxu0 0.0
      %809 = vmatpush1.msra.mxu0 0.0
      %810 = vmatprep.subr.mxu0 0.0
      %811 = vmatpush1.msra.mxu0 0.0
      %812 = vmatprep.subr.mxu0 0.0
      %813 = vmatpush1.msra.mxu0 0.0
      %814 = vmatprep.subr.mxu0 0.0
      %815 = vmatpush1.msra.mxu0 0.0
      %816 = vmatprep.subr.mxu0 0.0
      %817 = vmatpush1.msra.mxu0 0.0
      %818 = vmatprep.subr.mxu0 0.0
      %819 = vmatpush1.msra.mxu0 0.0
      %820 = vmatprep.subr.mxu0 0.0
      %821 = vmatpush1.msra.mxu0 0.0
      %822 = vmatprep.subr.mxu0 0.0
      %823 = vmatpush1.msra.mxu0 0.0
      %824 = vmatprep.subr.mxu0 0.0
      %825 = vmatpush1.msra.mxu0 0.0
      %826 = vmatprep.subr.mxu0 0.0
      %827 = vmatpush1.msra.mxu0 0.0
      %828 = vmatprep.subr.mxu0 0.0
      %829 = vmatpush1.msra.mxu0 0.0
      %830 = vmatprep.mubr.f32.mxu0 0.0
      %831 = vmatmul.mubr.f32.gmra.mrb[0].mxu0 %v719
      %v832 = vpop.f32.mrb[0].mxu0
      %v833 = vadd.f32 0.0, %v832
      %v834 = vpop.f32.mrb[0].mxu0
      %835 = vmatprep.mubr.f32.mxu0 0.0
      %836 = vmatmul.mubr.f32.gmra.mrb[0].mxu0 %v722
      %v837 = vpop.f32.mrb[0].mxu0
      %v838 = vadd.f32 0.0, %v837
      %v839 = vpop.f32.mrb[0].mxu0
      %840 = vmatprep.mubr.f32.mxu0 0.0
      %841 = vmatmul.mubr.f32.gmra.mrb[0].mxu0 %v725
      %v842 = vpop.f32.mrb[0].mxu0
      %v843 = vadd.f32 0.0, %v842
      %v844 = vpop.f32.mrb[0].mxu0
      %845 = vmatprep.mubr.f32.mxu0 0.0
      %846 = vmatmul.mubr.f32.gmra.mrb[0].mxu0 %v728
      %v847 = vpop.f32.mrb[0].mxu0
      %v848 = vadd.f32 0.0, %v847
      %v849 = vpop.f32.mrb[0].mxu0
      %850 = vmatprep.mubr.f32.mxu0 0.0
      %851 = vmatmul.mubr.f32.gmra.mrb[0].mxu0 %v731
      %v852 = vpop.f32.mrb[0].mxu0
      %v853 = vadd.f32 0.0, %v852
      %v854 = vpop.f32.mrb[0].mxu0
      %855 = vmatprep.mubr.f32.mxu0 0.0
      %856 = vmatmul.mubr.f32.gmra.mrb[0].mxu0 %v734
      %v857 = vpop.f32.mrb[0].mxu0
      %v858 = vadd.f32 0.0, %v857
      %v859 = vpop.f32.mrb[0].mxu0
      %860 = vmatprep.mubr.f32.mxu0 0.0
      %861 = vmatmul.mubr.f32.gmra.mrb[0].mxu0 %v737
      %v862 = vpop.f32.mrb[0].mxu0
      %v863 = vadd.f32 0.0, %v862
      %v864 = vpop.f32.mrb[0].mxu0
      %865 = vmatprep.mubr.f32.mxu0 0.0
      %866 = vmatmul.mubr.f32.gmra.mrb[0].mxu0 %v740
      %v867 = vpop.f32.mrb[0].mxu0
      %v868 = vadd.f32 0.0, %v867
      %v869 = vpop.f32.mrb[0].mxu0
      %870 = vmatprep.mubr.f32.mxu0 0.0
      %871 = vmatmul.mubr.f32.gmra.mrb[0].mxu0 %v743
      %v872 = vpop.f32.mrb[0].mxu0
      %v873 = vadd.f32 0.0, %v872
      %v874 = vpop.f32.mrb[0].mxu0
      %875 = vmatprep.mubr.f32.mxu0 0.0
      %876 = vmatmul.mubr.f32.gmra.mrb[0].mxu0 %v746
      %v877 = vpop.f32.mrb[0].mxu0
      %v878 = vadd.f32 0.0, %v877
      %v879 = vpop.f32.mrb[0].mxu0
      %880 = vmatprep.mubr.f32.mxu0 0.0
      %881 = vmatmul.mubr.f32.gmra.mrb[0].mxu0 %v749
      %v882 = vpop.f32.mrb[0].mxu0
      %v883 = vadd.f32 0.0, %v882
      %v884 = vpop.f32.mrb[0].mxu0
      %885 = vmatprep.mubr.f32.mxu0 0.0
      %886 = vmatmul.mubr.f32.gmra.mrb[0].mxu0 %v752
      %v887 = vpop.f32.mrb[0].mxu0
      %v888 = vadd.f32 0.0, %v887
      %v889 = vpop.f32.mrb[0].mxu0
      %890 = vmatprep.mubr.f32.mxu0 0.0
      %891 = vmatmul.mubr.f32.gmra.mrb[0].mxu0 %v755
      %v892 = vpop.f32.mrb[0].mxu0
      %v893 = vadd.f32 0.0, %v892
      %v894 = vpop.f32.mrb[0].mxu0
      %895 = vmatprep.mubr.f32.mxu0 0.0
      %896 = vmatmul.mubr.f32.gmra.mrb[0].mxu0 %v758
      %v897 = vpop.f32.mrb[0].mxu0
      %v898 = vadd.f32 0.0, %v897
      %v899 = vpop.f32.mrb[0].mxu0
      %900 = vmatprep.mubr.f32.mxu0 0.0
      %901 = vmatmul.mubr.f32.gmra.mrb[0].mxu0 %v761
      %v902 = vpop.f32.mrb[0].mxu0
      %v903 = vadd.f32 0.0, %v902
      %v904 = vpop.f32.mrb[0].mxu0
      %905 = vmatprep.mubr.f32.mxu0 0.0
      %906 = vmatmul.mubr.f32.gmra.mrb[0].mxu0 %v764
      %v907 = vpop.f32.mrb[0].mxu0
      %v908 = vadd.f32 0.0, %v907
      %v909 = vpop.f32.mrb[0].mxu0
      %910 = vdwg.mxu0
      %v912 = vsel %vm717, %v693, 0
      %v915 = vsel %vm717, %v694, 0
      %v918 = vsel %vm717, %v695, 0
      %v921 = vsel %vm717, %v696, 0
      %v924 = vsel %vm717, %v697, 0
      %v927 = vsel %vm717, %v698, 0
      %v930 = vsel %vm717, %v699, 0
      %v933 = vsel %vm717, %v700, 0
      %v936 = vsel %vm717, %v701, 0
      %v939 = vsel %vm717, %v702, 0
      %v942 = vsel %vm717, %v703, 0
      %v945 = vsel %vm717, %v704, 0
      %v948 = vsel %vm717, %v705, 0
      %v951 = vsel %vm717, %v706, 0
      %v954 = vsel %vm717, %v707, 0
      %v957 = vsel %vm717, %v708, 0
      %959 = vmatprep.subr.mxu0 0.0
      %960 = vmatpush1.msra.mxu0 %v402
      %961 = vmatprep.subr.mxu0 0.0
      %962 = vmatpush1.msra.mxu0 %v403
      %963 = vmatprep.subr.mxu0 0.0
      %964 = vmatpush1.msra.mxu0 %v404
      %965 = vmatprep.subr.mxu0 0.0
      %966 = vmatpush1.msra.mxu0 %v405
      %967 = vmatprep.subr.mxu0 0.0
      %968 = vmatpush1.msra.mxu0 %v406
      %969 = vmatprep.subr.mxu0 0.0
      %970 = vmatpush1.msra.mxu0 %v407
      %971 = vmatprep.subr.mxu0 0.0
      %972 = vmatpush1.msra.mxu0 %v408
      %973 = vmatprep.subr.mxu0 0.0
      %974 = vmatpush1.msra.mxu0 %v409
      %975 = vmatprep.subr.mxu0 0.0
      %976 = vmatpush1.msra.mxu0 0.0
      %977 = vmatprep.subr.mxu0 0.0
      %978 = vmatpush1.msra.mxu0 0.0
      %979 = vmatprep.subr.mxu0 0.0
      %980 = vmatpush1.msra.mxu0 0.0
      %981 = vmatprep.subr.mxu0 0.0
      %982 = vmatpush1.msra.mxu0 0.0
      %983 = vmatprep.subr.mxu0 0.0
      %984 = vmatpush1.msra.mxu0 0.0
      %985 = vmatprep.subr.mxu0 0.0
      %986 = vmatpush1.msra.mxu0 0.0
      %987 = vmatprep.subr.mxu0 0.0
      %988 = vmatpush1.msra.mxu0 0.0
      %989 = vmatprep.subr.mxu0 0.0
      %990 = vmatpush1.msra.mxu0 0.0
      %991 = vmatprep.subr.mxu0 0.0
      %992 = vmatpush1.msra.mxu0 0.0
      %993 = vmatprep.subr.mxu0 0.0
      %994 = vmatpush1.msra.mxu0 0.0
      %995 = vmatprep.subr.mxu0 0.0
      %996 = vmatpush1.msra.mxu0 0.0
      %997 = vmatprep.subr.mxu0 0.0
      %998 = vmatpush1.msra.mxu0 0.0
      %999 = vmatprep.subr.mxu0 0.0
      %1000 = vmatpush1.msra.mxu0 0.0
      %1001 = vmatprep.subr.mxu0 0.0
      %1002 = vmatpush1.msra.mxu0 0.0
      %1003 = vmatprep.subr.mxu0 0.0
      %1004 = vmatpush1.msra.mxu0 0.0
      %1005 = vmatprep.subr.mxu0 0.0
      %1006 = vmatpush1.msra.mxu0 0.0
      %1007 = vmatprep.subr.mxu0 0.0
      %1008 = vmatpush1.msra.mxu0 0.0
      %1009 = vmatprep.subr.mxu0 0.0
      %1010 = vmatpush1.msra.mxu0 0.0
      %1011 = vmatprep.subr.mxu0 0.0
      %1012 = vmatpush1.msra.mxu0 0.0
      %1013 = vmatprep.subr.mxu0 0.0
      %1014 = vmatpush1.msra.mxu0 0.0
      %1015 = vmatprep.subr.mxu0 0.0
      %1016 = vmatpush1.msra.mxu0 0.0
      %1017 = vmatprep.subr.mxu0 0.0
      %1018 = vmatpush1.msra.mxu0 0.0
      %1019 = vmatprep.subr.mxu0 0.0
      %1020 = vmatpush1.msra.mxu0 0.0
      %1021 = vmatprep.subr.mxu0 0.0
      %1022 = vmatpush1.msra.mxu0 0.0
      %1023 = vmatprep.mubr.f32.mxu0 0.0
      %1024 = vmatmul.mubr.f32.gmra.mrb[0].mxu0 %v912
      %v1025 = vpop.f32.mrb[0].mxu0
      %v1026 = vadd.f32 0.0, %v1025
      %v1027 = vpop.f32.mrb[0].mxu0
      %1028 = vmatprep.mubr.f32.mxu0 0.0
      %1029 = vmatmul.mubr.f32.gmra.mrb[0].mxu0 %v915
      %v1030 = vpop.f32.mrb[0].mxu0
      %v1031 = vadd.f32 0.0, %v1030
      %v1032 = vpop.f32.mrb[0].mxu0
      %1033 = vmatprep.mubr.f32.mxu0 0.0
      %1034 = vmatmul.mubr.f32.gmra.mrb[0].mxu0 %v918
      %v1035 = vpop.f32.mrb[0].mxu0
      %v1036 = vadd.f32 0.0, %v1035
      %v1037 = vpop.f32.mrb[0].mxu0
      %1038 = vmatprep.mubr.f32.mxu0 0.0
      %1039 = vmatmul.mubr.f32.gmra.mrb[0].mxu0 %v921
      %v1040 = vpop.f32.mrb[0].mxu0
      %v1041 = vadd.f32 0.0, %v1040
      %v1042 = vpop.f32.mrb[0].mxu0
      %1043 = vmatprep.mubr.f32.mxu0 0.0
      %1044 = vmatmul.mubr.f32.gmra.mrb[0].mxu0 %v924
      %v1045 = vpop.f32.mrb[0].mxu0
      %v1046 = vadd.f32 0.0, %v1045
      %v1047 = vpop.f32.mrb[0].mxu0
      %1048 = vmatprep.mubr.f32.mxu0 0.0
      %1049 = vmatmul.mubr.f32.gmra.mrb[0].mxu0 %v927
      %v1050 = vpop.f32.mrb[0].mxu0
      %v1051 = vadd.f32 0.0, %v1050
      %v1052 = vpop.f32.mrb[0].mxu0
      %1053 = vmatprep.mubr.f32.mxu0 0.0
      %1054 = vmatmul.mubr.f32.gmra.mrb[0].mxu0 %v930
      %v1055 = vpop.f32.mrb[0].mxu0
      %v1056 = vadd.f32 0.0, %v1055
      %v1057 = vpop.f32.mrb[0].mxu0
      %1058 = vmatprep.mubr.f32.mxu0 0.0
      %1059 = vmatmul.mubr.f32.gmra.mrb[0].mxu0 %v933
      %v1060 = vpop.f32.mrb[0].mxu0
      %v1061 = vadd.f32 0.0, %v1060
      %v1062 = vpop.f32.mrb[0].mxu0
      %1063 = vmatprep.mubr.f32.mxu0 0.0
      %1064 = vmatmul.mubr.f32.gmra.mrb[0].mxu0 %v936
      %v1065 = vpop.f32.mrb[0].mxu0
      %v1066 = vadd.f32 0.0, %v1065
      %v1067 = vpop.f32.mrb[0].mxu0
      %1068 = vmatprep.mubr.f32.mxu0 0.0
      %1069 = vmatmul.mubr.f32.gmra.mrb[0].mxu0 %v939
      %v1070 = vpop.f32.mrb[0].mxu0
      %v1071 = vadd.f32 0.0, %v1070
      %v1072 = vpop.f32.mrb[0].mxu0
      %1073 = vmatprep.mubr.f32.mxu0 0.0
      %1074 = vmatmul.mubr.f32.gmra.mrb[0].mxu0 %v942
      %v1075 = vpop.f32.mrb[0].mxu0
      %v1076 = vadd.f32 0.0, %v1075
      %v1077 = vpop.f32.mrb[0].mxu0
      %1078 = vmatprep.mubr.f32.mxu0 0.0
      %1079 = vmatmul.mubr.f32.gmra.mrb[0].mxu0 %v945
      %v1080 = vpop.f32.mrb[0].mxu0
      %v1081 = vadd.f32 0.0, %v1080
      %v1082 = vpop.f32.mrb[0].mxu0
      %1083 = vmatprep.mubr.f32.mxu0 0.0
      %1084 = vmatmul.mubr.f32.gmra.mrb[0].mxu0 %v948
      %v1085 = vpop.f32.mrb[0].mxu0
      %v1086 = vadd.f32 0.0, %v1085
      %v1087 = vpop.f32.mrb[0].mxu0
      %1088 = vmatprep.mubr.f32.mxu0 0.0
      %1089 = vmatmul.mubr.f32.gmra.mrb[0].mxu0 %v951
      %v1090 = vpop.f32.mrb[0].mxu0
      %v1091 = vadd.f32 0.0, %v1090
      %v1092 = vpop.f32.mrb[0].mxu0
      %1093 = vmatprep.mubr.f32.mxu0 0.0
      %1094 = vmatmul.mubr.f32.gmra.mrb[0].mxu0 %v954
      %v1095 = vpop.f32.mrb[0].mxu0
      %v1096 = vadd.f32 0.0, %v1095
      %v1097 = vpop.f32.mrb[0].mxu0
      %1098 = vmatprep.mubr.f32.mxu0 0.0
      %1099 = vmatmul.mubr.f32.gmra.mrb[0].mxu0 %v957
      %v1100 = vpop.f32.mrb[0].mxu0
      %v1101 = vadd.f32 0.0, %v1100
      %v1102 = vpop.f32.mrb[0].mxu0
      %1103 = vdwg.mxu0
      %v1104 = vsub.f32 %v833, %v1026
      %v1105 = vsub.f32 %v838, %v1031
      %v1106 = vsub.f32 %v843, %v1036
      %v1107 = vsub.f32 %v848, %v1041
      %v1108 = vsub.f32 %v853, %v1046
      %v1109 = vsub.f32 %v858, %v1051
      %v1110 = vsub.f32 %v863, %v1056
      %v1111 = vsub.f32 %v868, %v1061
      %v1112 = vsub.f32 %v873, %v1066
      %v1113 = vsub.f32 %v878, %v1071
      %v1114 = vsub.f32 %v883, %v1076
      %v1115 = vsub.f32 %v888, %v1081
      %v1116 = vsub.f32 %v893, %v1086
      %v1117 = vsub.f32 %v898, %v1091
      %v1118 = vsub.f32 %v903, %v1096
      %v1119 = vsub.f32 %v908, %v1101
      %v1120 = vmul.f32 %v1104, %v1104
      %v1121 = vmul.f32 %v1105, %v1105
      %v1122 = vmul.f32 %v1106, %v1106
      %v1123 = vmul.f32 %v1107, %v1107
      %v1124 = vmul.f32 %v1108, %v1108
      %v1125 = vmul.f32 %v1109, %v1109
      %v1126 = vmul.f32 %v1110, %v1110
      %v1127 = vmul.f32 %v1111, %v1111
      %v1128 = vmul.f32 %v1112, %v1112
      %v1129 = vmul.f32 %v1113, %v1113
      %v1130 = vmul.f32 %v1114, %v1114
      %v1131 = vmul.f32 %v1115, %v1115
      %v1132 = vmul.f32 %v1116, %v1116
      %v1133 = vmul.f32 %v1117, %v1117
      %v1134 = vmul.f32 %v1118, %v1118
      %v1135 = vmul.f32 %v1119, %v1119
      %vm1136 = vcmask 23552
      %v1137 = vsel %vm1136, %v1120, 0.0
      %1138 = vadd.xlane.f32.xlu0 %v1137
      %v1139 = vpop.xlane.xlu0 %1138
      %v1140 = vsel %vm1136, %v1121, 0.0
      %1141 = vadd.xlane.f32.xlu0 %v1140
      %v1142 = vpop.xlane.xlu0 %1141
      %v1143 = vsel %vm1136, %v1122, 0.0
      %1144 = vadd.xlane.f32.xlu0 %v1143
      %v1145 = vpop.xlane.xlu0 %1144
      %v1146 = vsel %vm1136, %v1123, 0.0
      %1147 = vadd.xlane.f32.xlu0 %v1146
      %v1148 = vpop.xlane.xlu0 %1147
      %v1149 = vsel %vm1136, %v1124, 0.0
      %1150 = vadd.xlane.f32.xlu0 %v1149
      %v1151 = vpop.xlane.xlu0 %1150
      %v1152 = vsel %vm1136, %v1125, 0.0
      %1153 = vadd.xlane.f32.xlu0 %v1152
      %v1154 = vpop.xlane.xlu0 %1153
      %v1155 = vsel %vm1136, %v1126, 0.0
      %1156 = vadd.xlane.f32.xlu0 %v1155
      %v1157 = vpop.xlane.xlu0 %1156
      %v1158 = vsel %vm1136, %v1127, 0.0
      %1159 = vadd.xlane.f32.xlu0 %v1158
      %v1160 = vpop.xlane.xlu0 %1159
      %v1161 = vsel %vm1136, %v1128, 0.0
      %1162 = vadd.xlane.f32.xlu0 %v1161
      %v1163 = vpop.xlane.xlu0 %1162
      %v1164 = vsel %vm1136, %v1129, 0.0
      %1165 = vadd.xlane.f32.xlu0 %v1164
      %v1166 = vpop.xlane.xlu0 %1165
      %v1167 = vsel %vm1136, %v1130, 0.0
      %1168 = vadd.xlane.f32.xlu0 %v1167
      %v1169 = vpop.xlane.xlu0 %1168
      %v1170 = vsel %vm1136, %v1131, 0.0
      %1171 = vadd.xlane.f32.xlu0 %v1170
      %v1172 = vpop.xlane.xlu0 %1171
      %v1173 = vsel %vm1136, %v1132, 0.0
      %1174 = vadd.xlane.f32.xlu0 %v1173
      %v1175 = vpop.xlane.xlu0 %1174
      %v1176 = vsel %vm1136, %v1133, 0.0
      %1177 = vadd.xlane.f32.xlu0 %v1176
      %v1178 = vpop.xlane.xlu0 %1177
      %v1179 = vsel %vm1136, %v1134, 0.0
      %1180 = vadd.xlane.f32.xlu0 %v1179
      %v1181 = vpop.xlane.xlu0 %1180
      %v1182 = vsel %vm1136, %v1135, 0.0
      %1183 = vadd.xlane.f32.xlu0 %v1182
      %v1184 = vpop.xlane.xlu0 %1183
      %v1185 = vadd.f32 %v1139, 1e-08
      %v1186 = vadd.f32 %v1142, 1e-08
      %v1187 = vadd.f32 %v1145, 1e-08
      %v1188 = vadd.f32 %v1148, 1e-08
      %v1189 = vadd.f32 %v1151, 1e-08
      %v1190 = vadd.f32 %v1154, 1e-08
      %v1191 = vadd.f32 %v1157, 1e-08
      %v1192 = vadd.f32 %v1160, 1e-08
      %v1193 = vadd.f32 %v1163, 1e-08
      %v1194 = vadd.f32 %v1166, 1e-08
      %v1195 = vadd.f32 %v1169, 1e-08
      %v1196 = vadd.f32 %v1172, 1e-08
      %v1197 = vadd.f32 %v1175, 1e-08
      %v1198 = vadd.f32 %v1178, 1e-08
      %v1199 = vadd.f32 %v1181, 1e-08
      %v1200 = vadd.f32 %v1184, 1e-08
      %v1201 = vrsqrt.pop %v1185
      %v1202 = vmul.f32 %v1185, %v1201
      %vm1203 = vcmp.eq.f32.partialorder %v1185, inf
      %v1204 = vsel %vm1203, %v1185, %v1202
      %vm1205 = vcmp.eq.f32.partialorder %v1185, 0.0
      %v1206 = vand.u32 %v1185, 2147483648
      %v1207 = vsel %vm1205, %v1206, %v1204
      %v1208 = vrsqrt.pop %v1186
      %v1209 = vmul.f32 %v1186, %v1208
      %vm1210 = vcmp.eq.f32.partialorder %v1186, inf
      %v1211 = vsel %vm1210, %v1186, %v1209
      %vm1212 = vcmp.eq.f32.partialorder %v1186, 0.0
      %v1213 = vand.u32 %v1186, 2147483648
      %v1214 = vsel %vm1212, %v1213, %v1211
      %v1215 = vrsqrt.pop %v1187
      %v1216 = vmul.f32 %v1187, %v1215
      %vm1217 = vcmp.eq.f32.partialorder %v1187, inf
      %v1218 = vsel %vm1217, %v1187, %v1216
      %vm1219 = vcmp.eq.f32.partialorder %v1187, 0.0
      %v1220 = vand.u32 %v1187, 2147483648
      %v1221 = vsel %vm1219, %v1220, %v1218
      %v1222 = vrsqrt.pop %v1188
      %v1223 = vmul.f32 %v1188, %v1222
      %vm1224 = vcmp.eq.f32.partialorder %v1188, inf
      %v1225 = vsel %vm1224, %v1188, %v1223
      %vm1226 = vcmp.eq.f32.partialorder %v1188, 0.0
      %v1227 = vand.u32 %v1188, 2147483648
      %v1228 = vsel %vm1226, %v1227, %v1225
      %v1229 = vrsqrt.pop %v1189
      %v1230 = vmul.f32 %v1189, %v1229
      %vm1231 = vcmp.eq.f32.partialorder %v1189, inf
      %v1232 = vsel %vm1231, %v1189, %v1230
      %vm1233 = vcmp.eq.f32.partialorder %v1189, 0.0
      %v1234 = vand.u32 %v1189, 2147483648
      %v1235 = vsel %vm1233, %v1234, %v1232
      %v1236 = vrsqrt.pop %v1190
      %v1237 = vmul.f32 %v1190, %v1236
      %vm1238 = vcmp.eq.f32.partialorder %v1190, inf
      %v1239 = vsel %vm1238, %v1190, %v1237
      %vm1240 = vcmp.eq.f32.partialorder %v1190, 0.0
      %v1241 = vand.u32 %v1190, 2147483648
      %v1242 = vsel %vm1240, %v1241, %v1239
      %v1243 = vrsqrt.pop %v1191
      %v1244 = vmul.f32 %v1191, %v1243
      %vm1245 = vcmp.eq.f32.partialorder %v1191, inf
      %v1246 = vsel %vm1245, %v1191, %v1244
      %vm1247 = vcmp.eq.f32.partialorder %v1191, 0.0
      %v1248 = vand.u32 %v1191, 2147483648
      %v1249 = vsel %vm1247, %v1248, %v1246
      %v1250 = vrsqrt.pop %v1192
      %v1251 = vmul.f32 %v1192, %v1250
      %vm1252 = vcmp.eq.f32.partialorder %v1192, inf
      %v1253 = vsel %vm1252, %v1192, %v1251
      %vm1254 = vcmp.eq.f32.partialorder %v1192, 0.0
      %v1255 = vand.u32 %v1192, 2147483648
      %v1256 = vsel %vm1254, %v1255, %v1253
      %v1257 = vrsqrt.pop %v1193
      %v1258 = vmul.f32 %v1193, %v1257
      %vm1259 = vcmp.eq.f32.partialorder %v1193, inf
      %v1260 = vsel %vm1259, %v1193, %v1258
      %vm1261 = vcmp.eq.f32.partialorder %v1193, 0.0
      %v1262 = vand.u32 %v1193, 2147483648
      %v1263 = vsel %vm1261, %v1262, %v1260
      %v1264 = vrsqrt.pop %v1194
      %v1265 = vmul.f32 %v1194, %v1264
      %vm1266 = vcmp.eq.f32.partialorder %v1194, inf
      %v1267 = vsel %vm1266, %v1194, %v1265
      %vm1268 = vcmp.eq.f32.partialorder %v1194, 0.0
      %v1269 = vand.u32 %v1194, 2147483648
      %v1270 = vsel %vm1268, %v1269, %v1267
      %v1271 = vrsqrt.pop %v1195
      %v1272 = vmul.f32 %v1195, %v1271
      %vm1273 = vcmp.eq.f32.partialorder %v1195, inf
      %v1274 = vsel %vm1273, %v1195, %v1272
      %vm1275 = vcmp.eq.f32.partialorder %v1195, 0.0
      %v1276 = vand.u32 %v1195, 2147483648
      %v1277 = vsel %vm1275, %v1276, %v1274
      %v1278 = vrsqrt.pop %v1196
      %v1279 = vmul.f32 %v1196, %v1278
      %vm1280 = vcmp.eq.f32.partialorder %v1196, inf
      %v1281 = vsel %vm1280, %v1196, %v1279
      %vm1282 = vcmp.eq.f32.partialorder %v1196, 0.0
      %v1283 = vand.u32 %v1196, 2147483648
      %v1284 = vsel %vm1282, %v1283, %v1281
      %v1285 = vrsqrt.pop %v1197
      %v1286 = vmul.f32 %v1197, %v1285
      %vm1287 = vcmp.eq.f32.partialorder %v1197, inf
      %v1288 = vsel %vm1287, %v1197, %v1286
      %vm1289 = vcmp.eq.f32.partialorder %v1197, 0.0
      %v1290 = vand.u32 %v1197, 2147483648
      %v1291 = vsel %vm1289, %v1290, %v1288
      %v1292 = vrsqrt.pop %v1198
      %v1293 = vmul.f32 %v1198, %v1292
      %vm1294 = vcmp.eq.f32.partialorder %v1198, inf
      %v1295 = vsel %vm1294, %v1198, %v1293
      %vm1296 = vcmp.eq.f32.partialorder %v1198, 0.0
      %v1297 = vand.u32 %v1198, 2147483648
      %v1298 = vsel %vm1296, %v1297, %v1295
      %v1299 = vrsqrt.pop %v1199
      %v1300 = vmul.f32 %v1199, %v1299
      %vm1301 = vcmp.eq.f32.partialorder %v1199, inf
      %v1302 = vsel %vm1301, %v1199, %v1300
      %vm1303 = vcmp.eq.f32.partialorder %v1199, 0.0
      %v1304 = vand.u32 %v1199, 2147483648
      %v1305 = vsel %vm1303, %v1304, %v1302
      %v1306 = vrsqrt.pop %v1200
      %v1307 = vmul.f32 %v1200, %v1306
      %vm1308 = vcmp.eq.f32.partialorder %v1200, inf
      %v1309 = vsel %vm1308, %v1200, %v1307
      %vm1310 = vcmp.eq.f32.partialorder %v1200, 0.0
      %v1311 = vand.u32 %v1200, 2147483648
      %v1312 = vsel %vm1310, %v1311, %v1309
      %v1313 = vadd.f32 %v1207, 1.0
      %v1314 = vadd.f32 %v1214, 1.0
      %v1315 = vadd.f32 %v1221, 1.0
      %v1316 = vadd.f32 %v1228, 1.0
      %v1317 = vadd.f32 %v1235, 1.0
      %v1318 = vadd.f32 %v1242, 1.0
      %v1319 = vadd.f32 %v1249, 1.0
      %v1320 = vadd.f32 %v1256, 1.0
      %v1321 = vadd.f32 %v1263, 1.0
      %v1322 = vadd.f32 %v1270, 1.0
      %v1323 = vadd.f32 %v1277, 1.0
      %v1324 = vadd.f32 %v1284, 1.0
      %v1325 = vadd.f32 %v1291, 1.0
      %v1326 = vadd.f32 %v1298, 1.0
      %v1327 = vadd.f32 %v1305, 1.0
      %v1328 = vadd.f32 %v1312, 1.0
      %v1329 = vrcp.pop %v1313
      %v1330 = vrcp.pop %v1314
      %v1331 = vrcp.pop %v1315
      %v1332 = vrcp.pop %v1316
      %v1333 = vrcp.pop %v1317
      %v1334 = vrcp.pop %v1318
      %v1335 = vrcp.pop %v1319
      %v1336 = vrcp.pop %v1320
      %v1337 = vrcp.pop %v1321
      %v1338 = vrcp.pop %v1322
      %v1339 = vrcp.pop %v1323
      %v1340 = vrcp.pop %v1324
      %v1341 = vrcp.pop %v1325
      %v1342 = vrcp.pop %v1326
      %v1343 = vrcp.pop %v1327
      %v1344 = vrcp.pop %v1328
      %v1345 = vmul.f32 %v1104, %v1329
      %v1346 = vmul.f32 %v1105, %v1330
      %v1347 = vmul.f32 %v1106, %v1331
      %v1348 = vmul.f32 %v1107, %v1332
      %v1349 = vmul.f32 %v1108, %v1333
      %v1350 = vmul.f32 %v1109, %v1334
      %v1351 = vmul.f32 %v1110, %v1335
      %v1352 = vmul.f32 %v1111, %v1336
      %v1353 = vmul.f32 %v1112, %v1337
      %v1354 = vmul.f32 %v1113, %v1338
      %v1355 = vmul.f32 %v1114, %v1339
      %v1356 = vmul.f32 %v1115, %v1340
      %v1357 = vmul.f32 %v1116, %v1341
      %v1358 = vmul.f32 %v1117, %v1342
      %v1359 = vmul.f32 %v1118, %v1343
      %v1360 = vmul.f32 %v1119, %v1344
      %v1361 = vld [vmem:[%s5] sm:$0xff]
      %v1362 = vld [vmem:[%s5 + $0x8] sm:$0xff]
      %v1363 = vld [vmem:[%s5 + $0x10] sm:$0xff]
      %v1364 = vld [vmem:[%s5 + $0x18] sm:$0xff]
      %vm1365 = vcmask 261120
      %v1367 = vsel %vm1365, %v394, 0
      %v1370 = vsel %vm1365, %v395, 0
      %v1373 = vsel %vm1365, %v396, 0
      %v1376 = vsel %vm1365, %v397, 0
      %v1379 = vsel %vm1365, %v398, 0
      %v1382 = vsel %vm1365, %v399, 0
      %v1385 = vsel %vm1365, %v400, 0
      %v1388 = vsel %vm1365, %v401, 0
      %1390 = vmatprep.subr.mxu0 0.0
      %1391 = vmatpush1.msra.mxu0 %v1361
      %1392 = vmatprep.subr.mxu0 0.0
      %1393 = vmatpush1.msra.mxu0 %v1362
      %1394 = vmatprep.subr.mxu0 0.0
      %1395 = vmatpush1.msra.mxu0 %v1363
      %1396 = vmatprep.subr.mxu0 0.0
      %1397 = vmatpush1.msra.mxu0 %v1364
      %1398 = vmatprep.subr.mxu0 0.0
      %1399 = vmatpush1.msra.mxu0 0.0
      %1400 = vmatprep.subr.mxu0 0.0
      %1401 = vmatpush1.msra.mxu0 0.0
      %1402 = vmatprep.subr.mxu0 0.0
      %1403 = vmatpush1.msra.mxu0 0.0
      %1404 = vmatprep.subr.mxu0 0.0
      %1405 = vmatpush1.msra.mxu0 0.0
      %1406 = vmatprep.subr.mxu0 0.0
      %1407 = vmatpush1.msra.mxu0 0.0
      %1408 = vmatprep.subr.mxu0 0.0
      %1409 = vmatpush1.msra.mxu0 0.0
      %1410 = vmatprep.subr.mxu0 0.0
      %1411 = vmatpush1.msra.mxu0 0.0
      %1412 = vmatprep.subr.mxu0 0.0
      %1413 = vmatpush1.msra.mxu0 0.0
      %1414 = vmatprep.subr.mxu0 0.0
      %1415 = vmatpush1.msra.mxu0 0.0
      %1416 = vmatprep.subr.mxu0 0.0
      %1417 = vmatpush1.msra.mxu0 0.0
      %1418 = vmatprep.subr.mxu0 0.0
      %1419 = vmatpush1.msra.mxu0 0.0
      %1420 = vmatprep.subr.mxu0 0.0
      %1421 = vmatpush1.msra.mxu0 0.0
      %1422 = vmatprep.subr.mxu0 0.0
      %1423 = vmatpush1.msra.mxu0 0.0
      %1424 = vmatprep.subr.mxu0 0.0
      %1425 = vmatpush1.msra.mxu0 0.0
      %1426 = vmatprep.subr.mxu0 0.0
      %1427 = vmatpush1.msra.mxu0 0.0
      %1428 = vmatprep.subr.mxu0 0.0
      %1429 = vmatpush1.msra.mxu0 0.0
      %1430 = vmatprep.subr.mxu0 0.0
      %1431 = vmatpush1.msra.mxu0 0.0
      %1432 = vmatprep.subr.mxu0 0.0
      %1433 = vmatpush1.msra.mxu0 0.0
      %1434 = vmatprep.subr.mxu0 0.0
      %1435 = vmatpush1.msra.mxu0 0.0
      %1436 = vmatprep.subr.mxu0 0.0
      %1437 = vmatpush1.msra.mxu0 0.0
      %1438 = vmatprep.subr.mxu0 0.0
      %1439 = vmatpush1.msra.mxu0 0.0
      %1440 = vmatprep.subr.mxu0 0.0
      %1441 = vmatpush1.msra.mxu0 0.0
      %1442 = vmatprep.subr.mxu0 0.0
      %1443 = vmatpush1.msra.mxu0 0.0
      %1444 = vmatprep.subr.mxu0 0.0
      %1445 = vmatpush1.msra.mxu0 0.0
      %1446 = vmatprep.subr.mxu0 0.0
      %1447 = vmatpush1.msra.mxu0 0.0
      %1448 = vmatprep.subr.mxu0 0.0
      %1449 = vmatpush1.msra.mxu0 0.0
      %1450 = vmatprep.subr.mxu0 0.0
      %1451 = vmatpush1.msra.mxu0 0.0
      %1452 = vmatprep.subr.mxu0 0.0
      %1453 = vmatpush1.msra.mxu0 0.0
      %1454 = vmatprep.mubr.f32.mxu0 0.0
      %1455 = vmatmul.mubr.f32.gmra.mrb[0].mxu0 %v1367
      %v1456 = vpop.f32.mrb[0].mxu0
      %v1457 = vadd.f32 0.0, %v1456
      %v1458 = vpop.f32.mrb[0].mxu0
      %1459 = vmatprep.mubr.f32.mxu0 0.0
      %1460 = vmatmul.mubr.f32.gmra.mrb[0].mxu0 %v1370
      %v1461 = vpop.f32.mrb[0].mxu0
      %v1462 = vadd.f32 0.0, %v1461
      %v1463 = vpop.f32.mrb[0].mxu0
      %1464 = vmatprep.mubr.f32.mxu0 0.0
      %1465 = vmatmul.mubr.f32.gmra.mrb[0].mxu0 %v1373
      %v1466 = vpop.f32.mrb[0].mxu0
      %v1467 = vadd.f32 0.0, %v1466
      %v1468 = vpop.f32.mrb[0].mxu0
      %1469 = vmatprep.mubr.f32.mxu0 0.0
      %1470 = vmatmul.mubr.f32.gmra.mrb[0].mxu0 %v1376
      %v1471 = vpop.f32.mrb[0].mxu0
      %v1472 = vadd.f32 0.0, %v1471
      %v1473 = vpop.f32.mrb[0].mxu0
      %1474 = vmatprep.mubr.f32.mxu0 0.0
      %1475 = vmatmul.mubr.f32.gmra.mrb[0].mxu0 %v1379
      %v1476 = vpop.f32.mrb[0].mxu0
      %v1477 = vadd.f32 0.0, %v1476
      %v1478 = vpop.f32.mrb[0].mxu0
      %1479 = vmatprep.mubr.f32.mxu0 0.0
      %1480 = vmatmul.mubr.f32.gmra.mrb[0].mxu0 %v1382
      %v1481 = vpop.f32.mrb[0].mxu0
      %v1482 = vadd.f32 0.0, %v1481
      %v1483 = vpop.f32.mrb[0].mxu0
      %1484 = vmatprep.mubr.f32.mxu0 0.0
      %1485 = vmatmul.mubr.f32.gmra.mrb[0].mxu0 %v1385
      %v1486 = vpop.f32.mrb[0].mxu0
      %v1487 = vadd.f32 0.0, %v1486
      %v1488 = vpop.f32.mrb[0].mxu0
      %1489 = vmatprep.mubr.f32.mxu0 0.0
      %1490 = vmatmul.mubr.f32.gmra.mrb[0].mxu0 %v1388
      %v1491 = vpop.f32.mrb[0].mxu0
      %v1492 = vadd.f32 0.0, %v1491
      %v1493 = vpop.f32.mrb[0].mxu0
      %1494 = vdwg.mxu0
      %v1495 = vld [vmem:[%s5 + $0x20] sm:$0xff]
      %v1496 = vld [vmem:[%s5 + $0x28] sm:$0xff]
      %v1497 = vld [vmem:[%s5 + $0x30] sm:$0xff]
      %v1498 = vld [vmem:[%s5 + $0x38] sm:$0xff]
      %1499 = vmatprep.subr.mxu0 0.0
      %1500 = vmatpush1.msra.mxu0 %v1495
      %1501 = vmatprep.subr.mxu0 0.0
      %1502 = vmatpush1.msra.mxu0 %v1496
      %1503 = vmatprep.subr.mxu0 0.0
      %1504 = vmatpush1.msra.mxu0 %v1497
      %1505 = vmatprep.subr.mxu0 0.0
      %1506 = vmatpush1.msra.mxu0 %v1498
      %1507 = vmatprep.subr.mxu0 0.0
      %1508 = vmatpush1.msra.mxu0 0.0
      %1509 = vmatprep.subr.mxu0 0.0
      %1510 = vmatpush1.msra.mxu0 0.0
      %1511 = vmatprep.subr.mxu0 0.0
      %1512 = vmatpush1.msra.mxu0 0.0
      %1513 = vmatprep.subr.mxu0 0.0
      %1514 = vmatpush1.msra.mxu0 0.0
      %1515 = vmatprep.subr.mxu0 0.0
      %1516 = vmatpush1.msra.mxu0 0.0
      %1517 = vmatprep.subr.mxu0 0.0
      %1518 = vmatpush1.msra.mxu0 0.0
      %1519 = vmatprep.subr.mxu0 0.0
      %1520 = vmatpush1.msra.mxu0 0.0
      %1521 = vmatprep.subr.mxu0 0.0
      %1522 = vmatpush1.msra.mxu0 0.0
      %1523 = vmatprep.subr.mxu0 0.0
      %1524 = vmatpush1.msra.mxu0 0.0
      %1525 = vmatprep.subr.mxu0 0.0
      %1526 = vmatpush1.msra.mxu0 0.0
      %1527 = vmatprep.subr.mxu0 0.0
      %1528 = vmatpush1.msra.mxu0 0.0
      %1529 = vmatprep.subr.mxu0 0.0
      %1530 = vmatpush1.msra.mxu0 0.0
      %1531 = vmatprep.subr.mxu0 0.0
      %1532 = vmatpush1.msra.mxu0 0.0
      %1533 = vmatprep.subr.mxu0 0.0
      %1534 = vmatpush1.msra.mxu0 0.0
      %1535 = vmatprep.subr.mxu0 0.0
      %1536 = vmatpush1.msra.mxu0 0.0
      %1537 = vmatprep.subr.mxu0 0.0
      %1538 = vmatpush1.msra.mxu0 0.0
      %1539 = vmatprep.subr.mxu0 0.0
      %1540 = vmatpush1.msra.mxu0 0.0
      %1541 = vmatprep.subr.mxu0 0.0
      %1542 = vmatpush1.msra.mxu0 0.0
      %1543 = vmatprep.subr.mxu0 0.0
      %1544 = vmatpush1.msra.mxu0 0.0
      %1545 = vmatprep.subr.mxu0 0.0
      %1546 = vmatpush1.msra.mxu0 0.0
      %1547 = vmatprep.subr.mxu0 0.0
      %1548 = vmatpush1.msra.mxu0 0.0
      %1549 = vmatprep.subr.mxu0 0.0
      %1550 = vmatpush1.msra.mxu0 0.0
      %1551 = vmatprep.subr.mxu0 0.0
      %1552 = vmatpush1.msra.mxu0 0.0
      %1553 = vmatprep.subr.mxu0 0.0
      %1554 = vmatpush1.msra.mxu0 0.0
      %1555 = vmatprep.subr.mxu0 0.0
      %1556 = vmatpush1.msra.mxu0 0.0
      %1557 = vmatprep.subr.mxu0 0.0
      %1558 = vmatpush1.msra.mxu0 0.0
      %1559 = vmatprep.subr.mxu0 0.0
      %1560 = vmatpush1.msra.mxu0 0.0
      %1561 = vmatprep.subr.mxu0 0.0
      %1562 = vmatpush1.msra.mxu0 0.0
      %1563 = vmatprep.mubr.f32.mxu0 0.0
      %1564 = vmatmul.mubr.f32.gmra.mrb[0].mxu0 %v1367
      %v1565 = vpop.f32.mrb[0].mxu0
      %v1566 = vadd.f32 0.0, %v1565
      %v1567 = vpop.f32.mrb[0].mxu0
      %1568 = vmatprep.mubr.f32.mxu0 0.0
      %1569 = vmatmul.mubr.f32.gmra.mrb[0].mxu0 %v1370
      %v1570 = vpop.f32.mrb[0].mxu0
      %v1571 = vadd.f32 0.0, %v1570
      %v1572 = vpop.f32.mrb[0].mxu0
      %1573 = vmatprep.mubr.f32.mxu0 0.0
      %1574 = vmatmul.mubr.f32.gmra.mrb[0].mxu0 %v1373
      %v1575 = vpop.f32.mrb[0].mxu0
      %v1576 = vadd.f32 0.0, %v1575
      %v1577 = vpop.f32.mrb[0].mxu0
      %1578 = vmatprep.mubr.f32.mxu0 0.0
      %1579 = vmatmul.mubr.f32.gmra.mrb[0].mxu0 %v1376
      %v1580 = vpop.f32.mrb[0].mxu0
      %v1581 = vadd.f32 0.0, %v1580
      %v1582 = vpop.f32.mrb[0].mxu0
      %1583 = vmatprep.mubr.f32.mxu0 0.0
      %1584 = vmatmul.mubr.f32.gmra.mrb[0].mxu0 %v1379
      %v1585 = vpop.f32.mrb[0].mxu0
      %v1586 = vadd.f32 0.0, %v1585
      %v1587 = vpop.f32.mrb[0].mxu0
      %1588 = vmatprep.mubr.f32.mxu0 0.0
      %1589 = vmatmul.mubr.f32.gmra.mrb[0].mxu0 %v1382
      %v1590 = vpop.f32.mrb[0].mxu0
      %v1591 = vadd.f32 0.0, %v1590
      %v1592 = vpop.f32.mrb[0].mxu0
      %1593 = vmatprep.mubr.f32.mxu0 0.0
      %1594 = vmatmul.mubr.f32.gmra.mrb[0].mxu0 %v1385
      %v1595 = vpop.f32.mrb[0].mxu0
      %v1596 = vadd.f32 0.0, %v1595
      %v1597 = vpop.f32.mrb[0].mxu0
      %1598 = vmatprep.mubr.f32.mxu0 0.0
      %1599 = vmatmul.mubr.f32.gmra.mrb[0].mxu0 %v1388
      %v1600 = vpop.f32.mrb[0].mxu0
      %v1601 = vadd.f32 0.0, %v1600
      %v1602 = vpop.f32.mrb[0].mxu0
      %1603 = vdwg.mxu0
      %v1604 = vpack.c.bf16 %v1462, %v1457
      %v1605 = vpack.c.bf16 %v1472, %v1467
      %v1606 = vpack.c.bf16 %v1482, %v1477
      %v1607 = vpack.c.bf16 %v1492, %v1487
      %v1608 = vpack.c.bf16 %v1571, %v1566
      %v1609 = vpack.c.bf16 %v1581, %v1576
      %v1610 = vpack.c.bf16 %v1591, %v1586
      %v1611 = vpack.c.bf16 %v1601, %v1596
      %v1613 = vsel %vm717, %v637, 0
      %v1616 = vsel %vm717, %v638, 0
      %v1619 = vsel %vm717, %v639, 0
      %v1622 = vsel %vm717, %v640, 0
      %v1625 = vsel %vm717, %v641, 0
      %v1628 = vsel %vm717, %v642, 0
      %v1631 = vsel %vm717, %v643, 0
      %v1634 = vsel %vm717, %v644, 0
      %1636 = vmatprep.subr.bf16.mxu0 0
      %1637 = vmatpush1.bf16.msra.mxu0 %v1608
      %1638 = vmatprep.subr.bf16.mxu0 0
      %1639 = vmatpush1.bf16.msra.mxu0 %v1609
      %1640 = vmatprep.subr.bf16.mxu0 0
      %1641 = vmatpush1.bf16.msra.mxu0 %v1610
      %1642 = vmatprep.subr.bf16.mxu0 0
      %1643 = vmatpush1.bf16.msra.mxu0 %v1611
      %1644 = vmatprep.subr.bf16.mxu0 0
      %1645 = vmatpush1.bf16.msra.mxu0 0
      %1646 = vmatprep.subr.bf16.mxu0 0
      %1647 = vmatpush1.bf16.msra.mxu0 0
      %1648 = vmatprep.subr.bf16.mxu0 0
      %1649 = vmatpush1.bf16.msra.mxu0 0
      %1650 = vmatprep.subr.bf16.mxu0 0
      %1651 = vmatpush1.bf16.msra.mxu0 0
      %1652 = vmatprep.subr.bf16.mxu0 0
      %1653 = vmatpush1.bf16.msra.mxu0 0
      %1654 = vmatprep.subr.bf16.mxu0 0
      %1655 = vmatpush1.bf16.msra.mxu0 0
      %1656 = vmatprep.subr.bf16.mxu0 0
      %1657 = vmatpush1.bf16.msra.mxu0 0
      %1658 = vmatprep.subr.bf16.mxu0 0
      %1659 = vmatpush1.bf16.msra.mxu0 0
      %1660 = vmatprep.subr.bf16.mxu0 0
      %1661 = vmatpush1.bf16.msra.mxu0 0
      %1662 = vmatprep.subr.bf16.mxu0 0
      %1663 = vmatpush1.bf16.msra.mxu0 0
      %1664 = vmatprep.subr.bf16.mxu0 0
      %1665 = vmatpush1.bf16.msra.mxu0 0
      %1666 = vmatprep.subr.bf16.mxu0 0
      %1667 = vmatpush1.bf16.msra.mxu0 0
      %1668 = vmatprep.mubr.bf16.mxu0 0
      %1669 = vmatmul.mubr.bf16.gmra.mrb[0].mxu0 %v1613
      %v1670 = vpop.f32.mrb[0].mxu0
      %v1671 = vadd.f32 0.0, %v1670
      %v1672 = vpop.f32.mrb[0].mxu0
      %v1673 = vpop.f32.mrb[0].mxu0
      %v1674 = vadd.f32 0.0, %v1673
      %v1675 = vpop.f32.mrb[0].mxu0
      %1676 = vmatprep.mubr.bf16.mxu0 0
      %1677 = vmatmul.mubr.bf16.gmra.mrb[0].mxu0 %v1616
      %v1678 = vpop.f32.mrb[0].mxu0
      %v1679 = vadd.f32 0.0, %v1678
      %v1680 = vpop.f32.mrb[0].mxu0
      %v1681 = vpop.f32.mrb[0].mxu0
      %v1682 = vadd.f32 0.0, %v1681
      %v1683 = vpop.f32.mrb[0].mxu0
      %1684 = vmatprep.mubr.bf16.mxu0 0
      %1685 = vmatmul.mubr.bf16.gmra.mrb[0].mxu0 %v1619
      %v1686 = vpop.f32.mrb[0].mxu0
      %v1687 = vadd.f32 0.0, %v1686
      %v1688 = vpop.f32.mrb[0].mxu0
      %v1689 = vpop.f32.mrb[0].mxu0
      %v1690 = vadd.f32 0.0, %v1689
      %v1691 = vpop.f32.mrb[0].mxu0
      %1692 = vmatprep.mubr.bf16.mxu0 0
      %1693 = vmatmul.mubr.bf16.gmra.mrb[0].mxu0 %v1622
      %v1694 = vpop.f32.mrb[0].mxu0
      %v1695 = vadd.f32 0.0, %v1694
      %v1696 = vpop.f32.mrb[0].mxu0
      %v1697 = vpop.f32.mrb[0].mxu0
      %v1698 = vadd.f32 0.0, %v1697
      %v1699 = vpop.f32.mrb[0].mxu0
      %1700 = vmatprep.mubr.bf16.mxu0 0
      %1701 = vmatmul.mubr.bf16.gmra.mrb[0].mxu0 %v1625
      %v1702 = vpop.f32.mrb[0].mxu0
      %v1703 = vadd.f32 0.0, %v1702
      %v1704 = vpop.f32.mrb[0].mxu0
      %v1705 = vpop.f32.mrb[0].mxu0
      %v1706 = vadd.f32 0.0, %v1705
      %v1707 = vpop.f32.mrb[0].mxu0
      %1708 = vmatprep.mubr.bf16.mxu0 0
      %1709 = vmatmul.mubr.bf16.gmra.mrb[0].mxu0 %v1628
      %v1710 = vpop.f32.mrb[0].mxu0
      %v1711 = vadd.f32 0.0, %v1710
      %v1712 = vpop.f32.mrb[0].mxu0
      %v1713 = vpop.f32.mrb[0].mxu0
      %v1714 = vadd.f32 0.0, %v1713
      %v1715 = vpop.f32.mrb[0].mxu0
      %1716 = vmatprep.mubr.bf16.mxu0 0
      %1717 = vmatmul.mubr.bf16.gmra.mrb[0].mxu0 %v1631
      %v1718 = vpop.f32.mrb[0].mxu0
      %v1719 = vadd.f32 0.0, %v1718
      %v1720 = vpop.f32.mrb[0].mxu0
      %v1721 = vpop.f32.mrb[0].mxu0
      %v1722 = vadd.f32 0.0, %v1721
      %v1723 = vpop.f32.mrb[0].mxu0
      %1724 = vmatprep.mubr.bf16.mxu0 0
      %1725 = vmatmul.mubr.bf16.gmra.mrb[0].mxu0 %v1634
      %v1726 = vpop.f32.mrb[0].mxu0
      %v1727 = vadd.f32 0.0, %v1726
      %v1728 = vpop.f32.mrb[0].mxu0
      %v1729 = vpop.f32.mrb[0].mxu0
      %v1730 = vadd.f32 0.0, %v1729
      %v1731 = vpop.f32.mrb[0].mxu0
      %1732 = vdwg.mxu0
      %v1734 = vsel %vm717, %v533, 0
      %v1737 = vsel %vm717, %v534, 0
      %v1740 = vsel %vm717, %v535, 0
      %v1743 = vsel %vm717, %v536, 0
      %v1746 = vsel %vm717, %v537, 0
      %v1749 = vsel %vm717, %v538, 0
      %v1752 = vsel %vm717, %v539, 0
      %v1755 = vsel %vm717, %v540, 0
      %1757 = vmatprep.subr.bf16.mxu0 0
      %1758 = vmatpush1.bf16.msra.mxu0 %v1604
      %1759 = vmatprep.subr.bf16.mxu0 0
      %1760 = vmatpush1.bf16.msra.mxu0 %v1605
      %1761 = vmatprep.subr.bf16.mxu0 0
      %1762 = vmatpush1.bf16.msra.mxu0 %v1606
      %1763 = vmatprep.subr.bf16.mxu0 0
      %1764 = vmatpush1.bf16.msra.mxu0 %v1607
      %1765 = vmatprep.subr.bf16.mxu0 0
      %1766 = vmatpush1.bf16.msra.mxu0 0
      %1767 = vmatprep.subr.bf16.mxu0 0
      %1768 = vmatpush1.bf16.msra.mxu0 0
      %1769 = vmatprep.subr.bf16.mxu0 0
      %1770 = vmatpush1.bf16.msra.mxu0 0
      %1771 = vmatprep.subr.bf16.mxu0 0
      %1772 = vmatpush1.bf16.msra.mxu0 0
      %1773 = vmatprep.subr.bf16.mxu0 0
      %1774 = vmatpush1.bf16.msra.mxu0 0
      %1775 = vmatprep.subr.bf16.mxu0 0
      %1776 = vmatpush1.bf16.msra.mxu0 0
      %1777 = vmatprep.subr.bf16.mxu0 0
      %1778 = vmatpush1.bf16.msra.mxu0 0
      %1779 = vmatprep.subr.bf16.mxu0 0
      %1780 = vmatpush1.bf16.msra.mxu0 0
      %1781 = vmatprep.subr.bf16.mxu0 0
      %1782 = vmatpush1.bf16.msra.mxu0 0
      %1783 = vmatprep.subr.bf16.mxu0 0
      %1784 = vmatpush1.bf16.msra.mxu0 0
      %1785 = vmatprep.subr.bf16.mxu0 0
      %1786 = vmatpush1.bf16.msra.mxu0 0
      %1787 = vmatprep.subr.bf16.mxu0 0
      %1788 = vmatpush1.bf16.msra.mxu0 0
      %1789 = vmatprep.mubr.bf16.mxu0 0
      %1790 = vmatmul.mubr.bf16.gmra.mrb[0].mxu0 %v1734
      %v1791 = vpop.f32.mrb[0].mxu0
      %v1792 = vadd.f32 %v1671, %v1791
      %v1793 = vpop.f32.mrb[0].mxu0
      %v1794 = vpop.f32.mrb[0].mxu0
      %v1795 = vadd.f32 %v1674, %v1794
      %v1796 = vpop.f32.mrb[0].mxu0
      %1797 = vmatprep.mubr.bf16.mxu0 0
      %1798 = vmatmul.mubr.bf16.gmra.mrb[0].mxu0 %v1737
      %v1799 = vpop.f32.mrb[0].mxu0
      %v1800 = vadd.f32 %v1679, %v1799
      %v1801 = vpop.f32.mrb[0].mxu0
      %v1802 = vpop.f32.mrb[0].mxu0
      %v1803 = vadd.f32 %v1682, %v1802
      %v1804 = vpop.f32.mrb[0].mxu0
      %1805 = vmatprep.mubr.bf16.mxu0 0
      %1806 = vmatmul.mubr.bf16.gmra.mrb[0].mxu0 %v1740
      %v1807 = vpop.f32.mrb[0].mxu0
      %v1808 = vadd.f32 %v1687, %v1807
      %v1809 = vpop.f32.mrb[0].mxu0
      %v1810 = vpop.f32.mrb[0].mxu0
      %v1811 = vadd.f32 %v1690, %v1810
      %v1812 = vpop.f32.mrb[0].mxu0
      %1813 = vmatprep.mubr.bf16.mxu0 0
      %1814 = vmatmul.mubr.bf16.gmra.mrb[0].mxu0 %v1743
      %v1815 = vpop.f32.mrb[0].mxu0
      %v1816 = vadd.f32 %v1695, %v1815
      %v1817 = vpop.f32.mrb[0].mxu0
      %v1818 = vpop.f32.mrb[0].mxu0
      %v1819 = vadd.f32 %v1698, %v1818
      %v1820 = vpop.f32.mrb[0].mxu0
      %1821 = vmatprep.mubr.bf16.mxu0 0
      %1822 = vmatmul.mubr.bf16.gmra.mrb[0].mxu0 %v1746
      %v1823 = vpop.f32.mrb[0].mxu0
      %v1824 = vadd.f32 %v1703, %v1823
      %v1825 = vpop.f32.mrb[0].mxu0
      %v1826 = vpop.f32.mrb[0].mxu0
      %v1827 = vadd.f32 %v1706, %v1826
      %v1828 = vpop.f32.mrb[0].mxu0
      %1829 = vmatprep.mubr.bf16.mxu0 0
      %1830 = vmatmul.mubr.bf16.gmra.mrb[0].mxu0 %v1749
      %v1831 = vpop.f32.mrb[0].mxu0
      %v1832 = vadd.f32 %v1711, %v1831
      %v1833 = vpop.f32.mrb[0].mxu0
      %v1834 = vpop.f32.mrb[0].mxu0
      %v1835 = vadd.f32 %v1714, %v1834
      %v1836 = vpop.f32.mrb[0].mxu0
      %1837 = vmatprep.mubr.bf16.mxu0 0
      %1838 = vmatmul.mubr.bf16.gmra.mrb[0].mxu0 %v1752
      %v1839 = vpop.f32.mrb[0].mxu0
      %v1840 = vadd.f32 %v1719, %v1839
      %v1841 = vpop.f32.mrb[0].mxu0
      %v1842 = vpop.f32.mrb[0].mxu0
      %v1843 = vadd.f32 %v1722, %v1842
      %v1844 = vpop.f32.mrb[0].mxu0
      %1845 = vmatprep.mubr.bf16.mxu0 0
      %1846 = vmatmul.mubr.bf16.gmra.mrb[0].mxu0 %v1755
      %v1847 = vpop.f32.mrb[0].mxu0
      %v1848 = vadd.f32 %v1727, %v1847
      %v1849 = vpop.f32.mrb[0].mxu0
      %v1850 = vpop.f32.mrb[0].mxu0
      %v1851 = vadd.f32 %v1730, %v1850
      %v1852 = vpop.f32.mrb[0].mxu0
      %1853 = vdwg.mxu0
      %v1854 = vld [vmem:[%s5 + $0x40] sm:$0x1]
      %v1855 = vlaneseq
      %v1856 = vshrl.u32 %v1855, 7
      %v1857 = vsub.s32 0, %v1856
      %v1858 = vrot.slane %v1854, %v1857
      %v1859 = vmul.f32 %v1139, %v1858
      %v1860 = vmul.f32 %v1142, %v1858
      %v1861 = vmul.f32 %v1145, %v1858
      %v1862 = vmul.f32 %v1148, %v1858
      %v1863 = vmul.f32 %v1151, %v1858
      %v1864 = vmul.f32 %v1154, %v1858
      %v1865 = vmul.f32 %v1157, %v1858
      %v1866 = vmul.f32 %v1160, %v1858
      %v1867 = vmul.f32 %v1163, %v1858
      %v1868 = vmul.f32 %v1166, %v1858
      %v1869 = vmul.f32 %v1169, %v1858
      %v1870 = vmul.f32 %v1172, %v1858
      %v1871 = vmul.f32 %v1175, %v1858
      %v1872 = vmul.f32 %v1178, %v1858
      %v1873 = vmul.f32 %v1181, %v1858
      %v1874 = vmul.f32 %v1184, %v1858
      %v1875 = vadd.f32 %v1792, %v1859
      %v1876 = vadd.f32 %v1795, %v1860
      %v1877 = vadd.f32 %v1800, %v1861
      %v1878 = vadd.f32 %v1803, %v1862
      %v1879 = vadd.f32 %v1808, %v1863
      %v1880 = vadd.f32 %v1811, %v1864
      %v1881 = vadd.f32 %v1816, %v1865
      %v1882 = vadd.f32 %v1819, %v1866
      %v1883 = vadd.f32 %v1824, %v1867
      %v1884 = vadd.f32 %v1827, %v1868
      %v1885 = vadd.f32 %v1832, %v1869
      %v1886 = vadd.f32 %v1835, %v1870
      %v1887 = vadd.f32 %v1840, %v1871
      %v1888 = vadd.f32 %v1843, %v1872
      %v1889 = vadd.f32 %v1848, %v1873
      %v1890 = vadd.f32 %v1851, %v1874
      %v1891 = vld [vmem:[%s5 + $0x48] sm:$0xff]
      %v1892 = vld [vmem:[%s5 + $0x50] sm:$0xff]
      %v1893 = vld [vmem:[%s5 + $0x58] sm:$0xff]
      %v1894 = vld [vmem:[%s5 + $0x60] sm:$0x7f]
      %vm1895 = vcmask 252928
      %v1897 = vsel %vm1895, %v410, 0
      %v1900 = vsel %vm1895, %v411, 0
      %v1903 = vsel %vm1895, %v412, 0
      %v1906 = vsel %vm1895, %v413, 0
      %v1909 = vsel %vm1895, %v414, 0
      %v1912 = vsel %vm1895, %v415, 0
      %v1915 = vsel %vm1895, %v416, 0
      %v1918 = vsel %vm1895, %v417, 0
      %v1921 = vsel %vm1895, %v418, 0
      %v1924 = vsel %vm1895, %v419, 0
      %v1927 = vsel %vm1895, %v420, 0
      %v1930 = vsel %vm1895, %v421, 0
      %v1933 = vsel %vm1895, %v422, 0
      %v1936 = vsel %vm1895, %v423, 0
      %v1939 = vsel %vm1895, %v424, 0
      %v1942 = vsel %vm1895, %v425, 0
      %vm1944 = vcmask 1046528
      %v1946 = vsel %vm1944, %v1894, 0
      %1948 = vmatprep.subr.mxu0 0.0
      %1949 = vmatpush1.msra.mxu0 %v1891
      %1950 = vmatprep.subr.mxu0 0.0
      %1951 = vmatpush1.msra.mxu0 %v1892
      %1952 = vmatprep.subr.mxu0 0.0
      %1953 = vmatpush1.msra.mxu0 %v1893
      %1954 = vmatprep.subr.mxu0 0.0
      %1955 = vmatpush1.msra.mxu0 %v1946
      %1956 = vmatprep.subr.mxu0 0.0
      %1957 = vmatpush1.msra.mxu0 0.0
      %1958 = vmatprep.subr.mxu0 0.0
      %1959 = vmatpush1.msra.mxu0 0.0
      %1960 = vmatprep.subr.mxu0 0.0
      %1961 = vmatpush1.msra.mxu0 0.0
      %1962 = vmatprep.subr.mxu0 0.0
      %1963 = vmatpush1.msra.mxu0 0.0
      %1964 = vmatprep.subr.mxu0 0.0
      %1965 = vmatpush1.msra.mxu0 0.0
      %1966 = vmatprep.subr.mxu0 0.0
      %1967 = vmatpush1.msra.mxu0 0.0
      %1968 = vmatprep.subr.mxu0 0.0
      %1969 = vmatpush1.msra.mxu0 0.0
      %1970 = vmatprep.subr.mxu0 0.0
      %1971 = vmatpush1.msra.mxu0 0.0
      %1972 = vmatprep.subr.mxu0 0.0
      %1973 = vmatpush1.msra.mxu0 0.0
      %1974 = vmatprep.subr.mxu0 0.0
      %1975 = vmatpush1.msra.mxu0 0.0
      %1976 = vmatprep.subr.mxu0 0.0
      %1977 = vmatpush1.msra.mxu0 0.0
      %1978 = vmatprep.subr.mxu0 0.0
      %1979 = vmatpush1.msra.mxu0 0.0
      %1980 = vmatprep.subr.mxu0 0.0
      %1981 = vmatpush1.msra.mxu0 0.0
      %1982 = vmatprep.subr.mxu0 0.0
      %1983 = vmatpush1.msra.mxu0 0.0
      %1984 = vmatprep.subr.mxu0 0.0
      %1985 = vmatpush1.msra.mxu0 0.0
      %1986 = vmatprep.subr.mxu0 0.0
      %1987 = vmatpush1.msra.mxu0 0.0
      %1988 = vmatprep.subr.mxu0 0.0
      %1989 = vmatpush1.msra.mxu0 0.0
      %1990 = vmatprep.subr.mxu0 0.0
      %1991 = vmatpush1.msra.mxu0 0.0
      %1992 = vmatprep.subr.mxu0 0.0
      %1993 = vmatpush1.msra.mxu0 0.0
      %1994 = vmatprep.subr.mxu0 0.0
      %1995 = vmatpush1.msra.mxu0 0.0
      %1996 = vmatprep.subr.mxu0 0.0
      %1997 = vmatpush1.msra.mxu0 0.0
      %1998 = vmatprep.subr.mxu0 0.0
      %1999 = vmatpush1.msra.mxu0 0.0
      %2000 = vmatprep.subr.mxu0 0.0
      %2001 = vmatpush1.msra.mxu0 0.0
      %2002 = vmatprep.subr.mxu0 0.0
      %2003 = vmatpush1.msra.mxu0 0.0
      %2004 = vmatprep.subr.mxu0 0.0
      %2005 = vmatpush1.msra.mxu0 0.0
      %2006 = vmatprep.subr.mxu0 0.0
      %2007 = vmatpush1.msra.mxu0 0.0
      %2008 = vmatprep.subr.mxu0 0.0
      %2009 = vmatpush1.msra.mxu0 0.0
      %2010 = vmatprep.subr.mxu0 0.0
      %2011 = vmatpush1.msra.mxu0 0.0
      %2012 = vmatprep.mubr.f32.mxu0 0.0
      %2013 = vmatmul.mubr.f32.gmra.mrb[0].mxu0 %v1897
      %v2014 = vpop.f32.mrb[0].mxu0
      %v2015 = vadd.f32 0.0, %v2014
      %v2016 = vpop.f32.mrb[0].mxu0
      %2017 = vmatprep.mubr.f32.mxu0 0.0
      %2018 = vmatmul.mubr.f32.gmra.mrb[0].mxu0 %v1900
      %v2019 = vpop.f32.mrb[0].mxu0
      %v2020 = vadd.f32 0.0, %v2019
      %v2021 = vpop.f32.mrb[0].mxu0
      %2022 = vmatprep.mubr.f32.mxu0 0.0
      %2023 = vmatmul.mubr.f32.gmra.mrb[0].mxu0 %v1903
      %v2024 = vpop.f32.mrb[0].mxu0
      %v2025 = vadd.f32 0.0, %v2024
      %v2026 = vpop.f32.mrb[0].mxu0
      %2027 = vmatprep.mubr.f32.mxu0 0.0
      %2028 = vmatmul.mubr.f32.gmra.mrb[0].mxu0 %v1906
      %v2029 = vpop.f32.mrb[0].mxu0
      %v2030 = vadd.f32 0.0, %v2029
      %v2031 = vpop.f32.mrb[0].mxu0
      %2032 = vmatprep.mubr.f32.mxu0 0.0
      %2033 = vmatmul.mubr.f32.gmra.mrb[0].mxu0 %v1909
      %v2034 = vpop.f32.mrb[0].mxu0
      %v2035 = vadd.f32 0.0, %v2034
      %v2036 = vpop.f32.mrb[0].mxu0
      %2037 = vmatprep.mubr.f32.mxu0 0.0
      %2038 = vmatmul.mubr.f32.gmra.mrb[0].mxu0 %v1912
      %v2039 = vpop.f32.mrb[0].mxu0
      %v2040 = vadd.f32 0.0, %v2039
      %v2041 = vpop.f32.mrb[0].mxu0
      %2042 = vmatprep.mubr.f32.mxu0 0.0
      %2043 = vmatmul.mubr.f32.gmra.mrb[0].mxu0 %v1915
      %v2044 = vpop.f32.mrb[0].mxu0
      %v2045 = vadd.f32 0.0, %v2044
      %v2046 = vpop.f32.mrb[0].mxu0
      %2047 = vmatprep.mubr.f32.mxu0 0.0
      %2048 = vmatmul.mubr.f32.gmra.mrb[0].mxu0 %v1918
      %v2049 = vpop.f32.mrb[0].mxu0
      %v2050 = vadd.f32 0.0, %v2049
      %v2051 = vpop.f32.mrb[0].mxu0
      %2052 = vmatprep.mubr.f32.mxu0 0.0
      %2053 = vmatmul.mubr.f32.gmra.mrb[0].mxu0 %v1921
      %v2054 = vpop.f32.mrb[0].mxu0
      %v2055 = vadd.f32 0.0, %v2054
      %v2056 = vpop.f32.mrb[0].mxu0
      %2057 = vmatprep.mubr.f32.mxu0 0.0
      %2058 = vmatmul.mubr.f32.gmra.mrb[0].mxu0 %v1924
      %v2059 = vpop.f32.mrb[0].mxu0
      %v2060 = vadd.f32 0.0, %v2059
      %v2061 = vpop.f32.mrb[0].mxu0
      %2062 = vmatprep.mubr.f32.mxu0 0.0
      %2063 = vmatmul.mubr.f32.gmra.mrb[0].mxu0 %v1927
      %v2064 = vpop.f32.mrb[0].mxu0
      %v2065 = vadd.f32 0.0, %v2064
      %v2066 = vpop.f32.mrb[0].mxu0
      %2067 = vmatprep.mubr.f32.mxu0 0.0
      %2068 = vmatmul.mubr.f32.gmra.mrb[0].mxu0 %v1930
      %v2069 = vpop.f32.mrb[0].mxu0
      %v2070 = vadd.f32 0.0, %v2069
      %v2071 = vpop.f32.mrb[0].mxu0
      %2072 = vmatprep.mubr.f32.mxu0 0.0
      %2073 = vmatmul.mubr.f32.gmra.mrb[0].mxu0 %v1933
      %v2074 = vpop.f32.mrb[0].mxu0
      %v2075 = vadd.f32 0.0, %v2074
      %v2076 = vpop.f32.mrb[0].mxu0
      %2077 = vmatprep.mubr.f32.mxu0 0.0
      %2078 = vmatmul.mubr.f32.gmra.mrb[0].mxu0 %v1936
      %v2079 = vpop.f32.mrb[0].mxu0
      %v2080 = vadd.f32 0.0, %v2079
      %v2081 = vpop.f32.mrb[0].mxu0
      %2082 = vmatprep.mubr.f32.mxu0 0.0
      %2083 = vmatmul.mubr.f32.gmra.mrb[0].mxu0 %v1939
      %v2084 = vpop.f32.mrb[0].mxu0
      %v2085 = vadd.f32 0.0, %v2084
      %v2086 = vpop.f32.mrb[0].mxu0
      %2087 = vmatprep.mubr.f32.mxu0 0.0
      %2088 = vmatmul.mubr.f32.gmra.mrb[0].mxu0 %v1942
      %v2089 = vpop.f32.mrb[0].mxu0
      %v2090 = vadd.f32 0.0, %v2089
      %v2091 = vpop.f32.mrb[0].mxu0
      %2092 = vdwg.mxu0
      %v2093 = vadd.f32 %v1875, %v2015
      %v2094 = vadd.f32 %v1876, %v2020
      %v2095 = vadd.f32 %v1877, %v2025
      %v2096 = vadd.f32 %v1878, %v2030
      %v2097 = vadd.f32 %v1879, %v2035
      %v2098 = vadd.f32 %v1880, %v2040
      %v2099 = vadd.f32 %v1881, %v2045
      %v2100 = vadd.f32 %v1882, %v2050
      %v2101 = vadd.f32 %v1883, %v2055
      %v2102 = vadd.f32 %v1884, %v2060
      %v2103 = vadd.f32 %v1885, %v2065
      %v2104 = vadd.f32 %v1886, %v2070
      %v2105 = vadd.f32 %v1887, %v2075
      %v2106 = vadd.f32 %v1888, %v2080
      %v2107 = vadd.f32 %v1889, %v2085
      %v2108 = vadd.f32 %v1890, %v2090
      %v2109 = vld [vmem:[%s5 + $0x68] sm:$0x1]
      %v2110 = vlaneseq
      %v2111 = vshrl.u32 %v2110, 7
      %v2112 = vsub.s32 0, %v2111
      %v2113 = vrot.slane %v2109, %v2112
      %v2114 = vadd.f32 %v2093, %v2113
      %v2115 = vadd.f32 %v2094, %v2113
      %v2116 = vadd.f32 %v2095, %v2113
      %v2117 = vadd.f32 %v2096, %v2113
      %v2118 = vadd.f32 %v2097, %v2113
      %v2119 = vadd.f32 %v2098, %v2113
      %v2120 = vadd.f32 %v2099, %v2113
      %v2121 = vadd.f32 %v2100, %v2113
      %v2122 = vadd.f32 %v2101, %v2113
      %v2123 = vadd.f32 %v2102, %v2113
      %v2124 = vadd.f32 %v2103, %v2113
      %v2125 = vadd.f32 %v2104, %v2113
      %v2126 = vadd.f32 %v2105, %v2113
      %v2127 = vadd.f32 %v2106, %v2113
      %v2128 = vadd.f32 %v2107, %v2113
      %v2129 = vadd.f32 %v2108, %v2113
      %v2130 = vmul.f32 %v2114, 0.5
      %v2131 = vmul.f32 %v2115, 0.5
      %v2132 = vmul.f32 %v2116, 0.5
      %v2133 = vmul.f32 %v2117, 0.5
      %v2134 = vmul.f32 %v2118, 0.5
      %v2135 = vmul.f32 %v2119, 0.5
      %v2136 = vmul.f32 %v2120, 0.5
      %v2137 = vmul.f32 %v2121, 0.5
      %v2138 = vmul.f32 %v2122, 0.5
      %v2139 = vmul.f32 %v2123, 0.5
      %v2140 = vmul.f32 %v2124, 0.5
      %v2141 = vmul.f32 %v2125, 0.5
      %v2142 = vmul.f32 %v2126, 0.5
      %v2143 = vmul.f32 %v2127, 0.5
      %v2144 = vmul.f32 %v2128, 0.5
      %v2145 = vmul.f32 %v2129, 0.5
      %v2146 = vtanh.pop %v2130
      %v2147 = vtanh.pop %v2131
      %v2148 = vtanh.pop %v2132
      %v2149 = vtanh.pop %v2133
      %v2150 = vtanh.pop %v2134
      %v2151 = vtanh.pop %v2135
      %v2152 = vtanh.pop %v2136
      %v2153 = vtanh.pop %v2137
      %v2154 = vtanh.pop %v2138
      %v2155 = vtanh.pop %v2139
      %v2156 = vtanh.pop %v2140
      %v2157 = vtanh.pop %v2141
      %v2158 = vtanh.pop %v2142
      %v2159 = vtanh.pop %v2143
      %v2160 = vtanh.pop %v2144
      %v2161 = vtanh.pop %v2145
      %v2162 = vmul.f32 %v2146, 0.5
      %v2163 = vmul.f32 %v2147, 0.5
      %v2164 = vmul.f32 %v2148, 0.5
      %v2165 = vmul.f32 %v2149, 0.5
      %v2166 = vmul.f32 %v2150, 0.5
      %v2167 = vmul.f32 %v2151, 0.5
      %v2168 = vmul.f32 %v2152, 0.5
      %v2169 = vmul.f32 %v2153, 0.5
      %v2170 = vmul.f32 %v2154, 0.5
      %v2171 = vmul.f32 %v2155, 0.5
      %v2172 = vmul.f32 %v2156, 0.5
      %v2173 = vmul.f32 %v2157, 0.5
      %v2174 = vmul.f32 %v2158, 0.5
      %v2175 = vmul.f32 %v2159, 0.5
      %v2176 = vmul.f32 %v2160, 0.5
      %v2177 = vmul.f32 %v2161, 0.5
      %v2178 = vadd.f32 %v2162, 0.5
      %v2179 = vadd.f32 %v2163, 0.5
      %v2180 = vadd.f32 %v2164, 0.5
      %v2181 = vadd.f32 %v2165, 0.5
      %v2182 = vadd.f32 %v2166, 0.5
      %v2183 = vadd.f32 %v2167, 0.5
      %v2184 = vadd.f32 %v2168, 0.5
      %v2185 = vadd.f32 %v2169, 0.5
      %v2186 = vadd.f32 %v2170, 0.5
      %v2187 = vadd.f32 %v2171, 0.5
      %v2188 = vadd.f32 %v2172, 0.5
      %v2189 = vadd.f32 %v2173, 0.5
      %v2190 = vadd.f32 %v2174, 0.5
      %v2191 = vadd.f32 %v2175, 0.5
      %v2192 = vadd.f32 %v2176, 0.5
      %v2193 = vadd.f32 %v2177, 0.5
      %v2194 = vmul.f32 %v2114, %v2178
      %v2195 = vmul.f32 %v2115, %v2179
      %v2196 = vmul.f32 %v2116, %v2180
      %v2197 = vmul.f32 %v2117, %v2181
      %v2198 = vmul.f32 %v2118, %v2182
      %v2199 = vmul.f32 %v2119, %v2183
      %v2200 = vmul.f32 %v2120, %v2184
      %v2201 = vmul.f32 %v2121, %v2185
      %v2202 = vmul.f32 %v2122, %v2186
      %v2203 = vmul.f32 %v2123, %v2187
      %v2204 = vmul.f32 %v2124, %v2188
      %v2205 = vmul.f32 %v2125, %v2189
      %v2206 = vmul.f32 %v2126, %v2190
      %v2207 = vmul.f32 %v2127, %v2191
      %v2208 = vmul.f32 %v2128, %v2192
      %v2209 = vmul.f32 %v2129, %v2193
      %v2210 = vld [vmem:[%s5 + $0x70] sm:$0xff]
      %v2211 = vld [vmem:[%s5 + $0x78] sm:$0xff]
      %v2212 = vld [vmem:[%s5 + $0x80] sm:$0xff]
      %v2213 = vld [vmem:[%s5 + $0x88] sm:$0xff]
      %v2214 = vld [vmem:[%s5 + $0x90] sm:$0x1]
      %v2215 = vlaneseq
      %v2216 = vshrl.u32 %v2215, 7
      %v2217 = vsub.s32 0, %v2216
      %v2218 = vrot.slane %v2214, %v2217
      %v2220 = vsel %vm1365, %v2194, 0
      %v2223 = vsel %vm1365, %v2195, 0
      %v2226 = vsel %vm1365, %v2196, 0
      %v2229 = vsel %vm1365, %v2197, 0
      %v2232 = vsel %vm1365, %v2198, 0
      %v2235 = vsel %vm1365, %v2199, 0
      %v2238 = vsel %vm1365, %v2200, 0
      %v2241 = vsel %vm1365, %v2201, 0
      %v2244 = vsel %vm1365, %v2202, 0
      %v2247 = vsel %vm1365, %v2203, 0
      %v2250 = vsel %vm1365, %v2204, 0
      %v2253 = vsel %vm1365, %v2205, 0
      %v2256 = vsel %vm1365, %v2206, 0
      %v2259 = vsel %vm1365, %v2207, 0
      %v2262 = vsel %vm1365, %v2208, 0
      %v2265 = vsel %vm1365, %v2209, 0
      %2267 = vmatprep.subr.mxu0 0.0
      %2268 = vmatpush1.msra.mxu0 %v2210
      %2269 = vmatprep.subr.mxu0 0.0
      %2270 = vmatpush1.msra.mxu0 %v2211
      %2271 = vmatprep.subr.mxu0 0.0
      %2272 = vmatpush1.msra.mxu0 %v2212
      %2273 = vmatprep.subr.mxu0 0.0
      %2274 = vmatpush1.msra.mxu0 %v2213
      %2275 = vmatprep.subr.mxu0 0.0
      %2276 = vmatpush1.msra.mxu0 0.0
      %2277 = vmatprep.subr.mxu0 0.0
      %2278 = vmatpush1.msra.mxu0 0.0
      %2279 = vmatprep.subr.mxu0 0.0
      %2280 = vmatpush1.msra.mxu0 0.0
      %2281 = vmatprep.subr.mxu0 0.0
      %2282 = vmatpush1.msra.mxu0 0.0
      %2283 = vmatprep.subr.mxu0 0.0
      %2284 = vmatpush1.msra.mxu0 0.0
      %2285 = vmatprep.subr.mxu0 0.0
      %2286 = vmatpush1.msra.mxu0 0.0
      %2287 = vmatprep.subr.mxu0 0.0
      %2288 = vmatpush1.msra.mxu0 0.0
      %2289 = vmatprep.subr.mxu0 0.0
      %2290 = vmatpush1.msra.mxu0 0.0
      %2291 = vmatprep.subr.mxu0 0.0
      %2292 = vmatpush1.msra.mxu0 0.0
      %2293 = vmatprep.subr.mxu0 0.0
      %2294 = vmatpush1.msra.mxu0 0.0
      %2295 = vmatprep.subr.mxu0 0.0
      %2296 = vmatpush1.msra.mxu0 0.0
      %2297 = vmatprep.subr.mxu0 0.0
      %2298 = vmatpush1.msra.mxu0 0.0
      %2299 = vmatprep.subr.mxu0 0.0
      %2300 = vmatpush1.msra.mxu0 0.0
      %2301 = vmatprep.subr.mxu0 0.0
      %2302 = vmatpush1.msra.mxu0 0.0
      %2303 = vmatprep.subr.mxu0 0.0
      %2304 = vmatpush1.msra.mxu0 0.0
      %2305 = vmatprep.subr.mxu0 0.0
      %2306 = vmatpush1.msra.mxu0 0.0
      %2307 = vmatprep.subr.mxu0 0.0
      %2308 = vmatpush1.msra.mxu0 0.0
      %2309 = vmatprep.subr.mxu0 0.0
      %2310 = vmatpush1.msra.mxu0 0.0
      %2311 = vmatprep.subr.mxu0 0.0
      %2312 = vmatpush1.msra.mxu0 0.0
      %2313 = vmatprep.subr.mxu0 0.0
      %2314 = vmatpush1.msra.mxu0 0.0
      %2315 = vmatprep.subr.mxu0 0.0
      %2316 = vmatpush1.msra.mxu0 0.0
      %2317 = vmatprep.subr.mxu0 0.0
      %2318 = vmatpush1.msra.mxu0 0.0
      %2319 = vmatprep.subr.mxu0 0.0
      %2320 = vmatpush1.msra.mxu0 0.0
      %2321 = vmatprep.subr.mxu0 0.0
      %2322 = vmatpush1.msra.mxu0 0.0
      %2323 = vmatprep.subr.mxu0 0.0
      %2324 = vmatpush1.msra.mxu0 0.0
      %2325 = vmatprep.subr.mxu0 0.0
      %2326 = vmatpush1.msra.mxu0 0.0
      %2327 = vmatprep.subr.mxu0 0.0
      %2328 = vmatpush1.msra.mxu0 0.0
      %2329 = vmatprep.subr.mxu0 0.0
      %2330 = vmatpush1.msra.mxu0 0.0
      %2331 = vmatprep.mubr.f32.mxu0 0.0
      %2332 = vmatmul.mubr.f32.gmra.mrb[0].mxu0 %v2220
      %v2333 = vpop.f32.mrb[0].mxu0
      %v2334 = vadd.f32 %v2218, %v2333
      %v2335 = vpop.f32.mrb[0].mxu0
      %2336 = vmatprep.mubr.f32.mxu0 0.0
      %2337 = vmatmul.mubr.f32.gmra.mrb[0].mxu0 %v2223
      %v2338 = vpop.f32.mrb[0].mxu0
      %v2339 = vadd.f32 %v2218, %v2338
      %v2340 = vpop.f32.mrb[0].mxu0
      %2341 = vmatprep.mubr.f32.mxu0 0.0
      %2342 = vmatmul.mubr.f32.gmra.mrb[0].mxu0 %v2226
      %v2343 = vpop.f32.mrb[0].mxu0
      %v2344 = vadd.f32 %v2218, %v2343
      %v2345 = vpop.f32.mrb[0].mxu0
      %2346 = vmatprep.mubr.f32.mxu0 0.0
      %2347 = vmatmul.mubr.f32.gmra.mrb[0].mxu0 %v2229
      %v2348 = vpop.f32.mrb[0].mxu0
      %v2349 = vadd.f32 %v2218, %v2348
      %v2350 = vpop.f32.mrb[0].mxu0
      %2351 = vmatprep.mubr.f32.mxu0 0.0
      %2352 = vmatmul.mubr.f32.gmra.mrb[0].mxu0 %v2232
      %v2353 = vpop.f32.mrb[0].mxu0
      %v2354 = vadd.f32 %v2218, %v2353
      %v2355 = vpop.f32.mrb[0].mxu0
      %2356 = vmatprep.mubr.f32.mxu0 0.0
      %2357 = vmatmul.mubr.f32.gmra.mrb[0].mxu0 %v2235
      %v2358 = vpop.f32.mrb[0].mxu0
      %v2359 = vadd.f32 %v2218, %v2358
      %v2360 = vpop.f32.mrb[0].mxu0
      %2361 = vmatprep.mubr.f32.mxu0 0.0
      %2362 = vmatmul.mubr.f32.gmra.mrb[0].mxu0 %v2238
      %v2363 = vpop.f32.mrb[0].mxu0
      %v2364 = vadd.f32 %v2218, %v2363
      %v2365 = vpop.f32.mrb[0].mxu0
      %2366 = vmatprep.mubr.f32.mxu0 0.0
      %2367 = vmatmul.mubr.f32.gmra.mrb[0].mxu0 %v2241
      %v2368 = vpop.f32.mrb[0].mxu0
      %v2369 = vadd.f32 %v2218, %v2368
      %v2370 = vpop.f32.mrb[0].mxu0
      %2371 = vmatprep.mubr.f32.mxu0 0.0
      %2372 = vmatmul.mubr.f32.gmra.mrb[0].mxu0 %v2244
      %v2373 = vpop.f32.mrb[0].mxu0
      %v2374 = vadd.f32 %v2218, %v2373
      %v2375 = vpop.f32.mrb[0].mxu0
      %2376 = vmatprep.mubr.f32.mxu0 0.0
      %2377 = vmatmul.mubr.f32.gmra.mrb[0].mxu0 %v2247
      %v2378 = vpop.f32.mrb[0].mxu0
      %v2379 = vadd.f32 %v2218, %v2378
      %v2380 = vpop.f32.mrb[0].mxu0
      %2381 = vmatprep.mubr.f32.mxu0 0.0
      %2382 = vmatmul.mubr.f32.gmra.mrb[0].mxu0 %v2250
      %v2383 = vpop.f32.mrb[0].mxu0
      %v2384 = vadd.f32 %v2218, %v2383
      %v2385 = vpop.f32.mrb[0].mxu0
      %2386 = vmatprep.mubr.f32.mxu0 0.0
      %2387 = vmatmul.mubr.f32.gmra.mrb[0].mxu0 %v2253
      %v2388 = vpop.f32.mrb[0].mxu0
      %v2389 = vadd.f32 %v2218, %v2388
      %v2390 = vpop.f32.mrb[0].mxu0
      %2391 = vmatprep.mubr.f32.mxu0 0.0
      %2392 = vmatmul.mubr.f32.gmra.mrb[0].mxu0 %v2256
      %v2393 = vpop.f32.mrb[0].mxu0
      %v2394 = vadd.f32 %v2218, %v2393
      %v2395 = vpop.f32.mrb[0].mxu0
      %2396 = vmatprep.mubr.f32.mxu0 0.0
      %2397 = vmatmul.mubr.f32.gmra.mrb[0].mxu0 %v2259
      %v2398 = vpop.f32.mrb[0].mxu0
      %v2399 = vadd.f32 %v2218, %v2398
      %v2400 = vpop.f32.mrb[0].mxu0
      %2401 = vmatprep.mubr.f32.mxu0 0.0
      %2402 = vmatmul.mubr.f32.gmra.mrb[0].mxu0 %v2262
      %v2403 = vpop.f32.mrb[0].mxu0
      %v2404 = vadd.f32 %v2218, %v2403
      %v2405 = vpop.f32.mrb[0].mxu0
      %2406 = vmatprep.mubr.f32.mxu0 0.0
      %2407 = vmatmul.mubr.f32.gmra.mrb[0].mxu0 %v2265
      %v2408 = vpop.f32.mrb[0].mxu0
      %v2409 = vadd.f32 %v2218, %v2408
      %v2410 = vpop.f32.mrb[0].mxu0
      %2411 = vdwg.mxu0
      %v2412 = vmul.f32 %v2334, 0.5
      %v2413 = vmul.f32 %v2339, 0.5
      %v2414 = vmul.f32 %v2344, 0.5
      %v2415 = vmul.f32 %v2349, 0.5
      %v2416 = vmul.f32 %v2354, 0.5
      %v2417 = vmul.f32 %v2359, 0.5
      %v2418 = vmul.f32 %v2364, 0.5
      %v2419 = vmul.f32 %v2369, 0.5
      %v2420 = vmul.f32 %v2374, 0.5
      %v2421 = vmul.f32 %v2379, 0.5
      %v2422 = vmul.f32 %v2384, 0.5
      %v2423 = vmul.f32 %v2389, 0.5
      %v2424 = vmul.f32 %v2394, 0.5
      %v2425 = vmul.f32 %v2399, 0.5
      %v2426 = vmul.f32 %v2404, 0.5
      %v2427 = vmul.f32 %v2409, 0.5
      %v2428 = vtanh.pop %v2412
      %v2429 = vtanh.pop %v2413
      %v2430 = vtanh.pop %v2414
      %v2431 = vtanh.pop %v2415
      %v2432 = vtanh.pop %v2416
      %v2433 = vtanh.pop %v2417
      %v2434 = vtanh.pop %v2418
      %v2435 = vtanh.pop %v2419
      %v2436 = vtanh.pop %v2420
      %v2437 = vtanh.pop %v2421
      %v2438 = vtanh.pop %v2422
      %v2439 = vtanh.pop %v2423
      %v2440 = vtanh.pop %v2424
      %v2441 = vtanh.pop %v2425
      %v2442 = vtanh.pop %v2426
      %v2443 = vtanh.pop %v2427
      %v2444 = vmul.f32 %v2428, 0.5
      %v2445 = vmul.f32 %v2429, 0.5
      %v2446 = vmul.f32 %v2430, 0.5
      %v2447 = vmul.f32 %v2431, 0.5
      %v2448 = vmul.f32 %v2432, 0.5
      %v2449 = vmul.f32 %v2433, 0.5
      %v2450 = vmul.f32 %v2434, 0.5
      %v2451 = vmul.f32 %v2435, 0.5
      %v2452 = vmul.f32 %v2436, 0.5
      %v2453 = vmul.f32 %v2437, 0.5
      %v2454 = vmul.f32 %v2438, 0.5
      %v2455 = vmul.f32 %v2439, 0.5
      %v2456 = vmul.f32 %v2440, 0.5
      %v2457 = vmul.f32 %v2441, 0.5
      %v2458 = vmul.f32 %v2442, 0.5
      %v2459 = vmul.f32 %v2443, 0.5
      %v2460 = vadd.f32 %v2444, 0.5
      %v2461 = vadd.f32 %v2445, 0.5
      %v2462 = vadd.f32 %v2446, 0.5
      %v2463 = vadd.f32 %v2447, 0.5
      %v2464 = vadd.f32 %v2448, 0.5
      %v2465 = vadd.f32 %v2449, 0.5
      %v2466 = vadd.f32 %v2450, 0.5
      %v2467 = vadd.f32 %v2451, 0.5
      %v2468 = vadd.f32 %v2452, 0.5
      %v2469 = vadd.f32 %v2453, 0.5
      %v2470 = vadd.f32 %v2454, 0.5
      %v2471 = vadd.f32 %v2455, 0.5
      %v2472 = vadd.f32 %v2456, 0.5
      %v2473 = vadd.f32 %v2457, 0.5
      %v2474 = vadd.f32 %v2458, 0.5
      %v2475 = vadd.f32 %v2459, 0.5
      %v2476 = vmul.f32 %v2334, %v2460
      %v2477 = vmul.f32 %v2339, %v2461
      %v2478 = vmul.f32 %v2344, %v2462
      %v2479 = vmul.f32 %v2349, %v2463
      %v2480 = vmul.f32 %v2354, %v2464
      %v2481 = vmul.f32 %v2359, %v2465
      %v2482 = vmul.f32 %v2364, %v2466
      %v2483 = vmul.f32 %v2369, %v2467
      %v2484 = vmul.f32 %v2374, %v2468
      %v2485 = vmul.f32 %v2379, %v2469
      %v2486 = vmul.f32 %v2384, %v2470
      %v2487 = vmul.f32 %v2389, %v2471
      %v2488 = vmul.f32 %v2394, %v2472
      %v2489 = vmul.f32 %v2399, %v2473
      %v2490 = vmul.f32 %v2404, %v2474
      %v2491 = vmul.f32 %v2409, %v2475
      %v2492 = vld [vmem:[%s5 + $0x98] sm:$0x1]
      %v2493 = vlaneseq
      %v2494 = vshrl.u32 %v2493, 7
      %v2495 = vsub.s32 0, %v2494
      %v2496 = vrot.slane %v2492, %v2495
      %v2497 = vmul.f32 %v2476, %v2496
      %v2498 = vmul.f32 %v2477, %v2496
      %v2499 = vmul.f32 %v2478, %v2496
      %v2500 = vmul.f32 %v2479, %v2496
      %v2501 = vmul.f32 %v2480, %v2496
      %v2502 = vmul.f32 %v2481, %v2496
      %v2503 = vmul.f32 %v2482, %v2496
      %v2504 = vmul.f32 %v2483, %v2496
      %v2505 = vmul.f32 %v2484, %v2496
      %v2506 = vmul.f32 %v2485, %v2496
      %v2507 = vmul.f32 %v2486, %v2496
      %v2508 = vmul.f32 %v2487, %v2496
      %v2509 = vmul.f32 %v2488, %v2496
      %v2510 = vmul.f32 %v2489, %v2496
      %v2511 = vmul.f32 %v2490, %v2496
      %v2512 = vmul.f32 %v2491, %v2496
      %v2513 = vsel %vm1365, %v2497, 0.0
      %2514 = vadd.xlane.f32.xlu0 %v2513
      %v2515 = vpop.xlane.xlu0 %2514
      %v2516 = vsel %vm1365, %v2498, 0.0
      %2517 = vadd.xlane.f32.xlu0 %v2516
      %v2518 = vpop.xlane.xlu0 %2517
      %v2519 = vsel %vm1365, %v2499, 0.0
      %2520 = vadd.xlane.f32.xlu0 %v2519
      %v2521 = vpop.xlane.xlu0 %2520
      %v2522 = vsel %vm1365, %v2500, 0.0
      %2523 = vadd.xlane.f32.xlu0 %v2522
      %v2524 = vpop.xlane.xlu0 %2523
      %v2525 = vsel %vm1365, %v2501, 0.0
      %2526 = vadd.xlane.f32.xlu0 %v2525
      %v2527 = vpop.xlane.xlu0 %2526
      %v2528 = vsel %vm1365, %v2502, 0.0
      %2529 = vadd.xlane.f32.xlu0 %v2528
      %v2530 = vpop.xlane.xlu0 %2529
      %v2531 = vsel %vm1365, %v2503, 0.0
      %2532 = vadd.xlane.f32.xlu0 %v2531
      %v2533 = vpop.xlane.xlu0 %2532
      %v2534 = vsel %vm1365, %v2504, 0.0
      %2535 = vadd.xlane.f32.xlu0 %v2534
      %v2536 = vpop.xlane.xlu0 %2535
      %v2537 = vsel %vm1365, %v2505, 0.0
      %2538 = vadd.xlane.f32.xlu0 %v2537
      %v2539 = vpop.xlane.xlu0 %2538
      %v2540 = vsel %vm1365, %v2506, 0.0
      %2541 = vadd.xlane.f32.xlu0 %v2540
      %v2542 = vpop.xlane.xlu0 %2541
      %v2543 = vsel %vm1365, %v2507, 0.0
      %2544 = vadd.xlane.f32.xlu0 %v2543
      %v2545 = vpop.xlane.xlu0 %2544
      %v2546 = vsel %vm1365, %v2508, 0.0
      %2547 = vadd.xlane.f32.xlu0 %v2546
      %v2548 = vpop.xlane.xlu0 %2547
      %v2549 = vsel %vm1365, %v2509, 0.0
      %2550 = vadd.xlane.f32.xlu0 %v2549
      %v2551 = vpop.xlane.xlu0 %2550
      %v2552 = vsel %vm1365, %v2510, 0.0
      %2553 = vadd.xlane.f32.xlu0 %v2552
      %v2554 = vpop.xlane.xlu0 %2553
      %v2555 = vsel %vm1365, %v2511, 0.0
      %2556 = vadd.xlane.f32.xlu0 %v2555
      %v2557 = vpop.xlane.xlu0 %2556
      %v2558 = vsel %vm1365, %v2512, 0.0
      %2559 = vadd.xlane.f32.xlu0 %v2558
      %v2560 = vpop.xlane.xlu0 %2559
      %v2561 = vld [vmem:[%s5 + $0xa0] sm:$0x1]
      %v2562 = vlaneseq
      %v2563 = vshrl.u32 %v2562, 7
      %v2564 = vsub.s32 0, %v2563
      %v2565 = vrot.slane %v2561, %v2564
      %v2566 = vadd.f32 %v2515, %v2565
      %v2567 = vadd.f32 %v2518, %v2565
      %v2568 = vadd.f32 %v2521, %v2565
      %v2569 = vadd.f32 %v2524, %v2565
      %v2570 = vadd.f32 %v2527, %v2565
      %v2571 = vadd.f32 %v2530, %v2565
      %v2572 = vadd.f32 %v2533, %v2565
      %v2573 = vadd.f32 %v2536, %v2565
      %v2574 = vadd.f32 %v2539, %v2565
      %v2575 = vadd.f32 %v2542, %v2565
      %v2576 = vadd.f32 %v2545, %v2565
      %v2577 = vadd.f32 %v2548, %v2565
      %v2578 = vadd.f32 %v2551, %v2565
      %v2579 = vadd.f32 %v2554, %v2565
      %v2580 = vadd.f32 %v2557, %v2565
      %v2581 = vadd.f32 %v2560, %v2565
      %v2582 = vmul.f32 %v2566, 0.5
      %v2583 = vmul.f32 %v2567, 0.5
      %v2584 = vmul.f32 %v2568, 0.5
      %v2585 = vmul.f32 %v2569, 0.5
      %v2586 = vmul.f32 %v2570, 0.5
      %v2587 = vmul.f32 %v2571, 0.5
      %v2588 = vmul.f32 %v2572, 0.5
      %v2589 = vmul.f32 %v2573, 0.5
      %v2590 = vmul.f32 %v2574, 0.5
      %v2591 = vmul.f32 %v2575, 0.5
      %v2592 = vmul.f32 %v2576, 0.5
      %v2593 = vmul.f32 %v2577, 0.5
      %v2594 = vmul.f32 %v2578, 0.5
      %v2595 = vmul.f32 %v2579, 0.5
      %v2596 = vmul.f32 %v2580, 0.5
      %v2597 = vmul.f32 %v2581, 0.5
      %v2598 = vtanh.pop %v2582
      %v2599 = vtanh.pop %v2583
      %v2600 = vtanh.pop %v2584
      %v2601 = vtanh.pop %v2585
      %v2602 = vtanh.pop %v2586
      %v2603 = vtanh.pop %v2587
      %v2604 = vtanh.pop %v2588
      %v2605 = vtanh.pop %v2589
      %v2606 = vtanh.pop %v2590
      %v2607 = vtanh.pop %v2591
      %v2608 = vtanh.pop %v2592
      %v2609 = vtanh.pop %v2593
      %v2610 = vtanh.pop %v2594
      %v2611 = vtanh.pop %v2595
      %v2612 = vtanh.pop %v2596
      %v2613 = vtanh.pop %v2597
      %v2614 = vmul.f32 %v2598, 0.5
      %v2615 = vmul.f32 %v2599, 0.5
      %v2616 = vmul.f32 %v2600, 0.5
      %v2617 = vmul.f32 %v2601, 0.5
      %v2618 = vmul.f32 %v2602, 0.5
      %v2619 = vmul.f32 %v2603, 0.5
      %v2620 = vmul.f32 %v2604, 0.5
      %v2621 = vmul.f32 %v2605, 0.5
      %v2622 = vmul.f32 %v2606, 0.5
      %v2623 = vmul.f32 %v2607, 0.5
      %v2624 = vmul.f32 %v2608, 0.5
      %v2625 = vmul.f32 %v2609, 0.5
      %v2626 = vmul.f32 %v2610, 0.5
      %v2627 = vmul.f32 %v2611, 0.5
      %v2628 = vmul.f32 %v2612, 0.5
      %v2629 = vmul.f32 %v2613, 0.5
      %v2630 = vadd.f32 %v2614, 0.5
      %v2631 = vadd.f32 %v2615, 0.5
      %v2632 = vadd.f32 %v2616, 0.5
      %v2633 = vadd.f32 %v2617, 0.5
      %v2634 = vadd.f32 %v2618, 0.5
      %v2635 = vadd.f32 %v2619, 0.5
      %v2636 = vadd.f32 %v2620, 0.5
      %v2637 = vadd.f32 %v2621, 0.5
      %v2638 = vadd.f32 %v2622, 0.5
      %v2639 = vadd.f32 %v2623, 0.5
      %v2640 = vadd.f32 %v2624, 0.5
      %v2641 = vadd.f32 %v2625, 0.5
      %v2642 = vadd.f32 %v2626, 0.5
      %v2643 = vadd.f32 %v2627, 0.5
      %v2644 = vadd.f32 %v2628, 0.5
      %v2645 = vadd.f32 %v2629, 0.5
      %v2646 = vmul.f32 %v2566, %v2630
      %v2647 = vmul.f32 %v2567, %v2631
      %v2648 = vmul.f32 %v2568, %v2632
      %v2649 = vmul.f32 %v2569, %v2633
      %v2650 = vmul.f32 %v2570, %v2634
      %v2651 = vmul.f32 %v2571, %v2635
      %v2652 = vmul.f32 %v2572, %v2636
      %v2653 = vmul.f32 %v2573, %v2637
      %v2654 = vmul.f32 %v2574, %v2638
      %v2655 = vmul.f32 %v2575, %v2639
      %v2656 = vmul.f32 %v2576, %v2640
      %v2657 = vmul.f32 %v2577, %v2641
      %v2658 = vmul.f32 %v2578, %v2642
      %v2659 = vmul.f32 %v2579, %v2643
      %v2660 = vmul.f32 %v2580, %v2644
      %v2661 = vmul.f32 %v2581, %v2645
      %2663 = vset.pattern.permute.xlu0 0
      %2664 = vperm.xlu0 %2663, %v2646
      %v2665 = vpop.permute.xlu0 %2664
      %2668 = vset.pattern.permute.xlu0 0
      %2669 = vperm.xlu0 %2668, %v2647
      %v2670 = vpop.permute.xlu0 %2669
      %2673 = vset.pattern.permute.xlu0 0
      %2674 = vperm.xlu0 %2673, %v2648
      %v2675 = vpop.permute.xlu0 %2674
      %2678 = vset.pattern.permute.xlu0 0
      %2679 = vperm.xlu0 %2678, %v2649
      %v2680 = vpop.permute.xlu0 %2679
      %2683 = vset.pattern.permute.xlu0 0
      %2684 = vperm.xlu0 %2683, %v2650
      %v2685 = vpop.permute.xlu0 %2684
      %2688 = vset.pattern.permute.xlu0 0
      %2689 = vperm.xlu0 %2688, %v2651
      %v2690 = vpop.permute.xlu0 %2689
      %2693 = vset.pattern.permute.xlu0 0
      %2694 = vperm.xlu0 %2693, %v2652
      %v2695 = vpop.permute.xlu0 %2694
      %2698 = vset.pattern.permute.xlu0 0
      %2699 = vperm.xlu0 %2698, %v2653
      %v2700 = vpop.permute.xlu0 %2699
      %2703 = vset.pattern.permute.xlu0 0
      %2704 = vperm.xlu0 %2703, %v2654
      %v2705 = vpop.permute.xlu0 %2704
      %2708 = vset.pattern.permute.xlu0 0
      %2709 = vperm.xlu0 %2708, %v2655
      %v2710 = vpop.permute.xlu0 %2709
      %2713 = vset.pattern.permute.xlu0 0
      %2714 = vperm.xlu0 %2713, %v2656
      %v2715 = vpop.permute.xlu0 %2714
      %2718 = vset.pattern.permute.xlu0 0
      %2719 = vperm.xlu0 %2718, %v2657
      %v2720 = vpop.permute.xlu0 %2719
      %2723 = vset.pattern.permute.xlu0 0
      %2724 = vperm.xlu0 %2723, %v2658
      %v2725 = vpop.permute.xlu0 %2724
      %2728 = vset.pattern.permute.xlu0 0
      %2729 = vperm.xlu0 %2728, %v2659
      %v2730 = vpop.permute.xlu0 %2729
      %2733 = vset.pattern.permute.xlu0 0
      %2734 = vperm.xlu0 %2733, %v2660
      %v2735 = vpop.permute.xlu0 %2734
      %2738 = vset.pattern.permute.xlu0 0
      %2739 = vperm.xlu0 %2738, %v2661
      %v2740 = vpop.permute.xlu0 %2739
      %v2742 = vmul.f32 %v2476, %v2665
      %v2743 = vmul.f32 %v2477, %v2670
      %v2744 = vmul.f32 %v2478, %v2675
      %v2745 = vmul.f32 %v2479, %v2680
      %v2746 = vmul.f32 %v2480, %v2685
      %v2747 = vmul.f32 %v2481, %v2690
      %v2748 = vmul.f32 %v2482, %v2695
      %v2749 = vmul.f32 %v2483, %v2700
      %v2750 = vmul.f32 %v2484, %v2705
      %v2751 = vmul.f32 %v2485, %v2710
      %v2752 = vmul.f32 %v2486, %v2715
      %v2753 = vmul.f32 %v2487, %v2720
      %v2754 = vmul.f32 %v2488, %v2725
      %v2755 = vmul.f32 %v2489, %v2730
      %v2756 = vmul.f32 %v2490, %v2735
      %v2757 = vmul.f32 %v2491, %v2740
      %v2758 = vpack.c.bf16 %v2743, %v2742
      %v2759 = vpack.c.bf16 %v2745, %v2744
      %v2760 = vpack.c.bf16 %v2747, %v2746
      %v2761 = vpack.c.bf16 %v2749, %v2748
      %v2762 = vpack.c.bf16 %v2751, %v2750
      %v2763 = vpack.c.bf16 %v2753, %v2752
      %v2764 = vpack.c.bf16 %v2755, %v2754
      %v2765 = vpack.c.bf16 %v2757, %v2756
      %2766 = vmatprep.subr.bf16.mxu0 0
      %2767 = vmatpush1.bf16.msra.mxu0 %v2758
      %2768 = vmatprep.subr.bf16.mxu0 0
      %2769 = vmatpush1.bf16.msra.mxu0 %v2759
      %2770 = vmatprep.subr.bf16.mxu0 0
      %2771 = vmatpush1.bf16.msra.mxu0 %v2760
      %2772 = vmatprep.subr.bf16.mxu0 0
      %2773 = vmatpush1.bf16.msra.mxu0 %v2761
      %2774 = vmatprep.subr.bf16.mxu0 0
      %2775 = vmatpush1.bf16.msra.mxu0 %v2762
      %2776 = vmatprep.subr.bf16.mxu0 0
      %2777 = vmatpush1.bf16.msra.mxu0 %v2763
      %2778 = vmatprep.subr.bf16.mxu0 0
      %2779 = vmatpush1.bf16.msra.mxu0 %v2764
      %2780 = vmatprep.subr.bf16.mxu0 0
      %2781 = vmatpush1.bf16.msra.mxu0 %v2765
      %2782 = vmatprep.subr.bf16.mxu0 0
      %2783 = vmatpush1.bf16.msra.mxu0 0
      %2784 = vmatprep.subr.bf16.mxu0 0
      %2785 = vmatpush1.bf16.msra.mxu0 0
      %2786 = vmatprep.subr.bf16.mxu0 0
      %2787 = vmatpush1.bf16.msra.mxu0 0
      %2788 = vmatprep.subr.bf16.mxu0 0
      %2789 = vmatpush1.bf16.msra.mxu0 0
      %2790 = vmatprep.subr.bf16.mxu0 0
      %2791 = vmatpush1.bf16.msra.mxu0 0
      %2792 = vmatprep.subr.bf16.mxu0 0
      %2793 = vmatpush1.bf16.msra.mxu0 0
      %2794 = vmatprep.subr.bf16.mxu0 0
      %2795 = vmatpush1.bf16.msra.mxu0 0
      %2796 = vmatprep.subr.bf16.mxu0 0
      %2797 = vmatpush1.bf16.msra.mxu0 0
      %2798 = vmatprep.mubr.bf16.mxu0 0
      %2799 = vmatmul.mubr.bf16.gmra.mrb[0].mxu0 %v673
      %v2800 = vpop.f32.mrb[0].mxu0
      %v2801 = vadd.f32 0.0, %v2800
      %v2802 = vpop.f32.mrb[0].mxu0
      %v2803 = vpop.f32.mrb[0].mxu0
      %v2804 = vadd.f32 0.0, %v2803
      %v2805 = vpop.f32.mrb[0].mxu0
      %2806 = vmatprep.mubr.bf16.mxu0 0
      %2807 = vmatmul.mubr.bf16.gmra.mrb[0].mxu0 %v674
      %v2808 = vpop.f32.mrb[0].mxu0
      %v2809 = vadd.f32 0.0, %v2808
      %v2810 = vpop.f32.mrb[0].mxu0
      %v2811 = vpop.f32.mrb[0].mxu0
      %v2812 = vadd.f32 0.0, %v2811
      %v2813 = vpop.f32.mrb[0].mxu0
      %2814 = vmatprep.mubr.bf16.mxu0 0
      %2815 = vmatmul.mubr.bf16.gmra.mrb[0].mxu0 %v675
      %v2816 = vpop.f32.mrb[0].mxu0
      %v2817 = vadd.f32 0.0, %v2816
      %v2818 = vpop.f32.mrb[0].mxu0
      %v2819 = vpop.f32.mrb[0].mxu0
      %v2820 = vadd.f32 0.0, %v2819
      %v2821 = vpop.f32.mrb[0].mxu0
      %2822 = vmatprep.mubr.bf16.mxu0 0
      %2823 = vmatmul.mubr.bf16.gmra.mrb[0].mxu0 %v676
      %v2824 = vpop.f32.mrb[0].mxu0
      %v2825 = vadd.f32 0.0, %v2824
      %v2826 = vpop.f32.mrb[0].mxu0
      %v2827 = vpop.f32.mrb[0].mxu0
      %v2828 = vadd.f32 0.0, %v2827
      %v2829 = vpop.f32.mrb[0].mxu0
      %2830 = vdwg.mxu0
      %v2831 = vld [vmem:[%s5 + $0xa8] sm:$0xff]
      %v2832 = vld [vmem:[%s5 + $0xb0] sm:$0xff]
      %v2833 = vld [vmem:[%s5 + $0xb8] sm:$0xff]
      %v2834 = vld [vmem:[%s5 + $0xc0] sm:$0xff]
      %v2835 = vld [vmem:[%s5 + $0xc8] sm:$0xff]
      %v2836 = vld [vmem:[%s5 + $0xd0] sm:$0xff]
      %v2837 = vld [vmem:[%s5 + $0xd8] sm:$0xff]
      %v2838 = vld [vmem:[%s5 + $0xe0] sm:$0xff]
      %v2840 = vsel %vm1365, %v2801, 0
      %v2843 = vsel %vm1365, %v2804, 0
      %v2846 = vsel %vm1365, %v2809, 0
      %v2849 = vsel %vm1365, %v2812, 0
      %v2852 = vsel %vm1365, %v2817, 0
      %v2855 = vsel %vm1365, %v2820, 0
      %v2858 = vsel %vm1365, %v2825, 0
      %v2861 = vsel %vm1365, %v2828, 0
      %2863 = vmatprep.subr.mxu0 0.0
      %2864 = vmatpush1.msra.mxu0 %v2835
      %2865 = vmatprep.subr.mxu0 0.0
      %2866 = vmatpush1.msra.mxu0 %v2836
      %2867 = vmatprep.subr.mxu0 0.0
      %2868 = vmatpush1.msra.mxu0 %v2837
      %2869 = vmatprep.subr.mxu0 0.0
      %2870 = vmatpush1.msra.mxu0 %v2838
      %2871 = vmatprep.subr.mxu0 0.0
      %2872 = vmatpush1.msra.mxu0 0.0
      %2873 = vmatprep.subr.mxu0 0.0
      %2874 = vmatpush1.msra.mxu0 0.0
      %2875 = vmatprep.subr.mxu0 0.0
      %2876 = vmatpush1.msra.mxu0 0.0
      %2877 = vmatprep.subr.mxu0 0.0
      %2878 = vmatpush1.msra.mxu0 0.0
      %2879 = vmatprep.subr.mxu0 0.0
      %2880 = vmatpush1.msra.mxu0 0.0
      %2881 = vmatprep.subr.mxu0 0.0
      %2882 = vmatpush1.msra.mxu0 0.0
      %2883 = vmatprep.subr.mxu0 0.0
      %2884 = vmatpush1.msra.mxu0 0.0
      %2885 = vmatprep.subr.mxu0 0.0
      %2886 = vmatpush1.msra.mxu0 0.0
      %2887 = vmatprep.subr.mxu0 0.0
      %2888 = vmatpush1.msra.mxu0 0.0
      %2889 = vmatprep.subr.mxu0 0.0
      %2890 = vmatpush1.msra.mxu0 0.0
      %2891 = vmatprep.subr.mxu0 0.0
      %2892 = vmatpush1.msra.mxu0 0.0
      %2893 = vmatprep.subr.mxu0 0.0
      %2894 = vmatpush1.msra.mxu0 0.0
      %2895 = vmatprep.subr.mxu0 0.0
      %2896 = vmatpush1.msra.mxu0 0.0
      %2897 = vmatprep.subr.mxu0 0.0
      %2898 = vmatpush1.msra.mxu0 0.0
      %2899 = vmatprep.subr.mxu0 0.0
      %2900 = vmatpush1.msra.mxu0 0.0
      %2901 = vmatprep.subr.mxu0 0.0
      %2902 = vmatpush1.msra.mxu0 0.0
      %2903 = vmatprep.subr.mxu0 0.0
      %2904 = vmatpush1.msra.mxu0 0.0
      %2905 = vmatprep.subr.mxu0 0.0
      %2906 = vmatpush1.msra.mxu0 0.0
      %2907 = vmatprep.subr.mxu0 0.0
      %2908 = vmatpush1.msra.mxu0 0.0
      %2909 = vmatprep.subr.mxu0 0.0
      %2910 = vmatpush1.msra.mxu0 0.0
      %2911 = vmatprep.subr.mxu0 0.0
      %2912 = vmatpush1.msra.mxu0 0.0
      %2913 = vmatprep.subr.mxu0 0.0
      %2914 = vmatpush1.msra.mxu0 0.0
      %2915 = vmatprep.subr.mxu0 0.0
      %2916 = vmatpush1.msra.mxu0 0.0
      %2917 = vmatprep.subr.mxu0 0.0
      %2918 = vmatpush1.msra.mxu0 0.0
      %2919 = vmatprep.subr.mxu0 0.0
      %2920 = vmatpush1.msra.mxu0 0.0
      %2921 = vmatprep.subr.mxu0 0.0
      %2922 = vmatpush1.msra.mxu0 0.0
      %2923 = vmatprep.subr.mxu0 0.0
      %2924 = vmatpush1.msra.mxu0 0.0
      %2925 = vmatprep.subr.mxu0 0.0
      %2926 = vmatpush1.msra.mxu0 0.0
      %2927 = vmatprep.mubr.f32.mxu0 0.0
      %2928 = vmatmul.mubr.f32.gmra.mrb[0].mxu0 %v2840
      %v2929 = vpop.f32.mrb[0].mxu0
      %v2930 = vadd.f32 0.0, %v2929
      %v2931 = vpop.f32.mrb[0].mxu0
      %2932 = vmatprep.mubr.f32.mxu0 0.0
      %2933 = vmatmul.mubr.f32.gmra.mrb[0].mxu0 %v2843
      %v2934 = vpop.f32.mrb[0].mxu0
      %v2935 = vadd.f32 0.0, %v2934
      %v2936 = vpop.f32.mrb[0].mxu0
      %2937 = vmatprep.mubr.f32.mxu0 0.0
      %2938 = vmatmul.mubr.f32.gmra.mrb[0].mxu0 %v2846
      %v2939 = vpop.f32.mrb[0].mxu0
      %v2940 = vadd.f32 0.0, %v2939
      %v2941 = vpop.f32.mrb[0].mxu0
      %2942 = vmatprep.mubr.f32.mxu0 0.0
      %2943 = vmatmul.mubr.f32.gmra.mrb[0].mxu0 %v2849
      %v2944 = vpop.f32.mrb[0].mxu0
      %v2945 = vadd.f32 0.0, %v2944
      %v2946 = vpop.f32.mrb[0].mxu0
      %2947 = vmatprep.mubr.f32.mxu0 0.0
      %2948 = vmatmul.mubr.f32.gmra.mrb[0].mxu0 %v2852
      %v2949 = vpop.f32.mrb[0].mxu0
      %v2950 = vadd.f32 0.0, %v2949
      %v2951 = vpop.f32.mrb[0].mxu0
      %2952 = vmatprep.mubr.f32.mxu0 0.0
      %2953 = vmatmul.mubr.f32.gmra.mrb[0].mxu0 %v2855
      %v2954 = vpop.f32.mrb[0].mxu0
      %v2955 = vadd.f32 0.0, %v2954
      %v2956 = vpop.f32.mrb[0].mxu0
      %2957 = vmatprep.mubr.f32.mxu0 0.0
      %2958 = vmatmul.mubr.f32.gmra.mrb[0].mxu0 %v2858
      %v2959 = vpop.f32.mrb[0].mxu0
      %v2960 = vadd.f32 0.0, %v2959
      %v2961 = vpop.f32.mrb[0].mxu0
      %2962 = vmatprep.mubr.f32.mxu0 0.0
      %2963 = vmatmul.mubr.f32.gmra.mrb[0].mxu0 %v2861
      %v2964 = vpop.f32.mrb[0].mxu0
      %v2965 = vadd.f32 0.0, %v2964
      %v2966 = vpop.f32.mrb[0].mxu0
      %2967 = vdwg.mxu0
      %2968 = vmatprep.subr.mxu0 0.0
      %2969 = vmatpush1.msra.mxu0 %v2831
      %2970 = vmatprep.subr.mxu0 0.0
      %2971 = vmatpush1.msra.mxu0 %v2832
      %2972 = vmatprep.subr.mxu0 0.0
      %2973 = vmatpush1.msra.mxu0 %v2833
      %2974 = vmatprep.subr.mxu0 0.0
      %2975 = vmatpush1.msra.mxu0 %v2834
      %2976 = vmatprep.subr.mxu0 0.0
      %2977 = vmatpush1.msra.mxu0 0.0
      %2978 = vmatprep.subr.mxu0 0.0
      %2979 = vmatpush1.msra.mxu0 0.0
      %2980 = vmatprep.subr.mxu0 0.0
      %2981 = vmatpush1.msra.mxu0 0.0
      %2982 = vmatprep.subr.mxu0 0.0
      %2983 = vmatpush1.msra.mxu0 0.0
      %2984 = vmatprep.subr.mxu0 0.0
      %2985 = vmatpush1.msra.mxu0 0.0
      %2986 = vmatprep.subr.mxu0 0.0
      %2987 = vmatpush1.msra.mxu0 0.0
      %2988 = vmatprep.subr.mxu0 0.0
      %2989 = vmatpush1.msra.mxu0 0.0
      %2990 = vmatprep.subr.mxu0 0.0
      %2991 = vmatpush1.msra.mxu0 0.0
      %2992 = vmatprep.subr.mxu0 0.0
      %2993 = vmatpush1.msra.mxu0 0.0
      %2994 = vmatprep.subr.mxu0 0.0
      %2995 = vmatpush1.msra.mxu0 0.0
      %2996 = vmatprep.subr.mxu0 0.0
      %2997 = vmatpush1.msra.mxu0 0.0
      %2998 = vmatprep.subr.mxu0 0.0
      %2999 = vmatpush1.msra.mxu0 0.0
      %3000 = vmatprep.subr.mxu0 0.0
      %3001 = vmatpush1.msra.mxu0 0.0
      %3002 = vmatprep.subr.mxu0 0.0
      %3003 = vmatpush1.msra.mxu0 0.0
      %3004 = vmatprep.subr.mxu0 0.0
      %3005 = vmatpush1.msra.mxu0 0.0
      %3006 = vmatprep.subr.mxu0 0.0
      %3007 = vmatpush1.msra.mxu0 0.0
      %3008 = vmatprep.subr.mxu0 0.0
      %3009 = vmatpush1.msra.mxu0 0.0
      %3010 = vmatprep.subr.mxu0 0.0
      %3011 = vmatpush1.msra.mxu0 0.0
      %3012 = vmatprep.subr.mxu0 0.0
      %3013 = vmatpush1.msra.mxu0 0.0
      %3014 = vmatprep.subr.mxu0 0.0
      %3015 = vmatpush1.msra.mxu0 0.0
      %3016 = vmatprep.subr.mxu0 0.0
      %3017 = vmatpush1.msra.mxu0 0.0
      %3018 = vmatprep.subr.mxu0 0.0
      %3019 = vmatpush1.msra.mxu0 0.0
      %3020 = vmatprep.subr.mxu0 0.0
      %3021 = vmatpush1.msra.mxu0 0.0
      %3022 = vmatprep.subr.mxu0 0.0
      %3023 = vmatpush1.msra.mxu0 0.0
      %3024 = vmatprep.subr.mxu0 0.0
      %3025 = vmatpush1.msra.mxu0 0.0
      %3026 = vmatprep.subr.mxu0 0.0
      %3027 = vmatpush1.msra.mxu0 0.0
      %3028 = vmatprep.subr.mxu0 0.0
      %3029 = vmatpush1.msra.mxu0 0.0
      %3030 = vmatprep.subr.mxu0 0.0
      %3031 = vmatpush1.msra.mxu0 0.0
      %3032 = vmatprep.mubr.f32.mxu0 0.0
      %3033 = vmatmul.mubr.f32.gmra.mrb[0].mxu0 %v1367
      %v3034 = vpop.f32.mrb[0].mxu0
      %v3035 = vadd.f32 %v2930, %v3034
      %v3036 = vpop.f32.mrb[0].mxu0
      %3037 = vmatprep.mubr.f32.mxu0 0.0
      %3038 = vmatmul.mubr.f32.gmra.mrb[0].mxu0 %v1370
      %v3039 = vpop.f32.mrb[0].mxu0
      %v3040 = vadd.f32 %v2935, %v3039
      %v3041 = vpop.f32.mrb[0].mxu0
      %3042 = vmatprep.mubr.f32.mxu0 0.0
      %3043 = vmatmul.mubr.f32.gmra.mrb[0].mxu0 %v1373
      %v3044 = vpop.f32.mrb[0].mxu0
      %v3045 = vadd.f32 %v2940, %v3044
      %v3046 = vpop.f32.mrb[0].mxu0
      %3047 = vmatprep.mubr.f32.mxu0 0.0
      %3048 = vmatmul.mubr.f32.gmra.mrb[0].mxu0 %v1376
      %v3049 = vpop.f32.mrb[0].mxu0
      %v3050 = vadd.f32 %v2945, %v3049
      %v3051 = vpop.f32.mrb[0].mxu0
      %3052 = vmatprep.mubr.f32.mxu0 0.0
      %3053 = vmatmul.mubr.f32.gmra.mrb[0].mxu0 %v1379
      %v3054 = vpop.f32.mrb[0].mxu0
      %v3055 = vadd.f32 %v2950, %v3054
      %v3056 = vpop.f32.mrb[0].mxu0
      %3057 = vmatprep.mubr.f32.mxu0 0.0
      %3058 = vmatmul.mubr.f32.gmra.mrb[0].mxu0 %v1382
      %v3059 = vpop.f32.mrb[0].mxu0
      %v3060 = vadd.f32 %v2955, %v3059
      %v3061 = vpop.f32.mrb[0].mxu0
      %3062 = vmatprep.mubr.f32.mxu0 0.0
      %3063 = vmatmul.mubr.f32.gmra.mrb[0].mxu0 %v1385
      %v3064 = vpop.f32.mrb[0].mxu0
      %v3065 = vadd.f32 %v2960, %v3064
      %v3066 = vpop.f32.mrb[0].mxu0
      %3067 = vmatprep.mubr.f32.mxu0 0.0
      %3068 = vmatmul.mubr.f32.gmra.mrb[0].mxu0 %v1388
      %v3069 = vpop.f32.mrb[0].mxu0
      %v3070 = vadd.f32 %v2965, %v3069
      %v3071 = vpop.f32.mrb[0].mxu0
      %3072 = vdwg.mxu0
      %v3073 = vld [vmem:[%s5 + $0xe8] sm:$0x1]
      %v3074 = vlaneseq
      %v3075 = vshrl.u32 %v3074, 7
      %v3076 = vsub.s32 0, %v3075
      %v3077 = vrot.slane %v3073, %v3076
      %v3078 = vadd.f32 %v3035, %v3077
      %v3079 = vadd.f32 %v3040, %v3077
      %v3080 = vadd.f32 %v3045, %v3077
      %v3081 = vadd.f32 %v3050, %v3077
      %v3082 = vadd.f32 %v3055, %v3077
      %v3083 = vadd.f32 %v3060, %v3077
      %v3084 = vadd.f32 %v3065, %v3077
      %v3085 = vadd.f32 %v3070, %v3077
      %v3086 = vmul.f32 %v3078, 0.5
      %v3087 = vmul.f32 %v3079, 0.5
      %v3088 = vmul.f32 %v3080, 0.5
      %v3089 = vmul.f32 %v3081, 0.5
      %v3090 = vmul.f32 %v3082, 0.5
      %v3091 = vmul.f32 %v3083, 0.5
      %v3092 = vmul.f32 %v3084, 0.5
      %v3093 = vmul.f32 %v3085, 0.5
      %v3094 = vtanh.pop %v3086
      %v3095 = vtanh.pop %v3087
      %v3096 = vtanh.pop %v3088
      %v3097 = vtanh.pop %v3089
      %v3098 = vtanh.pop %v3090
      %v3099 = vtanh.pop %v3091
      %v3100 = vtanh.pop %v3092
      %v3101 = vtanh.pop %v3093
      %v3102 = vmul.f32 %v3094, 0.5
      %v3103 = vmul.f32 %v3095, 0.5
      %v3104 = vmul.f32 %v3096, 0.5
      %v3105 = vmul.f32 %v3097, 0.5
      %v3106 = vmul.f32 %v3098, 0.5
      %v3107 = vmul.f32 %v3099, 0.5
      %v3108 = vmul.f32 %v3100, 0.5
      %v3109 = vmul.f32 %v3101, 0.5
      %v3110 = vadd.f32 %v3102, 0.5
      %v3111 = vadd.f32 %v3103, 0.5
      %v3112 = vadd.f32 %v3104, 0.5
      %v3113 = vadd.f32 %v3105, 0.5
      %v3114 = vadd.f32 %v3106, 0.5
      %v3115 = vadd.f32 %v3107, 0.5
      %v3116 = vadd.f32 %v3108, 0.5
      %v3117 = vadd.f32 %v3109, 0.5
      %v3118 = vmul.f32 %v3078, %v3110
      %v3119 = vmul.f32 %v3079, %v3111
      %v3120 = vmul.f32 %v3080, %v3112
      %v3121 = vmul.f32 %v3081, %v3113
      %v3122 = vmul.f32 %v3082, %v3114
      %v3123 = vmul.f32 %v3083, %v3115
      %v3124 = vmul.f32 %v3084, %v3116
      %v3125 = vmul.f32 %v3085, %v3117
      %v3126 = vld [vmem:[%s5 + $0xf0] sm:$0xff]
      %v3127 = vld [vmem:[%s5 + $0xf8] sm:$0xff]
      %v3128 = vld [vmem:[%s5 + $0x100] sm:$0xff]
      %v3129 = vld [vmem:[%s5 + $0x108] sm:$0xff]
      %v3130 = vld [vmem:[%s5 + $0x110] sm:$0x1]
      %v3131 = vlaneseq
      %v3132 = vshrl.u32 %v3131, 7
      %v3133 = vsub.s32 0, %v3132
      %v3134 = vrot.slane %v3130, %v3133
      %v3136 = vsel %vm1365, %v3118, 0
      %v3139 = vsel %vm1365, %v3119, 0
      %v3142 = vsel %vm1365, %v3120, 0
      %v3145 = vsel %vm1365, %v3121, 0
      %v3148 = vsel %vm1365, %v3122, 0
      %v3151 = vsel %vm1365, %v3123, 0
      %v3154 = vsel %vm1365, %v3124, 0
      %v3157 = vsel %vm1365, %v3125, 0
      %3159 = vmatprep.subr.mxu0 0.0
      %3160 = vmatpush1.msra.mxu0 %v3126
      %3161 = vmatprep.subr.mxu0 0.0
      %3162 = vmatpush1.msra.mxu0 %v3127
      %3163 = vmatprep.subr.mxu0 0.0
      %3164 = vmatpush1.msra.mxu0 %v3128
      %3165 = vmatprep.subr.mxu0 0.0
      %3166 = vmatpush1.msra.mxu0 %v3129
      %3167 = vmatprep.subr.mxu0 0.0
      %3168 = vmatpush1.msra.mxu0 0.0
      %3169 = vmatprep.subr.mxu0 0.0
      %3170 = vmatpush1.msra.mxu0 0.0
      %3171 = vmatprep.subr.mxu0 0.0
      %3172 = vmatpush1.msra.mxu0 0.0
      %3173 = vmatprep.subr.mxu0 0.0
      %3174 = vmatpush1.msra.mxu0 0.0
      %3175 = vmatprep.subr.mxu0 0.0
      %3176 = vmatpush1.msra.mxu0 0.0
      %3177 = vmatprep.subr.mxu0 0.0
      %3178 = vmatpush1.msra.mxu0 0.0
      %3179 = vmatprep.subr.mxu0 0.0
      %3180 = vmatpush1.msra.mxu0 0.0
      %3181 = vmatprep.subr.mxu0 0.0
      %3182 = vmatpush1.msra.mxu0 0.0
      %3183 = vmatprep.subr.mxu0 0.0
      %3184 = vmatpush1.msra.mxu0 0.0
      %3185 = vmatprep.subr.mxu0 0.0
      %3186 = vmatpush1.msra.mxu0 0.0
      %3187 = vmatprep.subr.mxu0 0.0
      %3188 = vmatpush1.msra.mxu0 0.0
      %3189 = vmatprep.subr.mxu0 0.0
      %3190 = vmatpush1.msra.mxu0 0.0
      %3191 = vmatprep.subr.mxu0 0.0
      %3192 = vmatpush1.msra.mxu0 0.0
      %3193 = vmatprep.subr.mxu0 0.0
      %3194 = vmatpush1.msra.mxu0 0.0
      %3195 = vmatprep.subr.mxu0 0.0
      %3196 = vmatpush1.msra.mxu0 0.0
      %3197 = vmatprep.subr.mxu0 0.0
      %3198 = vmatpush1.msra.mxu0 0.0
      %3199 = vmatprep.subr.mxu0 0.0
      %3200 = vmatpush1.msra.mxu0 0.0
      %3201 = vmatprep.subr.mxu0 0.0
      %3202 = vmatpush1.msra.mxu0 0.0
      %3203 = vmatprep.subr.mxu0 0.0
      %3204 = vmatpush1.msra.mxu0 0.0
      %3205 = vmatprep.subr.mxu0 0.0
      %3206 = vmatpush1.msra.mxu0 0.0
      %3207 = vmatprep.subr.mxu0 0.0
      %3208 = vmatpush1.msra.mxu0 0.0
      %3209 = vmatprep.subr.mxu0 0.0
      %3210 = vmatpush1.msra.mxu0 0.0
      %3211 = vmatprep.subr.mxu0 0.0
      %3212 = vmatpush1.msra.mxu0 0.0
      %3213 = vmatprep.subr.mxu0 0.0
      %3214 = vmatpush1.msra.mxu0 0.0
      %3215 = vmatprep.subr.mxu0 0.0
      %3216 = vmatpush1.msra.mxu0 0.0
      %3217 = vmatprep.subr.mxu0 0.0
      %3218 = vmatpush1.msra.mxu0 0.0
      %3219 = vmatprep.subr.mxu0 0.0
      %3220 = vmatpush1.msra.mxu0 0.0
      %3221 = vmatprep.subr.mxu0 0.0
      %3222 = vmatpush1.msra.mxu0 0.0
      %3223 = vmatprep.mubr.f32.mxu0 0.0
      %3224 = vmatmul.mubr.f32.gmra.mrb[0].mxu0 %v3136
      %v3225 = vpop.f32.mrb[0].mxu0
      %v3226 = vadd.f32 %v3134, %v3225
      %v3227 = vpop.f32.mrb[0].mxu0
      %3228 = vmatprep.mubr.f32.mxu0 0.0
      %3229 = vmatmul.mubr.f32.gmra.mrb[0].mxu0 %v3139
      %v3230 = vpop.f32.mrb[0].mxu0
      %v3231 = vadd.f32 %v3134, %v3230
      %v3232 = vpop.f32.mrb[0].mxu0
      %3233 = vmatprep.mubr.f32.mxu0 0.0
      %3234 = vmatmul.mubr.f32.gmra.mrb[0].mxu0 %v3142
      %v3235 = vpop.f32.mrb[0].mxu0
      %v3236 = vadd.f32 %v3134, %v3235
      %v3237 = vpop.f32.mrb[0].mxu0
      %3238 = vmatprep.mubr.f32.mxu0 0.0
      %3239 = vmatmul.mubr.f32.gmra.mrb[0].mxu0 %v3145
      %v3240 = vpop.f32.mrb[0].mxu0
      %v3241 = vadd.f32 %v3134, %v3240
      %v3242 = vpop.f32.mrb[0].mxu0
      %3243 = vmatprep.mubr.f32.mxu0 0.0
      %3244 = vmatmul.mubr.f32.gmra.mrb[0].mxu0 %v3148
      %v3245 = vpop.f32.mrb[0].mxu0
      %v3246 = vadd.f32 %v3134, %v3245
      %v3247 = vpop.f32.mrb[0].mxu0
      %3248 = vmatprep.mubr.f32.mxu0 0.0
      %3249 = vmatmul.mubr.f32.gmra.mrb[0].mxu0 %v3151
      %v3250 = vpop.f32.mrb[0].mxu0
      %v3251 = vadd.f32 %v3134, %v3250
      %v3252 = vpop.f32.mrb[0].mxu0
      %3253 = vmatprep.mubr.f32.mxu0 0.0
      %3254 = vmatmul.mubr.f32.gmra.mrb[0].mxu0 %v3154
      %v3255 = vpop.f32.mrb[0].mxu0
      %v3256 = vadd.f32 %v3134, %v3255
      %v3257 = vpop.f32.mrb[0].mxu0
      %3258 = vmatprep.mubr.f32.mxu0 0.0
      %3259 = vmatmul.mubr.f32.gmra.mrb[0].mxu0 %v3157
      %v3260 = vpop.f32.mrb[0].mxu0
      %v3261 = vadd.f32 %v3134, %v3260
      %v3262 = vpop.f32.mrb[0].mxu0
      %3263 = vdwg.mxu0
      %v3264 = vadd.f32 %v394, %v3226
      %v3265 = vadd.f32 %v395, %v3231
      %v3266 = vadd.f32 %v396, %v3236
      %v3267 = vadd.f32 %v397, %v3241
      %v3268 = vadd.f32 %v398, %v3246
      %v3269 = vadd.f32 %v399, %v3251
      %v3270 = vadd.f32 %v400, %v3256
      %v3271 = vadd.f32 %v401, %v3261
      %v3272 = vld [vmem:[%s5 + $0x118] sm:$0xff]
      %v3273 = vld [vmem:[%s5 + $0x120] sm:$0xff]
      %v3274 = vld [vmem:[%s5 + $0x128] sm:$0xff]
      %v3275 = vld [vmem:[%s5 + $0x130] sm:$0xff]
      %v3277 = vsel %vm1365, %v3264, 0
      %v3280 = vsel %vm1365, %v3265, 0
      %v3283 = vsel %vm1365, %v3266, 0
      %v3286 = vsel %vm1365, %v3267, 0
      %v3289 = vsel %vm1365, %v3268, 0
      %v3292 = vsel %vm1365, %v3269, 0
      %v3295 = vsel %vm1365, %v3270, 0
      %v3298 = vsel %vm1365, %v3271, 0
      %3300 = vmatprep.subr.mxu0 0.0
      %3301 = vmatpush1.msra.mxu0 %v3272
      %3302 = vmatprep.subr.mxu0 0.0
      %3303 = vmatpush1.msra.mxu0 %v3273
      %3304 = vmatprep.subr.mxu0 0.0
      %3305 = vmatpush1.msra.mxu0 %v3274
      %3306 = vmatprep.subr.mxu0 0.0
      %3307 = vmatpush1.msra.mxu0 %v3275
      %3308 = vmatprep.subr.mxu0 0.0
      %3309 = vmatpush1.msra.mxu0 0.0
      %3310 = vmatprep.subr.mxu0 0.0
      %3311 = vmatpush1.msra.mxu0 0.0
      %3312 = vmatprep.subr.mxu0 0.0
      %3313 = vmatpush1.msra.mxu0 0.0
      %3314 = vmatprep.subr.mxu0 0.0
      %3315 = vmatpush1.msra.mxu0 0.0
      %3316 = vmatprep.subr.mxu0 0.0
      %3317 = vmatpush1.msra.mxu0 0.0
      %3318 = vmatprep.subr.mxu0 0.0
      %3319 = vmatpush1.msra.mxu0 0.0
      %3320 = vmatprep.subr.mxu0 0.0
      %3321 = vmatpush1.msra.mxu0 0.0
      %3322 = vmatprep.subr.mxu0 0.0
      %3323 = vmatpush1.msra.mxu0 0.0
      %3324 = vmatprep.subr.mxu0 0.0
      %3325 = vmatpush1.msra.mxu0 0.0
      %3326 = vmatprep.subr.mxu0 0.0
      %3327 = vmatpush1.msra.mxu0 0.0
      %3328 = vmatprep.subr.mxu0 0.0
      %3329 = vmatpush1.msra.mxu0 0.0
      %3330 = vmatprep.subr.mxu0 0.0
      %3331 = vmatpush1.msra.mxu0 0.0
      %3332 = vmatprep.subr.mxu0 0.0
      %3333 = vmatpush1.msra.mxu0 0.0
      %3334 = vmatprep.subr.mxu0 0.0
      %3335 = vmatpush1.msra.mxu0 0.0
      %3336 = vmatprep.subr.mxu0 0.0
      %3337 = vmatpush1.msra.mxu0 0.0
      %3338 = vmatprep.subr.mxu0 0.0
      %3339 = vmatpush1.msra.mxu0 0.0
      %3340 = vmatprep.subr.mxu0 0.0
      %3341 = vmatpush1.msra.mxu0 0.0
      %3342 = vmatprep.subr.mxu0 0.0
      %3343 = vmatpush1.msra.mxu0 0.0
      %3344 = vmatprep.subr.mxu0 0.0
      %3345 = vmatpush1.msra.mxu0 0.0
      %3346 = vmatprep.subr.mxu0 0.0
      %3347 = vmatpush1.msra.mxu0 0.0
      %3348 = vmatprep.subr.mxu0 0.0
      %3349 = vmatpush1.msra.mxu0 0.0
      %3350 = vmatprep.subr.mxu0 0.0
      %3351 = vmatpush1.msra.mxu0 0.0
      %3352 = vmatprep.subr.mxu0 0.0
      %3353 = vmatpush1.msra.mxu0 0.0
      %3354 = vmatprep.subr.mxu0 0.0
      %3355 = vmatpush1.msra.mxu0 0.0
      %3356 = vmatprep.subr.mxu0 0.0
      %3357 = vmatpush1.msra.mxu0 0.0
      %3358 = vmatprep.subr.mxu0 0.0
      %3359 = vmatpush1.msra.mxu0 0.0
      %3360 = vmatprep.subr.mxu0 0.0
      %3361 = vmatpush1.msra.mxu0 0.0
      %3362 = vmatprep.subr.mxu0 0.0
      %3363 = vmatpush1.msra.mxu0 0.0
      %3364 = vmatprep.mubr.f32.mxu0 0.0
      %3365 = vmatmul.mubr.f32.gmra.mrb[0].mxu0 %v3277
      %v3366 = vpop.f32.mrb[0].mxu0
      %v3367 = vadd.f32 0.0, %v3366
      %v3368 = vpop.f32.mrb[0].mxu0
      %3369 = vmatprep.mubr.f32.mxu0 0.0
      %3370 = vmatmul.mubr.f32.gmra.mrb[0].mxu0 %v3280
      %v3371 = vpop.f32.mrb[0].mxu0
      %v3372 = vadd.f32 0.0, %v3371
      %v3373 = vpop.f32.mrb[0].mxu0
      %3374 = vmatprep.mubr.f32.mxu0 0.0
      %3375 = vmatmul.mubr.f32.gmra.mrb[0].mxu0 %v3283
      %v3376 = vpop.f32.mrb[0].mxu0
      %v3377 = vadd.f32 0.0, %v3376
      %v3378 = vpop.f32.mrb[0].mxu0
      %3379 = vmatprep.mubr.f32.mxu0 0.0
      %3380 = vmatmul.mubr.f32.gmra.mrb[0].mxu0 %v3286
      %v3381 = vpop.f32.mrb[0].mxu0
      %v3382 = vadd.f32 0.0, %v3381
      %v3383 = vpop.f32.mrb[0].mxu0
      %3384 = vmatprep.mubr.f32.mxu0 0.0
      %3385 = vmatmul.mubr.f32.gmra.mrb[0].mxu0 %v3289
      %v3386 = vpop.f32.mrb[0].mxu0
      %v3387 = vadd.f32 0.0, %v3386
      %v3388 = vpop.f32.mrb[0].mxu0
      %3389 = vmatprep.mubr.f32.mxu0 0.0
      %3390 = vmatmul.mubr.f32.gmra.mrb[0].mxu0 %v3292
      %v3391 = vpop.f32.mrb[0].mxu0
      %v3392 = vadd.f32 0.0, %v3391
      %v3393 = vpop.f32.mrb[0].mxu0
      %3394 = vmatprep.mubr.f32.mxu0 0.0
      %3395 = vmatmul.mubr.f32.gmra.mrb[0].mxu0 %v3295
      %v3396 = vpop.f32.mrb[0].mxu0
      %v3397 = vadd.f32 0.0, %v3396
      %v3398 = vpop.f32.mrb[0].mxu0
      %3399 = vmatprep.mubr.f32.mxu0 0.0
      %3400 = vmatmul.mubr.f32.gmra.mrb[0].mxu0 %v3298
      %v3401 = vpop.f32.mrb[0].mxu0
      %v3402 = vadd.f32 0.0, %v3401
      %v3403 = vpop.f32.mrb[0].mxu0
      %3404 = vdwg.mxu0
      %v3405 = vld [vmem:[%s5 + $0x138] sm:$0xff]
      %v3406 = vld [vmem:[%s5 + $0x140] sm:$0xff]
      %v3407 = vld [vmem:[%s5 + $0x148] sm:$0xff]
      %v3408 = vld [vmem:[%s5 + $0x150] sm:$0xff]
      %3409 = vmatprep.subr.mxu0 0.0
      %3410 = vmatpush1.msra.mxu0 %v3405
      %3411 = vmatprep.subr.mxu0 0.0
      %3412 = vmatpush1.msra.mxu0 %v3406
      %3413 = vmatprep.subr.mxu0 0.0
      %3414 = vmatpush1.msra.mxu0 %v3407
      %3415 = vmatprep.subr.mxu0 0.0
      %3416 = vmatpush1.msra.mxu0 %v3408
      %3417 = vmatprep.subr.mxu0 0.0
      %3418 = vmatpush1.msra.mxu0 0.0
      %3419 = vmatprep.subr.mxu0 0.0
      %3420 = vmatpush1.msra.mxu0 0.0
      %3421 = vmatprep.subr.mxu0 0.0
      %3422 = vmatpush1.msra.mxu0 0.0
      %3423 = vmatprep.subr.mxu0 0.0
      %3424 = vmatpush1.msra.mxu0 0.0
      %3425 = vmatprep.subr.mxu0 0.0
      %3426 = vmatpush1.msra.mxu0 0.0
      %3427 = vmatprep.subr.mxu0 0.0
      %3428 = vmatpush1.msra.mxu0 0.0
      %3429 = vmatprep.subr.mxu0 0.0
      %3430 = vmatpush1.msra.mxu0 0.0
      %3431 = vmatprep.subr.mxu0 0.0
      %3432 = vmatpush1.msra.mxu0 0.0
      %3433 = vmatprep.subr.mxu0 0.0
      %3434 = vmatpush1.msra.mxu0 0.0
      %3435 = vmatprep.subr.mxu0 0.0
      %3436 = vmatpush1.msra.mxu0 0.0
      %3437 = vmatprep.subr.mxu0 0.0
      %3438 = vmatpush1.msra.mxu0 0.0
      %3439 = vmatprep.subr.mxu0 0.0
      %3440 = vmatpush1.msra.mxu0 0.0
      %3441 = vmatprep.subr.mxu0 0.0
      %3442 = vmatpush1.msra.mxu0 0.0
      %3443 = vmatprep.subr.mxu0 0.0
      %3444 = vmatpush1.msra.mxu0 0.0
      %3445 = vmatprep.subr.mxu0 0.0
      %3446 = vmatpush1.msra.mxu0 0.0
      %3447 = vmatprep.subr.mxu0 0.0
      %3448 = vmatpush1.msra.mxu0 0.0
      %3449 = vmatprep.subr.mxu0 0.0
      %3450 = vmatpush1.msra.mxu0 0.0
      %3451 = vmatprep.subr.mxu0 0.0
      %3452 = vmatpush1.msra.mxu0 0.0
      %3453 = vmatprep.subr.mxu0 0.0
      %3454 = vmatpush1.msra.mxu0 0.0
      %3455 = vmatprep.subr.mxu0 0.0
      %3456 = vmatpush1.msra.mxu0 0.0
      %3457 = vmatprep.subr.mxu0 0.0
      %3458 = vmatpush1.msra.mxu0 0.0
      %3459 = vmatprep.subr.mxu0 0.0
      %3460 = vmatpush1.msra.mxu0 0.0
      %3461 = vmatprep.subr.mxu0 0.0
      %3462 = vmatpush1.msra.mxu0 0.0
      %3463 = vmatprep.subr.mxu0 0.0
      %3464 = vmatpush1.msra.mxu0 0.0
      %3465 = vmatprep.subr.mxu0 0.0
      %3466 = vmatpush1.msra.mxu0 0.0
      %3467 = vmatprep.subr.mxu0 0.0
      %3468 = vmatpush1.msra.mxu0 0.0
      %3469 = vmatprep.subr.mxu0 0.0
      %3470 = vmatpush1.msra.mxu0 0.0
      %3471 = vmatprep.subr.mxu0 0.0
      %3472 = vmatpush1.msra.mxu0 0.0
      %3473 = vmatprep.mubr.f32.mxu0 0.0
      %3474 = vmatmul.mubr.f32.gmra.mrb[0].mxu0 %v3277
      %v3475 = vpop.f32.mrb[0].mxu0
      %v3476 = vadd.f32 0.0, %v3475
      %v3477 = vpop.f32.mrb[0].mxu0
      %3478 = vmatprep.mubr.f32.mxu0 0.0
      %3479 = vmatmul.mubr.f32.gmra.mrb[0].mxu0 %v3280
      %v3480 = vpop.f32.mrb[0].mxu0
      %v3481 = vadd.f32 0.0, %v3480
      %v3482 = vpop.f32.mrb[0].mxu0
      %3483 = vmatprep.mubr.f32.mxu0 0.0
      %3484 = vmatmul.mubr.f32.gmra.mrb[0].mxu0 %v3283
      %v3485 = vpop.f32.mrb[0].mxu0
      %v3486 = vadd.f32 0.0, %v3485
      %v3487 = vpop.f32.mrb[0].mxu0
      %3488 = vmatprep.mubr.f32.mxu0 0.0
      %3489 = vmatmul.mubr.f32.gmra.mrb[0].mxu0 %v3286
      %v3490 = vpop.f32.mrb[0].mxu0
      %v3491 = vadd.f32 0.0, %v3490
      %v3492 = vpop.f32.mrb[0].mxu0
      %3493 = vmatprep.mubr.f32.mxu0 0.0
      %3494 = vmatmul.mubr.f32.gmra.mrb[0].mxu0 %v3289
      %v3495 = vpop.f32.mrb[0].mxu0
      %v3496 = vadd.f32 0.0, %v3495
      %v3497 = vpop.f32.mrb[0].mxu0
      %3498 = vmatprep.mubr.f32.mxu0 0.0
      %3499 = vmatmul.mubr.f32.gmra.mrb[0].mxu0 %v3292
      %v3500 = vpop.f32.mrb[0].mxu0
      %v3501 = vadd.f32 0.0, %v3500
      %v3502 = vpop.f32.mrb[0].mxu0
      %3503 = vmatprep.mubr.f32.mxu0 0.0
      %3504 = vmatmul.mubr.f32.gmra.mrb[0].mxu0 %v3295
      %v3505 = vpop.f32.mrb[0].mxu0
      %v3506 = vadd.f32 0.0, %v3505
      %v3507 = vpop.f32.mrb[0].mxu0
      %3508 = vmatprep.mubr.f32.mxu0 0.0
      %3509 = vmatmul.mubr.f32.gmra.mrb[0].mxu0 %v3298
      %v3510 = vpop.f32.mrb[0].mxu0
      %v3511 = vadd.f32 0.0, %v3510
      %v3512 = vpop.f32.mrb[0].mxu0
      %3513 = vdwg.mxu0
      %v3514 = vpack.c.bf16 %v3372, %v3367
      %v3515 = vpack.c.bf16 %v3382, %v3377
      %v3516 = vpack.c.bf16 %v3392, %v3387
      %v3517 = vpack.c.bf16 %v3402, %v3397
      %v3518 = vpack.c.bf16 %v3481, %v3476
      %v3519 = vpack.c.bf16 %v3491, %v3486
      %v3520 = vpack.c.bf16 %v3501, %v3496
      %v3521 = vpack.c.bf16 %v3511, %v3506
      %3522 = vmatprep.subr.bf16.mxu0 0
      %3523 = vmatpush1.bf16.msra.mxu0 %v3518
      %3524 = vmatprep.subr.bf16.mxu0 0
      %3525 = vmatpush1.bf16.msra.mxu0 %v3519
      %3526 = vmatprep.subr.bf16.mxu0 0
      %3527 = vmatpush1.bf16.msra.mxu0 %v3520
      %3528 = vmatprep.subr.bf16.mxu0 0
      %3529 = vmatpush1.bf16.msra.mxu0 %v3521
      %3530 = vmatprep.subr.bf16.mxu0 0
      %3531 = vmatpush1.bf16.msra.mxu0 0
      %3532 = vmatprep.subr.bf16.mxu0 0
      %3533 = vmatpush1.bf16.msra.mxu0 0
      %3534 = vmatprep.subr.bf16.mxu0 0
      %3535 = vmatpush1.bf16.msra.mxu0 0
      %3536 = vmatprep.subr.bf16.mxu0 0
      %3537 = vmatpush1.bf16.msra.mxu0 0
      %3538 = vmatprep.subr.bf16.mxu0 0
      %3539 = vmatpush1.bf16.msra.mxu0 0
      %3540 = vmatprep.subr.bf16.mxu0 0
      %3541 = vmatpush1.bf16.msra.mxu0 0
      %3542 = vmatprep.subr.bf16.mxu0 0
      %3543 = vmatpush1.bf16.msra.mxu0 0
      %3544 = vmatprep.subr.bf16.mxu0 0
      %3545 = vmatpush1.bf16.msra.mxu0 0
      %3546 = vmatprep.subr.bf16.mxu0 0
      %3547 = vmatpush1.bf16.msra.mxu0 0
      %3548 = vmatprep.subr.bf16.mxu0 0
      %3549 = vmatpush1.bf16.msra.mxu0 0
      %3550 = vmatprep.subr.bf16.mxu0 0
      %3551 = vmatpush1.bf16.msra.mxu0 0
      %3552 = vmatprep.subr.bf16.mxu0 0
      %3553 = vmatpush1.bf16.msra.mxu0 0
      %3554 = vmatprep.mubr.bf16.mxu0 0
      %3555 = vmatmul.mubr.bf16.gmra.mrb[0].mxu0 %v1613
      %v3556 = vpop.f32.mrb[0].mxu0
      %v3557 = vadd.f32 0.0, %v3556
      %v3558 = vpop.f32.mrb[0].mxu0
      %v3559 = vpop.f32.mrb[0].mxu0
      %v3560 = vadd.f32 0.0, %v3559
      %v3561 = vpop.f32.mrb[0].mxu0
      %3562 = vmatprep.mubr.bf16.mxu0 0
      %3563 = vmatmul.mubr.bf16.gmra.mrb[0].mxu0 %v1616
      %v3564 = vpop.f32.mrb[0].mxu0
      %v3565 = vadd.f32 0.0, %v3564
      %v3566 = vpop.f32.mrb[0].mxu0
      %v3567 = vpop.f32.mrb[0].mxu0
      %v3568 = vadd.f32 0.0, %v3567
      %v3569 = vpop.f32.mrb[0].mxu0
      %3570 = vmatprep.mubr.bf16.mxu0 0
      %3571 = vmatmul.mubr.bf16.gmra.mrb[0].mxu0 %v1619
      %v3572 = vpop.f32.mrb[0].mxu0
      %v3573 = vadd.f32 0.0, %v3572
      %v3574 = vpop.f32.mrb[0].mxu0
      %v3575 = vpop.f32.mrb[0].mxu0
      %v3576 = vadd.f32 0.0, %v3575
      %v3577 = vpop.f32.mrb[0].mxu0
      %3578 = vmatprep.mubr.bf16.mxu0 0
      %3579 = vmatmul.mubr.bf16.gmra.mrb[0].mxu0 %v1622
      %v3580 = vpop.f32.mrb[0].mxu0
      %v3581 = vadd.f32 0.0, %v3580
      %v3582 = vpop.f32.mrb[0].mxu0
      %v3583 = vpop.f32.mrb[0].mxu0
      %v3584 = vadd.f32 0.0, %v3583
      %v3585 = vpop.f32.mrb[0].mxu0
      %3586 = vmatprep.mubr.bf16.mxu0 0
      %3587 = vmatmul.mubr.bf16.gmra.mrb[0].mxu0 %v1625
      %v3588 = vpop.f32.mrb[0].mxu0
      %v3589 = vadd.f32 0.0, %v3588
      %v3590 = vpop.f32.mrb[0].mxu0
      %v3591 = vpop.f32.mrb[0].mxu0
      %v3592 = vadd.f32 0.0, %v3591
      %v3593 = vpop.f32.mrb[0].mxu0
      %3594 = vmatprep.mubr.bf16.mxu0 0
      %3595 = vmatmul.mubr.bf16.gmra.mrb[0].mxu0 %v1628
      %v3596 = vpop.f32.mrb[0].mxu0
      %v3597 = vadd.f32 0.0, %v3596
      %v3598 = vpop.f32.mrb[0].mxu0
      %v3599 = vpop.f32.mrb[0].mxu0
      %v3600 = vadd.f32 0.0, %v3599
      %v3601 = vpop.f32.mrb[0].mxu0
      %3602 = vmatprep.mubr.bf16.mxu0 0
      %3603 = vmatmul.mubr.bf16.gmra.mrb[0].mxu0 %v1631
      %v3604 = vpop.f32.mrb[0].mxu0
      %v3605 = vadd.f32 0.0, %v3604
      %v3606 = vpop.f32.mrb[0].mxu0
      %v3607 = vpop.f32.mrb[0].mxu0
      %v3608 = vadd.f32 0.0, %v3607
      %v3609 = vpop.f32.mrb[0].mxu0
      %3610 = vmatprep.mubr.bf16.mxu0 0
      %3611 = vmatmul.mubr.bf16.gmra.mrb[0].mxu0 %v1634
      %v3612 = vpop.f32.mrb[0].mxu0
      %v3613 = vadd.f32 0.0, %v3612
      %v3614 = vpop.f32.mrb[0].mxu0
      %v3615 = vpop.f32.mrb[0].mxu0
      %v3616 = vadd.f32 0.0, %v3615
      %v3617 = vpop.f32.mrb[0].mxu0
      %3618 = vdwg.mxu0
      %3619 = vmatprep.subr.bf16.mxu0 0
      %3620 = vmatpush1.bf16.msra.mxu0 %v3514
      %3621 = vmatprep.subr.bf16.mxu0 0
      %3622 = vmatpush1.bf16.msra.mxu0 %v3515
      %3623 = vmatprep.subr.bf16.mxu0 0
      %3624 = vmatpush1.bf16.msra.mxu0 %v3516
      %3625 = vmatprep.subr.bf16.mxu0 0
      %3626 = vmatpush1.bf16.msra.mxu0 %v3517
      %3627 = vmatprep.subr.bf16.mxu0 0
      %3628 = vmatpush1.bf16.msra.mxu0 0
      %3629 = vmatprep.subr.bf16.mxu0 0
      %3630 = vmatpush1.bf16.msra.mxu0 0
      %3631 = vmatprep.subr.bf16.mxu0 0
      %3632 = vmatpush1.bf16.msra.mxu0 0
      %3633 = vmatprep.subr.bf16.mxu0 0
      %3634 = vmatpush1.bf16.msra.mxu0 0
      %3635 = vmatprep.subr.bf16.mxu0 0
      %3636 = vmatpush1.bf16.msra.mxu0 0
      %3637 = vmatprep.subr.bf16.mxu0 0
      %3638 = vmatpush1.bf16.msra.mxu0 0
      %3639 = vmatprep.subr.bf16.mxu0 0
      %3640 = vmatpush1.bf16.msra.mxu0 0
      %3641 = vmatprep.subr.bf16.mxu0 0
      %3642 = vmatpush1.bf16.msra.mxu0 0
      %3643 = vmatprep.subr.bf16.mxu0 0
      %3644 = vmatpush1.bf16.msra.mxu0 0
      %3645 = vmatprep.subr.bf16.mxu0 0
      %3646 = vmatpush1.bf16.msra.mxu0 0
      %3647 = vmatprep.subr.bf16.mxu0 0
      %3648 = vmatpush1.bf16.msra.mxu0 0
      %3649 = vmatprep.subr.bf16.mxu0 0
      %3650 = vmatpush1.bf16.msra.mxu0 0
      %3651 = vmatprep.mubr.bf16.mxu0 0
      %3652 = vmatmul.mubr.bf16.gmra.mrb[0].mxu0 %v1734
      %v3653 = vpop.f32.mrb[0].mxu0
      %v3654 = vadd.f32 %v3557, %v3653
      %v3655 = vpop.f32.mrb[0].mxu0
      %v3656 = vpop.f32.mrb[0].mxu0
      %v3657 = vadd.f32 %v3560, %v3656
      %v3658 = vpop.f32.mrb[0].mxu0
      %3659 = vmatprep.mubr.bf16.mxu0 0
      %3660 = vmatmul.mubr.bf16.gmra.mrb[0].mxu0 %v1737
      %v3661 = vpop.f32.mrb[0].mxu0
      %v3662 = vadd.f32 %v3565, %v3661
      %v3663 = vpop.f32.mrb[0].mxu0
      %v3664 = vpop.f32.mrb[0].mxu0
      %v3665 = vadd.f32 %v3568, %v3664
      %v3666 = vpop.f32.mrb[0].mxu0
      %3667 = vmatprep.mubr.bf16.mxu0 0
      %3668 = vmatmul.mubr.bf16.gmra.mrb[0].mxu0 %v1740
      %v3669 = vpop.f32.mrb[0].mxu0
      %v3670 = vadd.f32 %v3573, %v3669
      %v3671 = vpop.f32.mrb[0].mxu0
      %v3672 = vpop.f32.mrb[0].mxu0
      %v3673 = vadd.f32 %v3576, %v3672
      %v3674 = vpop.f32.mrb[0].mxu0
      %3675 = vmatprep.mubr.bf16.mxu0 0
      %3676 = vmatmul.mubr.bf16.gmra.mrb[0].mxu0 %v1743
      %v3677 = vpop.f32.mrb[0].mxu0
      %v3678 = vadd.f32 %v3581, %v3677
      %v3679 = vpop.f32.mrb[0].mxu0
      %v3680 = vpop.f32.mrb[0].mxu0
      %v3681 = vadd.f32 %v3584, %v3680
      %v3682 = vpop.f32.mrb[0].mxu0
      %3683 = vmatprep.mubr.bf16.mxu0 0
      %3684 = vmatmul.mubr.bf16.gmra.mrb[0].mxu0 %v1746
      %v3685 = vpop.f32.mrb[0].mxu0
      %v3686 = vadd.f32 %v3589, %v3685
      %v3687 = vpop.f32.mrb[0].mxu0
      %v3688 = vpop.f32.mrb[0].mxu0
      %v3689 = vadd.f32 %v3592, %v3688
      %v3690 = vpop.f32.mrb[0].mxu0
      %3691 = vmatprep.mubr.bf16.mxu0 0
      %3692 = vmatmul.mubr.bf16.gmra.mrb[0].mxu0 %v1749
      %v3693 = vpop.f32.mrb[0].mxu0
      %v3694 = vadd.f32 %v3597, %v3693
      %v3695 = vpop.f32.mrb[0].mxu0
      %v3696 = vpop.f32.mrb[0].mxu0
      %v3697 = vadd.f32 %v3600, %v3696
      %v3698 = vpop.f32.mrb[0].mxu0
      %3699 = vmatprep.mubr.bf16.mxu0 0
      %3700 = vmatmul.mubr.bf16.gmra.mrb[0].mxu0 %v1752
      %v3701 = vpop.f32.mrb[0].mxu0
      %v3702 = vadd.f32 %v3605, %v3701
      %v3703 = vpop.f32.mrb[0].mxu0
      %v3704 = vpop.f32.mrb[0].mxu0
      %v3705 = vadd.f32 %v3608, %v3704
      %v3706 = vpop.f32.mrb[0].mxu0
      %3707 = vmatprep.mubr.bf16.mxu0 0
      %3708 = vmatmul.mubr.bf16.gmra.mrb[0].mxu0 %v1755
      %v3709 = vpop.f32.mrb[0].mxu0
      %v3710 = vadd.f32 %v3613, %v3709
      %v3711 = vpop.f32.mrb[0].mxu0
      %v3712 = vpop.f32.mrb[0].mxu0
      %v3713 = vadd.f32 %v3616, %v3712
      %v3714 = vpop.f32.mrb[0].mxu0
      %3715 = vdwg.mxu0
      %v3716 = vld [vmem:[%s5 + $0x158] sm:$0xff]
      %v3717 = vld [vmem:[%s5 + $0x160] sm:$0xff]
      %v3718 = vld [vmem:[%s5 + $0x168] sm:$0xff]
      %v3719 = vld [vmem:[%s5 + $0x170] sm:$0xff]
      %v3721 = vsel %vm1365, %v2742, 0
      %v3724 = vsel %vm1365, %v2743, 0
      %v3727 = vsel %vm1365, %v2744, 0
      %v3730 = vsel %vm1365, %v2745, 0
      %v3733 = vsel %vm1365, %v2746, 0
      %v3736 = vsel %vm1365, %v2747, 0
      %v3739 = vsel %vm1365, %v2748, 0
      %v3742 = vsel %vm1365, %v2749, 0
      %v3745 = vsel %vm1365, %v2750, 0
      %v3748 = vsel %vm1365, %v2751, 0
      %v3751 = vsel %vm1365, %v2752, 0
      %v3754 = vsel %vm1365, %v2753, 0
      %v3757 = vsel %vm1365, %v2754, 0
      %v3760 = vsel %vm1365, %v2755, 0
      %v3763 = vsel %vm1365, %v2756, 0
      %v3766 = vsel %vm1365, %v2757, 0
      %3768 = vmatprep.subr.mxu0 0.0
      %3769 = vmatpush1.msra.mxu0 %v3716
      %3770 = vmatprep.subr.mxu0 0.0
      %3771 = vmatpush1.msra.mxu0 %v3717
      %3772 = vmatprep.subr.mxu0 0.0
      %3773 = vmatpush1.msra.mxu0 %v3718
      %3774 = vmatprep.subr.mxu0 0.0
      %3775 = vmatpush1.msra.mxu0 %v3719
      %3776 = vmatprep.subr.mxu0 0.0
      %3777 = vmatpush1.msra.mxu0 0.0
      %3778 = vmatprep.subr.mxu0 0.0
      %3779 = vmatpush1.msra.mxu0 0.0
      %3780 = vmatprep.subr.mxu0 0.0
      %3781 = vmatpush1.msra.mxu0 0.0
      %3782 = vmatprep.subr.mxu0 0.0
      %3783 = vmatpush1.msra.mxu0 0.0
      %3784 = vmatprep.subr.mxu0 0.0
      %3785 = vmatpush1.msra.mxu0 0.0
      %3786 = vmatprep.subr.mxu0 0.0
      %3787 = vmatpush1.msra.mxu0 0.0
      %3788 = vmatprep.subr.mxu0 0.0
      %3789 = vmatpush1.msra.mxu0 0.0
      %3790 = vmatprep.subr.mxu0 0.0
      %3791 = vmatpush1.msra.mxu0 0.0
      %3792 = vmatprep.subr.mxu0 0.0
      %3793 = vmatpush1.msra.mxu0 0.0
      %3794 = vmatprep.subr.mxu0 0.0
      %3795 = vmatpush1.msra.mxu0 0.0
      %3796 = vmatprep.subr.mxu0 0.0
      %3797 = vmatpush1.msra.mxu0 0.0
      %3798 = vmatprep.subr.mxu0 0.0
      %3799 = vmatpush1.msra.mxu0 0.0
      %3800 = vmatprep.subr.mxu0 0.0
      %3801 = vmatpush1.msra.mxu0 0.0
      %3802 = vmatprep.subr.mxu0 0.0
      %3803 = vmatpush1.msra.mxu0 0.0
      %3804 = vmatprep.subr.mxu0 0.0
      %3805 = vmatpush1.msra.mxu0 0.0
      %3806 = vmatprep.subr.mxu0 0.0
      %3807 = vmatpush1.msra.mxu0 0.0
      %3808 = vmatprep.subr.mxu0 0.0
      %3809 = vmatpush1.msra.mxu0 0.0
      %3810 = vmatprep.subr.mxu0 0.0
      %3811 = vmatpush1.msra.mxu0 0.0
      %3812 = vmatprep.subr.mxu0 0.0
      %3813 = vmatpush1.msra.mxu0 0.0
      %3814 = vmatprep.subr.mxu0 0.0
      %3815 = vmatpush1.msra.mxu0 0.0
      %3816 = vmatprep.subr.mxu0 0.0
      %3817 = vmatpush1.msra.mxu0 0.0
      %3818 = vmatprep.subr.mxu0 0.0
      %3819 = vmatpush1.msra.mxu0 0.0
      %3820 = vmatprep.subr.mxu0 0.0
      %3821 = vmatpush1.msra.mxu0 0.0
      %3822 = vmatprep.subr.mxu0 0.0
      %3823 = vmatpush1.msra.mxu0 0.0
      %3824 = vmatprep.subr.mxu0 0.0
      %3825 = vmatpush1.msra.mxu0 0.0
      %3826 = vmatprep.subr.mxu0 0.0
      %3827 = vmatpush1.msra.mxu0 0.0
      %3828 = vmatprep.subr.mxu0 0.0
      %3829 = vmatpush1.msra.mxu0 0.0
      %3830 = vmatprep.subr.mxu0 0.0
      %3831 = vmatpush1.msra.mxu0 0.0
      %3832 = vmatprep.mubr.f32.mxu0 0.0
      %3833 = vmatmul.mubr.f32.gmra.mrb[0].mxu0 %v3721
      %v3834 = vpop.f32.mrb[0].mxu0
      %v3835 = vadd.f32 0.0, %v3834
      %v3836 = vpop.f32.mrb[0].mxu0
      %3837 = vmatprep.mubr.f32.mxu0 0.0
      %3838 = vmatmul.mubr.f32.gmra.mrb[0].mxu0 %v3724
      %v3839 = vpop.f32.mrb[0].mxu0
      %v3840 = vadd.f32 0.0, %v3839
      %v3841 = vpop.f32.mrb[0].mxu0
      %3842 = vmatprep.mubr.f32.mxu0 0.0
      %3843 = vmatmul.mubr.f32.gmra.mrb[0].mxu0 %v3727
      %v3844 = vpop.f32.mrb[0].mxu0
      %v3845 = vadd.f32 0.0, %v3844
      %v3846 = vpop.f32.mrb[0].mxu0
      %3847 = vmatprep.mubr.f32.mxu0 0.0
      %3848 = vmatmul.mubr.f32.gmra.mrb[0].mxu0 %v3730
      %v3849 = vpop.f32.mrb[0].mxu0
      %v3850 = vadd.f32 0.0, %v3849
      %v3851 = vpop.f32.mrb[0].mxu0
      %3852 = vmatprep.mubr.f32.mxu0 0.0
      %3853 = vmatmul.mubr.f32.gmra.mrb[0].mxu0 %v3733
      %v3854 = vpop.f32.mrb[0].mxu0
      %v3855 = vadd.f32 0.0, %v3854
      %v3856 = vpop.f32.mrb[0].mxu0
      %3857 = vmatprep.mubr.f32.mxu0 0.0
      %3858 = vmatmul.mubr.f32.gmra.mrb[0].mxu0 %v3736
      %v3859 = vpop.f32.mrb[0].mxu0
      %v3860 = vadd.f32 0.0, %v3859
      %v3861 = vpop.f32.mrb[0].mxu0
      %3862 = vmatprep.mubr.f32.mxu0 0.0
      %3863 = vmatmul.mubr.f32.gmra.mrb[0].mxu0 %v3739
      %v3864 = vpop.f32.mrb[0].mxu0
      %v3865 = vadd.f32 0.0, %v3864
      %v3866 = vpop.f32.mrb[0].mxu0
      %3867 = vmatprep.mubr.f32.mxu0 0.0
      %3868 = vmatmul.mubr.f32.gmra.mrb[0].mxu0 %v3742
      %v3869 = vpop.f32.mrb[0].mxu0
      %v3870 = vadd.f32 0.0, %v3869
      %v3871 = vpop.f32.mrb[0].mxu0
      %3872 = vmatprep.mubr.f32.mxu0 0.0
      %3873 = vmatmul.mubr.f32.gmra.mrb[0].mxu0 %v3745
      %v3874 = vpop.f32.mrb[0].mxu0
      %v3875 = vadd.f32 0.0, %v3874
      %v3876 = vpop.f32.mrb[0].mxu0
      %3877 = vmatprep.mubr.f32.mxu0 0.0
      %3878 = vmatmul.mubr.f32.gmra.mrb[0].mxu0 %v3748
      %v3879 = vpop.f32.mrb[0].mxu0
      %v3880 = vadd.f32 0.0, %v3879
      %v3881 = vpop.f32.mrb[0].mxu0
      %3882 = vmatprep.mubr.f32.mxu0 0.0
      %3883 = vmatmul.mubr.f32.gmra.mrb[0].mxu0 %v3751
      %v3884 = vpop.f32.mrb[0].mxu0
      %v3885 = vadd.f32 0.0, %v3884
      %v3886 = vpop.f32.mrb[0].mxu0
      %3887 = vmatprep.mubr.f32.mxu0 0.0
      %3888 = vmatmul.mubr.f32.gmra.mrb[0].mxu0 %v3754
      %v3889 = vpop.f32.mrb[0].mxu0
      %v3890 = vadd.f32 0.0, %v3889
      %v3891 = vpop.f32.mrb[0].mxu0
      %3892 = vmatprep.mubr.f32.mxu0 0.0
      %3893 = vmatmul.mubr.f32.gmra.mrb[0].mxu0 %v3757
      %v3894 = vpop.f32.mrb[0].mxu0
      %v3895 = vadd.f32 0.0, %v3894
      %v3896 = vpop.f32.mrb[0].mxu0
      %3897 = vmatprep.mubr.f32.mxu0 0.0
      %3898 = vmatmul.mubr.f32.gmra.mrb[0].mxu0 %v3760
      %v3899 = vpop.f32.mrb[0].mxu0
      %v3900 = vadd.f32 0.0, %v3899
      %v3901 = vpop.f32.mrb[0].mxu0
      %3902 = vmatprep.mubr.f32.mxu0 0.0
      %3903 = vmatmul.mubr.f32.gmra.mrb[0].mxu0 %v3763
      %v3904 = vpop.f32.mrb[0].mxu0
      %v3905 = vadd.f32 0.0, %v3904
      %v3906 = vpop.f32.mrb[0].mxu0
      %3907 = vmatprep.mubr.f32.mxu0 0.0
      %3908 = vmatmul.mubr.f32.gmra.mrb[0].mxu0 %v3766
      %v3909 = vpop.f32.mrb[0].mxu0
      %v3910 = vadd.f32 0.0, %v3909
      %v3911 = vpop.f32.mrb[0].mxu0
      %3912 = vdwg.mxu0
      %v3913 = vadd.f32 %v3654, %v3835
      %v3914 = vadd.f32 %v3657, %v3840
      %v3915 = vadd.f32 %v3662, %v3845
      %v3916 = vadd.f32 %v3665, %v3850
      %v3917 = vadd.f32 %v3670, %v3855
      %v3918 = vadd.f32 %v3673, %v3860
      %v3919 = vadd.f32 %v3678, %v3865
      %v3920 = vadd.f32 %v3681, %v3870
      %v3921 = vadd.f32 %v3686, %v3875
      %v3922 = vadd.f32 %v3689, %v3880
      %v3923 = vadd.f32 %v3694, %v3885
      %v3924 = vadd.f32 %v3697, %v3890
      %v3925 = vadd.f32 %v3702, %v3895
      %v3926 = vadd.f32 %v3705, %v3900
      %v3927 = vadd.f32 %v3710, %v3905
      %v3928 = vadd.f32 %v3713, %v3910
      %v3929 = vld [vmem:[%s5 + $0x178] sm:$0x1]
      %v3930 = vlaneseq
      %v3931 = vshrl.u32 %v3930, 7
      %v3932 = vsub.s32 0, %v3931
      %v3933 = vrot.slane %v3929, %v3932
      %v3934 = vadd.f32 %v3913, %v3933
      %v3935 = vadd.f32 %v3914, %v3933
      %v3936 = vadd.f32 %v3915, %v3933
      %v3937 = vadd.f32 %v3916, %v3933
      %v3938 = vadd.f32 %v3917, %v3933
      %v3939 = vadd.f32 %v3918, %v3933
      %v3940 = vadd.f32 %v3919, %v3933
      %v3941 = vadd.f32 %v3920, %v3933
      %v3942 = vadd.f32 %v3921, %v3933
      %v3943 = vadd.f32 %v3922, %v3933
      %v3944 = vadd.f32 %v3923, %v3933
      %v3945 = vadd.f32 %v3924, %v3933
      %v3946 = vadd.f32 %v3925, %v3933
      %v3947 = vadd.f32 %v3926, %v3933
      %v3948 = vadd.f32 %v3927, %v3933
      %v3949 = vadd.f32 %v3928, %v3933
      %v3950 = vmul.f32 %v3934, 0.5
      %v3951 = vmul.f32 %v3935, 0.5
      %v3952 = vmul.f32 %v3936, 0.5
      %v3953 = vmul.f32 %v3937, 0.5
      %v3954 = vmul.f32 %v3938, 0.5
      %v3955 = vmul.f32 %v3939, 0.5
      %v3956 = vmul.f32 %v3940, 0.5
      %v3957 = vmul.f32 %v3941, 0.5
      %v3958 = vmul.f32 %v3942, 0.5
      %v3959 = vmul.f32 %v3943, 0.5
      %v3960 = vmul.f32 %v3944, 0.5
      %v3961 = vmul.f32 %v3945, 0.5
      %v3962 = vmul.f32 %v3946, 0.5
      %v3963 = vmul.f32 %v3947, 0.5
      %v3964 = vmul.f32 %v3948, 0.5
      %v3965 = vmul.f32 %v3949, 0.5
      %v3966 = vtanh.pop %v3950
      %v3967 = vtanh.pop %v3951
      %v3968 = vtanh.pop %v3952
      %v3969 = vtanh.pop %v3953
      %v3970 = vtanh.pop %v3954
      %v3971 = vtanh.pop %v3955
      %v3972 = vtanh.pop %v3956
      %v3973 = vtanh.pop %v3957
      %v3974 = vtanh.pop %v3958
      %v3975 = vtanh.pop %v3959
      %v3976 = vtanh.pop %v3960
      %v3977 = vtanh.pop %v3961
      %v3978 = vtanh.pop %v3962
      %v3979 = vtanh.pop %v3963
      %v3980 = vtanh.pop %v3964
      %v3981 = vtanh.pop %v3965
      %v3982 = vmul.f32 %v3966, 0.5
      %v3983 = vmul.f32 %v3967, 0.5
      %v3984 = vmul.f32 %v3968, 0.5
      %v3985 = vmul.f32 %v3969, 0.5
      %v3986 = vmul.f32 %v3970, 0.5
      %v3987 = vmul.f32 %v3971, 0.5
      %v3988 = vmul.f32 %v3972, 0.5
      %v3989 = vmul.f32 %v3973, 0.5
      %v3990 = vmul.f32 %v3974, 0.5
      %v3991 = vmul.f32 %v3975, 0.5
      %v3992 = vmul.f32 %v3976, 0.5
      %v3993 = vmul.f32 %v3977, 0.5
      %v3994 = vmul.f32 %v3978, 0.5
      %v3995 = vmul.f32 %v3979, 0.5
      %v3996 = vmul.f32 %v3980, 0.5
      %v3997 = vmul.f32 %v3981, 0.5
      %v3998 = vadd.f32 %v3982, 0.5
      %v3999 = vadd.f32 %v3983, 0.5
      %v4000 = vadd.f32 %v3984, 0.5
      %v4001 = vadd.f32 %v3985, 0.5
      %v4002 = vadd.f32 %v3986, 0.5
      %v4003 = vadd.f32 %v3987, 0.5
      %v4004 = vadd.f32 %v3988, 0.5
      %v4005 = vadd.f32 %v3989, 0.5
      %v4006 = vadd.f32 %v3990, 0.5
      %v4007 = vadd.f32 %v3991, 0.5
      %v4008 = vadd.f32 %v3992, 0.5
      %v4009 = vadd.f32 %v3993, 0.5
      %v4010 = vadd.f32 %v3994, 0.5
      %v4011 = vadd.f32 %v3995, 0.5
      %v4012 = vadd.f32 %v3996, 0.5
      %v4013 = vadd.f32 %v3997, 0.5
      %v4014 = vmul.f32 %v3934, %v3998
      %v4015 = vmul.f32 %v3935, %v3999
      %v4016 = vmul.f32 %v3936, %v4000
      %v4017 = vmul.f32 %v3937, %v4001
      %v4018 = vmul.f32 %v3938, %v4002
      %v4019 = vmul.f32 %v3939, %v4003
      %v4020 = vmul.f32 %v3940, %v4004
      %v4021 = vmul.f32 %v3941, %v4005
      %v4022 = vmul.f32 %v3942, %v4006
      %v4023 = vmul.f32 %v3943, %v4007
      %v4024 = vmul.f32 %v3944, %v4008
      %v4025 = vmul.f32 %v3945, %v4009
      %v4026 = vmul.f32 %v3946, %v4010
      %v4027 = vmul.f32 %v3947, %v4011
      %v4028 = vmul.f32 %v3948, %v4012
      %v4029 = vmul.f32 %v3949, %v4013
      %v4030 = vld [vmem:[%s5 + $0x180] sm:$0xff]
      %v4031 = vld [vmem:[%s5 + $0x188] sm:$0xff]
      %v4032 = vld [vmem:[%s5 + $0x190] sm:$0xff]
      %v4033 = vld [vmem:[%s5 + $0x198] sm:$0xff]
      %v4034 = vld [vmem:[%s5 + $0x1a0] sm:$0x1]
      %v4035 = vlaneseq
      %v4036 = vshrl.u32 %v4035, 7
      %v4037 = vsub.s32 0, %v4036
      %v4038 = vrot.slane %v4034, %v4037
      %v4040 = vsel %vm1365, %v4014, 0
      %v4043 = vsel %vm1365, %v4015, 0
      %v4046 = vsel %vm1365, %v4016, 0
      %v4049 = vsel %vm1365, %v4017, 0
      %v4052 = vsel %vm1365, %v4018, 0
      %v4055 = vsel %vm1365, %v4019, 0
      %v4058 = vsel %vm1365, %v4020, 0
      %v4061 = vsel %vm1365, %v4021, 0
      %v4064 = vsel %vm1365, %v4022, 0
      %v4067 = vsel %vm1365, %v4023, 0
      %v4070 = vsel %vm1365, %v4024, 0
      %v4073 = vsel %vm1365, %v4025, 0
      %v4076 = vsel %vm1365, %v4026, 0
      %v4079 = vsel %vm1365, %v4027, 0
      %v4082 = vsel %vm1365, %v4028, 0
      %v4085 = vsel %vm1365, %v4029, 0
      %4087 = vmatprep.subr.mxu0 0.0
      %4088 = vmatpush1.msra.mxu0 %v4030
      %4089 = vmatprep.subr.mxu0 0.0
      %4090 = vmatpush1.msra.mxu0 %v4031
      %4091 = vmatprep.subr.mxu0 0.0
      %4092 = vmatpush1.msra.mxu0 %v4032
      %4093 = vmatprep.subr.mxu0 0.0
      %4094 = vmatpush1.msra.mxu0 %v4033
      %4095 = vmatprep.subr.mxu0 0.0
      %4096 = vmatpush1.msra.mxu0 0.0
      %4097 = vmatprep.subr.mxu0 0.0
      %4098 = vmatpush1.msra.mxu0 0.0
      %4099 = vmatprep.subr.mxu0 0.0
      %4100 = vmatpush1.msra.mxu0 0.0
      %4101 = vmatprep.subr.mxu0 0.0
      %4102 = vmatpush1.msra.mxu0 0.0
      %4103 = vmatprep.subr.mxu0 0.0
      %4104 = vmatpush1.msra.mxu0 0.0
      %4105 = vmatprep.subr.mxu0 0.0
      %4106 = vmatpush1.msra.mxu0 0.0
      %4107 = vmatprep.subr.mxu0 0.0
      %4108 = vmatpush1.msra.mxu0 0.0
      %4109 = vmatprep.subr.mxu0 0.0
      %4110 = vmatpush1.msra.mxu0 0.0
      %4111 = vmatprep.subr.mxu0 0.0
      %4112 = vmatpush1.msra.mxu0 0.0
      %4113 = vmatprep.subr.mxu0 0.0
      %4114 = vmatpush1.msra.mxu0 0.0
      %4115 = vmatprep.subr.mxu0 0.0
      %4116 = vmatpush1.msra.mxu0 0.0
      %4117 = vmatprep.subr.mxu0 0.0
      %4118 = vmatpush1.msra.mxu0 0.0
      %4119 = vmatprep.subr.mxu0 0.0
      %4120 = vmatpush1.msra.mxu0 0.0
      %4121 = vmatprep.subr.mxu0 0.0
      %4122 = vmatpush1.msra.mxu0 0.0
      %4123 = vmatprep.subr.mxu0 0.0
      %4124 = vmatpush1.msra.mxu0 0.0
      %4125 = vmatprep.subr.mxu0 0.0
      %4126 = vmatpush1.msra.mxu0 0.0
      %4127 = vmatprep.subr.mxu0 0.0
      %4128 = vmatpush1.msra.mxu0 0.0
      %4129 = vmatprep.subr.mxu0 0.0
      %4130 = vmatpush1.msra.mxu0 0.0
      %4131 = vmatprep.subr.mxu0 0.0
      %4132 = vmatpush1.msra.mxu0 0.0
      %4133 = vmatprep.subr.mxu0 0.0
      %4134 = vmatpush1.msra.mxu0 0.0
      %4135 = vmatprep.subr.mxu0 0.0
      %4136 = vmatpush1.msra.mxu0 0.0
      %4137 = vmatprep.subr.mxu0 0.0
      %4138 = vmatpush1.msra.mxu0 0.0
      %4139 = vmatprep.subr.mxu0 0.0
      %4140 = vmatpush1.msra.mxu0 0.0
      %4141 = vmatprep.subr.mxu0 0.0
      %4142 = vmatpush1.msra.mxu0 0.0
      %4143 = vmatprep.subr.mxu0 0.0
      %4144 = vmatpush1.msra.mxu0 0.0
      %4145 = vmatprep.subr.mxu0 0.0
      %4146 = vmatpush1.msra.mxu0 0.0
      %4147 = vmatprep.subr.mxu0 0.0
      %4148 = vmatpush1.msra.mxu0 0.0
      %4149 = vmatprep.subr.mxu0 0.0
      %4150 = vmatpush1.msra.mxu0 0.0
      %4151 = vmatprep.mubr.f32.mxu0 0.0
      %4152 = vmatmul.mubr.f32.gmra.mrb[0].mxu0 %v4040
      %v4153 = vpop.f32.mrb[0].mxu0
      %v4154 = vadd.f32 %v4038, %v4153
      %v4155 = vpop.f32.mrb[0].mxu0
      %4156 = vmatprep.mubr.f32.mxu0 0.0
      %4157 = vmatmul.mubr.f32.gmra.mrb[0].mxu0 %v4043
      %v4158 = vpop.f32.mrb[0].mxu0
      %v4159 = vadd.f32 %v4038, %v4158
      %v4160 = vpop.f32.mrb[0].mxu0
      %4161 = vmatprep.mubr.f32.mxu0 0.0
      %4162 = vmatmul.mubr.f32.gmra.mrb[0].mxu0 %v4046
      %v4163 = vpop.f32.mrb[0].mxu0
      %v4164 = vadd.f32 %v4038, %v4163
      %v4165 = vpop.f32.mrb[0].mxu0
      %4166 = vmatprep.mubr.f32.mxu0 0.0
      %4167 = vmatmul.mubr.f32.gmra.mrb[0].mxu0 %v4049
      %v4168 = vpop.f32.mrb[0].mxu0
      %v4169 = vadd.f32 %v4038, %v4168
      %v4170 = vpop.f32.mrb[0].mxu0
      %4171 = vmatprep.mubr.f32.mxu0 0.0
      %4172 = vmatmul.mubr.f32.gmra.mrb[0].mxu0 %v4052
      %v4173 = vpop.f32.mrb[0].mxu0
      %v4174 = vadd.f32 %v4038, %v4173
      %v4175 = vpop.f32.mrb[0].mxu0
      %4176 = vmatprep.mubr.f32.mxu0 0.0
      %4177 = vmatmul.mubr.f32.gmra.mrb[0].mxu0 %v4055
      %v4178 = vpop.f32.mrb[0].mxu0
      %v4179 = vadd.f32 %v4038, %v4178
      %v4180 = vpop.f32.mrb[0].mxu0
      %4181 = vmatprep.mubr.f32.mxu0 0.0
      %4182 = vmatmul.mubr.f32.gmra.mrb[0].mxu0 %v4058
      %v4183 = vpop.f32.mrb[0].mxu0
      %v4184 = vadd.f32 %v4038, %v4183
      %v4185 = vpop.f32.mrb[0].mxu0
      %4186 = vmatprep.mubr.f32.mxu0 0.0
      %4187 = vmatmul.mubr.f32.gmra.mrb[0].mxu0 %v4061
      %v4188 = vpop.f32.mrb[0].mxu0
      %v4189 = vadd.f32 %v4038, %v4188
      %v4190 = vpop.f32.mrb[0].mxu0
      %4191 = vmatprep.mubr.f32.mxu0 0.0
      %4192 = vmatmul.mubr.f32.gmra.mrb[0].mxu0 %v4064
      %v4193 = vpop.f32.mrb[0].mxu0
      %v4194 = vadd.f32 %v4038, %v4193
      %v4195 = vpop.f32.mrb[0].mxu0
      %4196 = vmatprep.mubr.f32.mxu0 0.0
      %4197 = vmatmul.mubr.f32.gmra.mrb[0].mxu0 %v4067
      %v4198 = vpop.f32.mrb[0].mxu0
      %v4199 = vadd.f32 %v4038, %v4198
      %v4200 = vpop.f32.mrb[0].mxu0
      %4201 = vmatprep.mubr.f32.mxu0 0.0
      %4202 = vmatmul.mubr.f32.gmra.mrb[0].mxu0 %v4070
      %v4203 = vpop.f32.mrb[0].mxu0
      %v4204 = vadd.f32 %v4038, %v4203
      %v4205 = vpop.f32.mrb[0].mxu0
      %4206 = vmatprep.mubr.f32.mxu0 0.0
      %4207 = vmatmul.mubr.f32.gmra.mrb[0].mxu0 %v4073
      %v4208 = vpop.f32.mrb[0].mxu0
      %v4209 = vadd.f32 %v4038, %v4208
      %v4210 = vpop.f32.mrb[0].mxu0
      %4211 = vmatprep.mubr.f32.mxu0 0.0
      %4212 = vmatmul.mubr.f32.gmra.mrb[0].mxu0 %v4076
      %v4213 = vpop.f32.mrb[0].mxu0
      %v4214 = vadd.f32 %v4038, %v4213
      %v4215 = vpop.f32.mrb[0].mxu0
      %4216 = vmatprep.mubr.f32.mxu0 0.0
      %4217 = vmatmul.mubr.f32.gmra.mrb[0].mxu0 %v4079
      %v4218 = vpop.f32.mrb[0].mxu0
      %v4219 = vadd.f32 %v4038, %v4218
      %v4220 = vpop.f32.mrb[0].mxu0
      %4221 = vmatprep.mubr.f32.mxu0 0.0
      %4222 = vmatmul.mubr.f32.gmra.mrb[0].mxu0 %v4082
      %v4223 = vpop.f32.mrb[0].mxu0
      %v4224 = vadd.f32 %v4038, %v4223
      %v4225 = vpop.f32.mrb[0].mxu0
      %4226 = vmatprep.mubr.f32.mxu0 0.0
      %4227 = vmatmul.mubr.f32.gmra.mrb[0].mxu0 %v4085
      %v4228 = vpop.f32.mrb[0].mxu0
      %v4229 = vadd.f32 %v4038, %v4228
      %v4230 = vpop.f32.mrb[0].mxu0
      %4231 = vdwg.mxu0
      %v4232 = vmul.f32 %v4154, 0.5
      %v4233 = vmul.f32 %v4159, 0.5
      %v4234 = vmul.f32 %v4164, 0.5
      %v4235 = vmul.f32 %v4169, 0.5
      %v4236 = vmul.f32 %v4174, 0.5
      %v4237 = vmul.f32 %v4179, 0.5
      %v4238 = vmul.f32 %v4184, 0.5
      %v4239 = vmul.f32 %v4189, 0.5
      %v4240 = vmul.f32 %v4194, 0.5
      %v4241 = vmul.f32 %v4199, 0.5
      %v4242 = vmul.f32 %v4204, 0.5
      %v4243 = vmul.f32 %v4209, 0.5
      %v4244 = vmul.f32 %v4214, 0.5
      %v4245 = vmul.f32 %v4219, 0.5
      %v4246 = vmul.f32 %v4224, 0.5
      %v4247 = vmul.f32 %v4229, 0.5
      %v4248 = vtanh.pop %v4232
      %v4249 = vtanh.pop %v4233
      %v4250 = vtanh.pop %v4234
      %v4251 = vtanh.pop %v4235
      %v4252 = vtanh.pop %v4236
      %v4253 = vtanh.pop %v4237
      %v4254 = vtanh.pop %v4238
      %v4255 = vtanh.pop %v4239
      %v4256 = vtanh.pop %v4240
      %v4257 = vtanh.pop %v4241
      %v4258 = vtanh.pop %v4242
      %v4259 = vtanh.pop %v4243
      %v4260 = vtanh.pop %v4244
      %v4261 = vtanh.pop %v4245
      %v4262 = vtanh.pop %v4246
      %v4263 = vtanh.pop %v4247
      %v4264 = vmul.f32 %v4248, 0.5
      %v4265 = vmul.f32 %v4249, 0.5
      %v4266 = vmul.f32 %v4250, 0.5
      %v4267 = vmul.f32 %v4251, 0.5
      %v4268 = vmul.f32 %v4252, 0.5
      %v4269 = vmul.f32 %v4253, 0.5
      %v4270 = vmul.f32 %v4254, 0.5
      %v4271 = vmul.f32 %v4255, 0.5
      %v4272 = vmul.f32 %v4256, 0.5
      %v4273 = vmul.f32 %v4257, 0.5
      %v4274 = vmul.f32 %v4258, 0.5
      %v4275 = vmul.f32 %v4259, 0.5
      %v4276 = vmul.f32 %v4260, 0.5
      %v4277 = vmul.f32 %v4261, 0.5
      %v4278 = vmul.f32 %v4262, 0.5
      %v4279 = vmul.f32 %v4263, 0.5
      %v4280 = vadd.f32 %v4264, 0.5
      %v4281 = vadd.f32 %v4265, 0.5
      %v4282 = vadd.f32 %v4266, 0.5
      %v4283 = vadd.f32 %v4267, 0.5
      %v4284 = vadd.f32 %v4268, 0.5
      %v4285 = vadd.f32 %v4269, 0.5
      %v4286 = vadd.f32 %v4270, 0.5
      %v4287 = vadd.f32 %v4271, 0.5
      %v4288 = vadd.f32 %v4272, 0.5
      %v4289 = vadd.f32 %v4273, 0.5
      %v4290 = vadd.f32 %v4274, 0.5
      %v4291 = vadd.f32 %v4275, 0.5
      %v4292 = vadd.f32 %v4276, 0.5
      %v4293 = vadd.f32 %v4277, 0.5
      %v4294 = vadd.f32 %v4278, 0.5
      %v4295 = vadd.f32 %v4279, 0.5
      %v4296 = vmul.f32 %v4154, %v4280
      %v4297 = vmul.f32 %v4159, %v4281
      %v4298 = vmul.f32 %v4164, %v4282
      %v4299 = vmul.f32 %v4169, %v4283
      %v4300 = vmul.f32 %v4174, %v4284
      %v4301 = vmul.f32 %v4179, %v4285
      %v4302 = vmul.f32 %v4184, %v4286
      %v4303 = vmul.f32 %v4189, %v4287
      %v4304 = vmul.f32 %v4194, %v4288
      %v4305 = vmul.f32 %v4199, %v4289
      %v4306 = vmul.f32 %v4204, %v4290
      %v4307 = vmul.f32 %v4209, %v4291
      %v4308 = vmul.f32 %v4214, %v4292
      %v4309 = vmul.f32 %v4219, %v4293
      %v4310 = vmul.f32 %v4224, %v4294
      %v4311 = vmul.f32 %v4229, %v4295
      %v4312 = vld [vmem:[%s5 + $0x1a8] sm:$0x1]
      %v4313 = vlaneseq
      %v4314 = vshrl.u32 %v4313, 7
      %v4315 = vsub.s32 0, %v4314
      %v4316 = vrot.slane %v4312, %v4315
      %v4317 = vmul.f32 %v4296, %v4316
      %v4318 = vmul.f32 %v4297, %v4316
      %v4319 = vmul.f32 %v4298, %v4316
      %v4320 = vmul.f32 %v4299, %v4316
      %v4321 = vmul.f32 %v4300, %v4316
      %v4322 = vmul.f32 %v4301, %v4316
      %v4323 = vmul.f32 %v4302, %v4316
      %v4324 = vmul.f32 %v4303, %v4316
      %v4325 = vmul.f32 %v4304, %v4316
      %v4326 = vmul.f32 %v4305, %v4316
      %v4327 = vmul.f32 %v4306, %v4316
      %v4328 = vmul.f32 %v4307, %v4316
      %v4329 = vmul.f32 %v4308, %v4316
      %v4330 = vmul.f32 %v4309, %v4316
      %v4331 = vmul.f32 %v4310, %v4316
      %v4332 = vmul.f32 %v4311, %v4316
      %v4333 = vsel %vm1365, %v4317, 0.0
      %4334 = vadd.xlane.f32.xlu0 %v4333
      %v4335 = vpop.xlane.xlu0 %4334
      %v4336 = vsel %vm1365, %v4318, 0.0
      %4337 = vadd.xlane.f32.xlu0 %v4336
      %v4338 = vpop.xlane.xlu0 %4337
      %v4339 = vsel %vm1365, %v4319, 0.0
      %4340 = vadd.xlane.f32.xlu0 %v4339
      %v4341 = vpop.xlane.xlu0 %4340
      %v4342 = vsel %vm1365, %v4320, 0.0
      %4343 = vadd.xlane.f32.xlu0 %v4342
      %v4344 = vpop.xlane.xlu0 %4343
      %v4345 = vsel %vm1365, %v4321, 0.0
      %4346 = vadd.xlane.f32.xlu0 %v4345
      %v4347 = vpop.xlane.xlu0 %4346
      %v4348 = vsel %vm1365, %v4322, 0.0
      %4349 = vadd.xlane.f32.xlu0 %v4348
      %v4350 = vpop.xlane.xlu0 %4349
      %v4351 = vsel %vm1365, %v4323, 0.0
      %4352 = vadd.xlane.f32.xlu0 %v4351
      %v4353 = vpop.xlane.xlu0 %4352
      %v4354 = vsel %vm1365, %v4324, 0.0
      %4355 = vadd.xlane.f32.xlu0 %v4354
      %v4356 = vpop.xlane.xlu0 %4355
      %v4357 = vsel %vm1365, %v4325, 0.0
      %4358 = vadd.xlane.f32.xlu0 %v4357
      %v4359 = vpop.xlane.xlu0 %4358
      %v4360 = vsel %vm1365, %v4326, 0.0
      %4361 = vadd.xlane.f32.xlu0 %v4360
      %v4362 = vpop.xlane.xlu0 %4361
      %v4363 = vsel %vm1365, %v4327, 0.0
      %4364 = vadd.xlane.f32.xlu0 %v4363
      %v4365 = vpop.xlane.xlu0 %4364
      %v4366 = vsel %vm1365, %v4328, 0.0
      %4367 = vadd.xlane.f32.xlu0 %v4366
      %v4368 = vpop.xlane.xlu0 %4367
      %v4369 = vsel %vm1365, %v4329, 0.0
      %4370 = vadd.xlane.f32.xlu0 %v4369
      %v4371 = vpop.xlane.xlu0 %4370
      %v4372 = vsel %vm1365, %v4330, 0.0
      %4373 = vadd.xlane.f32.xlu0 %v4372
      %v4374 = vpop.xlane.xlu0 %4373
      %v4375 = vsel %vm1365, %v4331, 0.0
      %4376 = vadd.xlane.f32.xlu0 %v4375
      %v4377 = vpop.xlane.xlu0 %4376
      %v4378 = vsel %vm1365, %v4332, 0.0
      %4379 = vadd.xlane.f32.xlu0 %v4378
      %v4380 = vpop.xlane.xlu0 %4379
      %v4381 = vld [vmem:[%s5 + $0x1b0] sm:$0x1]
      %v4382 = vlaneseq
      %v4383 = vshrl.u32 %v4382, 7
      %v4384 = vsub.s32 0, %v4383
      %v4385 = vrot.slane %v4381, %v4384
      %v4386 = vadd.f32 %v4335, %v4385
      %v4387 = vadd.f32 %v4338, %v4385
      %v4388 = vadd.f32 %v4341, %v4385
      %v4389 = vadd.f32 %v4344, %v4385
      %v4390 = vadd.f32 %v4347, %v4385
      %v4391 = vadd.f32 %v4350, %v4385
      %v4392 = vadd.f32 %v4353, %v4385
      %v4393 = vadd.f32 %v4356, %v4385
      %v4394 = vadd.f32 %v4359, %v4385
      %v4395 = vadd.f32 %v4362, %v4385
      %v4396 = vadd.f32 %v4365, %v4385
      %v4397 = vadd.f32 %v4368, %v4385
      %v4398 = vadd.f32 %v4371, %v4385
      %v4399 = vadd.f32 %v4374, %v4385
      %v4400 = vadd.f32 %v4377, %v4385
      %v4401 = vadd.f32 %v4380, %v4385
      %v4402 = vmul.f32 %v4386, 0.5
      %v4403 = vmul.f32 %v4387, 0.5
      %v4404 = vmul.f32 %v4388, 0.5
      %v4405 = vmul.f32 %v4389, 0.5
      %v4406 = vmul.f32 %v4390, 0.5
      %v4407 = vmul.f32 %v4391, 0.5
      %v4408 = vmul.f32 %v4392, 0.5
      %v4409 = vmul.f32 %v4393, 0.5
      %v4410 = vmul.f32 %v4394, 0.5
      %v4411 = vmul.f32 %v4395, 0.5
      %v4412 = vmul.f32 %v4396, 0.5
      %v4413 = vmul.f32 %v4397, 0.5
      %v4414 = vmul.f32 %v4398, 0.5
      %v4415 = vmul.f32 %v4399, 0.5
      %v4416 = vmul.f32 %v4400, 0.5
      %v4417 = vmul.f32 %v4401, 0.5
      %v4418 = vtanh.pop %v4402
      %v4419 = vtanh.pop %v4403
      %v4420 = vtanh.pop %v4404
      %v4421 = vtanh.pop %v4405
      %v4422 = vtanh.pop %v4406
      %v4423 = vtanh.pop %v4407
      %v4424 = vtanh.pop %v4408
      %v4425 = vtanh.pop %v4409
      %v4426 = vtanh.pop %v4410
      %v4427 = vtanh.pop %v4411
      %v4428 = vtanh.pop %v4412
      %v4429 = vtanh.pop %v4413
      %v4430 = vtanh.pop %v4414
      %v4431 = vtanh.pop %v4415
      %v4432 = vtanh.pop %v4416
      %v4433 = vtanh.pop %v4417
      %v4434 = vmul.f32 %v4418, 0.5
      %v4435 = vmul.f32 %v4419, 0.5
      %v4436 = vmul.f32 %v4420, 0.5
      %v4437 = vmul.f32 %v4421, 0.5
      %v4438 = vmul.f32 %v4422, 0.5
      %v4439 = vmul.f32 %v4423, 0.5
      %v4440 = vmul.f32 %v4424, 0.5
      %v4441 = vmul.f32 %v4425, 0.5
      %v4442 = vmul.f32 %v4426, 0.5
      %v4443 = vmul.f32 %v4427, 0.5
      %v4444 = vmul.f32 %v4428, 0.5
      %v4445 = vmul.f32 %v4429, 0.5
      %v4446 = vmul.f32 %v4430, 0.5
      %v4447 = vmul.f32 %v4431, 0.5
      %v4448 = vmul.f32 %v4432, 0.5
      %v4449 = vmul.f32 %v4433, 0.5
      %v4450 = vadd.f32 %v4434, 0.5
      %v4451 = vadd.f32 %v4435, 0.5
      %v4452 = vadd.f32 %v4436, 0.5
      %v4453 = vadd.f32 %v4437, 0.5
      %v4454 = vadd.f32 %v4438, 0.5
      %v4455 = vadd.f32 %v4439, 0.5
      %v4456 = vadd.f32 %v4440, 0.5
      %v4457 = vadd.f32 %v4441, 0.5
      %v4458 = vadd.f32 %v4442, 0.5
      %v4459 = vadd.f32 %v4443, 0.5
      %v4460 = vadd.f32 %v4444, 0.5
      %v4461 = vadd.f32 %v4445, 0.5
      %v4462 = vadd.f32 %v4446, 0.5
      %v4463 = vadd.f32 %v4447, 0.5
      %v4464 = vadd.f32 %v4448, 0.5
      %v4465 = vadd.f32 %v4449, 0.5
      %v4466 = vmul.f32 %v4386, %v4450
      %v4467 = vmul.f32 %v4387, %v4451
      %v4468 = vmul.f32 %v4388, %v4452
      %v4469 = vmul.f32 %v4389, %v4453
      %v4470 = vmul.f32 %v4390, %v4454
      %v4471 = vmul.f32 %v4391, %v4455
      %v4472 = vmul.f32 %v4392, %v4456
      %v4473 = vmul.f32 %v4393, %v4457
      %v4474 = vmul.f32 %v4394, %v4458
      %v4475 = vmul.f32 %v4395, %v4459
      %v4476 = vmul.f32 %v4396, %v4460
      %v4477 = vmul.f32 %v4397, %v4461
      %v4478 = vmul.f32 %v4398, %v4462
      %v4479 = vmul.f32 %v4399, %v4463
      %v4480 = vmul.f32 %v4400, %v4464
      %v4481 = vmul.f32 %v4401, %v4465
      %4483 = vset.pattern.permute.xlu0 0
      %4484 = vperm.xlu0 %4483, %v4466
      %v4485 = vpop.permute.xlu0 %4484
      %4488 = vset.pattern.permute.xlu0 0
      %4489 = vperm.xlu0 %4488, %v4467
      %v4490 = vpop.permute.xlu0 %4489
      %4493 = vset.pattern.permute.xlu0 0
      %4494 = vperm.xlu0 %4493, %v4468
      %v4495 = vpop.permute.xlu0 %4494
      %4498 = vset.pattern.permute.xlu0 0
      %4499 = vperm.xlu0 %4498, %v4469
      %v4500 = vpop.permute.xlu0 %4499
      %4503 = vset.pattern.permute.xlu0 0
      %4504 = vperm.xlu0 %4503, %v4470
      %v4505 = vpop.permute.xlu0 %4504
      %4508 = vset.pattern.permute.xlu0 0
      %4509 = vperm.xlu0 %4508, %v4471
      %v4510 = vpop.permute.xlu0 %4509
      %4513 = vset.pattern.permute.xlu0 0
      %4514 = vperm.xlu0 %4513, %v4472
      %v4515 = vpop.permute.xlu0 %4514
      %4518 = vset.pattern.permute.xlu0 0
      %4519 = vperm.xlu0 %4518, %v4473
      %v4520 = vpop.permute.xlu0 %4519
      %4523 = vset.pattern.permute.xlu0 0
      %4524 = vperm.xlu0 %4523, %v4474
      %v4525 = vpop.permute.xlu0 %4524
      %4528 = vset.pattern.permute.xlu0 0
      %4529 = vperm.xlu0 %4528, %v4475
      %v4530 = vpop.permute.xlu0 %4529
      %4533 = vset.pattern.permute.xlu0 0
      %4534 = vperm.xlu0 %4533, %v4476
      %v4535 = vpop.permute.xlu0 %4534
      %4538 = vset.pattern.permute.xlu0 0
      %4539 = vperm.xlu0 %4538, %v4477
      %v4540 = vpop.permute.xlu0 %4539
      %4543 = vset.pattern.permute.xlu0 0
      %4544 = vperm.xlu0 %4543, %v4478
      %v4545 = vpop.permute.xlu0 %4544
      %4548 = vset.pattern.permute.xlu0 0
      %4549 = vperm.xlu0 %4548, %v4479
      %v4550 = vpop.permute.xlu0 %4549
      %4553 = vset.pattern.permute.xlu0 0
      %4554 = vperm.xlu0 %4553, %v4480
      %v4555 = vpop.permute.xlu0 %4554
      %4558 = vset.pattern.permute.xlu0 0
      %4559 = vperm.xlu0 %4558, %v4481
      %v4560 = vpop.permute.xlu0 %4559
      %v4562 = vmul.f32 %v4296, %v4485
      %v4563 = vmul.f32 %v4297, %v4490
      %v4564 = vmul.f32 %v4298, %v4495
      %v4565 = vmul.f32 %v4299, %v4500
      %v4566 = vmul.f32 %v4300, %v4505
      %v4567 = vmul.f32 %v4301, %v4510
      %v4568 = vmul.f32 %v4302, %v4515
      %v4569 = vmul.f32 %v4303, %v4520
      %v4570 = vmul.f32 %v4304, %v4525
      %v4571 = vmul.f32 %v4305, %v4530
      %v4572 = vmul.f32 %v4306, %v4535
      %v4573 = vmul.f32 %v4307, %v4540
      %v4574 = vmul.f32 %v4308, %v4545
      %v4575 = vmul.f32 %v4309, %v4550
      %v4576 = vmul.f32 %v4310, %v4555
      %v4577 = vmul.f32 %v4311, %v4560
      %v4578 = vpack.c.bf16 %v4563, %v4562
      %v4579 = vpack.c.bf16 %v4565, %v4564
      %v4580 = vpack.c.bf16 %v4567, %v4566
      %v4581 = vpack.c.bf16 %v4569, %v4568
      %v4582 = vpack.c.bf16 %v4571, %v4570
      %v4583 = vpack.c.bf16 %v4573, %v4572
      %v4584 = vpack.c.bf16 %v4575, %v4574
      %v4585 = vpack.c.bf16 %v4577, %v4576
      %4586 = vmatprep.subr.bf16.mxu0 0
      %4587 = vmatpush1.bf16.msra.mxu0 %v4578
      %4588 = vmatprep.subr.bf16.mxu0 0
      %4589 = vmatpush1.bf16.msra.mxu0 %v4579
      %4590 = vmatprep.subr.bf16.mxu0 0
      %4591 = vmatpush1.bf16.msra.mxu0 %v4580
      %4592 = vmatprep.subr.bf16.mxu0 0
      %4593 = vmatpush1.bf16.msra.mxu0 %v4581
      %4594 = vmatprep.subr.bf16.mxu0 0
      %4595 = vmatpush1.bf16.msra.mxu0 %v4582
      %4596 = vmatprep.subr.bf16.mxu0 0
      %4597 = vmatpush1.bf16.msra.mxu0 %v4583
      %4598 = vmatprep.subr.bf16.mxu0 0
      %4599 = vmatpush1.bf16.msra.mxu0 %v4584
      %4600 = vmatprep.subr.bf16.mxu0 0
      %4601 = vmatpush1.bf16.msra.mxu0 %v4585
      %4602 = vmatprep.subr.bf16.mxu0 0
      %4603 = vmatpush1.bf16.msra.mxu0 0
      %4604 = vmatprep.subr.bf16.mxu0 0
      %4605 = vmatpush1.bf16.msra.mxu0 0
      %4606 = vmatprep.subr.bf16.mxu0 0
      %4607 = vmatpush1.bf16.msra.mxu0 0
      %4608 = vmatprep.subr.bf16.mxu0 0
      %4609 = vmatpush1.bf16.msra.mxu0 0
      %4610 = vmatprep.subr.bf16.mxu0 0
      %4611 = vmatpush1.bf16.msra.mxu0 0
      %4612 = vmatprep.subr.bf16.mxu0 0
      %4613 = vmatpush1.bf16.msra.mxu0 0
      %4614 = vmatprep.subr.bf16.mxu0 0
      %4615 = vmatpush1.bf16.msra.mxu0 0
      %4616 = vmatprep.subr.bf16.mxu0 0
      %4617 = vmatpush1.bf16.msra.mxu0 0
      %4618 = vmatprep.mubr.bf16.mxu0 0
      %4619 = vmatmul.mubr.bf16.gmra.mrb[0].mxu0 %v673
      %v4620 = vpop.f32.mrb[0].mxu0
      %v4621 = vadd.f32 0.0, %v4620
      %v4622 = vpop.f32.mrb[0].mxu0
      %v4623 = vpop.f32.mrb[0].mxu0
      %v4624 = vadd.f32 0.0, %v4623
      %v4625 = vpop.f32.mrb[0].mxu0
      %4626 = vmatprep.mubr.bf16.mxu0 0
      %4627 = vmatmul.mubr.bf16.gmra.mrb[0].mxu0 %v674
      %v4628 = vpop.f32.mrb[0].mxu0
      %v4629 = vadd.f32 0.0, %v4628
      %v4630 = vpop.f32.mrb[0].mxu0
      %v4631 = vpop.f32.mrb[0].mxu0
      %v4632 = vadd.f32 0.0, %v4631
      %v4633 = vpop.f32.mrb[0].mxu0
      %4634 = vmatprep.mubr.bf16.mxu0 0
      %4635 = vmatmul.mubr.bf16.gmra.mrb[0].mxu0 %v675
      %v4636 = vpop.f32.mrb[0].mxu0
      %v4637 = vadd.f32 0.0, %v4636
      %v4638 = vpop.f32.mrb[0].mxu0
      %v4639 = vpop.f32.mrb[0].mxu0
      %v4640 = vadd.f32 0.0, %v4639
      %v4641 = vpop.f32.mrb[0].mxu0
      %4642 = vmatprep.mubr.bf16.mxu0 0
      %4643 = vmatmul.mubr.bf16.gmra.mrb[0].mxu0 %v676
      %v4644 = vpop.f32.mrb[0].mxu0
      %v4645 = vadd.f32 0.0, %v4644
      %v4646 = vpop.f32.mrb[0].mxu0
      %v4647 = vpop.f32.mrb[0].mxu0
      %v4648 = vadd.f32 0.0, %v4647
      %v4649 = vpop.f32.mrb[0].mxu0
      %4650 = vdwg.mxu0
      %v4651 = vld [vmem:[%s5 + $0x1b8] sm:$0xff]
      %v4652 = vld [vmem:[%s5 + $0x1c0] sm:$0xff]
      %v4653 = vld [vmem:[%s5 + $0x1c8] sm:$0xff]
      %v4654 = vld [vmem:[%s5 + $0x1d0] sm:$0xff]
      %v4655 = vld [vmem:[%s5 + $0x1d8] sm:$0xff]
      %v4656 = vld [vmem:[%s5 + $0x1e0] sm:$0xff]
      %v4657 = vld [vmem:[%s5 + $0x1e8] sm:$0xff]
      %v4658 = vld [vmem:[%s5 + $0x1f0] sm:$0xff]
      %v4660 = vsel %vm1365, %v4621, 0
      %v4663 = vsel %vm1365, %v4624, 0
      %v4666 = vsel %vm1365, %v4629, 0
      %v4669 = vsel %vm1365, %v4632, 0
      %v4672 = vsel %vm1365, %v4637, 0
      %v4675 = vsel %vm1365, %v4640, 0
      %v4678 = vsel %vm1365, %v4645, 0
      %v4681 = vsel %vm1365, %v4648, 0
      %4683 = vmatprep.subr.mxu0 0.0
      %4684 = vmatpush1.msra.mxu0 %v4655
      %4685 = vmatprep.subr.mxu0 0.0
      %4686 = vmatpush1.msra.mxu0 %v4656
      %4687 = vmatprep.subr.mxu0 0.0
      %4688 = vmatpush1.msra.mxu0 %v4657
      %4689 = vmatprep.subr.mxu0 0.0
      %4690 = vmatpush1.msra.mxu0 %v4658
      %4691 = vmatprep.subr.mxu0 0.0
      %4692 = vmatpush1.msra.mxu0 0.0
      %4693 = vmatprep.subr.mxu0 0.0
      %4694 = vmatpush1.msra.mxu0 0.0
      %4695 = vmatprep.subr.mxu0 0.0
      %4696 = vmatpush1.msra.mxu0 0.0
      %4697 = vmatprep.subr.mxu0 0.0
      %4698 = vmatpush1.msra.mxu0 0.0
      %4699 = vmatprep.subr.mxu0 0.0
      %4700 = vmatpush1.msra.mxu0 0.0
      %4701 = vmatprep.subr.mxu0 0.0
      %4702 = vmatpush1.msra.mxu0 0.0
      %4703 = vmatprep.subr.mxu0 0.0
      %4704 = vmatpush1.msra.mxu0 0.0
      %4705 = vmatprep.subr.mxu0 0.0
      %4706 = vmatpush1.msra.mxu0 0.0
      %4707 = vmatprep.subr.mxu0 0.0
      %4708 = vmatpush1.msra.mxu0 0.0
      %4709 = vmatprep.subr.mxu0 0.0
      %4710 = vmatpush1.msra.mxu0 0.0
      %4711 = vmatprep.subr.mxu0 0.0
      %4712 = vmatpush1.msra.mxu0 0.0
      %4713 = vmatprep.subr.mxu0 0.0
      %4714 = vmatpush1.msra.mxu0 0.0
      %4715 = vmatprep.subr.mxu0 0.0
      %4716 = vmatpush1.msra.mxu0 0.0
      %4717 = vmatprep.subr.mxu0 0.0
      %4718 = vmatpush1.msra.mxu0 0.0
      %4719 = vmatprep.subr.mxu0 0.0
      %4720 = vmatpush1.msra.mxu0 0.0
      %4721 = vmatprep.subr.mxu0 0.0
      %4722 = vmatpush1.msra.mxu0 0.0
      %4723 = vmatprep.subr.mxu0 0.0
      %4724 = vmatpush1.msra.mxu0 0.0
      %4725 = vmatprep.subr.mxu0 0.0
      %4726 = vmatpush1.msra.mxu0 0.0
      %4727 = vmatprep.subr.mxu0 0.0
      %4728 = vmatpush1.msra.mxu0 0.0
      %4729 = vmatprep.subr.mxu0 0.0
      %4730 = vmatpush1.msra.mxu0 0.0
      %4731 = vmatprep.subr.mxu0 0.0
      %4732 = vmatpush1.msra.mxu0 0.0
      %4733 = vmatprep.subr.mxu0 0.0
      %4734 = vmatpush1.msra.mxu0 0.0
      %4735 = vmatprep.subr.mxu0 0.0
      %4736 = vmatpush1.msra.mxu0 0.0
      %4737 = vmatprep.subr.mxu0 0.0
      %4738 = vmatpush1.msra.mxu0 0.0
      %4739 = vmatprep.subr.mxu0 0.0
      %4740 = vmatpush1.msra.mxu0 0.0
      %4741 = vmatprep.subr.mxu0 0.0
      %4742 = vmatpush1.msra.mxu0 0.0
      %4743 = vmatprep.subr.mxu0 0.0
      %4744 = vmatpush1.msra.mxu0 0.0
      %4745 = vmatprep.subr.mxu0 0.0
      %4746 = vmatpush1.msra.mxu0 0.0
      %4747 = vmatprep.mubr.f32.mxu0 0.0
      %4748 = vmatmul.mubr.f32.gmra.mrb[0].mxu0 %v4660
      %v4749 = vpop.f32.mrb[0].mxu0
      %v4750 = vadd.f32 0.0, %v4749
      %v4751 = vpop.f32.mrb[0].mxu0
      %4752 = vmatprep.mubr.f32.mxu0 0.0
      %4753 = vmatmul.mubr.f32.gmra.mrb[0].mxu0 %v4663
      %v4754 = vpop.f32.mrb[0].mxu0
      %v4755 = vadd.f32 0.0, %v4754
      %v4756 = vpop.f32.mrb[0].mxu0
      %4757 = vmatprep.mubr.f32.mxu0 0.0
      %4758 = vmatmul.mubr.f32.gmra.mrb[0].mxu0 %v4666
      %v4759 = vpop.f32.mrb[0].mxu0
      %v4760 = vadd.f32 0.0, %v4759
      %v4761 = vpop.f32.mrb[0].mxu0
      %4762 = vmatprep.mubr.f32.mxu0 0.0
      %4763 = vmatmul.mubr.f32.gmra.mrb[0].mxu0 %v4669
      %v4764 = vpop.f32.mrb[0].mxu0
      %v4765 = vadd.f32 0.0, %v4764
      %v4766 = vpop.f32.mrb[0].mxu0
      %4767 = vmatprep.mubr.f32.mxu0 0.0
      %4768 = vmatmul.mubr.f32.gmra.mrb[0].mxu0 %v4672
      %v4769 = vpop.f32.mrb[0].mxu0
      %v4770 = vadd.f32 0.0, %v4769
      %v4771 = vpop.f32.mrb[0].mxu0
      %4772 = vmatprep.mubr.f32.mxu0 0.0
      %4773 = vmatmul.mubr.f32.gmra.mrb[0].mxu0 %v4675
      %v4774 = vpop.f32.mrb[0].mxu0
      %v4775 = vadd.f32 0.0, %v4774
      %v4776 = vpop.f32.mrb[0].mxu0
      %4777 = vmatprep.mubr.f32.mxu0 0.0
      %4778 = vmatmul.mubr.f32.gmra.mrb[0].mxu0 %v4678
      %v4779 = vpop.f32.mrb[0].mxu0
      %v4780 = vadd.f32 0.0, %v4779
      %v4781 = vpop.f32.mrb[0].mxu0
      %4782 = vmatprep.mubr.f32.mxu0 0.0
      %4783 = vmatmul.mubr.f32.gmra.mrb[0].mxu0 %v4681
      %v4784 = vpop.f32.mrb[0].mxu0
      %v4785 = vadd.f32 0.0, %v4784
      %v4786 = vpop.f32.mrb[0].mxu0
      %4787 = vdwg.mxu0
      %4788 = vmatprep.subr.mxu0 0.0
      %4789 = vmatpush1.msra.mxu0 %v4651
      %4790 = vmatprep.subr.mxu0 0.0
      %4791 = vmatpush1.msra.mxu0 %v4652
      %4792 = vmatprep.subr.mxu0 0.0
      %4793 = vmatpush1.msra.mxu0 %v4653
      %4794 = vmatprep.subr.mxu0 0.0
      %4795 = vmatpush1.msra.mxu0 %v4654
      %4796 = vmatprep.subr.mxu0 0.0
      %4797 = vmatpush1.msra.mxu0 0.0
      %4798 = vmatprep.subr.mxu0 0.0
      %4799 = vmatpush1.msra.mxu0 0.0
      %4800 = vmatprep.subr.mxu0 0.0
      %4801 = vmatpush1.msra.mxu0 0.0
      %4802 = vmatprep.subr.mxu0 0.0
      %4803 = vmatpush1.msra.mxu0 0.0
      %4804 = vmatprep.subr.mxu0 0.0
      %4805 = vmatpush1.msra.mxu0 0.0
      %4806 = vmatprep.subr.mxu0 0.0
      %4807 = vmatpush1.msra.mxu0 0.0
      %4808 = vmatprep.subr.mxu0 0.0
      %4809 = vmatpush1.msra.mxu0 0.0
      %4810 = vmatprep.subr.mxu0 0.0
      %4811 = vmatpush1.msra.mxu0 0.0
      %4812 = vmatprep.subr.mxu0 0.0
      %4813 = vmatpush1.msra.mxu0 0.0
      %4814 = vmatprep.subr.mxu0 0.0
      %4815 = vmatpush1.msra.mxu0 0.0
      %4816 = vmatprep.subr.mxu0 0.0
      %4817 = vmatpush1.msra.mxu0 0.0
      %4818 = vmatprep.subr.mxu0 0.0
      %4819 = vmatpush1.msra.mxu0 0.0
      %4820 = vmatprep.subr.mxu0 0.0
      %4821 = vmatpush1.msra.mxu0 0.0
      %4822 = vmatprep.subr.mxu0 0.0
      %4823 = vmatpush1.msra.mxu0 0.0
      %4824 = vmatprep.subr.mxu0 0.0
      %4825 = vmatpush1.msra.mxu0 0.0
      %4826 = vmatprep.subr.mxu0 0.0
      %4827 = vmatpush1.msra.mxu0 0.0
      %4828 = vmatprep.subr.mxu0 0.0
      %4829 = vmatpush1.msra.mxu0 0.0
      %4830 = vmatprep.subr.mxu0 0.0
      %4831 = vmatpush1.msra.mxu0 0.0
      %4832 = vmatprep.subr.mxu0 0.0
      %4833 = vmatpush1.msra.mxu0 0.0
      %4834 = vmatprep.subr.mxu0 0.0
      %4835 = vmatpush1.msra.mxu0 0.0
      %4836 = vmatprep.subr.mxu0 0.0
      %4837 = vmatpush1.msra.mxu0 0.0
      %4838 = vmatprep.subr.mxu0 0.0
      %4839 = vmatpush1.msra.mxu0 0.0
      %4840 = vmatprep.subr.mxu0 0.0
      %4841 = vmatpush1.msra.mxu0 0.0
      %4842 = vmatprep.subr.mxu0 0.0
      %4843 = vmatpush1.msra.mxu0 0.0
      %4844 = vmatprep.subr.mxu0 0.0
      %4845 = vmatpush1.msra.mxu0 0.0
      %4846 = vmatprep.subr.mxu0 0.0
      %4847 = vmatpush1.msra.mxu0 0.0
      %4848 = vmatprep.subr.mxu0 0.0
      %4849 = vmatpush1.msra.mxu0 0.0
      %4850 = vmatprep.subr.mxu0 0.0
      %4851 = vmatpush1.msra.mxu0 0.0
      %4852 = vmatprep.mubr.f32.mxu0 0.0
      %4853 = vmatmul.mubr.f32.gmra.mrb[0].mxu0 %v3277
      %v4854 = vpop.f32.mrb[0].mxu0
      %v4855 = vadd.f32 %v4750, %v4854
      %v4856 = vpop.f32.mrb[0].mxu0
      %4857 = vmatprep.mubr.f32.mxu0 0.0
      %4858 = vmatmul.mubr.f32.gmra.mrb[0].mxu0 %v3280
      %v4859 = vpop.f32.mrb[0].mxu0
      %v4860 = vadd.f32 %v4755, %v4859
      %v4861 = vpop.f32.mrb[0].mxu0
      %4862 = vmatprep.mubr.f32.mxu0 0.0
      %4863 = vmatmul.mubr.f32.gmra.mrb[0].mxu0 %v3283
      %v4864 = vpop.f32.mrb[0].mxu0
      %v4865 = vadd.f32 %v4760, %v4864
      %v4866 = vpop.f32.mrb[0].mxu0
      %4867 = vmatprep.mubr.f32.mxu0 0.0
      %4868 = vmatmul.mubr.f32.gmra.mrb[0].mxu0 %v3286
      %v4869 = vpop.f32.mrb[0].mxu0
      %v4870 = vadd.f32 %v4765, %v4869
      %v4871 = vpop.f32.mrb[0].mxu0
      %4872 = vmatprep.mubr.f32.mxu0 0.0
      %4873 = vmatmul.mubr.f32.gmra.mrb[0].mxu0 %v3289
      %v4874 = vpop.f32.mrb[0].mxu0
      %v4875 = vadd.f32 %v4770, %v4874
      %v4876 = vpop.f32.mrb[0].mxu0
      %4877 = vmatprep.mubr.f32.mxu0 0.0
      %4878 = vmatmul.mubr.f32.gmra.mrb[0].mxu0 %v3292
      %v4879 = vpop.f32.mrb[0].mxu0
      %v4880 = vadd.f32 %v4775, %v4879
      %v4881 = vpop.f32.mrb[0].mxu0
      %4882 = vmatprep.mubr.f32.mxu0 0.0
      %4883 = vmatmul.mubr.f32.gmra.mrb[0].mxu0 %v3295
      %v4884 = vpop.f32.mrb[0].mxu0
      %v4885 = vadd.f32 %v4780, %v4884
      %v4886 = vpop.f32.mrb[0].mxu0
      %4887 = vmatprep.mubr.f32.mxu0 0.0
      %4888 = vmatmul.mubr.f32.gmra.mrb[0].mxu0 %v3298
      %v4889 = vpop.f32.mrb[0].mxu0
      %v4890 = vadd.f32 %v4785, %v4889
      %v4891 = vpop.f32.mrb[0].mxu0
      %4892 = vdwg.mxu0
      %v4893 = vld [vmem:[%s5 + $0x1f8] sm:$0x1]
      %v4894 = vlaneseq
      %v4895 = vshrl.u32 %v4894, 7
      %v4896 = vsub.s32 0, %v4895
      %v4897 = vrot.slane %v4893, %v4896
      %v4898 = vadd.f32 %v4855, %v4897
      %v4899 = vadd.f32 %v4860, %v4897
      %v4900 = vadd.f32 %v4865, %v4897
      %v4901 = vadd.f32 %v4870, %v4897
      %v4902 = vadd.f32 %v4875, %v4897
      %v4903 = vadd.f32 %v4880, %v4897
      %v4904 = vadd.f32 %v4885, %v4897
      %v4905 = vadd.f32 %v4890, %v4897
      %v4906 = vmul.f32 %v4898, 0.5
      %v4907 = vmul.f32 %v4899, 0.5
      %v4908 = vmul.f32 %v4900, 0.5
      %v4909 = vmul.f32 %v4901, 0.5
      %v4910 = vmul.f32 %v4902, 0.5
      %v4911 = vmul.f32 %v4903, 0.5
      %v4912 = vmul.f32 %v4904, 0.5
      %v4913 = vmul.f32 %v4905, 0.5
      %v4914 = vtanh.pop %v4906
      %v4915 = vtanh.pop %v4907
      %v4916 = vtanh.pop %v4908
      %v4917 = vtanh.pop %v4909
      %v4918 = vtanh.pop %v4910
      %v4919 = vtanh.pop %v4911
      %v4920 = vtanh.pop %v4912
      %v4921 = vtanh.pop %v4913
      %v4922 = vmul.f32 %v4914, 0.5
      %v4923 = vmul.f32 %v4915, 0.5
      %v4924 = vmul.f32 %v4916, 0.5
      %v4925 = vmul.f32 %v4917, 0.5
      %v4926 = vmul.f32 %v4918, 0.5
      %v4927 = vmul.f32 %v4919, 0.5
      %v4928 = vmul.f32 %v4920, 0.5
      %v4929 = vmul.f32 %v4921, 0.5
      %v4930 = vadd.f32 %v4922, 0.5
      %v4931 = vadd.f32 %v4923, 0.5
      %v4932 = vadd.f32 %v4924, 0.5
      %v4933 = vadd.f32 %v4925, 0.5
      %v4934 = vadd.f32 %v4926, 0.5
      %v4935 = vadd.f32 %v4927, 0.5
      %v4936 = vadd.f32 %v4928, 0.5
      %v4937 = vadd.f32 %v4929, 0.5
      %v4938 = vmul.f32 %v4898, %v4930
      %v4939 = vmul.f32 %v4899, %v4931
      %v4940 = vmul.f32 %v4900, %v4932
      %v4941 = vmul.f32 %v4901, %v4933
      %v4942 = vmul.f32 %v4902, %v4934
      %v4943 = vmul.f32 %v4903, %v4935
      %v4944 = vmul.f32 %v4904, %v4936
      %v4945 = vmul.f32 %v4905, %v4937
      %v4946 = vld [vmem:[%s5 + $0x200] sm:$0xff]
      %v4947 = vld [vmem:[%s5 + $0x208] sm:$0xff]
      %v4948 = vld [vmem:[%s5 + $0x210] sm:$0xff]
      %v4949 = vld [vmem:[%s5 + $0x218] sm:$0xff]
      %v4950 = vld [vmem:[%s5 + $0x220] sm:$0x1]
      %v4951 = vlaneseq
      %v4952 = vshrl.u32 %v4951, 7
      %v4953 = vsub.s32 0, %v4952
      %v4954 = vrot.slane %v4950, %v4953
      %v4956 = vsel %vm1365, %v4938, 0
      %v4959 = vsel %vm1365, %v4939, 0
      %v4962 = vsel %vm1365, %v4940, 0
      %v4965 = vsel %vm1365, %v4941, 0
      %v4968 = vsel %vm1365, %v4942, 0
      %v4971 = vsel %vm1365, %v4943, 0
      %v4974 = vsel %vm1365, %v4944, 0
      %v4977 = vsel %vm1365, %v4945, 0
      %4979 = vmatprep.subr.mxu0 0.0
      %4980 = vmatpush1.msra.mxu0 %v4946
      %4981 = vmatprep.subr.mxu0 0.0
      %4982 = vmatpush1.msra.mxu0 %v4947
      %4983 = vmatprep.subr.mxu0 0.0
      %4984 = vmatpush1.msra.mxu0 %v4948
      %4985 = vmatprep.subr.mxu0 0.0
      %4986 = vmatpush1.msra.mxu0 %v4949
      %4987 = vmatprep.subr.mxu0 0.0
      %4988 = vmatpush1.msra.mxu0 0.0
      %4989 = vmatprep.subr.mxu0 0.0
      %4990 = vmatpush1.msra.mxu0 0.0
      %4991 = vmatprep.subr.mxu0 0.0
      %4992 = vmatpush1.msra.mxu0 0.0
      %4993 = vmatprep.subr.mxu0 0.0
      %4994 = vmatpush1.msra.mxu0 0.0
      %4995 = vmatprep.subr.mxu0 0.0
      %4996 = vmatpush1.msra.mxu0 0.0
      %4997 = vmatprep.subr.mxu0 0.0
      %4998 = vmatpush1.msra.mxu0 0.0
      %4999 = vmatprep.subr.mxu0 0.0
      %5000 = vmatpush1.msra.mxu0 0.0
      %5001 = vmatprep.subr.mxu0 0.0
      %5002 = vmatpush1.msra.mxu0 0.0
      %5003 = vmatprep.subr.mxu0 0.0
      %5004 = vmatpush1.msra.mxu0 0.0
      %5005 = vmatprep.subr.mxu0 0.0
      %5006 = vmatpush1.msra.mxu0 0.0
      %5007 = vmatprep.subr.mxu0 0.0
      %5008 = vmatpush1.msra.mxu0 0.0
      %5009 = vmatprep.subr.mxu0 0.0
      %5010 = vmatpush1.msra.mxu0 0.0
      %5011 = vmatprep.subr.mxu0 0.0
      %5012 = vmatpush1.msra.mxu0 0.0
      %5013 = vmatprep.subr.mxu0 0.0
      %5014 = vmatpush1.msra.mxu0 0.0
      %5015 = vmatprep.subr.mxu0 0.0
      %5016 = vmatpush1.msra.mxu0 0.0
      %5017 = vmatprep.subr.mxu0 0.0
      %5018 = vmatpush1.msra.mxu0 0.0
      %5019 = vmatprep.subr.mxu0 0.0
      %5020 = vmatpush1.msra.mxu0 0.0
      %5021 = vmatprep.subr.mxu0 0.0
      %5022 = vmatpush1.msra.mxu0 0.0
      %5023 = vmatprep.subr.mxu0 0.0
      %5024 = vmatpush1.msra.mxu0 0.0
      %5025 = vmatprep.subr.mxu0 0.0
      %5026 = vmatpush1.msra.mxu0 0.0
      %5027 = vmatprep.subr.mxu0 0.0
      %5028 = vmatpush1.msra.mxu0 0.0
      %5029 = vmatprep.subr.mxu0 0.0
      %5030 = vmatpush1.msra.mxu0 0.0
      %5031 = vmatprep.subr.mxu0 0.0
      %5032 = vmatpush1.msra.mxu0 0.0
      %5033 = vmatprep.subr.mxu0 0.0
      %5034 = vmatpush1.msra.mxu0 0.0
      %5035 = vmatprep.subr.mxu0 0.0
      %5036 = vmatpush1.msra.mxu0 0.0
      %5037 = vmatprep.subr.mxu0 0.0
      %5038 = vmatpush1.msra.mxu0 0.0
      %5039 = vmatprep.subr.mxu0 0.0
      %5040 = vmatpush1.msra.mxu0 0.0
      %5041 = vmatprep.subr.mxu0 0.0
      %5042 = vmatpush1.msra.mxu0 0.0
      %5043 = vmatprep.mubr.f32.mxu0 0.0
      %5044 = vmatmul.mubr.f32.gmra.mrb[0].mxu0 %v4956
      %v5045 = vpop.f32.mrb[0].mxu0
      %v5046 = vadd.f32 %v4954, %v5045
      %v5047 = vpop.f32.mrb[0].mxu0
      %5048 = vmatprep.mubr.f32.mxu0 0.0
      %5049 = vmatmul.mubr.f32.gmra.mrb[0].mxu0 %v4959
      %v5050 = vpop.f32.mrb[0].mxu0
      %v5051 = vadd.f32 %v4954, %v5050
      %v5052 = vpop.f32.mrb[0].mxu0
      %5053 = vmatprep.mubr.f32.mxu0 0.0
      %5054 = vmatmul.mubr.f32.gmra.mrb[0].mxu0 %v4962
      %v5055 = vpop.f32.mrb[0].mxu0
      %v5056 = vadd.f32 %v4954, %v5055
      %v5057 = vpop.f32.mrb[0].mxu0
      %5058 = vmatprep.mubr.f32.mxu0 0.0
      %5059 = vmatmul.mubr.f32.gmra.mrb[0].mxu0 %v4965
      %v5060 = vpop.f32.mrb[0].mxu0
      %v5061 = vadd.f32 %v4954, %v5060
      %v5062 = vpop.f32.mrb[0].mxu0
      %5063 = vmatprep.mubr.f32.mxu0 0.0
      %5064 = vmatmul.mubr.f32.gmra.mrb[0].mxu0 %v4968
      %v5065 = vpop.f32.mrb[0].mxu0
      %v5066 = vadd.f32 %v4954, %v5065
      %v5067 = vpop.f32.mrb[0].mxu0
      %5068 = vmatprep.mubr.f32.mxu0 0.0
      %5069 = vmatmul.mubr.f32.gmra.mrb[0].mxu0 %v4971
      %v5070 = vpop.f32.mrb[0].mxu0
      %v5071 = vadd.f32 %v4954, %v5070
      %v5072 = vpop.f32.mrb[0].mxu0
      %5073 = vmatprep.mubr.f32.mxu0 0.0
      %5074 = vmatmul.mubr.f32.gmra.mrb[0].mxu0 %v4974
      %v5075 = vpop.f32.mrb[0].mxu0
      %v5076 = vadd.f32 %v4954, %v5075
      %v5077 = vpop.f32.mrb[0].mxu0
      %5078 = vmatprep.mubr.f32.mxu0 0.0
      %5079 = vmatmul.mubr.f32.gmra.mrb[0].mxu0 %v4977
      %v5080 = vpop.f32.mrb[0].mxu0
      %v5081 = vadd.f32 %v4954, %v5080
      %v5082 = vpop.f32.mrb[0].mxu0
      %5083 = vdwg.mxu0
      %v5084 = vadd.f32 %v3264, %v5046
      %v5085 = vadd.f32 %v3265, %v5051
      %v5086 = vadd.f32 %v3266, %v5056
      %v5087 = vadd.f32 %v3267, %v5061
      %v5088 = vadd.f32 %v3268, %v5066
      %v5089 = vadd.f32 %v3269, %v5071
      %v5090 = vadd.f32 %v3270, %v5076
      %v5091 = vadd.f32 %v3271, %v5081
      %v5092 = vld [vmem:[%s5 + $0x228] sm:$0xff]
      %v5093 = vld [vmem:[%s5 + $0x230] sm:$0xff]
      %v5094 = vld [vmem:[%s5 + $0x238] sm:$0xff]
      %v5095 = vld [vmem:[%s5 + $0x240] sm:$0xff]
      %v5097 = vsel %vm1365, %v5084, 0
      %v5100 = vsel %vm1365, %v5085, 0
      %v5103 = vsel %vm1365, %v5086, 0
      %v5106 = vsel %vm1365, %v5087, 0
      %v5109 = vsel %vm1365, %v5088, 0
      %v5112 = vsel %vm1365, %v5089, 0
      %v5115 = vsel %vm1365, %v5090, 0
      %v5118 = vsel %vm1365, %v5091, 0
      %5120 = vmatprep.subr.mxu0 0.0
      %5121 = vmatpush1.msra.mxu0 %v5092
      %5122 = vmatprep.subr.mxu0 0.0
      %5123 = vmatpush1.msra.mxu0 %v5093
      %5124 = vmatprep.subr.mxu0 0.0
      %5125 = vmatpush1.msra.mxu0 %v5094
      %5126 = vmatprep.subr.mxu0 0.0
      %5127 = vmatpush1.msra.mxu0 %v5095
      %5128 = vmatprep.subr.mxu0 0.0
      %5129 = vmatpush1.msra.mxu0 0.0
      %5130 = vmatprep.subr.mxu0 0.0
      %5131 = vmatpush1.msra.mxu0 0.0
      %5132 = vmatprep.subr.mxu0 0.0
      %5133 = vmatpush1.msra.mxu0 0.0
      %5134 = vmatprep.subr.mxu0 0.0
      %5135 = vmatpush1.msra.mxu0 0.0
      %5136 = vmatprep.subr.mxu0 0.0
      %5137 = vmatpush1.msra.mxu0 0.0
      %5138 = vmatprep.subr.mxu0 0.0
      %5139 = vmatpush1.msra.mxu0 0.0
      %5140 = vmatprep.subr.mxu0 0.0
      %5141 = vmatpush1.msra.mxu0 0.0
      %5142 = vmatprep.subr.mxu0 0.0
      %5143 = vmatpush1.msra.mxu0 0.0
      %5144 = vmatprep.subr.mxu0 0.0
      %5145 = vmatpush1.msra.mxu0 0.0
      %5146 = vmatprep.subr.mxu0 0.0
      %5147 = vmatpush1.msra.mxu0 0.0
      %5148 = vmatprep.subr.mxu0 0.0
      %5149 = vmatpush1.msra.mxu0 0.0
      %5150 = vmatprep.subr.mxu0 0.0
      %5151 = vmatpush1.msra.mxu0 0.0
      %5152 = vmatprep.subr.mxu0 0.0
      %5153 = vmatpush1.msra.mxu0 0.0
      %5154 = vmatprep.subr.mxu0 0.0
      %5155 = vmatpush1.msra.mxu0 0.0
      %5156 = vmatprep.subr.mxu0 0.0
      %5157 = vmatpush1.msra.mxu0 0.0
      %5158 = vmatprep.subr.mxu0 0.0
      %5159 = vmatpush1.msra.mxu0 0.0
      %5160 = vmatprep.subr.mxu0 0.0
      %5161 = vmatpush1.msra.mxu0 0.0
      %5162 = vmatprep.subr.mxu0 0.0
      %5163 = vmatpush1.msra.mxu0 0.0
      %5164 = vmatprep.subr.mxu0 0.0
      %5165 = vmatpush1.msra.mxu0 0.0
      %5166 = vmatprep.subr.mxu0 0.0
      %5167 = vmatpush1.msra.mxu0 0.0
      %5168 = vmatprep.subr.mxu0 0.0
      %5169 = vmatpush1.msra.mxu0 0.0
      %5170 = vmatprep.subr.mxu0 0.0
      %5171 = vmatpush1.msra.mxu0 0.0
      %5172 = vmatprep.subr.mxu0 0.0
      %5173 = vmatpush1.msra.mxu0 0.0
      %5174 = vmatprep.subr.mxu0 0.0
      %5175 = vmatpush1.msra.mxu0 0.0
      %5176 = vmatprep.subr.mxu0 0.0
      %5177 = vmatpush1.msra.mxu0 0.0
      %5178 = vmatprep.subr.mxu0 0.0
      %5179 = vmatpush1.msra.mxu0 0.0
      %5180 = vmatprep.subr.mxu0 0.0
      %5181 = vmatpush1.msra.mxu0 0.0
      %5182 = vmatprep.subr.mxu0 0.0
      %5183 = vmatpush1.msra.mxu0 0.0
      %5184 = vmatprep.mubr.f32.mxu0 0.0
      %5185 = vmatmul.mubr.f32.gmra.mrb[0].mxu0 %v5097
      %v5186 = vpop.f32.mrb[0].mxu0
      %v5187 = vadd.f32 0.0, %v5186
      %v5188 = vpop.f32.mrb[0].mxu0
      %5189 = vmatprep.mubr.f32.mxu0 0.0
      %5190 = vmatmul.mubr.f32.gmra.mrb[0].mxu0 %v5100
      %v5191 = vpop.f32.mrb[0].mxu0
      %v5192 = vadd.f32 0.0, %v5191
      %v5193 = vpop.f32.mrb[0].mxu0
      %5194 = vmatprep.mubr.f32.mxu0 0.0
      %5195 = vmatmul.mubr.f32.gmra.mrb[0].mxu0 %v5103
      %v5196 = vpop.f32.mrb[0].mxu0
      %v5197 = vadd.f32 0.0, %v5196
      %v5198 = vpop.f32.mrb[0].mxu0
      %5199 = vmatprep.mubr.f32.mxu0 0.0
      %5200 = vmatmul.mubr.f32.gmra.mrb[0].mxu0 %v5106
      %v5201 = vpop.f32.mrb[0].mxu0
      %v5202 = vadd.f32 0.0, %v5201
      %v5203 = vpop.f32.mrb[0].mxu0
      %5204 = vmatprep.mubr.f32.mxu0 0.0
      %5205 = vmatmul.mubr.f32.gmra.mrb[0].mxu0 %v5109
      %v5206 = vpop.f32.mrb[0].mxu0
      %v5207 = vadd.f32 0.0, %v5206
      %v5208 = vpop.f32.mrb[0].mxu0
      %5209 = vmatprep.mubr.f32.mxu0 0.0
      %5210 = vmatmul.mubr.f32.gmra.mrb[0].mxu0 %v5112
      %v5211 = vpop.f32.mrb[0].mxu0
      %v5212 = vadd.f32 0.0, %v5211
      %v5213 = vpop.f32.mrb[0].mxu0
      %5214 = vmatprep.mubr.f32.mxu0 0.0
      %5215 = vmatmul.mubr.f32.gmra.mrb[0].mxu0 %v5115
      %v5216 = vpop.f32.mrb[0].mxu0
      %v5217 = vadd.f32 0.0, %v5216
      %v5218 = vpop.f32.mrb[0].mxu0
      %5219 = vmatprep.mubr.f32.mxu0 0.0
      %5220 = vmatmul.mubr.f32.gmra.mrb[0].mxu0 %v5118
      %v5221 = vpop.f32.mrb[0].mxu0
      %v5222 = vadd.f32 0.0, %v5221
      %v5223 = vpop.f32.mrb[0].mxu0
      %5224 = vdwg.mxu0
      %v5225 = vld [vmem:[%s5 + $0x248] sm:$0xff]
      %v5226 = vld [vmem:[%s5 + $0x250] sm:$0xff]
      %v5227 = vld [vmem:[%s5 + $0x258] sm:$0xff]
      %v5228 = vld [vmem:[%s5 + $0x260] sm:$0xff]
      %5229 = vmatprep.subr.mxu0 0.0
      %5230 = vmatpush1.msra.mxu0 %v5225
      %5231 = vmatprep.subr.mxu0 0.0
      %5232 = vmatpush1.msra.mxu0 %v5226
      %5233 = vmatprep.subr.mxu0 0.0
      %5234 = vmatpush1.msra.mxu0 %v5227
      %5235 = vmatprep.subr.mxu0 0.0
      %5236 = vmatpush1.msra.mxu0 %v5228
      %5237 = vmatprep.subr.mxu0 0.0
      %5238 = vmatpush1.msra.mxu0 0.0
      %5239 = vmatprep.subr.mxu0 0.0
      %5240 = vmatpush1.msra.mxu0 0.0
      %5241 = vmatprep.subr.mxu0 0.0
      %5242 = vmatpush1.msra.mxu0 0.0
      %5243 = vmatprep.subr.mxu0 0.0
      %5244 = vmatpush1.msra.mxu0 0.0
      %5245 = vmatprep.subr.mxu0 0.0
      %5246 = vmatpush1.msra.mxu0 0.0
      %5247 = vmatprep.subr.mxu0 0.0
      %5248 = vmatpush1.msra.mxu0 0.0
      %5249 = vmatprep.subr.mxu0 0.0
      %5250 = vmatpush1.msra.mxu0 0.0
      %5251 = vmatprep.subr.mxu0 0.0
      %5252 = vmatpush1.msra.mxu0 0.0
      %5253 = vmatprep.subr.mxu0 0.0
      %5254 = vmatpush1.msra.mxu0 0.0
      %5255 = vmatprep.subr.mxu0 0.0
      %5256 = vmatpush1.msra.mxu0 0.0
      %5257 = vmatprep.subr.mxu0 0.0
      %5258 = vmatpush1.msra.mxu0 0.0
      %5259 = vmatprep.subr.mxu0 0.0
      %5260 = vmatpush1.msra.mxu0 0.0
      %5261 = vmatprep.subr.mxu0 0.0
      %5262 = vmatpush1.msra.mxu0 0.0
      %5263 = vmatprep.subr.mxu0 0.0
      %5264 = vmatpush1.msra.mxu0 0.0
      %5265 = vmatprep.subr.mxu0 0.0
      %5266 = vmatpush1.msra.mxu0 0.0
      %5267 = vmatprep.subr.mxu0 0.0
      %5268 = vmatpush1.msra.mxu0 0.0
      %5269 = vmatprep.subr.mxu0 0.0
      %5270 = vmatpush1.msra.mxu0 0.0
      %5271 = vmatprep.subr.mxu0 0.0
      %5272 = vmatpush1.msra.mxu0 0.0
      %5273 = vmatprep.subr.mxu0 0.0
      %5274 = vmatpush1.msra.mxu0 0.0
      %5275 = vmatprep.subr.mxu0 0.0
      %5276 = vmatpush1.msra.mxu0 0.0
      %5277 = vmatprep.subr.mxu0 0.0
      %5278 = vmatpush1.msra.mxu0 0.0
      %5279 = vmatprep.subr.mxu0 0.0
      %5280 = vmatpush1.msra.mxu0 0.0
      %5281 = vmatprep.subr.mxu0 0.0
      %5282 = vmatpush1.msra.mxu0 0.0
      %5283 = vmatprep.subr.mxu0 0.0
      %5284 = vmatpush1.msra.mxu0 0.0
      %5285 = vmatprep.subr.mxu0 0.0
      %5286 = vmatpush1.msra.mxu0 0.0
      %5287 = vmatprep.subr.mxu0 0.0
      %5288 = vmatpush1.msra.mxu0 0.0
      %5289 = vmatprep.subr.mxu0 0.0
      %5290 = vmatpush1.msra.mxu0 0.0
      %5291 = vmatprep.subr.mxu0 0.0
      %5292 = vmatpush1.msra.mxu0 0.0
      %5293 = vmatprep.mubr.f32.mxu0 0.0
      %5294 = vmatmul.mubr.f32.gmra.mrb[0].mxu0 %v5097
      %v5295 = vpop.f32.mrb[0].mxu0
      %v5296 = vadd.f32 0.0, %v5295
      %v5297 = vpop.f32.mrb[0].mxu0
      %5298 = vmatprep.mubr.f32.mxu0 0.0
      %5299 = vmatmul.mubr.f32.gmra.mrb[0].mxu0 %v5100
      %v5300 = vpop.f32.mrb[0].mxu0
      %v5301 = vadd.f32 0.0, %v5300
      %v5302 = vpop.f32.mrb[0].mxu0
      %5303 = vmatprep.mubr.f32.mxu0 0.0
      %5304 = vmatmul.mubr.f32.gmra.mrb[0].mxu0 %v5103
      %v5305 = vpop.f32.mrb[0].mxu0
      %v5306 = vadd.f32 0.0, %v5305
      %v5307 = vpop.f32.mrb[0].mxu0
      %5308 = vmatprep.mubr.f32.mxu0 0.0
      %5309 = vmatmul.mubr.f32.gmra.mrb[0].mxu0 %v5106
      %v5310 = vpop.f32.mrb[0].mxu0
      %v5311 = vadd.f32 0.0, %v5310
      %v5312 = vpop.f32.mrb[0].mxu0
      %5313 = vmatprep.mubr.f32.mxu0 0.0
      %5314 = vmatmul.mubr.f32.gmra.mrb[0].mxu0 %v5109
      %v5315 = vpop.f32.mrb[0].mxu0
      %v5316 = vadd.f32 0.0, %v5315
      %v5317 = vpop.f32.mrb[0].mxu0
      %5318 = vmatprep.mubr.f32.mxu0 0.0
      %5319 = vmatmul.mubr.f32.gmra.mrb[0].mxu0 %v5112
      %v5320 = vpop.f32.mrb[0].mxu0
      %v5321 = vadd.f32 0.0, %v5320
      %v5322 = vpop.f32.mrb[0].mxu0
      %5323 = vmatprep.mubr.f32.mxu0 0.0
      %5324 = vmatmul.mubr.f32.gmra.mrb[0].mxu0 %v5115
      %v5325 = vpop.f32.mrb[0].mxu0
      %v5326 = vadd.f32 0.0, %v5325
      %v5327 = vpop.f32.mrb[0].mxu0
      %5328 = vmatprep.mubr.f32.mxu0 0.0
      %5329 = vmatmul.mubr.f32.gmra.mrb[0].mxu0 %v5118
      %v5330 = vpop.f32.mrb[0].mxu0
      %v5331 = vadd.f32 0.0, %v5330
      %v5332 = vpop.f32.mrb[0].mxu0
      %5333 = vdwg.mxu0
      %v5334 = vpack.c.bf16 %v5192, %v5187
      %v5335 = vpack.c.bf16 %v5202, %v5197
      %v5336 = vpack.c.bf16 %v5212, %v5207
      %v5337 = vpack.c.bf16 %v5222, %v5217
      %v5338 = vpack.c.bf16 %v5301, %v5296
      %v5339 = vpack.c.bf16 %v5311, %v5306
      %v5340 = vpack.c.bf16 %v5321, %v5316
      %v5341 = vpack.c.bf16 %v5331, %v5326
      %5342 = vmatprep.subr.bf16.mxu0 0
      %5343 = vmatpush1.bf16.msra.mxu0 %v5338
      %5344 = vmatprep.subr.bf16.mxu0 0
      %5345 = vmatpush1.bf16.msra.mxu0 %v5339
      %5346 = vmatprep.subr.bf16.mxu0 0
      %5347 = vmatpush1.bf16.msra.mxu0 %v5340
      %5348 = vmatprep.subr.bf16.mxu0 0
      %5349 = vmatpush1.bf16.msra.mxu0 %v5341
      %5350 = vmatprep.subr.bf16.mxu0 0
      %5351 = vmatpush1.bf16.msra.mxu0 0
      %5352 = vmatprep.subr.bf16.mxu0 0
      %5353 = vmatpush1.bf16.msra.mxu0 0
      %5354 = vmatprep.subr.bf16.mxu0 0
      %5355 = vmatpush1.bf16.msra.mxu0 0
      %5356 = vmatprep.subr.bf16.mxu0 0
      %5357 = vmatpush1.bf16.msra.mxu0 0
      %5358 = vmatprep.subr.bf16.mxu0 0
      %5359 = vmatpush1.bf16.msra.mxu0 0
      %5360 = vmatprep.subr.bf16.mxu0 0
      %5361 = vmatpush1.bf16.msra.mxu0 0
      %5362 = vmatprep.subr.bf16.mxu0 0
      %5363 = vmatpush1.bf16.msra.mxu0 0
      %5364 = vmatprep.subr.bf16.mxu0 0
      %5365 = vmatpush1.bf16.msra.mxu0 0
      %5366 = vmatprep.subr.bf16.mxu0 0
      %5367 = vmatpush1.bf16.msra.mxu0 0
      %5368 = vmatprep.subr.bf16.mxu0 0
      %5369 = vmatpush1.bf16.msra.mxu0 0
      %5370 = vmatprep.subr.bf16.mxu0 0
      %5371 = vmatpush1.bf16.msra.mxu0 0
      %5372 = vmatprep.subr.bf16.mxu0 0
      %5373 = vmatpush1.bf16.msra.mxu0 0
      %5374 = vmatprep.mubr.bf16.mxu0 0
      %5375 = vmatmul.mubr.bf16.gmra.mrb[0].mxu0 %v1613
      %v5376 = vpop.f32.mrb[0].mxu0
      %v5377 = vadd.f32 0.0, %v5376
      %v5378 = vpop.f32.mrb[0].mxu0
      %v5379 = vpop.f32.mrb[0].mxu0
      %v5380 = vadd.f32 0.0, %v5379
      %v5381 = vpop.f32.mrb[0].mxu0
      %5382 = vmatprep.mubr.bf16.mxu0 0
      %5383 = vmatmul.mubr.bf16.gmra.mrb[0].mxu0 %v1616
      %v5384 = vpop.f32.mrb[0].mxu0
      %v5385 = vadd.f32 0.0, %v5384
      %v5386 = vpop.f32.mrb[0].mxu0
      %v5387 = vpop.f32.mrb[0].mxu0
      %v5388 = vadd.f32 0.0, %v5387
      %v5389 = vpop.f32.mrb[0].mxu0
      %5390 = vmatprep.mubr.bf16.mxu0 0
      %5391 = vmatmul.mubr.bf16.gmra.mrb[0].mxu0 %v1619
      %v5392 = vpop.f32.mrb[0].mxu0
      %v5393 = vadd.f32 0.0, %v5392
      %v5394 = vpop.f32.mrb[0].mxu0
      %v5395 = vpop.f32.mrb[0].mxu0
      %v5396 = vadd.f32 0.0, %v5395
      %v5397 = vpop.f32.mrb[0].mxu0
      %5398 = vmatprep.mubr.bf16.mxu0 0
      %5399 = vmatmul.mubr.bf16.gmra.mrb[0].mxu0 %v1622
      %v5400 = vpop.f32.mrb[0].mxu0
      %v5401 = vadd.f32 0.0, %v5400
      %v5402 = vpop.f32.mrb[0].mxu0
      %v5403 = vpop.f32.mrb[0].mxu0
      %v5404 = vadd.f32 0.0, %v5403
      %v5405 = vpop.f32.mrb[0].mxu0
      %5406 = vmatprep.mubr.bf16.mxu0 0
      %5407 = vmatmul.mubr.bf16.gmra.mrb[0].mxu0 %v1625
      %v5408 = vpop.f32.mrb[0].mxu0
      %v5409 = vadd.f32 0.0, %v5408
      %v5410 = vpop.f32.mrb[0].mxu0
      %v5411 = vpop.f32.mrb[0].mxu0
      %v5412 = vadd.f32 0.0, %v5411
      %v5413 = vpop.f32.mrb[0].mxu0
      %5414 = vmatprep.mubr.bf16.mxu0 0
      %5415 = vmatmul.mubr.bf16.gmra.mrb[0].mxu0 %v1628
      %v5416 = vpop.f32.mrb[0].mxu0
      %v5417 = vadd.f32 0.0, %v5416
      %v5418 = vpop.f32.mrb[0].mxu0
      %v5419 = vpop.f32.mrb[0].mxu0
      %v5420 = vadd.f32 0.0, %v5419
      %v5421 = vpop.f32.mrb[0].mxu0
      %5422 = vmatprep.mubr.bf16.mxu0 0
      %5423 = vmatmul.mubr.bf16.gmra.mrb[0].mxu0 %v1631
      %v5424 = vpop.f32.mrb[0].mxu0
      %v5425 = vadd.f32 0.0, %v5424
      %v5426 = vpop.f32.mrb[0].mxu0
      %v5427 = vpop.f32.mrb[0].mxu0
      %v5428 = vadd.f32 0.0, %v5427
      %v5429 = vpop.f32.mrb[0].mxu0
      %5430 = vmatprep.mubr.bf16.mxu0 0
      %5431 = vmatmul.mubr.bf16.gmra.mrb[0].mxu0 %v1634
      %v5432 = vpop.f32.mrb[0].mxu0
      %v5433 = vadd.f32 0.0, %v5432
      %v5434 = vpop.f32.mrb[0].mxu0
      %v5435 = vpop.f32.mrb[0].mxu0
      %v5436 = vadd.f32 0.0, %v5435
      %v5437 = vpop.f32.mrb[0].mxu0
      %5438 = vdwg.mxu0
      %5439 = vmatprep.subr.bf16.mxu0 0
      %5440 = vmatpush1.bf16.msra.mxu0 %v5334
      %5441 = vmatprep.subr.bf16.mxu0 0
      %5442 = vmatpush1.bf16.msra.mxu0 %v5335
      %5443 = vmatprep.subr.bf16.mxu0 0
      %5444 = vmatpush1.bf16.msra.mxu0 %v5336
      %5445 = vmatprep.subr.bf16.mxu0 0
      %5446 = vmatpush1.bf16.msra.mxu0 %v5337
      %5447 = vmatprep.subr.bf16.mxu0 0
      %5448 = vmatpush1.bf16.msra.mxu0 0
      %5449 = vmatprep.subr.bf16.mxu0 0
      %5450 = vmatpush1.bf16.msra.mxu0 0
      %5451 = vmatprep.subr.bf16.mxu0 0
      %5452 = vmatpush1.bf16.msra.mxu0 0
      %5453 = vmatprep.subr.bf16.mxu0 0
      %5454 = vmatpush1.bf16.msra.mxu0 0
      %5455 = vmatprep.subr.bf16.mxu0 0
      %5456 = vmatpush1.bf16.msra.mxu0 0
      %5457 = vmatprep.subr.bf16.mxu0 0
      %5458 = vmatpush1.bf16.msra.mxu0 0
      %5459 = vmatprep.subr.bf16.mxu0 0
      %5460 = vmatpush1.bf16.msra.mxu0 0
      %5461 = vmatprep.subr.bf16.mxu0 0
      %5462 = vmatpush1.bf16.msra.mxu0 0
      %5463 = vmatprep.subr.bf16.mxu0 0
      %5464 = vmatpush1.bf16.msra.mxu0 0
      %5465 = vmatprep.subr.bf16.mxu0 0
      %5466 = vmatpush1.bf16.msra.mxu0 0
      %5467 = vmatprep.subr.bf16.mxu0 0
      %5468 = vmatpush1.bf16.msra.mxu0 0
      %5469 = vmatprep.subr.bf16.mxu0 0
      %5470 = vmatpush1.bf16.msra.mxu0 0
      %5471 = vmatprep.mubr.bf16.mxu0 0
      %5472 = vmatmul.mubr.bf16.gmra.mrb[0].mxu0 %v1734
      %v5473 = vpop.f32.mrb[0].mxu0
      %v5474 = vadd.f32 %v5377, %v5473
      %v5475 = vpop.f32.mrb[0].mxu0
      %v5476 = vpop.f32.mrb[0].mxu0
      %v5477 = vadd.f32 %v5380, %v5476
      %v5478 = vpop.f32.mrb[0].mxu0
      %5479 = vmatprep.mubr.bf16.mxu0 0
      %5480 = vmatmul.mubr.bf16.gmra.mrb[0].mxu0 %v1737
      %v5481 = vpop.f32.mrb[0].mxu0
      %v5482 = vadd.f32 %v5385, %v5481
      %v5483 = vpop.f32.mrb[0].mxu0
      %v5484 = vpop.f32.mrb[0].mxu0
      %v5485 = vadd.f32 %v5388, %v5484
      %v5486 = vpop.f32.mrb[0].mxu0
      %5487 = vmatprep.mubr.bf16.mxu0 0
      %5488 = vmatmul.mubr.bf16.gmra.mrb[0].mxu0 %v1740
      %v5489 = vpop.f32.mrb[0].mxu0
      %v5490 = vadd.f32 %v5393, %v5489
      %v5491 = vpop.f32.mrb[0].mxu0
      %v5492 = vpop.f32.mrb[0].mxu0
      %v5493 = vadd.f32 %v5396, %v5492
      %v5494 = vpop.f32.mrb[0].mxu0
      %5495 = vmatprep.mubr.bf16.mxu0 0
      %5496 = vmatmul.mubr.bf16.gmra.mrb[0].mxu0 %v1743
      %v5497 = vpop.f32.mrb[0].mxu0
      %v5498 = vadd.f32 %v5401, %v5497
      %v5499 = vpop.f32.mrb[0].mxu0
      %v5500 = vpop.f32.mrb[0].mxu0
      %v5501 = vadd.f32 %v5404, %v5500
      %v5502 = vpop.f32.mrb[0].mxu0
      %5503 = vmatprep.mubr.bf16.mxu0 0
      %5504 = vmatmul.mubr.bf16.gmra.mrb[0].mxu0 %v1746
      %v5505 = vpop.f32.mrb[0].mxu0
      %v5506 = vadd.f32 %v5409, %v5505
      %v5507 = vpop.f32.mrb[0].mxu0
      %v5508 = vpop.f32.mrb[0].mxu0
      %v5509 = vadd.f32 %v5412, %v5508
      %v5510 = vpop.f32.mrb[0].mxu0
      %5511 = vmatprep.mubr.bf16.mxu0 0
      %5512 = vmatmul.mubr.bf16.gmra.mrb[0].mxu0 %v1749
      %v5513 = vpop.f32.mrb[0].mxu0
      %v5514 = vadd.f32 %v5417, %v5513
      %v5515 = vpop.f32.mrb[0].mxu0
      %v5516 = vpop.f32.mrb[0].mxu0
      %v5517 = vadd.f32 %v5420, %v5516
      %v5518 = vpop.f32.mrb[0].mxu0
      %5519 = vmatprep.mubr.bf16.mxu0 0
      %5520 = vmatmul.mubr.bf16.gmra.mrb[0].mxu0 %v1752
      %v5521 = vpop.f32.mrb[0].mxu0
      %v5522 = vadd.f32 %v5425, %v5521
      %v5523 = vpop.f32.mrb[0].mxu0
      %v5524 = vpop.f32.mrb[0].mxu0
      %v5525 = vadd.f32 %v5428, %v5524
      %v5526 = vpop.f32.mrb[0].mxu0
      %5527 = vmatprep.mubr.bf16.mxu0 0
      %5528 = vmatmul.mubr.bf16.gmra.mrb[0].mxu0 %v1755
      %v5529 = vpop.f32.mrb[0].mxu0
      %v5530 = vadd.f32 %v5433, %v5529
      %v5531 = vpop.f32.mrb[0].mxu0
      %v5532 = vpop.f32.mrb[0].mxu0
      %v5533 = vadd.f32 %v5436, %v5532
      %v5534 = vpop.f32.mrb[0].mxu0
      %5535 = vdwg.mxu0
      %v5536 = vld [vmem:[%s5 + $0x268] sm:$0xff]
      %v5537 = vld [vmem:[%s5 + $0x270] sm:$0xff]
      %v5538 = vld [vmem:[%s5 + $0x278] sm:$0xff]
      %v5539 = vld [vmem:[%s5 + $0x280] sm:$0xff]
      %v5541 = vsel %vm1365, %v4562, 0
      %v5544 = vsel %vm1365, %v4563, 0
      %v5547 = vsel %vm1365, %v4564, 0
      %v5550 = vsel %vm1365, %v4565, 0
      %v5553 = vsel %vm1365, %v4566, 0
      %v5556 = vsel %vm1365, %v4567, 0
      %v5559 = vsel %vm1365, %v4568, 0
      %v5562 = vsel %vm1365, %v4569, 0
      %v5565 = vsel %vm1365, %v4570, 0
      %v5568 = vsel %vm1365, %v4571, 0
      %v5571 = vsel %vm1365, %v4572, 0
      %v5574 = vsel %vm1365, %v4573, 0
      %v5577 = vsel %vm1365, %v4574, 0
      %v5580 = vsel %vm1365, %v4575, 0
      %v5583 = vsel %vm1365, %v4576, 0
      %v5586 = vsel %vm1365, %v4577, 0
      %5588 = vmatprep.subr.mxu0 0.0
      %5589 = vmatpush1.msra.mxu0 %v5536
      %5590 = vmatprep.subr.mxu0 0.0
      %5591 = vmatpush1.msra.mxu0 %v5537
      %5592 = vmatprep.subr.mxu0 0.0
      %5593 = vmatpush1.msra.mxu0 %v5538
      %5594 = vmatprep.subr.mxu0 0.0
      %5595 = vmatpush1.msra.mxu0 %v5539
      %5596 = vmatprep.subr.mxu0 0.0
      %5597 = vmatpush1.msra.mxu0 0.0
      %5598 = vmatprep.subr.mxu0 0.0
      %5599 = vmatpush1.msra.mxu0 0.0
      %5600 = vmatprep.subr.mxu0 0.0
      %5601 = vmatpush1.msra.mxu0 0.0
      %5602 = vmatprep.subr.mxu0 0.0
      %5603 = vmatpush1.msra.mxu0 0.0
      %5604 = vmatprep.subr.mxu0 0.0
      %5605 = vmatpush1.msra.mxu0 0.0
      %5606 = vmatprep.subr.mxu0 0.0
      %5607 = vmatpush1.msra.mxu0 0.0
      %5608 = vmatprep.subr.mxu0 0.0
      %5609 = vmatpush1.msra.mxu0 0.0
      %5610 = vmatprep.subr.mxu0 0.0
      %5611 = vmatpush1.msra.mxu0 0.0
      %5612 = vmatprep.subr.mxu0 0.0
      %5613 = vmatpush1.msra.mxu0 0.0
      %5614 = vmatprep.subr.mxu0 0.0
      %5615 = vmatpush1.msra.mxu0 0.0
      %5616 = vmatprep.subr.mxu0 0.0
      %5617 = vmatpush1.msra.mxu0 0.0
      %5618 = vmatprep.subr.mxu0 0.0
      %5619 = vmatpush1.msra.mxu0 0.0
      %5620 = vmatprep.subr.mxu0 0.0
      %5621 = vmatpush1.msra.mxu0 0.0
      %5622 = vmatprep.subr.mxu0 0.0
      %5623 = vmatpush1.msra.mxu0 0.0
      %5624 = vmatprep.subr.mxu0 0.0
      %5625 = vmatpush1.msra.mxu0 0.0
      %5626 = vmatprep.subr.mxu0 0.0
      %5627 = vmatpush1.msra.mxu0 0.0
      %5628 = vmatprep.subr.mxu0 0.0
      %5629 = vmatpush1.msra.mxu0 0.0
      %5630 = vmatprep.subr.mxu0 0.0
      %5631 = vmatpush1.msra.mxu0 0.0
      %5632 = vmatprep.subr.mxu0 0.0
      %5633 = vmatpush1.msra.mxu0 0.0
      %5634 = vmatprep.subr.mxu0 0.0
      %5635 = vmatpush1.msra.mxu0 0.0
      %5636 = vmatprep.subr.mxu0 0.0
      %5637 = vmatpush1.msra.mxu0 0.0
      %5638 = vmatprep.subr.mxu0 0.0
      %5639 = vmatpush1.msra.mxu0 0.0
      %5640 = vmatprep.subr.mxu0 0.0
      %5641 = vmatpush1.msra.mxu0 0.0
      %5642 = vmatprep.subr.mxu0 0.0
      %5643 = vmatpush1.msra.mxu0 0.0
      %5644 = vmatprep.subr.mxu0 0.0
      %5645 = vmatpush1.msra.mxu0 0.0
      %5646 = vmatprep.subr.mxu0 0.0
      %5647 = vmatpush1.msra.mxu0 0.0
      %5648 = vmatprep.subr.mxu0 0.0
      %5649 = vmatpush1.msra.mxu0 0.0
      %5650 = vmatprep.subr.mxu0 0.0
      %5651 = vmatpush1.msra.mxu0 0.0
      %5652 = vmatprep.mubr.f32.mxu0 0.0
      %5653 = vmatmul.mubr.f32.gmra.mrb[0].mxu0 %v5541
      %v5654 = vpop.f32.mrb[0].mxu0
      %v5655 = vadd.f32 0.0, %v5654
      %v5656 = vpop.f32.mrb[0].mxu0
      %5657 = vmatprep.mubr.f32.mxu0 0.0
      %5658 = vmatmul.mubr.f32.gmra.mrb[0].mxu0 %v5544
      %v5659 = vpop.f32.mrb[0].mxu0
      %v5660 = vadd.f32 0.0, %v5659
      %v5661 = vpop.f32.mrb[0].mxu0
      %5662 = vmatprep.mubr.f32.mxu0 0.0
      %5663 = vmatmul.mubr.f32.gmra.mrb[0].mxu0 %v5547
      %v5664 = vpop.f32.mrb[0].mxu0
      %v5665 = vadd.f32 0.0, %v5664
      %v5666 = vpop.f32.mrb[0].mxu0
      %5667 = vmatprep.mubr.f32.mxu0 0.0
      %5668 = vmatmul.mubr.f32.gmra.mrb[0].mxu0 %v5550
      %v5669 = vpop.f32.mrb[0].mxu0
      %v5670 = vadd.f32 0.0, %v5669
      %v5671 = vpop.f32.mrb[0].mxu0
      %5672 = vmatprep.mubr.f32.mxu0 0.0
      %5673 = vmatmul.mubr.f32.gmra.mrb[0].mxu0 %v5553
      %v5674 = vpop.f32.mrb[0].mxu0
      %v5675 = vadd.f32 0.0, %v5674
      %v5676 = vpop.f32.mrb[0].mxu0
      %5677 = vmatprep.mubr.f32.mxu0 0.0
      %5678 = vmatmul.mubr.f32.gmra.mrb[0].mxu0 %v5556
      %v5679 = vpop.f32.mrb[0].mxu0
      %v5680 = vadd.f32 0.0, %v5679
      %v5681 = vpop.f32.mrb[0].mxu0
      %5682 = vmatprep.mubr.f32.mxu0 0.0
      %5683 = vmatmul.mubr.f32.gmra.mrb[0].mxu0 %v5559
      %v5684 = vpop.f32.mrb[0].mxu0
      %v5685 = vadd.f32 0.0, %v5684
      %v5686 = vpop.f32.mrb[0].mxu0
      %5687 = vmatprep.mubr.f32.mxu0 0.0
      %5688 = vmatmul.mubr.f32.gmra.mrb[0].mxu0 %v5562
      %v5689 = vpop.f32.mrb[0].mxu0
      %v5690 = vadd.f32 0.0, %v5689
      %v5691 = vpop.f32.mrb[0].mxu0
      %5692 = vmatprep.mubr.f32.mxu0 0.0
      %5693 = vmatmul.mubr.f32.gmra.mrb[0].mxu0 %v5565
      %v5694 = vpop.f32.mrb[0].mxu0
      %v5695 = vadd.f32 0.0, %v5694
      %v5696 = vpop.f32.mrb[0].mxu0
      %5697 = vmatprep.mubr.f32.mxu0 0.0
      %5698 = vmatmul.mubr.f32.gmra.mrb[0].mxu0 %v5568
      %v5699 = vpop.f32.mrb[0].mxu0
      %v5700 = vadd.f32 0.0, %v5699
      %v5701 = vpop.f32.mrb[0].mxu0
      %5702 = vmatprep.mubr.f32.mxu0 0.0
      %5703 = vmatmul.mubr.f32.gmra.mrb[0].mxu0 %v5571
      %v5704 = vpop.f32.mrb[0].mxu0
      %v5705 = vadd.f32 0.0, %v5704
      %v5706 = vpop.f32.mrb[0].mxu0
      %5707 = vmatprep.mubr.f32.mxu0 0.0
      %5708 = vmatmul.mubr.f32.gmra.mrb[0].mxu0 %v5574
      %v5709 = vpop.f32.mrb[0].mxu0
      %v5710 = vadd.f32 0.0, %v5709
      %v5711 = vpop.f32.mrb[0].mxu0
      %5712 = vmatprep.mubr.f32.mxu0 0.0
      %5713 = vmatmul.mubr.f32.gmra.mrb[0].mxu0 %v5577
      %v5714 = vpop.f32.mrb[0].mxu0
      %v5715 = vadd.f32 0.0, %v5714
      %v5716 = vpop.f32.mrb[0].mxu0
      %5717 = vmatprep.mubr.f32.mxu0 0.0
      %5718 = vmatmul.mubr.f32.gmra.mrb[0].mxu0 %v5580
      %v5719 = vpop.f32.mrb[0].mxu0
      %v5720 = vadd.f32 0.0, %v5719
      %v5721 = vpop.f32.mrb[0].mxu0
      %5722 = vmatprep.mubr.f32.mxu0 0.0
      %5723 = vmatmul.mubr.f32.gmra.mrb[0].mxu0 %v5583
      %v5724 = vpop.f32.mrb[0].mxu0
      %v5725 = vadd.f32 0.0, %v5724
      %v5726 = vpop.f32.mrb[0].mxu0
      %5727 = vmatprep.mubr.f32.mxu0 0.0
      %5728 = vmatmul.mubr.f32.gmra.mrb[0].mxu0 %v5586
      %v5729 = vpop.f32.mrb[0].mxu0
      %v5730 = vadd.f32 0.0, %v5729
      %v5731 = vpop.f32.mrb[0].mxu0
      %5732 = vdwg.mxu0
      %v5733 = vadd.f32 %v5474, %v5655
      %v5734 = vadd.f32 %v5477, %v5660
      %v5735 = vadd.f32 %v5482, %v5665
      %v5736 = vadd.f32 %v5485, %v5670
      %v5737 = vadd.f32 %v5490, %v5675
      %v5738 = vadd.f32 %v5493, %v5680
      %v5739 = vadd.f32 %v5498, %v5685
      %v5740 = vadd.f32 %v5501, %v5690
      %v5741 = vadd.f32 %v5506, %v5695
      %v5742 = vadd.f32 %v5509, %v5700
      %v5743 = vadd.f32 %v5514, %v5705
      %v5744 = vadd.f32 %v5517, %v5710
      %v5745 = vadd.f32 %v5522, %v5715
      %v5746 = vadd.f32 %v5525, %v5720
      %v5747 = vadd.f32 %v5530, %v5725
      %v5748 = vadd.f32 %v5533, %v5730
      %v5749 = vld [vmem:[%s5 + $0x288] sm:$0x1]
      %v5750 = vlaneseq
      %v5751 = vshrl.u32 %v5750, 7
      %v5752 = vsub.s32 0, %v5751
      %v5753 = vrot.slane %v5749, %v5752
      %v5754 = vadd.f32 %v5733, %v5753
      %v5755 = vadd.f32 %v5734, %v5753
      %v5756 = vadd.f32 %v5735, %v5753
      %v5757 = vadd.f32 %v5736, %v5753
      %v5758 = vadd.f32 %v5737, %v5753
      %v5759 = vadd.f32 %v5738, %v5753
      %v5760 = vadd.f32 %v5739, %v5753
      %v5761 = vadd.f32 %v5740, %v5753
      %v5762 = vadd.f32 %v5741, %v5753
      %v5763 = vadd.f32 %v5742, %v5753
      %v5764 = vadd.f32 %v5743, %v5753
      %v5765 = vadd.f32 %v5744, %v5753
      %v5766 = vadd.f32 %v5745, %v5753
      %v5767 = vadd.f32 %v5746, %v5753
      %v5768 = vadd.f32 %v5747, %v5753
      %v5769 = vadd.f32 %v5748, %v5753
      %v5770 = vmul.f32 %v5754, 0.5
      %v5771 = vmul.f32 %v5755, 0.5
      %v5772 = vmul.f32 %v5756, 0.5
      %v5773 = vmul.f32 %v5757, 0.5
      %v5774 = vmul.f32 %v5758, 0.5
      %v5775 = vmul.f32 %v5759, 0.5
      %v5776 = vmul.f32 %v5760, 0.5
      %v5777 = vmul.f32 %v5761, 0.5
      %v5778 = vmul.f32 %v5762, 0.5
      %v5779 = vmul.f32 %v5763, 0.5
      %v5780 = vmul.f32 %v5764, 0.5
      %v5781 = vmul.f32 %v5765, 0.5
      %v5782 = vmul.f32 %v5766, 0.5
      %v5783 = vmul.f32 %v5767, 0.5
      %v5784 = vmul.f32 %v5768, 0.5
      %v5785 = vmul.f32 %v5769, 0.5
      %v5786 = vtanh.pop %v5770
      %v5787 = vtanh.pop %v5771
      %v5788 = vtanh.pop %v5772
      %v5789 = vtanh.pop %v5773
      %v5790 = vtanh.pop %v5774
      %v5791 = vtanh.pop %v5775
      %v5792 = vtanh.pop %v5776
      %v5793 = vtanh.pop %v5777
      %v5794 = vtanh.pop %v5778
      %v5795 = vtanh.pop %v5779
      %v5796 = vtanh.pop %v5780
      %v5797 = vtanh.pop %v5781
      %v5798 = vtanh.pop %v5782
      %v5799 = vtanh.pop %v5783
      %v5800 = vtanh.pop %v5784
      %v5801 = vtanh.pop %v5785
      %v5802 = vmul.f32 %v5786, 0.5
      %v5803 = vmul.f32 %v5787, 0.5
      %v5804 = vmul.f32 %v5788, 0.5
      %v5805 = vmul.f32 %v5789, 0.5
      %v5806 = vmul.f32 %v5790, 0.5
      %v5807 = vmul.f32 %v5791, 0.5
      %v5808 = vmul.f32 %v5792, 0.5
      %v5809 = vmul.f32 %v5793, 0.5
      %v5810 = vmul.f32 %v5794, 0.5
      %v5811 = vmul.f32 %v5795, 0.5
      %v5812 = vmul.f32 %v5796, 0.5
      %v5813 = vmul.f32 %v5797, 0.5
      %v5814 = vmul.f32 %v5798, 0.5
      %v5815 = vmul.f32 %v5799, 0.5
      %v5816 = vmul.f32 %v5800, 0.5
      %v5817 = vmul.f32 %v5801, 0.5
      %v5818 = vadd.f32 %v5802, 0.5
      %v5819 = vadd.f32 %v5803, 0.5
      %v5820 = vadd.f32 %v5804, 0.5
      %v5821 = vadd.f32 %v5805, 0.5
      %v5822 = vadd.f32 %v5806, 0.5
      %v5823 = vadd.f32 %v5807, 0.5
      %v5824 = vadd.f32 %v5808, 0.5
      %v5825 = vadd.f32 %v5809, 0.5
      %v5826 = vadd.f32 %v5810, 0.5
      %v5827 = vadd.f32 %v5811, 0.5
      %v5828 = vadd.f32 %v5812, 0.5
      %v5829 = vadd.f32 %v5813, 0.5
      %v5830 = vadd.f32 %v5814, 0.5
      %v5831 = vadd.f32 %v5815, 0.5
      %v5832 = vadd.f32 %v5816, 0.5
      %v5833 = vadd.f32 %v5817, 0.5
      %v5834 = vmul.f32 %v5754, %v5818
      %v5835 = vmul.f32 %v5755, %v5819
      %v5836 = vmul.f32 %v5756, %v5820
      %v5837 = vmul.f32 %v5757, %v5821
      %v5838 = vmul.f32 %v5758, %v5822
      %v5839 = vmul.f32 %v5759, %v5823
      %v5840 = vmul.f32 %v5760, %v5824
      %v5841 = vmul.f32 %v5761, %v5825
      %v5842 = vmul.f32 %v5762, %v5826
      %v5843 = vmul.f32 %v5763, %v5827
      %v5844 = vmul.f32 %v5764, %v5828
      %v5845 = vmul.f32 %v5765, %v5829
      %v5846 = vmul.f32 %v5766, %v5830
      %v5847 = vmul.f32 %v5767, %v5831
      %v5848 = vmul.f32 %v5768, %v5832
      %v5849 = vmul.f32 %v5769, %v5833
      %v5850 = vld [vmem:[%s5 + $0x290] sm:$0xff]
      %v5851 = vld [vmem:[%s5 + $0x298] sm:$0xff]
      %v5852 = vld [vmem:[%s5 + $0x2a0] sm:$0xff]
      %v5853 = vld [vmem:[%s5 + $0x2a8] sm:$0xff]
      %v5854 = vld [vmem:[%s5 + $0x2b0] sm:$0x1]
      %v5855 = vlaneseq
      %v5856 = vshrl.u32 %v5855, 7
      %v5857 = vsub.s32 0, %v5856
      %v5858 = vrot.slane %v5854, %v5857
      %v5860 = vsel %vm1365, %v5834, 0
      %v5863 = vsel %vm1365, %v5835, 0
      %v5866 = vsel %vm1365, %v5836, 0
      %v5869 = vsel %vm1365, %v5837, 0
      %v5872 = vsel %vm1365, %v5838, 0
      %v5875 = vsel %vm1365, %v5839, 0
      %v5878 = vsel %vm1365, %v5840, 0
      %v5881 = vsel %vm1365, %v5841, 0
      %v5884 = vsel %vm1365, %v5842, 0
      %v5887 = vsel %vm1365, %v5843, 0
      %v5890 = vsel %vm1365, %v5844, 0
      %v5893 = vsel %vm1365, %v5845, 0
      %v5896 = vsel %vm1365, %v5846, 0
      %v5899 = vsel %vm1365, %v5847, 0
      %v5902 = vsel %vm1365, %v5848, 0
      %v5905 = vsel %vm1365, %v5849, 0
      %5907 = vmatprep.subr.mxu0 0.0
      %5908 = vmatpush1.msra.mxu0 %v5850
      %5909 = vmatprep.subr.mxu0 0.0
      %5910 = vmatpush1.msra.mxu0 %v5851
      %5911 = vmatprep.subr.mxu0 0.0
      %5912 = vmatpush1.msra.mxu0 %v5852
      %5913 = vmatprep.subr.mxu0 0.0
      %5914 = vmatpush1.msra.mxu0 %v5853
      %5915 = vmatprep.subr.mxu0 0.0
      %5916 = vmatpush1.msra.mxu0 0.0
      %5917 = vmatprep.subr.mxu0 0.0
      %5918 = vmatpush1.msra.mxu0 0.0
      %5919 = vmatprep.subr.mxu0 0.0
      %5920 = vmatpush1.msra.mxu0 0.0
      %5921 = vmatprep.subr.mxu0 0.0
      %5922 = vmatpush1.msra.mxu0 0.0
      %5923 = vmatprep.subr.mxu0 0.0
      %5924 = vmatpush1.msra.mxu0 0.0
      %5925 = vmatprep.subr.mxu0 0.0
      %5926 = vmatpush1.msra.mxu0 0.0
      %5927 = vmatprep.subr.mxu0 0.0
      %5928 = vmatpush1.msra.mxu0 0.0
      %5929 = vmatprep.subr.mxu0 0.0
      %5930 = vmatpush1.msra.mxu0 0.0
      %5931 = vmatprep.subr.mxu0 0.0
      %5932 = vmatpush1.msra.mxu0 0.0
      %5933 = vmatprep.subr.mxu0 0.0
      %5934 = vmatpush1.msra.mxu0 0.0
      %5935 = vmatprep.subr.mxu0 0.0
      %5936 = vmatpush1.msra.mxu0 0.0
      %5937 = vmatprep.subr.mxu0 0.0
      %5938 = vmatpush1.msra.mxu0 0.0
      %5939 = vmatprep.subr.mxu0 0.0
      %5940 = vmatpush1.msra.mxu0 0.0
      %5941 = vmatprep.subr.mxu0 0.0
      %5942 = vmatpush1.msra.mxu0 0.0
      %5943 = vmatprep.subr.mxu0 0.0
      %5944 = vmatpush1.msra.mxu0 0.0
      %5945 = vmatprep.subr.mxu0 0.0
      %5946 = vmatpush1.msra.mxu0 0.0
      %5947 = vmatprep.subr.mxu0 0.0
      %5948 = vmatpush1.msra.mxu0 0.0
      %5949 = vmatprep.subr.mxu0 0.0
      %5950 = vmatpush1.msra.mxu0 0.0
      %5951 = vmatprep.subr.mxu0 0.0
      %5952 = vmatpush1.msra.mxu0 0.0
      %5953 = vmatprep.subr.mxu0 0.0
      %5954 = vmatpush1.msra.mxu0 0.0
      %5955 = vmatprep.subr.mxu0 0.0
      %5956 = vmatpush1.msra.mxu0 0.0
      %5957 = vmatprep.subr.mxu0 0.0
      %5958 = vmatpush1.msra.mxu0 0.0
      %5959 = vmatprep.subr.mxu0 0.0
      %5960 = vmatpush1.msra.mxu0 0.0
      %5961 = vmatprep.subr.mxu0 0.0
      %5962 = vmatpush1.msra.mxu0 0.0
      %5963 = vmatprep.subr.mxu0 0.0
      %5964 = vmatpush1.msra.mxu0 0.0
      %5965 = vmatprep.subr.mxu0 0.0
      %5966 = vmatpush1.msra.mxu0 0.0
      %5967 = vmatprep.subr.mxu0 0.0
      %5968 = vmatpush1.msra.mxu0 0.0
      %5969 = vmatprep.subr.mxu0 0.0
      %5970 = vmatpush1.msra.mxu0 0.0
      %5971 = vmatprep.mubr.f32.mxu0 0.0
      %5972 = vmatmul.mubr.f32.gmra.mrb[0].mxu0 %v5860
      %v5973 = vpop.f32.mrb[0].mxu0
      %v5974 = vadd.f32 %v5858, %v5973
      %v5975 = vpop.f32.mrb[0].mxu0
      %5976 = vmatprep.mubr.f32.mxu0 0.0
      %5977 = vmatmul.mubr.f32.gmra.mrb[0].mxu0 %v5863
      %v5978 = vpop.f32.mrb[0].mxu0
      %v5979 = vadd.f32 %v5858, %v5978
      %v5980 = vpop.f32.mrb[0].mxu0
      %5981 = vmatprep.mubr.f32.mxu0 0.0
      %5982 = vmatmul.mubr.f32.gmra.mrb[0].mxu0 %v5866
      %v5983 = vpop.f32.mrb[0].mxu0
      %v5984 = vadd.f32 %v5858, %v5983
      %v5985 = vpop.f32.mrb[0].mxu0
      %5986 = vmatprep.mubr.f32.mxu0 0.0
      %5987 = vmatmul.mubr.f32.gmra.mrb[0].mxu0 %v5869
      %v5988 = vpop.f32.mrb[0].mxu0
      %v5989 = vadd.f32 %v5858, %v5988
      %v5990 = vpop.f32.mrb[0].mxu0
      %5991 = vmatprep.mubr.f32.mxu0 0.0
      %5992 = vmatmul.mubr.f32.gmra.mrb[0].mxu0 %v5872
      %v5993 = vpop.f32.mrb[0].mxu0
      %v5994 = vadd.f32 %v5858, %v5993
      %v5995 = vpop.f32.mrb[0].mxu0
      %5996 = vmatprep.mubr.f32.mxu0 0.0
      %5997 = vmatmul.mubr.f32.gmra.mrb[0].mxu0 %v5875
      %v5998 = vpop.f32.mrb[0].mxu0
      %v5999 = vadd.f32 %v5858, %v5998
      %v6000 = vpop.f32.mrb[0].mxu0
      %6001 = vmatprep.mubr.f32.mxu0 0.0
      %6002 = vmatmul.mubr.f32.gmra.mrb[0].mxu0 %v5878
      %v6003 = vpop.f32.mrb[0].mxu0
      %v6004 = vadd.f32 %v5858, %v6003
      %v6005 = vpop.f32.mrb[0].mxu0
      %6006 = vmatprep.mubr.f32.mxu0 0.0
      %6007 = vmatmul.mubr.f32.gmra.mrb[0].mxu0 %v5881
      %v6008 = vpop.f32.mrb[0].mxu0
      %v6009 = vadd.f32 %v5858, %v6008
      %v6010 = vpop.f32.mrb[0].mxu0
      %6011 = vmatprep.mubr.f32.mxu0 0.0
      %6012 = vmatmul.mubr.f32.gmra.mrb[0].mxu0 %v5884
      %v6013 = vpop.f32.mrb[0].mxu0
      %v6014 = vadd.f32 %v5858, %v6013
      %v6015 = vpop.f32.mrb[0].mxu0
      %6016 = vmatprep.mubr.f32.mxu0 0.0
      %6017 = vmatmul.mubr.f32.gmra.mrb[0].mxu0 %v5887
      %v6018 = vpop.f32.mrb[0].mxu0
      %v6019 = vadd.f32 %v5858, %v6018
      %v6020 = vpop.f32.mrb[0].mxu0
      %6021 = vmatprep.mubr.f32.mxu0 0.0
      %6022 = vmatmul.mubr.f32.gmra.mrb[0].mxu0 %v5890
      %v6023 = vpop.f32.mrb[0].mxu0
      %v6024 = vadd.f32 %v5858, %v6023
      %v6025 = vpop.f32.mrb[0].mxu0
      %6026 = vmatprep.mubr.f32.mxu0 0.0
      %6027 = vmatmul.mubr.f32.gmra.mrb[0].mxu0 %v5893
      %v6028 = vpop.f32.mrb[0].mxu0
      %v6029 = vadd.f32 %v5858, %v6028
      %v6030 = vpop.f32.mrb[0].mxu0
      %6031 = vmatprep.mubr.f32.mxu0 0.0
      %6032 = vmatmul.mubr.f32.gmra.mrb[0].mxu0 %v5896
      %v6033 = vpop.f32.mrb[0].mxu0
      %v6034 = vadd.f32 %v5858, %v6033
      %v6035 = vpop.f32.mrb[0].mxu0
      %6036 = vmatprep.mubr.f32.mxu0 0.0
      %6037 = vmatmul.mubr.f32.gmra.mrb[0].mxu0 %v5899
      %v6038 = vpop.f32.mrb[0].mxu0
      %v6039 = vadd.f32 %v5858, %v6038
      %v6040 = vpop.f32.mrb[0].mxu0
      %6041 = vmatprep.mubr.f32.mxu0 0.0
      %6042 = vmatmul.mubr.f32.gmra.mrb[0].mxu0 %v5902
      %v6043 = vpop.f32.mrb[0].mxu0
      %v6044 = vadd.f32 %v5858, %v6043
      %v6045 = vpop.f32.mrb[0].mxu0
      %6046 = vmatprep.mubr.f32.mxu0 0.0
      %6047 = vmatmul.mubr.f32.gmra.mrb[0].mxu0 %v5905
      %v6048 = vpop.f32.mrb[0].mxu0
      %v6049 = vadd.f32 %v5858, %v6048
      %v6050 = vpop.f32.mrb[0].mxu0
      %6051 = vdwg.mxu0
      %v6052 = vmul.f32 %v5974, 0.5
      %v6053 = vmul.f32 %v5979, 0.5
      %v6054 = vmul.f32 %v5984, 0.5
      %v6055 = vmul.f32 %v5989, 0.5
      %v6056 = vmul.f32 %v5994, 0.5
      %v6057 = vmul.f32 %v5999, 0.5
      %v6058 = vmul.f32 %v6004, 0.5
      %v6059 = vmul.f32 %v6009, 0.5
      %v6060 = vmul.f32 %v6014, 0.5
      %v6061 = vmul.f32 %v6019, 0.5
      %v6062 = vmul.f32 %v6024, 0.5
      %v6063 = vmul.f32 %v6029, 0.5
      %v6064 = vmul.f32 %v6034, 0.5
      %v6065 = vmul.f32 %v6039, 0.5
      %v6066 = vmul.f32 %v6044, 0.5
      %v6067 = vmul.f32 %v6049, 0.5
      %v6068 = vtanh.pop %v6052
      %v6069 = vtanh.pop %v6053
      %v6070 = vtanh.pop %v6054
      %v6071 = vtanh.pop %v6055
      %v6072 = vtanh.pop %v6056
      %v6073 = vtanh.pop %v6057
      %v6074 = vtanh.pop %v6058
      %v6075 = vtanh.pop %v6059
      %v6076 = vtanh.pop %v6060
      %v6077 = vtanh.pop %v6061
      %v6078 = vtanh.pop %v6062
      %v6079 = vtanh.pop %v6063
      %v6080 = vtanh.pop %v6064
      %v6081 = vtanh.pop %v6065
      %v6082 = vtanh.pop %v6066
      %v6083 = vtanh.pop %v6067
      %v6084 = vmul.f32 %v6068, 0.5
      %v6085 = vmul.f32 %v6069, 0.5
      %v6086 = vmul.f32 %v6070, 0.5
      %v6087 = vmul.f32 %v6071, 0.5
      %v6088 = vmul.f32 %v6072, 0.5
      %v6089 = vmul.f32 %v6073, 0.5
      %v6090 = vmul.f32 %v6074, 0.5
      %v6091 = vmul.f32 %v6075, 0.5
      %v6092 = vmul.f32 %v6076, 0.5
      %v6093 = vmul.f32 %v6077, 0.5
      %v6094 = vmul.f32 %v6078, 0.5
      %v6095 = vmul.f32 %v6079, 0.5
      %v6096 = vmul.f32 %v6080, 0.5
      %v6097 = vmul.f32 %v6081, 0.5
      %v6098 = vmul.f32 %v6082, 0.5
      %v6099 = vmul.f32 %v6083, 0.5
      %v6100 = vadd.f32 %v6084, 0.5
      %v6101 = vadd.f32 %v6085, 0.5
      %v6102 = vadd.f32 %v6086, 0.5
      %v6103 = vadd.f32 %v6087, 0.5
      %v6104 = vadd.f32 %v6088, 0.5
      %v6105 = vadd.f32 %v6089, 0.5
      %v6106 = vadd.f32 %v6090, 0.5
      %v6107 = vadd.f32 %v6091, 0.5
      %v6108 = vadd.f32 %v6092, 0.5
      %v6109 = vadd.f32 %v6093, 0.5
      %v6110 = vadd.f32 %v6094, 0.5
      %v6111 = vadd.f32 %v6095, 0.5
      %v6112 = vadd.f32 %v6096, 0.5
      %v6113 = vadd.f32 %v6097, 0.5
      %v6114 = vadd.f32 %v6098, 0.5
      %v6115 = vadd.f32 %v6099, 0.5
      %v6116 = vmul.f32 %v5974, %v6100
      %v6117 = vmul.f32 %v5979, %v6101
      %v6118 = vmul.f32 %v5984, %v6102
      %v6119 = vmul.f32 %v5989, %v6103
      %v6120 = vmul.f32 %v5994, %v6104
      %v6121 = vmul.f32 %v5999, %v6105
      %v6122 = vmul.f32 %v6004, %v6106
      %v6123 = vmul.f32 %v6009, %v6107
      %v6124 = vmul.f32 %v6014, %v6108
      %v6125 = vmul.f32 %v6019, %v6109
      %v6126 = vmul.f32 %v6024, %v6110
      %v6127 = vmul.f32 %v6029, %v6111
      %v6128 = vmul.f32 %v6034, %v6112
      %v6129 = vmul.f32 %v6039, %v6113
      %v6130 = vmul.f32 %v6044, %v6114
      %v6131 = vmul.f32 %v6049, %v6115
      %v6132 = vld [vmem:[%s5 + $0x2b8] sm:$0x1]
      %v6133 = vlaneseq
      %v6134 = vshrl.u32 %v6133, 7
      %v6135 = vsub.s32 0, %v6134
      %v6136 = vrot.slane %v6132, %v6135
      %v6137 = vmul.f32 %v6116, %v6136
      %v6138 = vmul.f32 %v6117, %v6136
      %v6139 = vmul.f32 %v6118, %v6136
      %v6140 = vmul.f32 %v6119, %v6136
      %v6141 = vmul.f32 %v6120, %v6136
      %v6142 = vmul.f32 %v6121, %v6136
      %v6143 = vmul.f32 %v6122, %v6136
      %v6144 = vmul.f32 %v6123, %v6136
      %v6145 = vmul.f32 %v6124, %v6136
      %v6146 = vmul.f32 %v6125, %v6136
      %v6147 = vmul.f32 %v6126, %v6136
      %v6148 = vmul.f32 %v6127, %v6136
      %v6149 = vmul.f32 %v6128, %v6136
      %v6150 = vmul.f32 %v6129, %v6136
      %v6151 = vmul.f32 %v6130, %v6136
      %v6152 = vmul.f32 %v6131, %v6136
      %v6153 = vsel %vm1365, %v6137, 0.0
      %6154 = vadd.xlane.f32.xlu0 %v6153
      %v6155 = vpop.xlane.xlu0 %6154
      %v6156 = vsel %vm1365, %v6138, 0.0
      %6157 = vadd.xlane.f32.xlu0 %v6156
      %v6158 = vpop.xlane.xlu0 %6157
      %v6159 = vsel %vm1365, %v6139, 0.0
      %6160 = vadd.xlane.f32.xlu0 %v6159
      %v6161 = vpop.xlane.xlu0 %6160
      %v6162 = vsel %vm1365, %v6140, 0.0
      %6163 = vadd.xlane.f32.xlu0 %v6162
      %v6164 = vpop.xlane.xlu0 %6163
      %v6165 = vsel %vm1365, %v6141, 0.0
      %6166 = vadd.xlane.f32.xlu0 %v6165
      %v6167 = vpop.xlane.xlu0 %6166
      %v6168 = vsel %vm1365, %v6142, 0.0
      %6169 = vadd.xlane.f32.xlu0 %v6168
      %v6170 = vpop.xlane.xlu0 %6169
      %v6171 = vsel %vm1365, %v6143, 0.0
      %6172 = vadd.xlane.f32.xlu0 %v6171
      %v6173 = vpop.xlane.xlu0 %6172
      %v6174 = vsel %vm1365, %v6144, 0.0
      %6175 = vadd.xlane.f32.xlu0 %v6174
      %v6176 = vpop.xlane.xlu0 %6175
      %v6177 = vsel %vm1365, %v6145, 0.0
      %6178 = vadd.xlane.f32.xlu0 %v6177
      %v6179 = vpop.xlane.xlu0 %6178
      %v6180 = vsel %vm1365, %v6146, 0.0
      %6181 = vadd.xlane.f32.xlu0 %v6180
      %v6182 = vpop.xlane.xlu0 %6181
      %v6183 = vsel %vm1365, %v6147, 0.0
      %6184 = vadd.xlane.f32.xlu0 %v6183
      %v6185 = vpop.xlane.xlu0 %6184
      %v6186 = vsel %vm1365, %v6148, 0.0
      %6187 = vadd.xlane.f32.xlu0 %v6186
      %v6188 = vpop.xlane.xlu0 %6187
      %v6189 = vsel %vm1365, %v6149, 0.0
      %6190 = vadd.xlane.f32.xlu0 %v6189
      %v6191 = vpop.xlane.xlu0 %6190
      %v6192 = vsel %vm1365, %v6150, 0.0
      %6193 = vadd.xlane.f32.xlu0 %v6192
      %v6194 = vpop.xlane.xlu0 %6193
      %v6195 = vsel %vm1365, %v6151, 0.0
      %6196 = vadd.xlane.f32.xlu0 %v6195
      %v6197 = vpop.xlane.xlu0 %6196
      %v6198 = vsel %vm1365, %v6152, 0.0
      %6199 = vadd.xlane.f32.xlu0 %v6198
      %v6200 = vpop.xlane.xlu0 %6199
      %v6201 = vld [vmem:[%s5 + $0x2c0] sm:$0x1]
      %v6202 = vlaneseq
      %v6203 = vshrl.u32 %v6202, 7
      %v6204 = vsub.s32 0, %v6203
      %v6205 = vrot.slane %v6201, %v6204
      %v6206 = vadd.f32 %v6155, %v6205
      %v6207 = vadd.f32 %v6158, %v6205
      %v6208 = vadd.f32 %v6161, %v6205
      %v6209 = vadd.f32 %v6164, %v6205
      %v6210 = vadd.f32 %v6167, %v6205
      %v6211 = vadd.f32 %v6170, %v6205
      %v6212 = vadd.f32 %v6173, %v6205
      %v6213 = vadd.f32 %v6176, %v6205
      %v6214 = vadd.f32 %v6179, %v6205
      %v6215 = vadd.f32 %v6182, %v6205
      %v6216 = vadd.f32 %v6185, %v6205
      %v6217 = vadd.f32 %v6188, %v6205
      %v6218 = vadd.f32 %v6191, %v6205
      %v6219 = vadd.f32 %v6194, %v6205
      %v6220 = vadd.f32 %v6197, %v6205
      %v6221 = vadd.f32 %v6200, %v6205
      %v6222 = vmul.f32 %v6206, 0.5
      %v6223 = vmul.f32 %v6207, 0.5
      %v6224 = vmul.f32 %v6208, 0.5
      %v6225 = vmul.f32 %v6209, 0.5
      %v6226 = vmul.f32 %v6210, 0.5
      %v6227 = vmul.f32 %v6211, 0.5
      %v6228 = vmul.f32 %v6212, 0.5
      %v6229 = vmul.f32 %v6213, 0.5
      %v6230 = vmul.f32 %v6214, 0.5
      %v6231 = vmul.f32 %v6215, 0.5
      %v6232 = vmul.f32 %v6216, 0.5
      %v6233 = vmul.f32 %v6217, 0.5
      %v6234 = vmul.f32 %v6218, 0.5
      %v6235 = vmul.f32 %v6219, 0.5
      %v6236 = vmul.f32 %v6220, 0.5
      %v6237 = vmul.f32 %v6221, 0.5
      %v6238 = vtanh.pop %v6222
      %v6239 = vtanh.pop %v6223
      %v6240 = vtanh.pop %v6224
      %v6241 = vtanh.pop %v6225
      %v6242 = vtanh.pop %v6226
      %v6243 = vtanh.pop %v6227
      %v6244 = vtanh.pop %v6228
      %v6245 = vtanh.pop %v6229
      %v6246 = vtanh.pop %v6230
      %v6247 = vtanh.pop %v6231
      %v6248 = vtanh.pop %v6232
      %v6249 = vtanh.pop %v6233
      %v6250 = vtanh.pop %v6234
      %v6251 = vtanh.pop %v6235
      %v6252 = vtanh.pop %v6236
      %v6253 = vtanh.pop %v6237
      %v6254 = vmul.f32 %v6238, 0.5
      %v6255 = vmul.f32 %v6239, 0.5
      %v6256 = vmul.f32 %v6240, 0.5
      %v6257 = vmul.f32 %v6241, 0.5
      %v6258 = vmul.f32 %v6242, 0.5
      %v6259 = vmul.f32 %v6243, 0.5
      %v6260 = vmul.f32 %v6244, 0.5
      %v6261 = vmul.f32 %v6245, 0.5
      %v6262 = vmul.f32 %v6246, 0.5
      %v6263 = vmul.f32 %v6247, 0.5
      %v6264 = vmul.f32 %v6248, 0.5
      %v6265 = vmul.f32 %v6249, 0.5
      %v6266 = vmul.f32 %v6250, 0.5
      %v6267 = vmul.f32 %v6251, 0.5
      %v6268 = vmul.f32 %v6252, 0.5
      %v6269 = vmul.f32 %v6253, 0.5
      %v6270 = vadd.f32 %v6254, 0.5
      %v6271 = vadd.f32 %v6255, 0.5
      %v6272 = vadd.f32 %v6256, 0.5
      %v6273 = vadd.f32 %v6257, 0.5
      %v6274 = vadd.f32 %v6258, 0.5
      %v6275 = vadd.f32 %v6259, 0.5
      %v6276 = vadd.f32 %v6260, 0.5
      %v6277 = vadd.f32 %v6261, 0.5
      %v6278 = vadd.f32 %v6262, 0.5
      %v6279 = vadd.f32 %v6263, 0.5
      %v6280 = vadd.f32 %v6264, 0.5
      %v6281 = vadd.f32 %v6265, 0.5
      %v6282 = vadd.f32 %v6266, 0.5
      %v6283 = vadd.f32 %v6267, 0.5
      %v6284 = vadd.f32 %v6268, 0.5
      %v6285 = vadd.f32 %v6269, 0.5
      %v6286 = vmul.f32 %v6206, %v6270
      %v6287 = vmul.f32 %v6207, %v6271
      %v6288 = vmul.f32 %v6208, %v6272
      %v6289 = vmul.f32 %v6209, %v6273
      %v6290 = vmul.f32 %v6210, %v6274
      %v6291 = vmul.f32 %v6211, %v6275
      %v6292 = vmul.f32 %v6212, %v6276
      %v6293 = vmul.f32 %v6213, %v6277
      %v6294 = vmul.f32 %v6214, %v6278
      %v6295 = vmul.f32 %v6215, %v6279
      %v6296 = vmul.f32 %v6216, %v6280
      %v6297 = vmul.f32 %v6217, %v6281
      %v6298 = vmul.f32 %v6218, %v6282
      %v6299 = vmul.f32 %v6219, %v6283
      %v6300 = vmul.f32 %v6220, %v6284
      %v6301 = vmul.f32 %v6221, %v6285
      %v6302 = vtanh.pop %v6286
      %v6303 = vtanh.pop %v6287
      %v6304 = vtanh.pop %v6288
      %v6305 = vtanh.pop %v6289
      %v6306 = vtanh.pop %v6290
      %v6307 = vtanh.pop %v6291
      %v6308 = vtanh.pop %v6292
      %v6309 = vtanh.pop %v6293
      %v6310 = vtanh.pop %v6294
      %v6311 = vtanh.pop %v6295
      %v6312 = vtanh.pop %v6296
      %v6313 = vtanh.pop %v6297
      %v6314 = vtanh.pop %v6298
      %v6315 = vtanh.pop %v6299
      %v6316 = vtanh.pop %v6300
      %v6317 = vtanh.pop %v6301
      %6319 = vset.pattern.permute.xlu0 0
      %6320 = vperm.xlu0 %6319, %v6302
      %v6321 = vpop.permute.xlu0 %6320
      %6324 = vset.pattern.permute.xlu0 0
      %6325 = vperm.xlu0 %6324, %v6303
      %v6326 = vpop.permute.xlu0 %6325
      %6329 = vset.pattern.permute.xlu0 0
      %6330 = vperm.xlu0 %6329, %v6304
      %v6331 = vpop.permute.xlu0 %6330
      %6334 = vset.pattern.permute.xlu0 0
      %6335 = vperm.xlu0 %6334, %v6305
      %v6336 = vpop.permute.xlu0 %6335
      %6339 = vset.pattern.permute.xlu0 0
      %6340 = vperm.xlu0 %6339, %v6306
      %v6341 = vpop.permute.xlu0 %6340
      %6344 = vset.pattern.permute.xlu0 0
      %6345 = vperm.xlu0 %6344, %v6307
      %v6346 = vpop.permute.xlu0 %6345
      %6349 = vset.pattern.permute.xlu0 0
      %6350 = vperm.xlu0 %6349, %v6308
      %v6351 = vpop.permute.xlu0 %6350
      %6354 = vset.pattern.permute.xlu0 0
      %6355 = vperm.xlu0 %6354, %v6309
      %v6356 = vpop.permute.xlu0 %6355
      %6359 = vset.pattern.permute.xlu0 0
      %6360 = vperm.xlu0 %6359, %v6310
      %v6361 = vpop.permute.xlu0 %6360
      %6364 = vset.pattern.permute.xlu0 0
      %6365 = vperm.xlu0 %6364, %v6311
      %v6366 = vpop.permute.xlu0 %6365
      %6369 = vset.pattern.permute.xlu0 0
      %6370 = vperm.xlu0 %6369, %v6312
      %v6371 = vpop.permute.xlu0 %6370
      %6374 = vset.pattern.permute.xlu0 0
      %6375 = vperm.xlu0 %6374, %v6313
      %v6376 = vpop.permute.xlu0 %6375
      %6379 = vset.pattern.permute.xlu0 0
      %6380 = vperm.xlu0 %6379, %v6314
      %v6381 = vpop.permute.xlu0 %6380
      %6384 = vset.pattern.permute.xlu0 0
      %6385 = vperm.xlu0 %6384, %v6315
      %v6386 = vpop.permute.xlu0 %6385
      %6389 = vset.pattern.permute.xlu0 0
      %6390 = vperm.xlu0 %6389, %v6316
      %v6391 = vpop.permute.xlu0 %6390
      %6394 = vset.pattern.permute.xlu0 0
      %6395 = vperm.xlu0 %6394, %v6317
      %v6396 = vpop.permute.xlu0 %6395
      %v6398 = vmul.f32 %v1345, %v6321
      %v6399 = vmul.f32 %v1346, %v6326
      %v6400 = vmul.f32 %v1347, %v6331
      %v6401 = vmul.f32 %v1348, %v6336
      %v6402 = vmul.f32 %v1349, %v6341
      %v6403 = vmul.f32 %v1350, %v6346
      %v6404 = vmul.f32 %v1351, %v6351
      %v6405 = vmul.f32 %v1352, %v6356
      %v6406 = vmul.f32 %v1353, %v6361
      %v6407 = vmul.f32 %v1354, %v6366
      %v6408 = vmul.f32 %v1355, %v6371
      %v6409 = vmul.f32 %v1356, %v6376
      %v6410 = vmul.f32 %v1357, %v6381
      %v6411 = vmul.f32 %v1358, %v6386
      %v6412 = vmul.f32 %v1359, %v6391
      %v6413 = vmul.f32 %v1360, %v6396
      %v6414 = vmul.f32 %v6398, 15.0
      %v6415 = vmul.f32 %v6399, 15.0
      %v6416 = vmul.f32 %v6400, 15.0
      %v6417 = vmul.f32 %v6401, 15.0
      %v6418 = vmul.f32 %v6402, 15.0
      %v6419 = vmul.f32 %v6403, 15.0
      %v6420 = vmul.f32 %v6404, 15.0
      %v6421 = vmul.f32 %v6405, 15.0
      %v6422 = vmul.f32 %v6406, 15.0
      %v6423 = vmul.f32 %v6407, 15.0
      %v6424 = vmul.f32 %v6408, 15.0
      %v6425 = vmul.f32 %v6409, 15.0
      %v6426 = vmul.f32 %v6410, 15.0
      %v6427 = vmul.f32 %v6411, 15.0
      %v6428 = vmul.f32 %v6412, 15.0
      %v6429 = vmul.f32 %v6413, 15.0
      %6430 = vmatprep.subr.mxu0 0.0
      %6431 = vmatpush1.msra.mxu0 %v6414
      %6432 = vmatprep.subr.mxu0 0.0
      %6433 = vmatpush1.msra.mxu0 %v6415
      %6434 = vmatprep.subr.mxu0 0.0
      %6435 = vmatpush1.msra.mxu0 %v6416
      %6436 = vmatprep.subr.mxu0 0.0
      %6437 = vmatpush1.msra.mxu0 %v6417
      %6438 = vmatprep.subr.mxu0 0.0
      %6439 = vmatpush1.msra.mxu0 %v6418
      %6440 = vmatprep.subr.mxu0 0.0
      %6441 = vmatpush1.msra.mxu0 %v6419
      %6442 = vmatprep.subr.mxu0 0.0
      %6443 = vmatpush1.msra.mxu0 %v6420
      %6444 = vmatprep.subr.mxu0 0.0
      %6445 = vmatpush1.msra.mxu0 %v6421
      %6446 = vmatprep.subr.mxu0 0.0
      %6447 = vmatpush1.msra.mxu0 %v6422
      %6448 = vmatprep.subr.mxu0 0.0
      %6449 = vmatpush1.msra.mxu0 %v6423
      %6450 = vmatprep.subr.mxu0 0.0
      %6451 = vmatpush1.msra.mxu0 %v6424
      %6452 = vmatprep.subr.mxu0 0.0
      %6453 = vmatpush1.msra.mxu0 %v6425
      %6454 = vmatprep.subr.mxu0 0.0
      %6455 = vmatpush1.msra.mxu0 %v6426
      %6456 = vmatprep.subr.mxu0 0.0
      %6457 = vmatpush1.msra.mxu0 %v6427
      %6458 = vmatprep.subr.mxu0 0.0
      %6459 = vmatpush1.msra.mxu0 %v6428
      %6460 = vmatprep.subr.mxu0 0.0
      %6461 = vmatpush1.msra.mxu0 %v6429
      %6462 = vmatprep.subr.mxu0 0.0
      %6463 = vmatpush1.msra.mxu0 0.0
      %6464 = vmatprep.subr.mxu0 0.0
      %6465 = vmatpush1.msra.mxu0 0.0
      %6466 = vmatprep.subr.mxu0 0.0
      %6467 = vmatpush1.msra.mxu0 0.0
      %6468 = vmatprep.subr.mxu0 0.0
      %6469 = vmatpush1.msra.mxu0 0.0
      %6470 = vmatprep.subr.mxu0 0.0
      %6471 = vmatpush1.msra.mxu0 0.0
      %6472 = vmatprep.subr.mxu0 0.0
      %6473 = vmatpush1.msra.mxu0 0.0
      %6474 = vmatprep.subr.mxu0 0.0
      %6475 = vmatpush1.msra.mxu0 0.0
      %6476 = vmatprep.subr.mxu0 0.0
      %6477 = vmatpush1.msra.mxu0 0.0
      %6478 = vmatprep.subr.mxu0 0.0
      %6479 = vmatpush1.msra.mxu0 0.0
      %6480 = vmatprep.subr.mxu0 0.0
      %6481 = vmatpush1.msra.mxu0 0.0
      %6482 = vmatprep.subr.mxu0 0.0
      %6483 = vmatpush1.msra.mxu0 0.0
      %6484 = vmatprep.subr.mxu0 0.0
      %6485 = vmatpush1.msra.mxu0 0.0
      %6486 = vmatprep.subr.mxu0 0.0
      %6487 = vmatpush1.msra.mxu0 0.0
      %6488 = vmatprep.subr.mxu0 0.0
      %6489 = vmatpush1.msra.mxu0 0.0
      %6490 = vmatprep.subr.mxu0 0.0
      %6491 = vmatpush1.msra.mxu0 0.0
      %6492 = vmatprep.subr.mxu0 0.0
      %6493 = vmatpush1.msra.mxu0 0.0
      %6494 = vmatprep.mubr.f32.mxu0 0.0
      %6495 = vmatmul.mubr.f32.gmra.mrb[0].mxu0 %v709
      %v6496 = vpop.f32.mrb[0].mxu0
      %v6497 = vadd.f32 0.0, %v6496
      %v6498 = vpop.f32.mrb[0].mxu0
      %6499 = vmatprep.mubr.f32.mxu0 0.0
      %6500 = vmatmul.mubr.f32.gmra.mrb[0].mxu0 %v710
      %v6501 = vpop.f32.mrb[0].mxu0
      %v6502 = vadd.f32 0.0, %v6501
      %v6503 = vpop.f32.mrb[0].mxu0
      %6504 = vmatprep.mubr.f32.mxu0 0.0
      %6505 = vmatmul.mubr.f32.gmra.mrb[0].mxu0 %v711
      %v6506 = vpop.f32.mrb[0].mxu0
      %v6507 = vadd.f32 0.0, %v6506
      %v6508 = vpop.f32.mrb[0].mxu0
      %6509 = vmatprep.mubr.f32.mxu0 0.0
      %6510 = vmatmul.mubr.f32.gmra.mrb[0].mxu0 %v712
      %v6511 = vpop.f32.mrb[0].mxu0
      %v6512 = vadd.f32 0.0, %v6511
      %v6513 = vpop.f32.mrb[0].mxu0
      %6514 = vmatprep.mubr.f32.mxu0 0.0
      %6515 = vmatmul.mubr.f32.gmra.mrb[0].mxu0 %v713
      %v6516 = vpop.f32.mrb[0].mxu0
      %v6517 = vadd.f32 0.0, %v6516
      %v6518 = vpop.f32.mrb[0].mxu0
      %6519 = vmatprep.mubr.f32.mxu0 0.0
      %6520 = vmatmul.mubr.f32.gmra.mrb[0].mxu0 %v714
      %v6521 = vpop.f32.mrb[0].mxu0
      %v6522 = vadd.f32 0.0, %v6521
      %v6523 = vpop.f32.mrb[0].mxu0
      %6524 = vmatprep.mubr.f32.mxu0 0.0
      %6525 = vmatmul.mubr.f32.gmra.mrb[0].mxu0 %v715
      %v6526 = vpop.f32.mrb[0].mxu0
      %v6527 = vadd.f32 0.0, %v6526
      %v6528 = vpop.f32.mrb[0].mxu0
      %6529 = vmatprep.mubr.f32.mxu0 0.0
      %6530 = vmatmul.mubr.f32.gmra.mrb[0].mxu0 %v716
      %v6531 = vpop.f32.mrb[0].mxu0
      %v6532 = vadd.f32 0.0, %v6531
      %v6533 = vpop.f32.mrb[0].mxu0
      %6534 = vdwg.mxu0
      %v6535 = vadd.f32 %v402, %v6497
      %v6536 = vadd.f32 %v403, %v6502
      %v6537 = vadd.f32 %v404, %v6507
      %v6538 = vadd.f32 %v405, %v6512
      %v6539 = vadd.f32 %v406, %v6517
      %v6540 = vadd.f32 %v407, %v6522
      %v6541 = vadd.f32 %v408, %v6527
      %v6542 = vadd.f32 %v409, %v6532
      %6543 = vmatprep.subr.mxu0 0.0
      %6544 = vmatpush1.msra.mxu0 %v1139
      %6545 = vmatprep.subr.mxu0 0.0
      %6546 = vmatpush1.msra.mxu0 %v1142
      %6547 = vmatprep.subr.mxu0 0.0
      %6548 = vmatpush1.msra.mxu0 %v1145
      %6549 = vmatprep.subr.mxu0 0.0
      %6550 = vmatpush1.msra.mxu0 %v1148
      %6551 = vmatprep.subr.mxu0 0.0
      %6552 = vmatpush1.msra.mxu0 %v1151
      %6553 = vmatprep.subr.mxu0 0.0
      %6554 = vmatpush1.msra.mxu0 %v1154
      %6555 = vmatprep.subr.mxu0 0.0
      %6556 = vmatpush1.msra.mxu0 %v1157
      %6557 = vmatprep.subr.mxu0 0.0
      %6558 = vmatpush1.msra.mxu0 %v1160
      %6559 = vmatprep.subr.mxu0 0.0
      %6560 = vmatpush1.msra.mxu0 %v1163
      %6561 = vmatprep.subr.mxu0 0.0
      %6562 = vmatpush1.msra.mxu0 %v1166
      %6563 = vmatprep.subr.mxu0 0.0
      %6564 = vmatpush1.msra.mxu0 %v1169
      %6565 = vmatprep.subr.mxu0 0.0
      %6566 = vmatpush1.msra.mxu0 %v1172
      %6567 = vmatprep.subr.mxu0 0.0
      %6568 = vmatpush1.msra.mxu0 %v1175
      %6569 = vmatprep.subr.mxu0 0.0
      %6570 = vmatpush1.msra.mxu0 %v1178
      %6571 = vmatprep.subr.mxu0 0.0
      %6572 = vmatpush1.msra.mxu0 %v1181
      %6573 = vmatprep.subr.mxu0 0.0
      %6574 = vmatpush1.msra.mxu0 %v1184
      %6575 = vmatprep.subr.mxu0 0.0
      %6576 = vmatpush1.msra.mxu0 0.0
      %6577 = vmatprep.subr.mxu0 0.0
      %6578 = vmatpush1.msra.mxu0 0.0
      %6579 = vmatprep.subr.mxu0 0.0
      %6580 = vmatpush1.msra.mxu0 0.0
      %6581 = vmatprep.subr.mxu0 0.0
      %6582 = vmatpush1.msra.mxu0 0.0
      %6583 = vmatprep.subr.mxu0 0.0
      %6584 = vmatpush1.msra.mxu0 0.0
      %6585 = vmatprep.subr.mxu0 0.0
      %6586 = vmatpush1.msra.mxu0 0.0
      %6587 = vmatprep.subr.mxu0 0.0
      %6588 = vmatpush1.msra.mxu0 0.0
      %6589 = vmatprep.subr.mxu0 0.0
      %6590 = vmatpush1.msra.mxu0 0.0
      %6591 = vmatprep.subr.mxu0 0.0
      %6592 = vmatpush1.msra.mxu0 0.0
      %6593 = vmatprep.subr.mxu0 0.0
      %6594 = vmatpush1.msra.mxu0 0.0
      %6595 = vmatprep.subr.mxu0 0.0
      %6596 = vmatpush1.msra.mxu0 0.0
      %6597 = vmatprep.subr.mxu0 0.0
      %6598 = vmatpush1.msra.mxu0 0.0
      %6599 = vmatprep.subr.mxu0 0.0
      %6600 = vmatpush1.msra.mxu0 0.0
      %6601 = vmatprep.subr.mxu0 0.0
      %6602 = vmatpush1.msra.mxu0 0.0
      %6603 = vmatprep.subr.mxu0 0.0
      %6604 = vmatpush1.msra.mxu0 0.0
      %6605 = vmatprep.subr.mxu0 0.0
      %6606 = vmatpush1.msra.mxu0 0.0
      %6607 = vmatprep.mubr.f32.mxu0 0.0
      %6608 = vmatmul.mubr.f32.gmra.mrb[0].mxu0 %v709
      %v6609 = vpop.f32.mrb[0].mxu0
      %v6610 = vadd.f32 0.0, %v6609
      %v6611 = vpop.f32.mrb[0].mxu0
      %6612 = vmatprep.mubr.f32.mxu0 0.0
      %6613 = vmatmul.mubr.f32.gmra.mrb[0].mxu0 %v710
      %v6614 = vpop.f32.mrb[0].mxu0
      %v6615 = vadd.f32 0.0, %v6614
      %v6616 = vpop.f32.mrb[0].mxu0
      %6617 = vmatprep.mubr.f32.mxu0 0.0
      %6618 = vmatmul.mubr.f32.gmra.mrb[0].mxu0 %v711
      %v6619 = vpop.f32.mrb[0].mxu0
      %v6620 = vadd.f32 0.0, %v6619
      %v6621 = vpop.f32.mrb[0].mxu0
      %6622 = vmatprep.mubr.f32.mxu0 0.0
      %6623 = vmatmul.mubr.f32.gmra.mrb[0].mxu0 %v712
      %v6624 = vpop.f32.mrb[0].mxu0
      %v6625 = vadd.f32 0.0, %v6624
      %v6626 = vpop.f32.mrb[0].mxu0
      %6627 = vmatprep.mubr.f32.mxu0 0.0
      %6628 = vmatmul.mubr.f32.gmra.mrb[0].mxu0 %v713
      %v6629 = vpop.f32.mrb[0].mxu0
      %v6630 = vadd.f32 0.0, %v6629
      %v6631 = vpop.f32.mrb[0].mxu0
      %6632 = vmatprep.mubr.f32.mxu0 0.0
      %6633 = vmatmul.mubr.f32.gmra.mrb[0].mxu0 %v714
      %v6634 = vpop.f32.mrb[0].mxu0
      %v6635 = vadd.f32 0.0, %v6634
      %v6636 = vpop.f32.mrb[0].mxu0
      %6637 = vmatprep.mubr.f32.mxu0 0.0
      %6638 = vmatmul.mubr.f32.gmra.mrb[0].mxu0 %v715
      %v6639 = vpop.f32.mrb[0].mxu0
      %v6640 = vadd.f32 0.0, %v6639
      %v6641 = vpop.f32.mrb[0].mxu0
      %6642 = vmatprep.mubr.f32.mxu0 0.0
      %6643 = vmatmul.mubr.f32.gmra.mrb[0].mxu0 %v716
      %v6644 = vpop.f32.mrb[0].mxu0
      %v6645 = vadd.f32 0.0, %v6644
      %v6646 = vpop.f32.mrb[0].mxu0
      %6647 = vdwg.mxu0
      %v6648 = vld [vmem:[%s5 + $0x2c8] sm:$0x1]
      %6650 = vset.pattern.permute.xlu0 0
      %6651 = vperm.xlu0 %6650, %v6610
      %v6652 = vpop.permute.xlu0 %6651
      %6655 = vset.pattern.permute.xlu0 0
      %6656 = vperm.xlu0 %6655, %v6615
      %v6657 = vpop.permute.xlu0 %6656
      %6660 = vset.pattern.permute.xlu0 0
      %6661 = vperm.xlu0 %6660, %v6620
      %v6662 = vpop.permute.xlu0 %6661
      %6665 = vset.pattern.permute.xlu0 0
      %6666 = vperm.xlu0 %6665, %v6625
      %v6667 = vpop.permute.xlu0 %6666
      %6670 = vset.pattern.permute.xlu0 0
      %6671 = vperm.xlu0 %6670, %v6630
      %v6672 = vpop.permute.xlu0 %6671
      %6675 = vset.pattern.permute.xlu0 0
      %6676 = vperm.xlu0 %6675, %v6635
      %v6677 = vpop.permute.xlu0 %6676
      %6680 = vset.pattern.permute.xlu0 0
      %6681 = vperm.xlu0 %6680, %v6640
      %v6682 = vpop.permute.xlu0 %6681
      %6685 = vset.pattern.permute.xlu0 0
      %6686 = vperm.xlu0 %6685, %v6645
      %v6687 = vpop.permute.xlu0 %6686
      %v6689 = vlaneseq
      %v6690 = vshrl.u32 %v6689, 7
      %v6691 = vsub.s32 0, %v6690
      %v6692 = vrot.slane %v6648, %v6691
      %v6693 = vmul.f32 %v6652, %v6692
      %v6694 = vmul.f32 %v6657, %v6692
      %v6695 = vmul.f32 %v6662, %v6692
      %v6696 = vmul.f32 %v6667, %v6692
      %v6697 = vmul.f32 %v6672, %v6692
      %v6698 = vmul.f32 %v6677, %v6692
      %v6699 = vmul.f32 %v6682, %v6692
      %v6700 = vmul.f32 %v6687, %v6692
      %v6701 = vld [vmem:[%s5 + $0x2d0] sm:$0x1]
      %v6702 = vlaneseq
      %v6703 = vshrl.u32 %v6702, 7
      %v6704 = vsub.s32 0, %v6703
      %v6705 = vrot.slane %v6701, %v6704
      %v6706 = vadd.f32 %v6693, %v6705
      %v6707 = vadd.f32 %v6694, %v6705
      %v6708 = vadd.f32 %v6695, %v6705
      %v6709 = vadd.f32 %v6696, %v6705
      %v6710 = vadd.f32 %v6697, %v6705
      %v6711 = vadd.f32 %v6698, %v6705
      %v6712 = vadd.f32 %v6699, %v6705
      %v6713 = vadd.f32 %v6700, %v6705
      %v6714 = vmul.f32 %v6706, 0.5
      %v6715 = vmul.f32 %v6707, 0.5
      %v6716 = vmul.f32 %v6708, 0.5
      %v6717 = vmul.f32 %v6709, 0.5
      %v6718 = vmul.f32 %v6710, 0.5
      %v6719 = vmul.f32 %v6711, 0.5
      %v6720 = vmul.f32 %v6712, 0.5
      %v6721 = vmul.f32 %v6713, 0.5
      %v6722 = vtanh.pop %v6714
      %v6723 = vtanh.pop %v6715
      %v6724 = vtanh.pop %v6716
      %v6725 = vtanh.pop %v6717
      %v6726 = vtanh.pop %v6718
      %v6727 = vtanh.pop %v6719
      %v6728 = vtanh.pop %v6720
      %v6729 = vtanh.pop %v6721
      %v6730 = vmul.f32 %v6722, 0.5
      %v6731 = vmul.f32 %v6723, 0.5
      %v6732 = vmul.f32 %v6724, 0.5
      %v6733 = vmul.f32 %v6725, 0.5
      %v6734 = vmul.f32 %v6726, 0.5
      %v6735 = vmul.f32 %v6727, 0.5
      %v6736 = vmul.f32 %v6728, 0.5
      %v6737 = vmul.f32 %v6729, 0.5
      %v6738 = vadd.f32 %v6730, 0.5
      %v6739 = vadd.f32 %v6731, 0.5
      %v6740 = vadd.f32 %v6732, 0.5
      %v6741 = vadd.f32 %v6733, 0.5
      %v6742 = vadd.f32 %v6734, 0.5
      %v6743 = vadd.f32 %v6735, 0.5
      %v6744 = vadd.f32 %v6736, 0.5
      %v6745 = vadd.f32 %v6737, 0.5
      %v6746 = vmul.f32 %v6706, %v6738
      %v6747 = vmul.f32 %v6707, %v6739
      %v6748 = vmul.f32 %v6708, %v6740
      %v6749 = vmul.f32 %v6709, %v6741
      %v6750 = vmul.f32 %v6710, %v6742
      %v6751 = vmul.f32 %v6711, %v6743
      %v6752 = vmul.f32 %v6712, %v6744
      %v6753 = vmul.f32 %v6713, %v6745
      %v6754 = vld [vmem:[%s5 + $0x2d8] sm:$0xff]
      %v6755 = vld [vmem:[%s5 + $0x2e0] sm:$0xff]
      %v6756 = vld [vmem:[%s5 + $0x2e8] sm:$0x1]
      %v6757 = vlaneseq
      %v6758 = vshrl.u32 %v6757, 7
      %v6759 = vsub.s32 0, %v6758
      %v6760 = vrot.slane %v6756, %v6759
      %vm6761 = vcmask 130048
      %v6763 = vsel %vm6761, %v6746, 0
      %v6766 = vsel %vm6761, %v6747, 0
      %v6769 = vsel %vm6761, %v6748, 0
      %v6772 = vsel %vm6761, %v6749, 0
      %v6775 = vsel %vm6761, %v6750, 0
      %v6778 = vsel %vm6761, %v6751, 0
      %v6781 = vsel %vm6761, %v6752, 0
      %v6784 = vsel %vm6761, %v6753, 0
      %6786 = vmatprep.subr.mxu0 0.0
      %6787 = vmatpush1.msra.mxu0 %v6754
      %6788 = vmatprep.subr.mxu0 0.0
      %6789 = vmatpush1.msra.mxu0 %v6755
      %6790 = vmatprep.subr.mxu0 0.0
      %6791 = vmatpush1.msra.mxu0 0.0
      %6792 = vmatprep.subr.mxu0 0.0
      %6793 = vmatpush1.msra.mxu0 0.0
      %6794 = vmatprep.subr.mxu0 0.0
      %6795 = vmatpush1.msra.mxu0 0.0
      %6796 = vmatprep.subr.mxu0 0.0
      %6797 = vmatpush1.msra.mxu0 0.0
      %6798 = vmatprep.subr.mxu0 0.0
      %6799 = vmatpush1.msra.mxu0 0.0
      %6800 = vmatprep.subr.mxu0 0.0
      %6801 = vmatpush1.msra.mxu0 0.0
      %6802 = vmatprep.subr.mxu0 0.0
      %6803 = vmatpush1.msra.mxu0 0.0
      %6804 = vmatprep.subr.mxu0 0.0
      %6805 = vmatpush1.msra.mxu0 0.0
      %6806 = vmatprep.subr.mxu0 0.0
      %6807 = vmatpush1.msra.mxu0 0.0
      %6808 = vmatprep.subr.mxu0 0.0
      %6809 = vmatpush1.msra.mxu0 0.0
      %6810 = vmatprep.subr.mxu0 0.0
      %6811 = vmatpush1.msra.mxu0 0.0
      %6812 = vmatprep.subr.mxu0 0.0
      %6813 = vmatpush1.msra.mxu0 0.0
      %6814 = vmatprep.subr.mxu0 0.0
      %6815 = vmatpush1.msra.mxu0 0.0
      %6816 = vmatprep.subr.mxu0 0.0
      %6817 = vmatpush1.msra.mxu0 0.0
      %6818 = vmatprep.subr.mxu0 0.0
      %6819 = vmatpush1.msra.mxu0 0.0
      %6820 = vmatprep.subr.mxu0 0.0
      %6821 = vmatpush1.msra.mxu0 0.0
      %6822 = vmatprep.subr.mxu0 0.0
      %6823 = vmatpush1.msra.mxu0 0.0
      %6824 = vmatprep.subr.mxu0 0.0
      %6825 = vmatpush1.msra.mxu0 0.0
      %6826 = vmatprep.subr.mxu0 0.0
      %6827 = vmatpush1.msra.mxu0 0.0
      %6828 = vmatprep.subr.mxu0 0.0
      %6829 = vmatpush1.msra.mxu0 0.0
      %6830 = vmatprep.subr.mxu0 0.0
      %6831 = vmatpush1.msra.mxu0 0.0
      %6832 = vmatprep.subr.mxu0 0.0
      %6833 = vmatpush1.msra.mxu0 0.0
      %6834 = vmatprep.subr.mxu0 0.0
      %6835 = vmatpush1.msra.mxu0 0.0
      %6836 = vmatprep.subr.mxu0 0.0
      %6837 = vmatpush1.msra.mxu0 0.0
      %6838 = vmatprep.subr.mxu0 0.0
      %6839 = vmatpush1.msra.mxu0 0.0
      %6840 = vmatprep.subr.mxu0 0.0
      %6841 = vmatpush1.msra.mxu0 0.0
      %6842 = vmatprep.subr.mxu0 0.0
      %6843 = vmatpush1.msra.mxu0 0.0
      %6844 = vmatprep.subr.mxu0 0.0
      %6845 = vmatpush1.msra.mxu0 0.0
      %6846 = vmatprep.subr.mxu0 0.0
      %6847 = vmatpush1.msra.mxu0 0.0
      %6848 = vmatprep.subr.mxu0 0.0
      %6849 = vmatpush1.msra.mxu0 0.0
      %6850 = vmatprep.mubr.f32.mxu0 0.0
      %6851 = vmatmul.mubr.f32.gmra.mrb[0].mxu0 %v6763
      %v6852 = vpop.f32.mrb[0].mxu0
      %v6853 = vadd.f32 %v6760, %v6852
      %v6854 = vpop.f32.mrb[0].mxu0
      %6855 = vmatprep.mubr.f32.mxu0 0.0
      %6856 = vmatmul.mubr.f32.gmra.mrb[0].mxu0 %v6766
      %v6857 = vpop.f32.mrb[0].mxu0
      %v6858 = vadd.f32 %v6760, %v6857
      %v6859 = vpop.f32.mrb[0].mxu0
      %6860 = vmatprep.mubr.f32.mxu0 0.0
      %6861 = vmatmul.mubr.f32.gmra.mrb[0].mxu0 %v6769
      %v6862 = vpop.f32.mrb[0].mxu0
      %v6863 = vadd.f32 %v6760, %v6862
      %v6864 = vpop.f32.mrb[0].mxu0
      %6865 = vmatprep.mubr.f32.mxu0 0.0
      %6866 = vmatmul.mubr.f32.gmra.mrb[0].mxu0 %v6772
      %v6867 = vpop.f32.mrb[0].mxu0
      %v6868 = vadd.f32 %v6760, %v6867
      %v6869 = vpop.f32.mrb[0].mxu0
      %6870 = vmatprep.mubr.f32.mxu0 0.0
      %6871 = vmatmul.mubr.f32.gmra.mrb[0].mxu0 %v6775
      %v6872 = vpop.f32.mrb[0].mxu0
      %v6873 = vadd.f32 %v6760, %v6872
      %v6874 = vpop.f32.mrb[0].mxu0
      %6875 = vmatprep.mubr.f32.mxu0 0.0
      %6876 = vmatmul.mubr.f32.gmra.mrb[0].mxu0 %v6778
      %v6877 = vpop.f32.mrb[0].mxu0
      %v6878 = vadd.f32 %v6760, %v6877
      %v6879 = vpop.f32.mrb[0].mxu0
      %6880 = vmatprep.mubr.f32.mxu0 0.0
      %6881 = vmatmul.mubr.f32.gmra.mrb[0].mxu0 %v6781
      %v6882 = vpop.f32.mrb[0].mxu0
      %v6883 = vadd.f32 %v6760, %v6882
      %v6884 = vpop.f32.mrb[0].mxu0
      %6885 = vmatprep.mubr.f32.mxu0 0.0
      %6886 = vmatmul.mubr.f32.gmra.mrb[0].mxu0 %v6784
      %v6887 = vpop.f32.mrb[0].mxu0
      %v6888 = vadd.f32 %v6760, %v6887
      %v6889 = vpop.f32.mrb[0].mxu0
      %6890 = vdwg.mxu0
      %v6891 = vmul.f32 %v6853, 0.5
      %v6892 = vmul.f32 %v6858, 0.5
      %v6893 = vmul.f32 %v6863, 0.5
      %v6894 = vmul.f32 %v6868, 0.5
      %v6895 = vmul.f32 %v6873, 0.5
      %v6896 = vmul.f32 %v6878, 0.5
      %v6897 = vmul.f32 %v6883, 0.5
      %v6898 = vmul.f32 %v6888, 0.5
      %v6899 = vtanh.pop %v6891
      %v6900 = vtanh.pop %v6892
      %v6901 = vtanh.pop %v6893
      %v6902 = vtanh.pop %v6894
      %v6903 = vtanh.pop %v6895
      %v6904 = vtanh.pop %v6896
      %v6905 = vtanh.pop %v6897
      %v6906 = vtanh.pop %v6898
      %v6907 = vmul.f32 %v6899, 0.5
      %v6908 = vmul.f32 %v6900, 0.5
      %v6909 = vmul.f32 %v6901, 0.5
      %v6910 = vmul.f32 %v6902, 0.5
      %v6911 = vmul.f32 %v6903, 0.5
      %v6912 = vmul.f32 %v6904, 0.5
      %v6913 = vmul.f32 %v6905, 0.5
      %v6914 = vmul.f32 %v6906, 0.5
      %v6915 = vadd.f32 %v6907, 0.5
      %v6916 = vadd.f32 %v6908, 0.5
      %v6917 = vadd.f32 %v6909, 0.5
      %v6918 = vadd.f32 %v6910, 0.5
      %v6919 = vadd.f32 %v6911, 0.5
      %v6920 = vadd.f32 %v6912, 0.5
      %v6921 = vadd.f32 %v6913, 0.5
      %v6922 = vadd.f32 %v6914, 0.5
      %v6923 = vmul.f32 %v6853, %v6915
      %v6924 = vmul.f32 %v6858, %v6916
      %v6925 = vmul.f32 %v6863, %v6917
      %v6926 = vmul.f32 %v6868, %v6918
      %v6927 = vmul.f32 %v6873, %v6919
      %v6928 = vmul.f32 %v6878, %v6920
      %v6929 = vmul.f32 %v6883, %v6921
      %v6930 = vmul.f32 %v6888, %v6922
      %v6931 = vadd.f32 %v5084, %v6923
      %v6932 = vadd.f32 %v5085, %v6924
      %v6933 = vadd.f32 %v5086, %v6925
      %v6934 = vadd.f32 %v5087, %v6926
      %v6935 = vadd.f32 %v5088, %v6927
      %v6936 = vadd.f32 %v5089, %v6928
      %v6937 = vadd.f32 %v5090, %v6929
      %v6938 = vadd.f32 %v5091, %v6930
      %6947 = vrot.lane.b32.xlu0 %v6535, 32
      %v6948 = vpop.permute.xlu0 %6947
      %6949 = vrot.lane.b32.xlu0 %v6536, 32
      %v6950 = vpop.permute.xlu0 %6949
      %6951 = vrot.lane.b32.xlu0 %v6537, 32
      %v6952 = vpop.permute.xlu0 %6951
      %6953 = vrot.lane.b32.xlu0 %v6538, 32
      %v6954 = vpop.permute.xlu0 %6953
      %6955 = vrot.lane.b32.xlu0 %v6539, 32
      %v6956 = vpop.permute.xlu0 %6955
      %6957 = vrot.lane.b32.xlu0 %v6540, 32
      %v6958 = vpop.permute.xlu0 %6957
      %6959 = vrot.lane.b32.xlu0 %v6541, 32
      %v6960 = vpop.permute.xlu0 %6959
      %6961 = vrot.lane.b32.xlu0 %v6542, 32
      %v6962 = vpop.permute.xlu0 %6961
      %v6971 = vsel %vm1365, %v6931, %v6948
      %v6972 = vsel %vm1365, %v6932, %v6950
      %v6973 = vsel %vm1365, %v6933, %v6952
      %v6974 = vsel %vm1365, %v6934, %v6954
      %v6975 = vsel %vm1365, %v6935, %v6956
      %v6976 = vsel %vm1365, %v6936, %v6958
      %v6977 = vsel %vm1365, %v6937, %v6960
      %v6978 = vsel %vm1365, %v6938, %v6962
      %vm6979 = vcmask 285696
      %v6980 = vsel %vm6979, %v6971, 0.0
      %v6981 = vsel %vm6979, %v6972, 0.0
      %v6982 = vsel %vm6979, %v6973, 0.0
      %v6983 = vsel %vm6979, %v6974, 0.0
      %v6984 = vsel %vm6979, %v6975, 0.0
      %v6985 = vsel %vm6979, %v6976, 0.0
      %v6986 = vsel %vm6979, %v6977, 0.0
      %v6987 = vsel %vm6979, %v6978, 0.0
      %6988 = vst [vmem:[%s368] sm:$0xff] %v6980
      %6989 = vst [vmem:[%s368 + $0x8] sm:$0xff] %v6981
      %6990 = vst [vmem:[%s368 + $0x10] sm:$0xff] %v6982
      %6991 = vst [vmem:[%s368 + $0x18] sm:$0xff] %v6983
      %6992 = vst [vmem:[%s368 + $0x20] sm:$0xff] %v6984
      %6993 = vst [vmem:[%s368 + $0x28] sm:$0xff] %v6985
      %6994 = vst [vmem:[%s368 + $0x30] sm:$0xff] %v6986
      %6995 = vst [vmem:[%s368 + $0x38] sm:$0xff] %v6987
      %6996 = vst.msk [vmem:[%s374] sm:$0xff] %vm1365, %v4562
      %6997 = vst.msk [vmem:[%s374 + $0x8] sm:$0xff] %vm1365, %v4563
      %6998 = vst.msk [vmem:[%s374 + $0x10] sm:$0xff] %vm1365, %v4564
      %6999 = vst.msk [vmem:[%s374 + $0x18] sm:$0xff] %vm1365, %v4565
      %7000 = vst.msk [vmem:[%s374 + $0x20] sm:$0xff] %vm1365, %v4566
      %7001 = vst.msk [vmem:[%s374 + $0x28] sm:$0xff] %vm1365, %v4567
      %7002 = vst.msk [vmem:[%s374 + $0x30] sm:$0xff] %vm1365, %v4568
      %7003 = vst.msk [vmem:[%s374 + $0x38] sm:$0xff] %vm1365, %v4569
      %7004 = vst.msk [vmem:[%s374 + $0x40] sm:$0xff] %vm1365, %v4570
      %7005 = vst.msk [vmem:[%s374 + $0x48] sm:$0xff] %vm1365, %v4571
      %7006 = vst.msk [vmem:[%s374 + $0x50] sm:$0xff] %vm1365, %v4572
      %7007 = vst.msk [vmem:[%s374 + $0x58] sm:$0xff] %vm1365, %v4573
      %7008 = vst.msk [vmem:[%s374 + $0x60] sm:$0xff] %vm1365, %v4574
      %7009 = vst.msk [vmem:[%s374 + $0x68] sm:$0xff] %vm1365, %v4575
      %7010 = vst.msk [vmem:[%s374 + $0x70] sm:$0xff] %vm1365, %v4576
      %7011 = vst.msk [vmem:[%s374 + $0x78] sm:$0xff] %vm1365, %v4577
      %s7012 = smul.u32 8, %s19
      %p7013 = scmp.lt.s32.totalorder %s7012, 15
      %s7014 = scalar_select %p7013, %s7012, 15
      %s7015 = smul.addr %s7014, 8
      %s7016 = scalar_lea.vmem %s6, %s7015
      %s7017 = smul.u32 16, %s19
      %p7018 = scmp.lt.s32.totalorder %s7017, 31
      %s7019 = scalar_select %p7018, %s7017, 31
      %s7020 = smul.addr %s7019, 8
      %s7021 = scalar_lea.vmem %s7, %s7020
      // Predicated region
      $region45: #{equivariant_block.1} parent=43 // pred_check
        %p7022 = pneg %p188
      $region46: #{equivariant_block.1} parent=43 // pred_check_branch
        %7024 = sbr.rel (%p7022) target = $region48
      $region47: #{equivariant_block.1} parent=43 // pred_region
        %s7025 = smul.u32 8, %s19
      $region48: #{equivariant_block.1} parent=43 // pred_fallthru
        _
      // Predicated region
      $region49: #{equivariant_block.1} parent=43 // pred_check
        %p7026 = pneg %p214
      $region50: #{equivariant_block.1} parent=43 // pred_check_branch
        %7028 = sbr.rel (%p7026) target = $region52
      $region51: #{equivariant_block.1} parent=43 // pred_region
        %s7029 = smul.u32 16, %s19
      $region52: #{equivariant_block.1} parent=43 // pred_fallthru
        _
    $region44: #{equivariant_block.1} parent=5 // pred_fallthru
      _
    %p7030 = scmp.le.s32.totalorder 2, %s14
    // Predicated region
    $region53: #{equivariant_block.1} parent=5 // pred_check
      %p7031 = pneg %p7030
    $region54: #{equivariant_block.1} parent=5 // pred_check_branch
      %7033 = sbr.rel (%p7031) target = $region56
    $region55: #{equivariant_block.1} parent=5 // pred_region
      %s7034 = ssub.s32 %s14, 2
      // Predicated region
      $region57: #{equivariant_block.1} parent=55 // pred_check
        %p7035 = pneg %p194
      $region58: #{equivariant_block.1} parent=55 // pred_check_branch
        %7037 = sbr.rel (%p7035) target = $region60
      $region59: #{equivariant_block.1} parent=55 // pred_region
        %s7038 = smul.u32 8, %s20
        %p7039 = scmp.lt.s32.totalorder %s7038, 15
        %s7040 = scalar_select %p7039, %s7038, 15
        %s7041 = smul.addr %s7040, 8
        %s7042 = scalar_lea.vmem %s6, %s7041
      $region60: #{equivariant_block.1} parent=55 // pred_fallthru
        _
      // Predicated region
      $region61: #{equivariant_block.1} parent=55 // pred_check
        %p7043 = pneg %p220
      $region62: #{equivariant_block.1} parent=55 // pred_check_branch
        %7045 = sbr.rel (%p7043) target = $region64
      $region63: #{equivariant_block.1} parent=55 // pred_region
        %s7046 = smul.u32 16, %s20
        %p7047 = scmp.lt.s32.totalorder %s7046, 31
        %s7048 = scalar_select %p7047, %s7046, 31
        %s7049 = smul.addr %s7048, 8
        %s7050 = scalar_lea.vmem %s7, %s7049
      $region64: #{equivariant_block.1} parent=55 // pred_fallthru
        _
    $region56: #{equivariant_block.1} parent=5 // pred_fallthru
      _
  $region6: #{equivariant_block.1} parent=0 // loop_footer
    %s18 = sadd.s32 1, %s14
  $region7: #{equivariant_block.1} parent=0 // loop_footer_branch
    %13 = sbr.rel target = $region3
  $region8: #{equivariant_block.1} parent=0 // loop_exit
    _

</llo_original>
